<compile_context>
chip_gen: v6e
topology: v6e:2x2x1
jax: 0.10.0
libtpu: 0.0.40
codegen_flags: <defaults>
</compile_context>

<pallas_src>
import jax
import jax.numpy as jnp
from jax import lax
from jax.experimental import pallas as pl
from jax.experimental.pallas import tpu as pltpu

LANE = 128


def _round_up(x, m):
    return ((x + m - 1) // m) * m


# ------------------------------ Pallas kernel ------------------------------- #

def _make_fused_kernel(num_layers, seq_len, batch_tile, hidden_pad):
    """Fused kernel: all LSTM layers + linear head, time loop inside the kernel."""
    T, bt, Hp = seq_len, batch_tile, hidden_pad
    multi = num_layers > 1
    # Partial unroll for long T exposes adjacent steps to the LLO scheduler (MXU push /
    # EUP sigmoid-tanh / ybuf store co-issue); full unroll for short sequences.
    unroll = True if T <= 16 else 8

    def kernel(*refs):
        # refs = [x, (w_ih_0, w_hh_0, b_0), ..., w_out, b_out, out, gbuf, (ybuf)]
        x_ref = refs[0]
        layer_refs = [(refs[1 + 3 * l], refs[2 + 3 * l], refs[3 + 3 * l])
                      for l in range(num_layers)]
        w_out_ref = refs[1 + 3 * num_layers]
        b_out_ref = refs[2 + 3 * num_layers]
        out_ref = refs[3 + 3 * num_layers]
        gbuf = refs[4 + 3 * num_layers]                      # (T*bt, 4Hp) bf16 scratch
        ybuf = refs[5 + 3 * num_layers] if multi else None   # (T*bt, Hp) bf16 scratch

        h_top = None
        for l, (wih_ref, whh_ref, b_ref) in enumerate(layer_refs):
            last = (l == num_layers - 1)
            acts = x_ref[...] if l == 0 else ybuf[...]       # (T*bt, F) bf16

            # Hoisted, time-invariant input projection: ONE big MXU matmul per layer.
            # Bias is a (1, 4Hp) row; the VPU broadcasts it along sublanes (no temp).
            g_in = jnp.dot(acts, wih_ref[...],
                           preferred_element_type=jnp.float32) + b_ref[...]
            gbuf[...] = g_in.astype(jnp.bfloat16)

            w_hh = whh_ref[...]                               # read once per layer

            def step(t, carry, _w_hh=w_hh, _last=last):
                h, c = carry                                  # f32 (bt, Hp)
                row = pl.multiple_of(t * bt, bt)
                g = gbuf[pl.ds(row, bt), :].astype(jnp.float32) + jnp.dot(
                    h.astype(jnp.bfloat16), _w_hh,
                    preferred_element_type=jnp.float32)
                # Gate slices fall on 128-lane boundaries (Hp is a multiple of 128).
                i = jax.nn.sigmoid(g[:, 0 * Hp:1 * Hp])
                f = jax.nn.sigmoid(g[:, 1 * Hp:2 * Hp])
                gg = jnp.tanh(g[:, 2 * Hp:3 * Hp])
                o = jax.nn.sigmoid(g[:, 3 * Hp:4 * Hp])
                c = f * c + i * gg
                h = o * jnp.tanh(c)
                if not _last:                 # last layer: only the final h is consumed
                    ybuf[pl.ds(row, bt), :] = h.astype(jnp.bfloat16)
                return (h, c)

            init = (jnp.zeros((bt, Hp), jnp.float32),
                    jnp.zeros((bt, Hp), jnp.float32))
            h_top, _ = lax.fori_loop(0, T, step, init, unroll=unroll)

        # Classifier head fused into the same kernel; lane-padded (C_pad=128) output
        # makes the final store an unmasked full-lane vst.
        logits = jnp.dot(h_top.astype(jnp.bfloat16), w_out_ref[...],
                         preferred_element_type=jnp.float32) + b_out_ref[...]
        out_ref[...] = logits.astype(out_ref.dtype)

    return kernel


# -------------------------------- Wrappers ---------------------------------- #

def prepare_params(raw):
    """Pad H/E/C to lane multiples, cast MXU operands to bf16.

    Padding keeps exact semantics: padded gate columns get zero weights/bias so the
    padded channels of c and h stay exactly 0 (given zero initial state), padded rows
    of W_ih/W_hh/W_out are zero, and padded logit columns are zero (sliced off later).
    Gate k lives at columns [k*H_pad, k*H_pad + H). Gate order [i, f, g, o].
    """
    E = raw["embedding"].shape[1]
    H = raw["lstm"][0]["w_hh"].shape[0]
    C = raw["w_out"].shape[1]
    E_pad = max(LANE, _round_up(E, LANE))
    H_pad = max(LANE, _round_up(H, LANE))
    C_pad = max(LANE, _round_up(C, LANE))

    def pad_gate_cols(w):
        parts = []
        for k in range(4):
            blk = w[..., k * H:(k + 1) * H]
            parts.append(jnp.pad(blk, [(0, 0)] * (w.ndim - 1) + [(0, H_pad - H)]))
        return jnp.concatenate(parts, axis=-1)

    layers = []
    for l, layer in enumerate(raw["lstm"]):
        F = layer["w_ih"].shape[0]
        F_pad = E_pad if l == 0 else H_pad
        w_ih = jnp.pad(pad_gate_cols(layer["w_ih"]),
                       ((0, F_pad - F), (0, 0))).astype(jnp.bfloat16)
        w_hh = jnp.pad(pad_gate_cols(layer["w_hh"]),
                       ((0, H_pad - H), (0, 0))).astype(jnp.bfloat16)
        bias = pad_gate_cols(layer["bias"]).astype(jnp.float32)        # (1, 4*H_pad)
        layers.append({"w_ih": w_ih, "w_hh": w_hh, "bias": bias})

    return {
        "emb_table": jnp.pad(raw["embedding"], ((0, 0), (0, E_pad - E))).astype(jnp.bfloat16),
        "layers": layers,
        "w_out": jnp.pad(raw["w_out"], ((0, H_pad - H), (0, C_pad - C))).astype(jnp.bfloat16),
        "b_out": jnp.pad(raw["b_out"], ((0, 0), (0, C_pad - C))).astype(jnp.float32),
        "hidden_pad": H_pad,
        "num_classes": C,
    }


def lstm_classifier_forward(token_ids, prepared, *, batch_tile=None):
    """token_ids: (B, T) int32. Mirrors LSTM.forward of the PyTorch module."""
    B, T = token_ids.shape
    E_pad = int(prepared["emb_table"].shape[1])
    H_pad = int(prepared["hidden_pad"])
    C_pad = int(prepared["w_out"].shape[1])
    C = int(prepared["num_classes"])
    num_layers = len(prepared["layers"])

    # bf16 packs 16 sublane rows per vreg -> 16-aligned batch tiles avoid masked/relayout
    # ops. At production B, choose batch_tile so the tile count is even (>=2) so the
    # "parallel" grid axis actually splits across v7x's two TensorCores.
    if batch_tile is None:
        batch_tile = min(_round_up(B, 16), 128)
    assert batch_tile % 16 == 0, "batch tiles must be 16-aligned for bf16 sublane packing"
    B_pad = _round_up(B, batch_tile)
    n_tiles = B_pad // batch_tile

    ids = token_ids if B_pad == B else jnp.pad(token_ids, ((0, B_pad - B), (0, 0)))
    # Embedding gather straight into the per-tile, time-major (tile, T*bt, E_pad) slab:
    # the transpose happens on the tiny int32 id tensor, never on activations.
    idx = ids.reshape(n_tiles, batch_tile, T).transpose(0, 2, 1).reshape(n_tiles, T * batch_tile)
    x = prepared["emb_table"][idx]                       # (n_tiles, T*bt, E_pad) bf16

    kernel = _make_fused_kernel(num_layers, T, batch_tile, H_pad)

    # Resident VMEM footprint: x/out double-buffered, weights single-buffered,
    # gbuf/ybuf scratch + working-set headroom. On v7x (64 MiB/TC) pick batch_tile /
    # chunk T so this stays <= ~48 MiB; on v5e/v6e simply raise the scoped limit.
    footprint = 2 * (T * batch_tile * E_pad) * 2 + 2 * batch_tile * C_pad * 4
    for layer in prepared["layers"]:
        footprint += layer["w_ih"].size * 2 + layer["w_hh"].size * 2 + layer["bias"].size * 4
    footprint += prepared["w_out"].size * 2 + prepared["b_out"].size * 4
    footprint += T * batch_tile * 4 * H_pad * 2                      # gbuf
    if num_layers > 1:
        footprint += T * batch_tile * H_pad * 2                      # ybuf
    footprint += 16 * batch_tile * 4 * H_pad * 4                     # gate/temp headroom
    vmem_limit = int(min(max(32 * 1024 * 1024, 2 * footprint), 100 * 1024 * 1024))

    def invoke(single_buffer_weights):
        def wspec(shape):
            idx_map = lambda b, _s=shape: (0,) * len(_s)
            if single_buffer_weights:
                # Grid-invariant weights never change across batch tiles: single-buffer
                # them instead of the default 2-deep pipeline (halves weight VMEM).
                return pl.BlockSpec(shape, idx_map, pipeline_mode=pl.Buffered(1))
            return pl.BlockSpec(shape, idx_map)

        in_specs = [pl.BlockSpec((None, T * batch_tile, E_pad), lambda b: (b, 0, 0))]
        inputs = [x]
        for layer in prepared["layers"]:
            for name in ("w_ih", "w_hh", "bias"):
                arr = layer[name]
                in_specs.append(wspec(arr.shape))
                inputs.append(arr)
        in_specs.append(wspec(prepared["w_out"].shape))
        in_specs.append(wspec(prepared["b_out"].shape))
        inputs_all = inputs + [prepared["w_out"], prepared["b_out"]]

        scratch = [pltpu.VMEM((T * batch_tile, 4 * H_pad), jnp.bfloat16)]   # gate scratch
        if num_layers > 1:
            scratch.append(pltpu.VMEM((T * batch_tile, H_pad), jnp.bfloat16))  # layer act

        # TODO(synk): for production H (>=1024) on v7x, stream per-layer weights with
        # memory_space=pl.ANY + manual double-buffered DMA instead of holding all layers
        # resident in VMEM simultaneously.
        return pl.pallas_call(
            kernel,
            out_shape=jax.ShapeDtypeStruct((B_pad, C_pad), jnp.float32),
            grid_spec=pltpu.PrefetchScalarGridSpec(
                num_scalar_prefetch=0,
                grid=(n_tiles,),                       # independent batch tiles
                in_specs=in_specs,
                out_specs=pl.BlockSpec((batch_tile, C_pad), lambda b: (b, 0)),
                scratch_shapes=scratch,
            ),
            compiler_params=pltpu.CompilerParams(
                dimension_semantics=("parallel",),     # batch tiles -> v7x's 2 TCs
                vmem_limit_bytes=vmem_limit,
            ),
        )(*inputs_all)

    try:
        out = invoke(True)
    except Exception:
        # pipeline_mode=pl.Buffered not supported on this build -> default buffering.
        out = invoke(False)

    return out[:B, :C]


# ---------------------------- Pure-JAX reference ----------------------------- #

def _reference_forward(token_ids, params):
    emb = params["embedding"][token_ids].astype(jnp.float32)   # (B, T, E)
    x = jnp.transpose(emb, (1, 0, 2))                          # (T, B, E)
    for layer in params["lstm"]:
        w_ih, w_hh, bias = layer["w_ih"], layer["w_hh"], layer["bias"]
        H = w_hh.shape[0]
        B = x.shape[1]

        def step(carry, xt):
            h, c = carry
            g = xt @ w_ih + h @ w_hh + bias[0]
            i = jax.nn.sigmoid(g[:, 0 * H:1 * H])
            f = jax.nn.sigmoid(g[:, 1 * H:2 * H])
            gg = jnp.tanh(g[:, 2 * H:3 * H])
            o = jax.nn.sigmoid(g[:, 3 * H:4 * H])
            c = f * c + i * gg
            h = o * jnp.tanh(c)
            return (h, c), h

        init = (jnp.zeros((B, H), jnp.float32), jnp.zeros((B, H), jnp.float32))
        _, ys = lax.scan(step, init, x)
        x = ys
    return x[-1] @ params["w_out"] + params["b_out"][0]


# ---------------------------------- Main ------------------------------------- #

def _init_params(key, vocab_size, embedding_dim, hidden_dim, num_layers, num_classes=4):
    keys = jax.random.split(key, 3 + 3 * num_layers)
    s = 0.1
    params = {
        "embedding": jax.random.uniform(keys[0], (vocab_size, embedding_dim),
                                        jnp.float32, -s, s),
        "w_out": jax.random.uniform(keys[1], (hidden_dim, num_classes),
                                    jnp.float32, -s, s),
        "b_out": jax.random.uniform(keys[2], (1, num_classes), jnp.float32, -s, s),
        "lstm": [],
    }
    for l in range(num_layers):
        in_dim = embedding_dim if l == 0 else hidden_dim
        k = keys[3 + 3 * l: 6 + 3 * l]
        params["lstm"].append({
            # PyTorch stores (4H, in)/(4H, H); we keep the transposed layout
            # (in, 4H)/(H, 4H) and fold b_ih + b_hh into one bias row. Gate order [i,f,g,o].
            "w_ih": jax.random.uniform(k[0], (in_dim, 4 * hidden_dim), jnp.float32, -s, s),
            "w_hh": jax.random.uniform(k[1], (hidden_dim, 4 * hidden_dim), jnp.float32, -s, s),
            "bias": jax.random.uniform(k[2], (1, 4 * hidden_dim), jnp.float32, -s, s),
        })
    return params


if __name__ == "__main__":
    VOCAB, EMB, HID, LAYERS, CLASSES = 50, 32, 32, 2, 4
    B, T = 4, 8

    root = jax.random.PRNGKey(0)
    k_param, k_tok = jax.random.split(root)
    raw_params = _init_params(k_param, VOCAB, EMB, HID, LAYERS, CLASSES)
    token_ids = jax.random.randint(k_tok, (B, T), 0, VOCAB, dtype=jnp.int32)

    prepared = prepare_params(raw_params)
    out = lstm_classifier_forward(token_ids, prepared)
    out = jax.block_until_ready(out)

    ref = jax.block_until_ready(_reference_forward(token_ids, raw_params))
    assert out.shape == (B, CLASSES), out.shape
    # bf16 MXU operands / bf16 gate scratch -> compare vs pure-f32 reference with
    # bf16-level tolerance.
    max_diff = float(jnp.max(jnp.abs(out - ref)))
    assert jnp.allclose(out, ref, rtol=2e-2, atol=2e-2), \
        f"mismatch vs reference (max diff {max_diff})"

    print("KERNEL_OK")
</pallas_src>

<mosaic_0001>
module attributes {stable_mosaic.version = 11 : i64} {
  func.func @kernel(%arg0: i32, %arg1: memref<1x128x128xbf16, #tpu.memory_space<vmem>>, %arg2: memref<128x512xbf16, #tpu.memory_space<vmem>>, %arg3: memref<128x512xbf16, #tpu.memory_space<vmem>>, %arg4: memref<1x512xf32, #tpu.memory_space<vmem>>, %arg5: memref<128x512xbf16, #tpu.memory_space<vmem>>, %arg6: memref<128x512xbf16, #tpu.memory_space<vmem>>, %arg7: memref<1x512xf32, #tpu.memory_space<vmem>>, %arg8: memref<128x128xbf16, #tpu.memory_space<vmem>>, %arg9: memref<1x128xf32, #tpu.memory_space<vmem>>, %arg10: memref<16x128xf32, #tpu.memory_space<vmem>>, %arg11: memref<128x512xbf16, #tpu.memory_space<vmem>>, %arg12: memref<128x128xbf16, #tpu.memory_space<vmem>>) attributes {dimension_semantics = [#tpu.dimension_semantics<parallel>], iteration_bounds = array<i64: 1>, scalar_prefetch = 0 : i64, scratch_operands = 2 : i64, tpu.core_type = #tpu.core_type<tc>, window_params = [{transform_indices = @transform_0, window_bounds = array<i64: 1, 128, 128>}, {pipeline_mode = #tpu.pipeline_mode<synchronous>, transform_indices = @transform_1, window_bounds = array<i64: 128, 512>}, {pipeline_mode = #tpu.pipeline_mode<synchronous>, transform_indices = @transform_2, window_bounds = array<i64: 128, 512>}, {pipeline_mode = #tpu.pipeline_mode<synchronous>, transform_indices = @transform_3, window_bounds = array<i64: 1, 512>}, {pipeline_mode = #tpu.pipeline_mode<synchronous>, transform_indices = @transform_4, window_bounds = array<i64: 128, 512>}, {pipeline_mode = #tpu.pipeline_mode<synchronous>, transform_indices = @transform_5, window_bounds = array<i64: 128, 512>}, {pipeline_mode = #tpu.pipeline_mode<synchronous>, transform_indices = @transform_6, window_bounds = array<i64: 1, 512>}, {pipeline_mode = #tpu.pipeline_mode<synchronous>, transform_indices = @transform_7, window_bounds = array<i64: 128, 128>}, {pipeline_mode = #tpu.pipeline_mode<synchronous>, transform_indices = @transform_8, window_bounds = array<i64: 1, 128>}, {transform_indices = @transform_9, window_bounds = array<i64: 16, 128>}]} {
    %c0 = arith.constant 0 : index
    %c0_0 = arith.constant 0 : index
    %c0_1 = arith.constant 0 : index
    %0 = vector.load %arg1[%c0, %c0_0, %c0_1] : memref<1x128x128xbf16, #tpu.memory_space<vmem>>, vector<1x128x128xbf16>
    %1 = vector.shape_cast %0 : vector<1x128x128xbf16> to vector<128x128xbf16>
    %c0_2 = arith.constant 0 : index
    %c0_3 = arith.constant 0 : index
    %2 = vector.load %arg2[%c0_2, %c0_3] : memref<128x512xbf16, #tpu.memory_space<vmem>>, vector<128x512xbf16>
    %cst = arith.constant dense<0.000000e+00> : vector<128x512xf32>
    %3 = tpu.matmul %1, %2, %cst {dimension_numbers = #tpu.dot_dimension_numbers<[1], [0], [0], [1], [0, 0, 1, 1], [], []>} : vector<128x128xbf16>, vector<128x512xbf16>, vector<128x512xf32> -> vector<128x512xf32>
    %c0_4 = arith.constant 0 : index
    %c0_5 = arith.constant 0 : index
    %4 = vector.load %arg4[%c0_4, %c0_5] : memref<1x512xf32, #tpu.memory_space<vmem>>, vector<1x512xf32>
    %5 = vector.broadcast %4 : vector<1x512xf32> to vector<128x512xf32>
    %6 = arith.addf %3, %5 : vector<128x512xf32>
    %7 = arith.truncf %6 : vector<128x512xf32> to vector<128x512xbf16>
    %c0_6 = arith.constant 0 : index
    %c0_7 = arith.constant 0 : index
    %8 = vector.load %arg11[%c0_6, %c0_7] : memref<128x512xbf16, #tpu.memory_space<vmem>>, vector<128x512xbf16>
    tpu.vector_store %arg11[%c0_6, %c0_7], %7 {strides = array<i32>} : memref<128x512xbf16, #tpu.memory_space<vmem>>, vector<128x512xbf16>,
    %c0_8 = arith.constant 0 : index
    %c0_9 = arith.constant 0 : index
    %9 = vector.load %arg3[%c0_8, %c0_9] : memref<128x512xbf16, #tpu.memory_space<vmem>>, vector<128x512xbf16>
    %cst_10 = arith.constant 0.000000e+00 : f32
    %10 = vector.broadcast %cst_10 : f32 to vector<16x128xf32>
    %cst_11 = arith.constant 0.000000e+00 : f32
    %11 = vector.broadcast %cst_11 : f32 to vector<16x128xf32>
    %c0_i32 = arith.constant 0 : i32
    %c16_i32 = arith.constant 16 : i32
    %12 = arith.muli %c0_i32, %c16_i32 : i32
    %13 = tpu.assume_multiple %12, 16 : i32
    %14 = arith.index_cast %13 : i32 to index
    %c0_12 = arith.constant 0 : index
    %15 = vector.load %arg11[%14, %c0_12] : memref<128x512xbf16, #tpu.memory_space<vmem>>, vector<16x512xbf16>
    %16 = arith.extf %15 : vector<16x512xbf16> to vector<16x512xf32>
    %17 = arith.truncf %10 : vector<16x128xf32> to vector<16x128xbf16>
    %cst_13 = arith.constant dense<0.000000e+00> : vector<16x512xf32>
    %18 = tpu.matmul %17, %9, %cst_13 {dimension_numbers = #tpu.dot_dimension_numbers<[1], [0], [0], [1], [0, 0, 1, 1], [], []>} : vector<16x128xbf16>, vector<128x512xbf16>, vector<16x512xf32> -> vector<16x512xf32>
    %19 = arith.addf %16, %18 : vector<16x512xf32>
    %20 = vector.extract_strided_slice %19 {offsets = [0, 0], sizes = [16, 128], strides = [1, 1]} : vector<16x512xf32> to vector<16x128xf32>
    %21 = arith.negf %20 : vector<16x128xf32>
    %22 = math.exp %21 : vector<16x128xf32>
    %cst_14 = arith.constant 1.000000e+00 : f32
    %23 = vector.broadcast %cst_14 : f32 to vector<16x128xf32>
    %24 = arith.addf %23, %22 : vector<16x128xf32>
    %25 = arith.divf %23, %24 : vector<16x128xf32>
    %26 = vector.extract_strided_slice %19 {offsets = [0, 128], sizes = [16, 128], strides = [1, 1]} : vector<16x512xf32> to vector<16x128xf32>
    %27 = arith.negf %26 : vector<16x128xf32>
    %28 = math.exp %27 : vector<16x128xf32>
    %cst_15 = arith.constant 1.000000e+00 : f32
    %29 = vector.broadcast %cst_15 : f32 to vector<16x128xf32>
    %30 = arith.addf %29, %28 : vector<16x128xf32>
    %31 = arith.divf %29, %30 : vector<16x128xf32>
    %32 = vector.extract_strided_slice %19 {offsets = [0, 256], sizes = [16, 128], strides = [1, 1]} : vector<16x512xf32> to vector<16x128xf32>
    %33 = math.tanh %32 : vector<16x128xf32>
    %34 = vector.extract_strided_slice %19 {offsets = [0, 384], sizes = [16, 128], strides = [1, 1]} : vector<16x512xf32> to vector<16x128xf32>
    %35 = arith.negf %34 : vector<16x128xf32>
    %36 = math.exp %35 : vector<16x128xf32>
    %cst_16 = arith.constant 1.000000e+00 : f32
    %37 = vector.broadcast %cst_16 : f32 to vector<16x128xf32>
    %38 = arith.addf %37, %36 : vector<16x128xf32>
    %39 = arith.divf %37, %38 : vector<16x128xf32>
    %40 = arith.mulf %31, %11 : vector<16x128xf32>
    %41 = arith.mulf %25, %33 : vector<16x128xf32>
    %42 = arith.addf %40, %41 : vector<16x128xf32>
    %43 = math.tanh %42 : vector<16x128xf32>
    %44 = arith.mulf %39, %43 : vector<16x128xf32>
    %45 = arith.truncf %44 : vector<16x128xf32> to vector<16x128xbf16>
    %46 = arith.index_cast %13 : i32 to index
    %c0_17 = arith.constant 0 : index
    %47 = vector.load %arg12[%46, %c0_17] : memref<128x128xbf16, #tpu.memory_space<vmem>>, vector<16x128xbf16>
    tpu.vector_store %arg12[%46, %c0_17], %45 {strides = array<i32>} : memref<128x128xbf16, #tpu.memory_space<vmem>>, vector<16x128xbf16>,
    %c1_i32 = arith.constant 1 : i32
    %c16_i32_18 = arith.constant 16 : i32
    %48 = arith.muli %c1_i32, %c16_i32_18 : i32
    %49 = tpu.assume_multiple %48, 16 : i32
    %50 = arith.index_cast %49 : i32 to index
    %c0_19 = arith.constant 0 : index
    %51 = vector.load %arg11[%50, %c0_19] : memref<128x512xbf16, #tpu.memory_space<vmem>>, vector<16x512xbf16>
    %52 = arith.extf %51 : vector<16x512xbf16> to vector<16x512xf32>
    %53 = arith.truncf %44 : vector<16x128xf32> to vector<16x128xbf16>
    %cst_20 = arith.constant dense<0.000000e+00> : vector<16x512xf32>
    %54 = tpu.matmul %53, %9, %cst_20 {dimension_numbers = #tpu.dot_dimension_numbers<[1], [0], [0], [1], [0, 0, 1, 1], [], []>} : vector<16x128xbf16>, vector<128x512xbf16>, vector<16x512xf32> -> vector<16x512xf32>
    %55 = arith.addf %52, %54 : vector<16x512xf32>
    %56 = vector.extract_strided_slice %55 {offsets = [0, 0], sizes = [16, 128], strides = [1, 1]} : vector<16x512xf32> to vector<16x128xf32>
    %57 = arith.negf %56 : vector<16x128xf32>
    %58 = math.exp %57 : vector<16x128xf32>
    %cst_21 = arith.constant 1.000000e+00 : f32
    %59 = vector.broadcast %cst_21 : f32 to vector<16x128xf32>
    %60 = arith.addf %59, %58 : vector<16x128xf32>
    %61 = arith.divf %59, %60 : vector<16x128xf32>
    %62 = vector.extract_strided_slice %55 {offsets = [0, 128], sizes = [16, 128], strides = [1, 1]} : vector<16x512xf32> to vector<16x128xf32>
    %63 = arith.negf %62 : vector<16x128xf32>
    %64 = math.exp %63 : vector<16x128xf32>
    %cst_22 = arith.constant 1.000000e+00 : f32
    %65 = vector.broadcast %cst_22 : f32 to vector<16x128xf32>
    %66 = arith.addf %65, %64 : vector<16x128xf32>
    %67 = arith.divf %65, %66 : vector<16x128xf32>
    %68 = vector.extract_strided_slice %55 {offsets = [0, 256], sizes = [16, 128], strides = [1, 1]} : vector<16x512xf32> to vector<16x128xf32>
    %69 = math.tanh %68 : vector<16x128xf32>
    %70 = vector.extract_strided_slice %55 {offsets = [0, 384], sizes = [16, 128], strides = [1, 1]} : vector<16x512xf32> to vector<16x128xf32>
    %71 = arith.negf %70 : vector<16x128xf32>
    %72 = math.exp %71 : vector<16x128xf32>
    %cst_23 = arith.constant 1.000000e+00 : f32
    %73 = vector.broadcast %cst_23 : f32 to vector<16x128xf32>
    %74 = arith.addf %73, %72 : vector<16x128xf32>
    %75 = arith.divf %73, %74 : vector<16x128xf32>
    %76 = arith.mulf %67, %42 : vector<16x128xf32>
    %77 = arith.mulf %61, %69 : vector<16x128xf32>
    %78 = arith.addf %76, %77 : vector<16x128xf32>
    %79 = math.tanh %78 : vector<16x128xf32>
    %80 = arith.mulf %75, %79 : vector<16x128xf32>
    %81 = arith.truncf %80 : vector<16x128xf32> to vector<16x128xbf16>
    %82 = arith.index_cast %49 : i32 to index
    %c0_24 = arith.constant 0 : index
    %83 = vector.load %arg12[%82, %c0_24] : memref<128x128xbf16, #tpu.memory_space<vmem>>, vector<16x128xbf16>
    tpu.vector_store %arg12[%82, %c0_24], %81 {strides = array<i32>} : memref<128x128xbf16, #tpu.memory_space<vmem>>, vector<16x128xbf16>,
    %c2_i32 = arith.constant 2 : i32
    %c16_i32_25 = arith.constant 16 : i32
    %84 = arith.muli %c2_i32, %c16_i32_25 : i32
    %85 = tpu.assume_multiple %84, 16 : i32
    %86 = arith.index_cast %85 : i32 to index
    %c0_26 = arith.constant 0 : index
    %87 = vector.load %arg11[%86, %c0_26] : memref<128x512xbf16, #tpu.memory_space<vmem>>, vector<16x512xbf16>
    %88 = arith.extf %87 : vector<16x512xbf16> to vector<16x512xf32>
    %89 = arith.truncf %80 : vector<16x128xf32> to vector<16x128xbf16>
    %cst_27 = arith.constant dense<0.000000e+00> : vector<16x512xf32>
    %90 = tpu.matmul %89, %9, %cst_27 {dimension_numbers = #tpu.dot_dimension_numbers<[1], [0], [0], [1], [0, 0, 1, 1], [], []>} : vector<16x128xbf16>, vector<128x512xbf16>, vector<16x512xf32> -> vector<16x512xf32>
    %91 = arith.addf %88, %90 : vector<16x512xf32>
    %92 = vector.extract_strided_slice %91 {offsets = [0, 0], sizes = [16, 128], strides = [1, 1]} : vector<16x512xf32> to vector<16x128xf32>
    %93 = arith.negf %92 : vector<16x128xf32>
    %94 = math.exp %93 : vector<16x128xf32>
    %cst_28 = arith.constant 1.000000e+00 : f32
    %95 = vector.broadcast %cst_28 : f32 to vector<16x128xf32>
    %96 = arith.addf %95, %94 : vector<16x128xf32>
    %97 = arith.divf %95, %96 : vector<16x128xf32>
    %98 = vector.extract_strided_slice %91 {offsets = [0, 128], sizes = [16, 128], strides = [1, 1]} : vector<16x512xf32> to vector<16x128xf32>
    %99 = arith.negf %98 : vector<16x128xf32>
    %100 = math.exp %99 : vector<16x128xf32>
    %cst_29 = arith.constant 1.000000e+00 : f32
    %101 = vector.broadcast %cst_29 : f32 to vector<16x128xf32>
    %102 = arith.addf %101, %100 : vector<16x128xf32>
    %103 = arith.divf %101, %102 : vector<16x128xf32>
    %104 = vector.extract_strided_slice %91 {offsets = [0, 256], sizes = [16, 128], strides = [1, 1]} : vector<16x512xf32> to vector<16x128xf32>
    %105 = math.tanh %104 : vector<16x128xf32>
    %106 = vector.extract_strided_slice %91 {offsets = [0, 384], sizes = [16, 128], strides = [1, 1]} : vector<16x512xf32> to vector<16x128xf32>
    %107 = arith.negf %106 : vector<16x128xf32>
    %108 = math.exp %107 : vector<16x128xf32>
    %cst_30 = arith.constant 1.000000e+00 : f32
    %109 = vector.broadcast %cst_30 : f32 to vector<16x128xf32>
    %110 = arith.addf %109, %108 : vector<16x128xf32>
    %111 = arith.divf %109, %110 : vector<16x128xf32>
    %112 = arith.mulf %103, %78 : vector<16x128xf32>
    %113 = arith.mulf %97, %105 : vector<16x128xf32>
    %114 = arith.addf %112, %113 : vector<16x128xf32>
    %115 = math.tanh %114 : vector<16x128xf32>
    %116 = arith.mulf %111, %115 : vector<16x128xf32>
    %117 = arith.truncf %116 : vector<16x128xf32> to vector<16x128xbf16>
    %118 = arith.index_cast %85 : i32 to index
    %c0_31 = arith.constant 0 : index
    %119 = vector.load %arg12[%118, %c0_31] : memref<128x128xbf16, #tpu.memory_space<vmem>>, vector<16x128xbf16>
    tpu.vector_store %arg12[%118, %c0_31], %117 {strides = array<i32>} : memref<128x128xbf16, #tpu.memory_space<vmem>>, vector<16x128xbf16>,
    %c3_i32 = arith.constant 3 : i32
    %c16_i32_32 = arith.constant 16 : i32
    %120 = arith.muli %c3_i32, %c16_i32_32 : i32
    %121 = tpu.assume_multiple %120, 16 : i32
    %122 = arith.index_cast %121 : i32 to index
    %c0_33 = arith.constant 0 : index
    %123 = vector.load %arg11[%122, %c0_33] : memref<128x512xbf16, #tpu.memory_space<vmem>>, vector<16x512xbf16>
    %124 = arith.extf %123 : vector<16x512xbf16> to vector<16x512xf32>
    %125 = arith.truncf %116 : vector<16x128xf32> to vector<16x128xbf16>
    %cst_34 = arith.constant dense<0.000000e+00> : vector<16x512xf32>
    %126 = tpu.matmul %125, %9, %cst_34 {dimension_numbers = #tpu.dot_dimension_numbers<[1], [0], [0], [1], [0, 0, 1, 1], [], []>} : vector<16x128xbf16>, vector<128x512xbf16>, vector<16x512xf32> -> vector<16x512xf32>
    %127 = arith.addf %124, %126 : vector<16x512xf32>
    %128 = vector.extract_strided_slice %127 {offsets = [0, 0], sizes = [16, 128], strides = [1, 1]} : vector<16x512xf32> to vector<16x128xf32>
    %129 = arith.negf %128 : vector<16x128xf32>
    %130 = math.exp %129 : vector<16x128xf32>
    %cst_35 = arith.constant 1.000000e+00 : f32
    %131 = vector.broadcast %cst_35 : f32 to vector<16x128xf32>
    %132 = arith.addf %131, %130 : vector<16x128xf32>
    %133 = arith.divf %131, %132 : vector<16x128xf32>
    %134 = vector.extract_strided_slice %127 {offsets = [0, 128], sizes = [16, 128], strides = [1, 1]} : vector<16x512xf32> to vector<16x128xf32>
    %135 = arith.negf %134 : vector<16x128xf32>
    %136 = math.exp %135 : vector<16x128xf32>
    %cst_36 = arith.constant 1.000000e+00 : f32
    %137 = vector.broadcast %cst_36 : f32 to vector<16x128xf32>
    %138 = arith.addf %137, %136 : vector<16x128xf32>
    %139 = arith.divf %137, %138 : vector<16x128xf32>
    %140 = vector.extract_strided_slice %127 {offsets = [0, 256], sizes = [16, 128], strides = [1, 1]} : vector<16x512xf32> to vector<16x128xf32>
    %141 = math.tanh %140 : vector<16x128xf32>
    %142 = vector.extract_strided_slice %127 {offsets = [0, 384], sizes = [16, 128], strides = [1, 1]} : vector<16x512xf32> to vector<16x128xf32>
    %143 = arith.negf %142 : vector<16x128xf32>
    %144 = math.exp %143 : vector<16x128xf32>
    %cst_37 = arith.constant 1.000000e+00 : f32
    %145 = vector.broadcast %cst_37 : f32 to vector<16x128xf32>
    %146 = arith.addf %145, %144 : vector<16x128xf32>
    %147 = arith.divf %145, %146 : vector<16x128xf32>
    %148 = arith.mulf %139, %114 : vector<16x128xf32>
    %149 = arith.mulf %133, %141 : vector<16x128xf32>
    %150 = arith.addf %148, %149 : vector<16x128xf32>
    %151 = math.tanh %150 : vector<16x128xf32>
    %152 = arith.mulf %147, %151 : vector<16x128xf32>
    %153 = arith.truncf %152 : vector<16x128xf32> to vector<16x128xbf16>
    %154 = arith.index_cast %121 : i32 to index
    %c0_38 = arith.constant 0 : index
    %155 = vector.load %arg12[%154, %c0_38] : memref<128x128xbf16, #tpu.memory_space<vmem>>, vector<16x128xbf16>
    tpu.vector_store %arg12[%154, %c0_38], %153 {strides = array<i32>} : memref<128x128xbf16, #tpu.memory_space<vmem>>, vector<16x128xbf16>,
    %c4_i32 = arith.constant 4 : i32
    %c16_i32_39 = arith.constant 16 : i32
    %156 = arith.muli %c4_i32, %c16_i32_39 : i32
    %157 = tpu.assume_multiple %156, 16 : i32
    %158 = arith.index_cast %157 : i32 to index
    %c0_40 = arith.constant 0 : index
    %159 = vector.load %arg11[%158, %c0_40] : memref<128x512xbf16, #tpu.memory_space<vmem>>, vector<16x512xbf16>
    %160 = arith.extf %159 : vector<16x512xbf16> to vector<16x512xf32>
    %161 = arith.truncf %152 : vector<16x128xf32> to vector<16x128xbf16>
    %cst_41 = arith.constant dense<0.000000e+00> : vector<16x512xf32>
    %162 = tpu.matmul %161, %9, %cst_41 {dimension_numbers = #tpu.dot_dimension_numbers<[1], [0], [0], [1], [0, 0, 1, 1], [], []>} : vector<16x128xbf16>, vector<128x512xbf16>, vector<16x512xf32> -> vector<16x512xf32>
    %163 = arith.addf %160, %162 : vector<16x512xf32>
    %164 = vector.extract_strided_slice %163 {offsets = [0, 0], sizes = [16, 128], strides = [1, 1]} : vector<16x512xf32> to vector<16x128xf32>
    %165 = arith.negf %164 : vector<16x128xf32>
    %166 = math.exp %165 : vector<16x128xf32>
    %cst_42 = arith.constant 1.000000e+00 : f32
    %167 = vector.broadcast %cst_42 : f32 to vector<16x128xf32>
    %168 = arith.addf %167, %166 : vector<16x128xf32>
    %169 = arith.divf %167, %168 : vector<16x128xf32>
    %170 = vector.extract_strided_slice %163 {offsets = [0, 128], sizes = [16, 128], strides = [1, 1]} : vector<16x512xf32> to vector<16x128xf32>
    %171 = arith.negf %170 : vector<16x128xf32>
    %172 = math.exp %171 : vector<16x128xf32>
    %cst_43 = arith.constant 1.000000e+00 : f32
    %173 = vector.broadcast %cst_43 : f32 to vector<16x128xf32>
    %174 = arith.addf %173, %172 : vector<16x128xf32>
    %175 = arith.divf %173, %174 : vector<16x128xf32>
    %176 = vector.extract_strided_slice %163 {offsets = [0, 256], sizes = [16, 128], strides = [1, 1]} : vector<16x512xf32> to vector<16x128xf32>
    %177 = math.tanh %176 : vector<16x128xf32>
    %178 = vector.extract_strided_slice %163 {offsets = [0, 384], sizes = [16, 128], strides = [1, 1]} : vector<16x512xf32> to vector<16x128xf32>
    %179 = arith.negf %178 : vector<16x128xf32>
    %180 = math.exp %179 : vector<16x128xf32>
    %cst_44 = arith.constant 1.000000e+00 : f32
    %181 = vector.broadcast %cst_44 : f32 to vector<16x128xf32>
    %182 = arith.addf %181, %180 : vector<16x128xf32>
    %183 = arith.divf %181, %182 : vector<16x128xf32>
    %184 = arith.mulf %175, %150 : vector<16x128xf32>
    %185 = arith.mulf %169, %177 : vector<16x128xf32>
    %186 = arith.addf %184, %185 : vector<16x128xf32>
    %187 = math.tanh %186 : vector<16x128xf32>
    %188 = arith.mulf %183, %187 : vector<16x128xf32>
    %189 = arith.truncf %188 : vector<16x128xf32> to vector<16x128xbf16>
    %190 = arith.index_cast %157 : i32 to index
    %c0_45 = arith.constant 0 : index
    %191 = vector.load %arg12[%190, %c0_45] : memref<128x128xbf16, #tpu.memory_space<vmem>>, vector<16x128xbf16>
    tpu.vector_store %arg12[%190, %c0_45], %189 {strides = array<i32>} : memref<128x128xbf16, #tpu.memory_space<vmem>>, vector<16x128xbf16>,
    %c5_i32 = arith.constant 5 : i32
    %c16_i32_46 = arith.constant 16 : i32
    %192 = arith.muli %c5_i32, %c16_i32_46 : i32
    %193 = tpu.assume_multiple %192, 16 : i32
    %194 = arith.index_cast %193 : i32 to index
    %c0_47 = arith.constant 0 : index
    %195 = vector.load %arg11[%194, %c0_47] : memref<128x512xbf16, #tpu.memory_space<vmem>>, vector<16x512xbf16>
    %196 = arith.extf %195 : vector<16x512xbf16> to vector<16x512xf32>
    %197 = arith.truncf %188 : vector<16x128xf32> to vector<16x128xbf16>
    %cst_48 = arith.constant dense<0.000000e+00> : vector<16x512xf32>
    %198 = tpu.matmul %197, %9, %cst_48 {dimension_numbers = #tpu.dot_dimension_numbers<[1], [0], [0], [1], [0, 0, 1, 1], [], []>} : vector<16x128xbf16>, vector<128x512xbf16>, vector<16x512xf32> -> vector<16x512xf32>
    %199 = arith.addf %196, %198 : vector<16x512xf32>
    %200 = vector.extract_strided_slice %199 {offsets = [0, 0], sizes = [16, 128], strides = [1, 1]} : vector<16x512xf32> to vector<16x128xf32>
    %201 = arith.negf %200 : vector<16x128xf32>
    %202 = math.exp %201 : vector<16x128xf32>
    %cst_49 = arith.constant 1.000000e+00 : f32
    %203 = vector.broadcast %cst_49 : f32 to vector<16x128xf32>
    %204 = arith.addf %203, %202 : vector<16x128xf32>
    %205 = arith.divf %203, %204 : vector<16x128xf32>
    %206 = vector.extract_strided_slice %199 {offsets = [0, 128], sizes = [16, 128], strides = [1, 1]} : vector<16x512xf32> to vector<16x128xf32>
    %207 = arith.negf %206 : vector<16x128xf32>
    %208 = math.exp %207 : vector<16x128xf32>
    %cst_50 = arith.constant 1.000000e+00 : f32
    %209 = vector.broadcast %cst_50 : f32 to vector<16x128xf32>
    %210 = arith.addf %209, %208 : vector<16x128xf32>
    %211 = arith.divf %209, %210 : vector<16x128xf32>
    %212 = vector.extract_strided_slice %199 {offsets = [0, 256], sizes = [16, 128], strides = [1, 1]} : vector<16x512xf32> to vector<16x128xf32>
    %213 = math.tanh %212 : vector<16x128xf32>
    %214 = vector.extract_strided_slice %199 {offsets = [0, 384], sizes = [16, 128], strides = [1, 1]} : vector<16x512xf32> to vector<16x128xf32>
    %215 = arith.negf %214 : vector<16x128xf32>
    %216 = math.exp %215 : vector<16x128xf32>
    %cst_51 = arith.constant 1.000000e+00 : f32
    %217 = vector.broadcast %cst_51 : f32 to vector<16x128xf32>
    %218 = arith.addf %217, %216 : vector<16x128xf32>
    %219 = arith.divf %217, %218 : vector<16x128xf32>
    %220 = arith.mulf %211, %186 : vector<16x128xf32>
    %221 = arith.mulf %205, %213 : vector<16x128xf32>
    %222 = arith.addf %220, %221 : vector<16x128xf32>
    %223 = math.tanh %222 : vector<16x128xf32>
    %224 = arith.mulf %219, %223 : vector<16x128xf32>
    %225 = arith.truncf %224 : vector<16x128xf32> to vector<16x128xbf16>
    %226 = arith.index_cast %193 : i32 to index
    %c0_52 = arith.constant 0 : index
    %227 = vector.load %arg12[%226, %c0_52] : memref<128x128xbf16, #tpu.memory_space<vmem>>, vector<16x128xbf16>
    tpu.vector_store %arg12[%226, %c0_52], %225 {strides = array<i32>} : memref<128x128xbf16, #tpu.memory_space<vmem>>, vector<16x128xbf16>,
    %c6_i32 = arith.constant 6 : i32
    %c16_i32_53 = arith.constant 16 : i32
    %228 = arith.muli %c6_i32, %c16_i32_53 : i32
    %229 = tpu.assume_multiple %228, 16 : i32
    %230 = arith.index_cast %229 : i32 to index
    %c0_54 = arith.constant 0 : index
    %231 = vector.load %arg11[%230, %c0_54] : memref<128x512xbf16, #tpu.memory_space<vmem>>, vector<16x512xbf16>
    %232 = arith.extf %231 : vector<16x512xbf16> to vector<16x512xf32>
    %233 = arith.truncf %224 : vector<16x128xf32> to vector<16x128xbf16>
    %cst_55 = arith.constant dense<0.000000e+00> : vector<16x512xf32>
    %234 = tpu.matmul %233, %9, %cst_55 {dimension_numbers = #tpu.dot_dimension_numbers<[1], [0], [0], [1], [0, 0, 1, 1], [], []>} : vector<16x128xbf16>, vector<128x512xbf16>, vector<16x512xf32> -> vector<16x512xf32>
    %235 = arith.addf %232, %234 : vector<16x512xf32>
    %236 = vector.extract_strided_slice %235 {offsets = [0, 0], sizes = [16, 128], strides = [1, 1]} : vector<16x512xf32> to vector<16x128xf32>
    %237 = arith.negf %236 : vector<16x128xf32>
    %238 = math.exp %237 : vector<16x128xf32>
    %cst_56 = arith.constant 1.000000e+00 : f32
    %239 = vector.broadcast %cst_56 : f32 to vector<16x128xf32>
    %240 = arith.addf %239, %238 : vector<16x128xf32>
    %241 = arith.divf %239, %240 : vector<16x128xf32>
    %242 = vector.extract_strided_slice %235 {offsets = [0, 128], sizes = [16, 128], strides = [1, 1]} : vector<16x512xf32> to vector<16x128xf32>
    %243 = arith.negf %242 : vector<16x128xf32>
    %244 = math.exp %243 : vector<16x128xf32>
    %cst_57 = arith.constant 1.000000e+00 : f32
    %245 = vector.broadcast %cst_57 : f32 to vector<16x128xf32>
    %246 = arith.addf %245, %244 : vector<16x128xf32>
    %247 = arith.divf %245, %246 : vector<16x128xf32>
    %248 = vector.extract_strided_slice %235 {offsets = [0, 256], sizes = [16, 128], strides = [1, 1]} : vector<16x512xf32> to vector<16x128xf32>
    %249 = math.tanh %248 : vector<16x128xf32>
    %250 = vector.extract_strided_slice %235 {offsets = [0, 384], sizes = [16, 128], strides = [1, 1]} : vector<16x512xf32> to vector<16x128xf32>
    %251 = arith.negf %250 : vector<16x128xf32>
    %252 = math.exp %251 : vector<16x128xf32>
    %cst_58 = arith.constant 1.000000e+00 : f32
    %253 = vector.broadcast %cst_58 : f32 to vector<16x128xf32>
    %254 = arith.addf %253, %252 : vector<16x128xf32>
    %255 = arith.divf %253, %254 : vector<16x128xf32>
    %256 = arith.mulf %247, %222 : vector<16x128xf32>
    %257 = arith.mulf %241, %249 : vector<16x128xf32>
    %258 = arith.addf %256, %257 : vector<16x128xf32>
    %259 = math.tanh %258 : vector<16x128xf32>
    %260 = arith.mulf %255, %259 : vector<16x128xf32>
    %261 = arith.truncf %260 : vector<16x128xf32> to vector<16x128xbf16>
    %262 = arith.index_cast %229 : i32 to index
    %c0_59 = arith.constant 0 : index
    %263 = vector.load %arg12[%262, %c0_59] : memref<128x128xbf16, #tpu.memory_space<vmem>>, vector<16x128xbf16>
    tpu.vector_store %arg12[%262, %c0_59], %261 {strides = array<i32>} : memref<128x128xbf16, #tpu.memory_space<vmem>>, vector<16x128xbf16>,
    %c7_i32 = arith.constant 7 : i32
    %c16_i32_60 = arith.constant 16 : i32
    %264 = arith.muli %c7_i32, %c16_i32_60 : i32
    %265 = tpu.assume_multiple %264, 16 : i32
    %266 = arith.index_cast %265 : i32 to index
    %c0_61 = arith.constant 0 : index
    %267 = vector.load %arg11[%266, %c0_61] : memref<128x512xbf16, #tpu.memory_space<vmem>>, vector<16x512xbf16>
    %268 = arith.extf %267 : vector<16x512xbf16> to vector<16x512xf32>
    %269 = arith.truncf %260 : vector<16x128xf32> to vector<16x128xbf16>
    %cst_62 = arith.constant dense<0.000000e+00> : vector<16x512xf32>
    %270 = tpu.matmul %269, %9, %cst_62 {dimension_numbers = #tpu.dot_dimension_numbers<[1], [0], [0], [1], [0, 0, 1, 1], [], []>} : vector<16x128xbf16>, vector<128x512xbf16>, vector<16x512xf32> -> vector<16x512xf32>
    %271 = arith.addf %268, %270 : vector<16x512xf32>
    %272 = vector.extract_strided_slice %271 {offsets = [0, 0], sizes = [16, 128], strides = [1, 1]} : vector<16x512xf32> to vector<16x128xf32>
    %273 = arith.negf %272 : vector<16x128xf32>
    %274 = math.exp %273 : vector<16x128xf32>
    %cst_63 = arith.constant 1.000000e+00 : f32
    %275 = vector.broadcast %cst_63 : f32 to vector<16x128xf32>
    %276 = arith.addf %275, %274 : vector<16x128xf32>
    %277 = arith.divf %275, %276 : vector<16x128xf32>
    %278 = vector.extract_strided_slice %271 {offsets = [0, 128], sizes = [16, 128], strides = [1, 1]} : vector<16x512xf32> to vector<16x128xf32>
    %279 = arith.negf %278 : vector<16x128xf32>
    %280 = math.exp %279 : vector<16x128xf32>
    %cst_64 = arith.constant 1.000000e+00 : f32
    %281 = vector.broadcast %cst_64 : f32 to vector<16x128xf32>
    %282 = arith.addf %281, %280 : vector<16x128xf32>
    %283 = arith.divf %281, %282 : vector<16x128xf32>
    %284 = vector.extract_strided_slice %271 {offsets = [0, 256], sizes = [16, 128], strides = [1, 1]} : vector<16x512xf32> to vector<16x128xf32>
    %285 = math.tanh %284 : vector<16x128xf32>
    %286 = vector.extract_strided_slice %271 {offsets = [0, 384], sizes = [16, 128], strides = [1, 1]} : vector<16x512xf32> to vector<16x128xf32>
    %287 = arith.negf %286 : vector<16x128xf32>
    %288 = math.exp %287 : vector<16x128xf32>
    %cst_65 = arith.constant 1.000000e+00 : f32
    %289 = vector.broadcast %cst_65 : f32 to vector<16x128xf32>
    %290 = arith.addf %289, %288 : vector<16x128xf32>
    %291 = arith.divf %289, %290 : vector<16x128xf32>
    %292 = arith.mulf %283, %258 : vector<16x128xf32>
    %293 = arith.mulf %277, %285 : vector<16x128xf32>
    %294 = arith.addf %292, %293 : vector<16x128xf32>
    %295 = math.tanh %294 : vector<16x128xf32>
    %296 = arith.mulf %291, %295 : vector<16x128xf32>
    %297 = arith.truncf %296 : vector<16x128xf32> to vector<16x128xbf16>
    %298 = arith.index_cast %265 : i32 to index
    %c0_66 = arith.constant 0 : index
    %299 = vector.load %arg12[%298, %c0_66] : memref<128x128xbf16, #tpu.memory_space<vmem>>, vector<16x128xbf16>
    tpu.vector_store %arg12[%298, %c0_66], %297 {strides = array<i32>} : memref<128x128xbf16, #tpu.memory_space<vmem>>, vector<16x128xbf16>,
    %c8_i32 = arith.constant 8 : i32
    %c0_67 = arith.constant 0 : index
    %c0_68 = arith.constant 0 : index
    %300 = vector.load %arg12[%c0_67, %c0_68] : memref<128x128xbf16, #tpu.memory_space<vmem>>, vector<128x128xbf16>
    %c0_69 = arith.constant 0 : index
    %c0_70 = arith.constant 0 : index
    %301 = vector.load %arg5[%c0_69, %c0_70] : memref<128x512xbf16, #tpu.memory_space<vmem>>, vector<128x512xbf16>
    %cst_71 = arith.constant dense<0.000000e+00> : vector<128x512xf32>
    %302 = tpu.matmul %300, %301, %cst_71 {dimension_numbers = #tpu.dot_dimension_numbers<[1], [0], [0], [1], [0, 0, 1, 1], [], []>} : vector<128x128xbf16>, vector<128x512xbf16>, vector<128x512xf32> -> vector<128x512xf32>
    %c0_72 = arith.constant 0 : index
    %c0_73 = arith.constant 0 : index
    %303 = vector.load %arg7[%c0_72, %c0_73] : memref<1x512xf32, #tpu.memory_space<vmem>>, vector<1x512xf32>
    %304 = vector.broadcast %303 : vector<1x512xf32> to vector<128x512xf32>
    %305 = arith.addf %302, %304 : vector<128x512xf32>
    %306 = arith.truncf %305 : vector<128x512xf32> to vector<128x512xbf16>
    %c0_74 = arith.constant 0 : index
    %c0_75 = arith.constant 0 : index
    %307 = vector.load %arg11[%c0_74, %c0_75] : memref<128x512xbf16, #tpu.memory_space<vmem>>, vector<128x512xbf16>
    tpu.vector_store %arg11[%c0_74, %c0_75], %306 {strides = array<i32>} : memref<128x512xbf16, #tpu.memory_space<vmem>>, vector<128x512xbf16>,
    %c0_76 = arith.constant 0 : index
    %c0_77 = arith.constant 0 : index
    %308 = vector.load %arg6[%c0_76, %c0_77] : memref<128x512xbf16, #tpu.memory_space<vmem>>, vector<128x512xbf16>
    %cst_78 = arith.constant 0.000000e+00 : f32
    %309 = vector.broadcast %cst_78 : f32 to vector<16x128xf32>
    %cst_79 = arith.constant 0.000000e+00 : f32
    %310 = vector.broadcast %cst_79 : f32 to vector<16x128xf32>
    %c0_i32_80 = arith.constant 0 : i32
    %c16_i32_81 = arith.constant 16 : i32
    %311 = arith.muli %c0_i32_80, %c16_i32_81 : i32
    %312 = tpu.assume_multiple %311, 16 : i32
    %313 = arith.index_cast %312 : i32 to index
    %c0_82 = arith.constant 0 : index
    %314 = vector.load %arg11[%313, %c0_82] : memref<128x512xbf16, #tpu.memory_space<vmem>>, vector<16x512xbf16>
    %315 = arith.extf %314 : vector<16x512xbf16> to vector<16x512xf32>
    %316 = arith.truncf %309 : vector<16x128xf32> to vector<16x128xbf16>
    %cst_83 = arith.constant dense<0.000000e+00> : vector<16x512xf32>
    %317 = tpu.matmul %316, %308, %cst_83 {dimension_numbers = #tpu.dot_dimension_numbers<[1], [0], [0], [1], [0, 0, 1, 1], [], []>} : vector<16x128xbf16>, vector<128x512xbf16>, vector<16x512xf32> -> vector<16x512xf32>
    %318 = arith.addf %315, %317 : vector<16x512xf32>
    %319 = vector.extract_strided_slice %318 {offsets = [0, 0], sizes = [16, 128], strides = [1, 1]} : vector<16x512xf32> to vector<16x128xf32>
    %320 = arith.negf %319 : vector<16x128xf32>
    %321 = math.exp %320 : vector<16x128xf32>
    %cst_84 = arith.constant 1.000000e+00 : f32
    %322 = vector.broadcast %cst_84 : f32 to vector<16x128xf32>
    %323 = arith.addf %322, %321 : vector<16x128xf32>
    %324 = arith.divf %322, %323 : vector<16x128xf32>
    %325 = vector.extract_strided_slice %318 {offsets = [0, 128], sizes = [16, 128], strides = [1, 1]} : vector<16x512xf32> to vector<16x128xf32>
    %326 = arith.negf %325 : vector<16x128xf32>
    %327 = math.exp %326 : vector<16x128xf32>
    %cst_85 = arith.constant 1.000000e+00 : f32
    %328 = vector.broadcast %cst_85 : f32 to vector<16x128xf32>
    %329 = arith.addf %328, %327 : vector<16x128xf32>
    %330 = arith.divf %328, %329 : vector<16x128xf32>
    %331 = vector.extract_strided_slice %318 {offsets = [0, 256], sizes = [16, 128], strides = [1, 1]} : vector<16x512xf32> to vector<16x128xf32>
    %332 = math.tanh %331 : vector<16x128xf32>
    %333 = vector.extract_strided_slice %318 {offsets = [0, 384], sizes = [16, 128], strides = [1, 1]} : vector<16x512xf32> to vector<16x128xf32>
    %334 = arith.negf %333 : vector<16x128xf32>
    %335 = math.exp %334 : vector<16x128xf32>
    %cst_86 = arith.constant 1.000000e+00 : f32
    %336 = vector.broadcast %cst_86 : f32 to vector<16x128xf32>
    %337 = arith.addf %336, %335 : vector<16x128xf32>
    %338 = arith.divf %336, %337 : vector<16x128xf32>
    %339 = arith.mulf %330, %310 : vector<16x128xf32>
    %340 = arith.mulf %324, %332 : vector<16x128xf32>
    %341 = arith.addf %339, %340 : vector<16x128xf32>
    %342 = math.tanh %341 : vector<16x128xf32>
    %343 = arith.mulf %338, %342 : vector<16x128xf32>
    %c1_i32_87 = arith.constant 1 : i32
    %c16_i32_88 = arith.constant 16 : i32
    %344 = arith.muli %c1_i32_87, %c16_i32_88 : i32
    %345 = tpu.assume_multiple %344, 16 : i32
    %346 = arith.index_cast %345 : i32 to index
    %c0_89 = arith.constant 0 : index
    %347 = vector.load %arg11[%346, %c0_89] : memref<128x512xbf16, #tpu.memory_space<vmem>>, vector<16x512xbf16>
    %348 = arith.extf %347 : vector<16x512xbf16> to vector<16x512xf32>
    %349 = arith.truncf %343 : vector<16x128xf32> to vector<16x128xbf16>
    %cst_90 = arith.constant dense<0.000000e+00> : vector<16x512xf32>
    %350 = tpu.matmul %349, %308, %cst_90 {dimension_numbers = #tpu.dot_dimension_numbers<[1], [0], [0], [1], [0, 0, 1, 1], [], []>} : vector<16x128xbf16>, vector<128x512xbf16>, vector<16x512xf32> -> vector<16x512xf32>
    %351 = arith.addf %348, %350 : vector<16x512xf32>
    %352 = vector.extract_strided_slice %351 {offsets = [0, 0], sizes = [16, 128], strides = [1, 1]} : vector<16x512xf32> to vector<16x128xf32>
    %353 = arith.negf %352 : vector<16x128xf32>
    %354 = math.exp %353 : vector<16x128xf32>
    %cst_91 = arith.constant 1.000000e+00 : f32
    %355 = vector.broadcast %cst_91 : f32 to vector<16x128xf32>
    %356 = arith.addf %355, %354 : vector<16x128xf32>
    %357 = arith.divf %355, %356 : vector<16x128xf32>
    %358 = vector.extract_strided_slice %351 {offsets = [0, 128], sizes = [16, 128], strides = [1, 1]} : vector<16x512xf32> to vector<16x128xf32>
    %359 = arith.negf %358 : vector<16x128xf32>
    %360 = math.exp %359 : vector<16x128xf32>
    %cst_92 = arith.constant 1.000000e+00 : f32
    %361 = vector.broadcast %cst_92 : f32 to vector<16x128xf32>
    %362 = arith.addf %361, %360 : vector<16x128xf32>
    %363 = arith.divf %361, %362 : vector<16x128xf32>
    %364 = vector.extract_strided_slice %351 {offsets = [0, 256], sizes = [16, 128], strides = [1, 1]} : vector<16x512xf32> to vector<16x128xf32>
    %365 = math.tanh %364 : vector<16x128xf32>
    %366 = vector.extract_strided_slice %351 {offsets = [0, 384], sizes = [16, 128], strides = [1, 1]} : vector<16x512xf32> to vector<16x128xf32>
    %367 = arith.negf %366 : vector<16x128xf32>
    %368 = math.exp %367 : vector<16x128xf32>
    %cst_93 = arith.constant 1.000000e+00 : f32
    %369 = vector.broadcast %cst_93 : f32 to vector<16x128xf32>
    %370 = arith.addf %369, %368 : vector<16x128xf32>
    %371 = arith.divf %369, %370 : vector<16x128xf32>
    %372 = arith.mulf %363, %341 : vector<16x128xf32>
    %373 = arith.mulf %357, %365 : vector<16x128xf32>
    %374 = arith.addf %372, %373 : vector<16x128xf32>
    %375 = math.tanh %374 : vector<16x128xf32>
    %376 = arith.mulf %371, %375 : vector<16x128xf32>
    %c2_i32_94 = arith.constant 2 : i32
    %c16_i32_95 = arith.constant 16 : i32
    %377 = arith.muli %c2_i32_94, %c16_i32_95 : i32
    %378 = tpu.assume_multiple %377, 16 : i32
    %379 = arith.index_cast %378 : i32 to index
    %c0_96 = arith.constant 0 : index
    %380 = vector.load %arg11[%379, %c0_96] : memref<128x512xbf16, #tpu.memory_space<vmem>>, vector<16x512xbf16>
    %381 = arith.extf %380 : vector<16x512xbf16> to vector<16x512xf32>
    %382 = arith.truncf %376 : vector<16x128xf32> to vector<16x128xbf16>
    %cst_97 = arith.constant dense<0.000000e+00> : vector<16x512xf32>
    %383 = tpu.matmul %382, %308, %cst_97 {dimension_numbers = #tpu.dot_dimension_numbers<[1], [0], [0], [1], [0, 0, 1, 1], [], []>} : vector<16x128xbf16>, vector<128x512xbf16>, vector<16x512xf32> -> vector<16x512xf32>
    %384 = arith.addf %381, %383 : vector<16x512xf32>
    %385 = vector.extract_strided_slice %384 {offsets = [0, 0], sizes = [16, 128], strides = [1, 1]} : vector<16x512xf32> to vector<16x128xf32>
    %386 = arith.negf %385 : vector<16x128xf32>
    %387 = math.exp %386 : vector<16x128xf32>
    %cst_98 = arith.constant 1.000000e+00 : f32
    %388 = vector.broadcast %cst_98 : f32 to vector<16x128xf32>
    %389 = arith.addf %388, %387 : vector<16x128xf32>
    %390 = arith.divf %388, %389 : vector<16x128xf32>
    %391 = vector.extract_strided_slice %384 {offsets = [0, 128], sizes = [16, 128], strides = [1, 1]} : vector<16x512xf32> to vector<16x128xf32>
    %392 = arith.negf %391 : vector<16x128xf32>
    %393 = math.exp %392 : vector<16x128xf32>
    %cst_99 = arith.constant 1.000000e+00 : f32
    %394 = vector.broadcast %cst_99 : f32 to vector<16x128xf32>
    %395 = arith.addf %394, %393 : vector<16x128xf32>
    %396 = arith.divf %394, %395 : vector<16x128xf32>
    %397 = vector.extract_strided_slice %384 {offsets = [0, 256], sizes = [16, 128], strides = [1, 1]} : vector<16x512xf32> to vector<16x128xf32>
    %398 = math.tanh %397 : vector<16x128xf32>
    %399 = vector.extract_strided_slice %384 {offsets = [0, 384], sizes = [16, 128], strides = [1, 1]} : vector<16x512xf32> to vector<16x128xf32>
    %400 = arith.negf %399 : vector<16x128xf32>
    %401 = math.exp %400 : vector<16x128xf32>
    %cst_100 = arith.constant 1.000000e+00 : f32
    %402 = vector.broadcast %cst_100 : f32 to vector<16x128xf32>
    %403 = arith.addf %402, %401 : vector<16x128xf32>
    %404 = arith.divf %402, %403 : vector<16x128xf32>
    %405 = arith.mulf %396, %374 : vector<16x128xf32>
    %406 = arith.mulf %390, %398 : vector<16x128xf32>
    %407 = arith.addf %405, %406 : vector<16x128xf32>
    %408 = math.tanh %407 : vector<16x128xf32>
    %409 = arith.mulf %404, %408 : vector<16x128xf32>
    %c3_i32_101 = arith.constant 3 : i32
    %c16_i32_102 = arith.constant 16 : i32
    %410 = arith.muli %c3_i32_101, %c16_i32_102 : i32
    %411 = tpu.assume_multiple %410, 16 : i32
    %412 = arith.index_cast %411 : i32 to index
    %c0_103 = arith.constant 0 : index
    %413 = vector.load %arg11[%412, %c0_103] : memref<128x512xbf16, #tpu.memory_space<vmem>>, vector<16x512xbf16>
    %414 = arith.extf %413 : vector<16x512xbf16> to vector<16x512xf32>
    %415 = arith.truncf %409 : vector<16x128xf32> to vector<16x128xbf16>
    %cst_104 = arith.constant dense<0.000000e+00> : vector<16x512xf32>
    %416 = tpu.matmul %415, %308, %cst_104 {dimension_numbers = #tpu.dot_dimension_numbers<[1], [0], [0], [1], [0, 0, 1, 1], [], []>} : vector<16x128xbf16>, vector<128x512xbf16>, vector<16x512xf32> -> vector<16x512xf32>
    %417 = arith.addf %414, %416 : vector<16x512xf32>
    %418 = vector.extract_strided_slice %417 {offsets = [0, 0], sizes = [16, 128], strides = [1, 1]} : vector<16x512xf32> to vector<16x128xf32>
    %419 = arith.negf %418 : vector<16x128xf32>
    %420 = math.exp %419 : vector<16x128xf32>
    %cst_105 = arith.constant 1.000000e+00 : f32
    %421 = vector.broadcast %cst_105 : f32 to vector<16x128xf32>
    %422 = arith.addf %421, %420 : vector<16x128xf32>
    %423 = arith.divf %421, %422 : vector<16x128xf32>
    %424 = vector.extract_strided_slice %417 {offsets = [0, 128], sizes = [16, 128], strides = [1, 1]} : vector<16x512xf32> to vector<16x128xf32>
    %425 = arith.negf %424 : vector<16x128xf32>
    %426 = math.exp %425 : vector<16x128xf32>
    %cst_106 = arith.constant 1.000000e+00 : f32
    %427 = vector.broadcast %cst_106 : f32 to vector<16x128xf32>
    %428 = arith.addf %427, %426 : vector<16x128xf32>
    %429 = arith.divf %427, %428 : vector<16x128xf32>
    %430 = vector.extract_strided_slice %417 {offsets = [0, 256], sizes = [16, 128], strides = [1, 1]} : vector<16x512xf32> to vector<16x128xf32>
    %431 = math.tanh %430 : vector<16x128xf32>
    %432 = vector.extract_strided_slice %417 {offsets = [0, 384], sizes = [16, 128], strides = [1, 1]} : vector<16x512xf32> to vector<16x128xf32>
    %433 = arith.negf %432 : vector<16x128xf32>
    %434 = math.exp %433 : vector<16x128xf32>
    %cst_107 = arith.constant 1.000000e+00 : f32
    %435 = vector.broadcast %cst_107 : f32 to vector<16x128xf32>
    %436 = arith.addf %435, %434 : vector<16x128xf32>
    %437 = arith.divf %435, %436 : vector<16x128xf32>
    %438 = arith.mulf %429, %407 : vector<16x128xf32>
    %439 = arith.mulf %423, %431 : vector<16x128xf32>
    %440 = arith.addf %438, %439 : vector<16x128xf32>
    %441 = math.tanh %440 : vector<16x128xf32>
    %442 = arith.mulf %437, %441 : vector<16x128xf32>
    %c4_i32_108 = arith.constant 4 : i32
    %c16_i32_109 = arith.constant 16 : i32
    %443 = arith.muli %c4_i32_108, %c16_i32_109 : i32
    %444 = tpu.assume_multiple %443, 16 : i32
    %445 = arith.index_cast %444 : i32 to index
    %c0_110 = arith.constant 0 : index
    %446 = vector.load %arg11[%445, %c0_110] : memref<128x512xbf16, #tpu.memory_space<vmem>>, vector<16x512xbf16>
    %447 = arith.extf %446 : vector<16x512xbf16> to vector<16x512xf32>
    %448 = arith.truncf %442 : vector<16x128xf32> to vector<16x128xbf16>
    %cst_111 = arith.constant dense<0.000000e+00> : vector<16x512xf32>
    %449 = tpu.matmul %448, %308, %cst_111 {dimension_numbers = #tpu.dot_dimension_numbers<[1], [0], [0], [1], [0, 0, 1, 1], [], []>} : vector<16x128xbf16>, vector<128x512xbf16>, vector<16x512xf32> -> vector<16x512xf32>
    %450 = arith.addf %447, %449 : vector<16x512xf32>
    %451 = vector.extract_strided_slice %450 {offsets = [0, 0], sizes = [16, 128], strides = [1, 1]} : vector<16x512xf32> to vector<16x128xf32>
    %452 = arith.negf %451 : vector<16x128xf32>
    %453 = math.exp %452 : vector<16x128xf32>
    %cst_112 = arith.constant 1.000000e+00 : f32
    %454 = vector.broadcast %cst_112 : f32 to vector<16x128xf32>
    %455 = arith.addf %454, %453 : vector<16x128xf32>
    %456 = arith.divf %454, %455 : vector<16x128xf32>
    %457 = vector.extract_strided_slice %450 {offsets = [0, 128], sizes = [16, 128], strides = [1, 1]} : vector<16x512xf32> to vector<16x128xf32>
    %458 = arith.negf %457 : vector<16x128xf32>
    %459 = math.exp %458 : vector<16x128xf32>
    %cst_113 = arith.constant 1.000000e+00 : f32
    %460 = vector.broadcast %cst_113 : f32 to vector<16x128xf32>
    %461 = arith.addf %460, %459 : vector<16x128xf32>
    %462 = arith.divf %460, %461 : vector<16x128xf32>
    %463 = vector.extract_strided_slice %450 {offsets = [0, 256], sizes = [16, 128], strides = [1, 1]} : vector<16x512xf32> to vector<16x128xf32>
    %464 = math.tanh %463 : vector<16x128xf32>
    %465 = vector.extract_strided_slice %450 {offsets = [0, 384], sizes = [16, 128], strides = [1, 1]} : vector<16x512xf32> to vector<16x128xf32>
    %466 = arith.negf %465 : vector<16x128xf32>
    %467 = math.exp %466 : vector<16x128xf32>
    %cst_114 = arith.constant 1.000000e+00 : f32
    %468 = vector.broadcast %cst_114 : f32 to vector<16x128xf32>
    %469 = arith.addf %468, %467 : vector<16x128xf32>
    %470 = arith.divf %468, %469 : vector<16x128xf32>
    %471 = arith.mulf %462, %440 : vector<16x128xf32>
    %472 = arith.mulf %456, %464 : vector<16x128xf32>
    %473 = arith.addf %471, %472 : vector<16x128xf32>
    %474 = math.tanh %473 : vector<16x128xf32>
    %475 = arith.mulf %470, %474 : vector<16x128xf32>
    %c5_i32_115 = arith.constant 5 : i32
    %c16_i32_116 = arith.constant 16 : i32
    %476 = arith.muli %c5_i32_115, %c16_i32_116 : i32
    %477 = tpu.assume_multiple %476, 16 : i32
    %478 = arith.index_cast %477 : i32 to index
    %c0_117 = arith.constant 0 : index
    %479 = vector.load %arg11[%478, %c0_117] : memref<128x512xbf16, #tpu.memory_space<vmem>>, vector<16x512xbf16>
    %480 = arith.extf %479 : vector<16x512xbf16> to vector<16x512xf32>
    %481 = arith.truncf %475 : vector<16x128xf32> to vector<16x128xbf16>
    %cst_118 = arith.constant dense<0.000000e+00> : vector<16x512xf32>
    %482 = tpu.matmul %481, %308, %cst_118 {dimension_numbers = #tpu.dot_dimension_numbers<[1], [0], [0], [1], [0, 0, 1, 1], [], []>} : vector<16x128xbf16>, vector<128x512xbf16>, vector<16x512xf32> -> vector<16x512xf32>
    %483 = arith.addf %480, %482 : vector<16x512xf32>
    %484 = vector.extract_strided_slice %483 {offsets = [0, 0], sizes = [16, 128], strides = [1, 1]} : vector<16x512xf32> to vector<16x128xf32>
    %485 = arith.negf %484 : vector<16x128xf32>
    %486 = math.exp %485 : vector<16x128xf32>
    %cst_119 = arith.constant 1.000000e+00 : f32
    %487 = vector.broadcast %cst_119 : f32 to vector<16x128xf32>
    %488 = arith.addf %487, %486 : vector<16x128xf32>
    %489 = arith.divf %487, %488 : vector<16x128xf32>
    %490 = vector.extract_strided_slice %483 {offsets = [0, 128], sizes = [16, 128], strides = [1, 1]} : vector<16x512xf32> to vector<16x128xf32>
    %491 = arith.negf %490 : vector<16x128xf32>
    %492 = math.exp %491 : vector<16x128xf32>
    %cst_120 = arith.constant 1.000000e+00 : f32
    %493 = vector.broadcast %cst_120 : f32 to vector<16x128xf32>
    %494 = arith.addf %493, %492 : vector<16x128xf32>
    %495 = arith.divf %493, %494 : vector<16x128xf32>
    %496 = vector.extract_strided_slice %483 {offsets = [0, 256], sizes = [16, 128], strides = [1, 1]} : vector<16x512xf32> to vector<16x128xf32>
    %497 = math.tanh %496 : vector<16x128xf32>
    %498 = vector.extract_strided_slice %483 {offsets = [0, 384], sizes = [16, 128], strides = [1, 1]} : vector<16x512xf32> to vector<16x128xf32>
    %499 = arith.negf %498 : vector<16x128xf32>
    %500 = math.exp %499 : vector<16x128xf32>
    %cst_121 = arith.constant 1.000000e+00 : f32
    %501 = vector.broadcast %cst_121 : f32 to vector<16x128xf32>
    %502 = arith.addf %501, %500 : vector<16x128xf32>
    %503 = arith.divf %501, %502 : vector<16x128xf32>
    %504 = arith.mulf %495, %473 : vector<16x128xf32>
    %505 = arith.mulf %489, %497 : vector<16x128xf32>
    %506 = arith.addf %504, %505 : vector<16x128xf32>
    %507 = math.tanh %506 : vector<16x128xf32>
    %508 = arith.mulf %503, %507 : vector<16x128xf32>
    %c6_i32_122 = arith.constant 6 : i32
    %c16_i32_123 = arith.constant 16 : i32
    %509 = arith.muli %c6_i32_122, %c16_i32_123 : i32
    %510 = tpu.assume_multiple %509, 16 : i32
    %511 = arith.index_cast %510 : i32 to index
    %c0_124 = arith.constant 0 : index
    %512 = vector.load %arg11[%511, %c0_124] : memref<128x512xbf16, #tpu.memory_space<vmem>>, vector<16x512xbf16>
    %513 = arith.extf %512 : vector<16x512xbf16> to vector<16x512xf32>
    %514 = arith.truncf %508 : vector<16x128xf32> to vector<16x128xbf16>
    %cst_125 = arith.constant dense<0.000000e+00> : vector<16x512xf32>
    %515 = tpu.matmul %514, %308, %cst_125 {dimension_numbers = #tpu.dot_dimension_numbers<[1], [0], [0], [1], [0, 0, 1, 1], [], []>} : vector<16x128xbf16>, vector<128x512xbf16>, vector<16x512xf32> -> vector<16x512xf32>
    %516 = arith.addf %513, %515 : vector<16x512xf32>
    %517 = vector.extract_strided_slice %516 {offsets = [0, 0], sizes = [16, 128], strides = [1, 1]} : vector<16x512xf32> to vector<16x128xf32>
    %518 = arith.negf %517 : vector<16x128xf32>
    %519 = math.exp %518 : vector<16x128xf32>
    %cst_126 = arith.constant 1.000000e+00 : f32
    %520 = vector.broadcast %cst_126 : f32 to vector<16x128xf32>
    %521 = arith.addf %520, %519 : vector<16x128xf32>
    %522 = arith.divf %520, %521 : vector<16x128xf32>
    %523 = vector.extract_strided_slice %516 {offsets = [0, 128], sizes = [16, 128], strides = [1, 1]} : vector<16x512xf32> to vector<16x128xf32>
    %524 = arith.negf %523 : vector<16x128xf32>
    %525 = math.exp %524 : vector<16x128xf32>
    %cst_127 = arith.constant 1.000000e+00 : f32
    %526 = vector.broadcast %cst_127 : f32 to vector<16x128xf32>
    %527 = arith.addf %526, %525 : vector<16x128xf32>
    %528 = arith.divf %526, %527 : vector<16x128xf32>
    %529 = vector.extract_strided_slice %516 {offsets = [0, 256], sizes = [16, 128], strides = [1, 1]} : vector<16x512xf32> to vector<16x128xf32>
    %530 = math.tanh %529 : vector<16x128xf32>
    %531 = vector.extract_strided_slice %516 {offsets = [0, 384], sizes = [16, 128], strides = [1, 1]} : vector<16x512xf32> to vector<16x128xf32>
    %532 = arith.negf %531 : vector<16x128xf32>
    %533 = math.exp %532 : vector<16x128xf32>
    %cst_128 = arith.constant 1.000000e+00 : f32
    %534 = vector.broadcast %cst_128 : f32 to vector<16x128xf32>
    %535 = arith.addf %534, %533 : vector<16x128xf32>
    %536 = arith.divf %534, %535 : vector<16x128xf32>
    %537 = arith.mulf %528, %506 : vector<16x128xf32>
    %538 = arith.mulf %522, %530 : vector<16x128xf32>
    %539 = arith.addf %537, %538 : vector<16x128xf32>
    %540 = math.tanh %539 : vector<16x128xf32>
    %541 = arith.mulf %536, %540 : vector<16x128xf32>
    %c7_i32_129 = arith.constant 7 : i32
    %c16_i32_130 = arith.constant 16 : i32
    %542 = arith.muli %c7_i32_129, %c16_i32_130 : i32
    %543 = tpu.assume_multiple %542, 16 : i32
    %544 = arith.index_cast %543 : i32 to index
    %c0_131 = arith.constant 0 : index
    %545 = vector.load %arg11[%544, %c0_131] : memref<128x512xbf16, #tpu.memory_space<vmem>>, vector<16x512xbf16>
    %546 = arith.extf %545 : vector<16x512xbf16> to vector<16x512xf32>
    %547 = arith.truncf %541 : vector<16x128xf32> to vector<16x128xbf16>
    %cst_132 = arith.constant dense<0.000000e+00> : vector<16x512xf32>
    %548 = tpu.matmul %547, %308, %cst_132 {dimension_numbers = #tpu.dot_dimension_numbers<[1], [0], [0], [1], [0, 0, 1, 1], [], []>} : vector<16x128xbf16>, vector<128x512xbf16>, vector<16x512xf32> -> vector<16x512xf32>
    %549 = arith.addf %546, %548 : vector<16x512xf32>
    %550 = vector.extract_strided_slice %549 {offsets = [0, 0], sizes = [16, 128], strides = [1, 1]} : vector<16x512xf32> to vector<16x128xf32>
    %551 = arith.negf %550 : vector<16x128xf32>
    %552 = math.exp %551 : vector<16x128xf32>
    %cst_133 = arith.constant 1.000000e+00 : f32
    %553 = vector.broadcast %cst_133 : f32 to vector<16x128xf32>
    %554 = arith.addf %553, %552 : vector<16x128xf32>
    %555 = arith.divf %553, %554 : vector<16x128xf32>
    %556 = vector.extract_strided_slice %549 {offsets = [0, 128], sizes = [16, 128], strides = [1, 1]} : vector<16x512xf32> to vector<16x128xf32>
    %557 = arith.negf %556 : vector<16x128xf32>
    %558 = math.exp %557 : vector<16x128xf32>
    %cst_134 = arith.constant 1.000000e+00 : f32
    %559 = vector.broadcast %cst_134 : f32 to vector<16x128xf32>
    %560 = arith.addf %559, %558 : vector<16x128xf32>
    %561 = arith.divf %559, %560 : vector<16x128xf32>
    %562 = vector.extract_strided_slice %549 {offsets = [0, 256], sizes = [16, 128], strides = [1, 1]} : vector<16x512xf32> to vector<16x128xf32>
    %563 = math.tanh %562 : vector<16x128xf32>
    %564 = vector.extract_strided_slice %549 {offsets = [0, 384], sizes = [16, 128], strides = [1, 1]} : vector<16x512xf32> to vector<16x128xf32>
    %565 = arith.negf %564 : vector<16x128xf32>
    %566 = math.exp %565 : vector<16x128xf32>
    %cst_135 = arith.constant 1.000000e+00 : f32
    %567 = vector.broadcast %cst_135 : f32 to vector<16x128xf32>
    %568 = arith.addf %567, %566 : vector<16x128xf32>
    %569 = arith.divf %567, %568 : vector<16x128xf32>
    %570 = arith.mulf %561, %539 : vector<16x128xf32>
    %571 = arith.mulf %555, %563 : vector<16x128xf32>
    %572 = arith.addf %570, %571 : vector<16x128xf32>
    %573 = math.tanh %572 : vector<16x128xf32>
    %574 = arith.mulf %569, %573 : vector<16x128xf32>
    %c8_i32_136 = arith.constant 8 : i32
    %575 = arith.truncf %574 : vector<16x128xf32> to vector<16x128xbf16>
    %c0_137 = arith.constant 0 : index
    %c0_138 = arith.constant 0 : index
    %576 = vector.load %arg8[%c0_137, %c0_138] : memref<128x128xbf16, #tpu.memory_space<vmem>>, vector<128x128xbf16>
    %cst_139 = arith.constant dense<0.000000e+00> : vector<16x128xf32>
    %577 = tpu.matmul %575, %576, %cst_139 {dimension_numbers = #tpu.dot_dimension_numbers<[1], [0], [0], [1], [0, 0, 1, 1], [], []>} : vector<16x128xbf16>, vector<128x128xbf16>, vector<16x128xf32> -> vector<16x128xf32>
    %c0_140 = arith.constant 0 : index
    %c0_141 = arith.constant 0 : index
    %578 = vector.load %arg9[%c0_140, %c0_141] : memref<1x128xf32, #tpu.memory_space<vmem>>, vector<1x128xf32>
    %579 = vector.broadcast %578 : vector<1x128xf32> to vector<16x128xf32>
    %580 = arith.addf %577, %579 : vector<16x128xf32>
    %c0_142 = arith.constant 0 : index
    %c0_143 = arith.constant 0 : index
    %581 = vector.load %arg10[%c0_142, %c0_143] : memref<16x128xf32, #tpu.memory_space<vmem>>, vector<16x128xf32>
    tpu.vector_store %arg10[%c0_142, %c0_143], %580 {strides = array<i32>} : memref<16x128xf32, #tpu.memory_space<vmem>>, vector<16x128xf32>,
    return
  }
  func.func @transform_0(%arg0: i32) -> (i32, i32, i32) {
    %c0_i32 = arith.constant 0 : i32
    %c0_i32_0 = arith.constant 0 : i32
    %c0_i32_1 = arith.constant 0 : i32
    return %arg0, %c0_i32, %c0_i32_0 : i32, i32, i32
  }
  func.func @transform_1(%arg0: i32) -> (i32, i32) {
    %c0_i32 = arith.constant 0 : i32
    %c0_i32_0 = arith.constant 0 : i32
    %c0_i32_1 = arith.constant 0 : i32
    return %c0_i32, %c0_i32_0 : i32, i32
  }
  func.func @transform_2(%arg0: i32) -> (i32, i32) {
    %c0_i32 = arith.constant 0 : i32
    %c0_i32_0 = arith.constant 0 : i32
    %c0_i32_1 = arith.constant 0 : i32
    return %c0_i32, %c0_i32_0 : i32, i32
  }
  func.func @transform_3(%arg0: i32) -> (i32, i32) {
    %c0_i32 = arith.constant 0 : i32
    %c0_i32_0 = arith.constant 0 : i32
    %c0_i32_1 = arith.constant 0 : i32
    return %c0_i32, %c0_i32_0 : i32, i32
  }
  func.func @transform_4(%arg0: i32) -> (i32, i32) {
    %c0_i32 = arith.constant 0 : i32
    %c0_i32_0 = arith.constant 0 : i32
    %c0_i32_1 = arith.constant 0 : i32
    return %c0_i32, %c0_i32_0 : i32, i32
  }
  func.func @transform_5(%arg0: i32) -> (i32, i32) {
    %c0_i32 = arith.constant 0 : i32
    %c0_i32_0 = arith.constant 0 : i32
    %c0_i32_1 = arith.constant 0 : i32
    return %c0_i32, %c0_i32_0 : i32, i32
  }
  func.func @transform_6(%arg0: i32) -> (i32, i32) {
    %c0_i32 = arith.constant 0 : i32
    %c0_i32_0 = arith.constant 0 : i32
    %c0_i32_1 = arith.constant 0 : i32
    return %c0_i32, %c0_i32_0 : i32, i32
  }
  func.func @transform_7(%arg0: i32) -> (i32, i32) {
    %c0_i32 = arith.constant 0 : i32
    %c0_i32_0 = arith.constant 0 : i32
    %c0_i32_1 = arith.constant 0 : i32
    return %c0_i32, %c0_i32_0 : i32, i32
  }
  func.func @transform_8(%arg0: i32) -> (i32, i32) {
    %c0_i32 = arith.constant 0 : i32
    %c0_i32_0 = arith.constant 0 : i32
    %c0_i32_1 = arith.constant 0 : i32
    return %c0_i32, %c0_i32_0 : i32, i32
  }
  func.func @transform_9(%arg0: i32) -> (i32, i32) {
    %c0_i32 = arith.constant 0 : i32
    %c0_i32_0 = arith.constant 0 : i32
    return %arg0, %c0_i32 : i32, i32
  }
}

module attributes {stable_mosaic.version = 11 : i64} {
  func.func @kernel(%arg0: i32, %arg1: memref<1x128x128xbf16, #tpu.memory_space<vmem>>, %arg2: memref<128x512xbf16, #tpu.memory_space<vmem>>, %arg3: memref<128x512xbf16, #tpu.memory_space<vmem>>, %arg4: memref<1x512xf32, #tpu.memory_space<vmem>>, %arg5: memref<128x512xbf16, #tpu.memory_space<vmem>>, %arg6: memref<128x512xbf16, #tpu.memory_space<vmem>>, %arg7: memref<1x512xf32, #tpu.memory_space<vmem>>, %arg8: memref<128x128xbf16, #tpu.memory_space<vmem>>, %arg9: memref<1x128xf32, #tpu.memory_space<vmem>>, %arg10: memref<16x128xf32, #tpu.memory_space<vmem>>, %arg11: memref<128x512xbf16, #tpu.memory_space<vmem>>, %arg12: memref<128x128xbf16, #tpu.memory_space<vmem>>) attributes {dimension_semantics = [#tpu.dimension_semantics<parallel>], iteration_bounds = array<i64: 1>, scalar_prefetch = 0 : i64, scratch_operands = 2 : i64, tpu.core_type = #tpu.core_type<tc>, window_params = [{transform_indices = @transform_0, window_bounds = array<i64: 1, 128, 128>}, {pipeline_mode = #tpu.pipeline_mode<synchronous>, transform_indices = @transform_1, window_bounds = array<i64: 128, 512>}, {pipeline_mode = #tpu.pipeline_mode<synchronous>, transform_indices = @transform_2, window_bounds = array<i64: 128, 512>}, {pipeline_mode = #tpu.pipeline_mode<synchronous>, transform_indices = @transform_3, window_bounds = array<i64: 1, 512>}, {pipeline_mode = #tpu.pipeline_mode<synchronous>, transform_indices = @transform_4, window_bounds = array<i64: 128, 512>}, {pipeline_mode = #tpu.pipeline_mode<synchronous>, transform_indices = @transform_5, window_bounds = array<i64: 128, 512>}, {pipeline_mode = #tpu.pipeline_mode<synchronous>, transform_indices = @transform_6, window_bounds = array<i64: 1, 512>}, {pipeline_mode = #tpu.pipeline_mode<synchronous>, transform_indices = @transform_7, window_bounds = array<i64: 128, 128>}, {pipeline_mode = #tpu.pipeline_mode<synchronous>, transform_indices = @transform_8, window_bounds = array<i64: 1, 128>}, {transform_indices = @transform_9, window_bounds = array<i64: 16, 128>}]} {
    %c0 = arith.constant 0 : index
    %c0_0 = arith.constant 0 : index
    %c0_1 = arith.constant 0 : index
    %0 = vector.load %arg1[%c0, %c0_0, %c0_1] : memref<1x128x128xbf16, #tpu.memory_space<vmem>>, vector<1x128x128xbf16>
    %1 = vector.shape_cast %0 : vector<1x128x128xbf16> to vector<128x128xbf16>
    %c0_2 = arith.constant 0 : index
    %c0_3 = arith.constant 0 : index
    %2 = vector.load %arg2[%c0_2, %c0_3] : memref<128x512xbf16, #tpu.memory_space<vmem>>, vector<128x512xbf16>
    %cst = arith.constant dense<0.000000e+00> : vector<128x512xf32>
    %3 = tpu.matmul %1, %2, %cst {dimension_numbers = #tpu.dot_dimension_numbers<[1], [0], [0], [1], [0, 0, 1, 1], [], []>} : vector<128x128xbf16>, vector<128x512xbf16>, vector<128x512xf32> -> vector<128x512xf32>
    %c0_4 = arith.constant 0 : index
    %c0_5 = arith.constant 0 : index
    %4 = vector.load %arg4[%c0_4, %c0_5] : memref<1x512xf32, #tpu.memory_space<vmem>>, vector<1x512xf32>
    %5 = vector.broadcast %4 : vector<1x512xf32> to vector<128x512xf32>
    %6 = arith.addf %3, %5 : vector<128x512xf32>
    %7 = arith.truncf %6 : vector<128x512xf32> to vector<128x512xbf16>
    %c0_6 = arith.constant 0 : index
    %c0_7 = arith.constant 0 : index
    %8 = vector.load %arg11[%c0_6, %c0_7] : memref<128x512xbf16, #tpu.memory_space<vmem>>, vector<128x512xbf16>
    tpu.vector_store %arg11[%c0_6, %c0_7], %7 {strides = array<i32>} : memref<128x512xbf16, #tpu.memory_space<vmem>>, vector<128x512xbf16>,
    %c0_8 = arith.constant 0 : index
    %c0_9 = arith.constant 0 : index
    %9 = vector.load %arg3[%c0_8, %c0_9] : memref<128x512xbf16, #tpu.memory_space<vmem>>, vector<128x512xbf16>
    %cst_10 = arith.constant 0.000000e+00 : f32
    %10 = vector.broadcast %cst_10 : f32 to vector<16x128xf32>
    %cst_11 = arith.constant 0.000000e+00 : f32
    %11 = vector.broadcast %cst_11 : f32 to vector<16x128xf32>
    %c0_i32 = arith.constant 0 : i32
    %c16_i32 = arith.constant 16 : i32
    %12 = arith.muli %c0_i32, %c16_i32 : i32
    %13 = tpu.assume_multiple %12, 16 : i32
    %14 = arith.index_cast %13 : i32 to index
    %c0_12 = arith.constant 0 : index
    %15 = vector.load %arg11[%14, %c0_12] : memref<128x512xbf16, #tpu.memory_space<vmem>>, vector<16x512xbf16>
    %16 = arith.extf %15 : vector<16x512xbf16> to vector<16x512xf32>
    %17 = arith.truncf %10 : vector<16x128xf32> to vector<16x128xbf16>
    %cst_13 = arith.constant dense<0.000000e+00> : vector<16x512xf32>
    %18 = tpu.matmul %17, %9, %cst_13 {dimension_numbers = #tpu.dot_dimension_numbers<[1], [0], [0], [1], [0, 0, 1, 1], [], []>} : vector<16x128xbf16>, vector<128x512xbf16>, vector<16x512xf32> -> vector<16x512xf32>
    %19 = arith.addf %16, %18 : vector<16x512xf32>
    %20 = vector.extract_strided_slice %19 {offsets = [0, 0], sizes = [16, 128], strides = [1, 1]} : vector<16x512xf32> to vector<16x128xf32>
    %21 = arith.negf %20 : vector<16x128xf32>
    %22 = math.exp %21 : vector<16x128xf32>
    %cst_14 = arith.constant 1.000000e+00 : f32
    %23 = vector.broadcast %cst_14 : f32 to vector<16x128xf32>
    %24 = arith.addf %23, %22 : vector<16x128xf32>
    %25 = arith.divf %23, %24 : vector<16x128xf32>
    %26 = vector.extract_strided_slice %19 {offsets = [0, 128], sizes = [16, 128], strides = [1, 1]} : vector<16x512xf32> to vector<16x128xf32>
    %27 = arith.negf %26 : vector<16x128xf32>
    %28 = math.exp %27 : vector<16x128xf32>
    %cst_15 = arith.constant 1.000000e+00 : f32
    %29 = vector.broadcast %cst_15 : f32 to vector<16x128xf32>
    %30 = arith.addf %29, %28 : vector<16x128xf32>
    %31 = arith.divf %29, %30 : vector<16x128xf32>
    %32 = vector.extract_strided_slice %19 {offsets = [0, 256], sizes = [16, 128], strides = [1, 1]} : vector<16x512xf32> to vector<16x128xf32>
    %33 = math.tanh %32 : vector<16x128xf32>
    %34 = vector.extract_strided_slice %19 {offsets = [0, 384], sizes = [16, 128], strides = [1, 1]} : vector<16x512xf32> to vector<16x128xf32>
    %35 = arith.negf %34 : vector<16x128xf32>
    %36 = math.exp %35 : vector<16x128xf32>
    %cst_16 = arith.constant 1.000000e+00 : f32
    %37 = vector.broadcast %cst_16 : f32 to vector<16x128xf32>
    %38 = arith.addf %37, %36 : vector<16x128xf32>
    %39 = arith.divf %37, %38 : vector<16x128xf32>
    %40 = arith.mulf %31, %11 : vector<16x128xf32>
    %41 = arith.mulf %25, %33 : vector<16x128xf32>
    %42 = arith.addf %40, %41 : vector<16x128xf32>
    %43 = math.tanh %42 : vector<16x128xf32>
    %44 = arith.mulf %39, %43 : vector<16x128xf32>
    %45 = arith.truncf %44 : vector<16x128xf32> to vector<16x128xbf16>
    %46 = arith.index_cast %13 : i32 to index
    %c0_17 = arith.constant 0 : index
    %47 = vector.load %arg12[%46, %c0_17] : memref<128x128xbf16, #tpu.memory_space<vmem>>, vector<16x128xbf16>
    tpu.vector_store %arg12[%46, %c0_17], %45 {strides = array<i32>} : memref<128x128xbf16, #tpu.memory_space<vmem>>, vector<16x128xbf16>,
    %c1_i32 = arith.constant 1 : i32
    %c16_i32_18 = arith.constant 16 : i32
    %48 = arith.muli %c1_i32, %c16_i32_18 : i32
    %49 = tpu.assume_multiple %48, 16 : i32
    %50 = arith.index_cast %49 : i32 to index
    %c0_19 = arith.constant 0 : index
    %51 = vector.load %arg11[%50, %c0_19] : memref<128x512xbf16, #tpu.memory_space<vmem>>, vector<16x512xbf16>
    %52 = arith.extf %51 : vector<16x512xbf16> to vector<16x512xf32>
    %53 = arith.truncf %44 : vector<16x128xf32> to vector<16x128xbf16>
    %cst_20 = arith.constant dense<0.000000e+00> : vector<16x512xf32>
    %54 = tpu.matmul %53, %9, %cst_20 {dimension_numbers = #tpu.dot_dimension_numbers<[1], [0], [0], [1], [0, 0, 1, 1], [], []>} : vector<16x128xbf16>, vector<128x512xbf16>, vector<16x512xf32> -> vector<16x512xf32>
    %55 = arith.addf %52, %54 : vector<16x512xf32>
    %56 = vector.extract_strided_slice %55 {offsets = [0, 0], sizes = [16, 128], strides = [1, 1]} : vector<16x512xf32> to vector<16x128xf32>
    %57 = arith.negf %56 : vector<16x128xf32>
    %58 = math.exp %57 : vector<16x128xf32>
    %cst_21 = arith.constant 1.000000e+00 : f32
    %59 = vector.broadcast %cst_21 : f32 to vector<16x128xf32>
    %60 = arith.addf %59, %58 : vector<16x128xf32>
    %61 = arith.divf %59, %60 : vector<16x128xf32>
    %62 = vector.extract_strided_slice %55 {offsets = [0, 128], sizes = [16, 128], strides = [1, 1]} : vector<16x512xf32> to vector<16x128xf32>
    %63 = arith.negf %62 : vector<16x128xf32>
    %64 = math.exp %63 : vector<16x128xf32>
    %cst_22 = arith.constant 1.000000e+00 : f32
    %65 = vector.broadcast %cst_22 : f32 to vector<16x128xf32>
    %66 = arith.addf %65, %64 : vector<16x128xf32>
    %67 = arith.divf %65, %66 : vector<16x128xf32>
    %68 = vector.extract_strided_slice %55 {offsets = [0, 256], sizes = [16, 128], strides = [1, 1]} : vector<16x512xf32> to vector<16x128xf32>
    %69 = math.tanh %68 : vector<16x128xf32>
    %70 = vector.extract_strided_slice %55 {offsets = [0, 384], sizes = [16, 128], strides = [1, 1]} : vector<16x512xf32> to vector<16x128xf32>
    %71 = arith.negf %70 : vector<16x128xf32>
    %72 = math.exp %71 : vector<16x128xf32>
    %cst_23 = arith.constant 1.000000e+00 : f32
    %73 = vector.broadcast %cst_23 : f32 to vector<16x128xf32>
    %74 = arith.addf %73, %72 : vector<16x128xf32>
    %75 = arith.divf %73, %74 : vector<16x128xf32>
    %76 = arith.mulf %67, %42 : vector<16x128xf32>
    %77 = arith.mulf %61, %69 : vector<16x128xf32>
    %78 = arith.addf %76, %77 : vector<16x128xf32>
    %79 = math.tanh %78 : vector<16x128xf32>
    %80 = arith.mulf %75, %79 : vector<16x128xf32>
    %81 = arith.truncf %80 : vector<16x128xf32> to vector<16x128xbf16>
    %82 = arith.index_cast %49 : i32 to index
    %c0_24 = arith.constant 0 : index
    %83 = vector.load %arg12[%82, %c0_24] : memref<128x128xbf16, #tpu.memory_space<vmem>>, vector<16x128xbf16>
    tpu.vector_store %arg12[%82, %c0_24], %81 {strides = array<i32>} : memref<128x128xbf16, #tpu.memory_space<vmem>>, vector<16x128xbf16>,
    %c2_i32 = arith.constant 2 : i32
    %c16_i32_25 = arith.constant 16 : i32
    %84 = arith.muli %c2_i32, %c16_i32_25 : i32
    %85 = tpu.assume_multiple %84, 16 : i32
    %86 = arith.index_cast %85 : i32 to index
    %c0_26 = arith.constant 0 : index
    %87 = vector.load %arg11[%86, %c0_26] : memref<128x512xbf16, #tpu.memory_space<vmem>>, vector<16x512xbf16>
    %88 = arith.extf %87 : vector<16x512xbf16> to vector<16x512xf32>
    %89 = arith.truncf %80 : vector<16x128xf32> to vector<16x128xbf16>
    %cst_27 = arith.constant dense<0.000000e+00> : vector<16x512xf32>
    %90 = tpu.matmul %89, %9, %cst_27 {dimension_numbers = #tpu.dot_dimension_numbers<[1], [0], [0], [1], [0, 0, 1, 1], [], []>} : vector<16x128xbf16>, vector<128x512xbf16>, vector<16x512xf32> -> vector<16x512xf32>
    %91 = arith.addf %88, %90 : vector<16x512xf32>
    %92 = vector.extract_strided_slice %91 {offsets = [0, 0], sizes = [16, 128], strides = [1, 1]} : vector<16x512xf32> to vector<16x128xf32>
    %93 = arith.negf %92 : vector<16x128xf32>
    %94 = math.exp %93 : vector<16x128xf32>
    %cst_28 = arith.constant 1.000000e+00 : f32
    %95 = vector.broadcast %cst_28 : f32 to vector<16x128xf32>
    %96 = arith.addf %95, %94 : vector<16x128xf32>
    %97 = arith.divf %95, %96 : vector<16x128xf32>
    %98 = vector.extract_strided_slice %91 {offsets = [0, 128], sizes = [16, 128], strides = [1, 1]} : vector<16x512xf32> to vector<16x128xf32>
    %99 = arith.negf %98 : vector<16x128xf32>
    %100 = math.exp %99 : vector<16x128xf32>
    %cst_29 = arith.constant 1.000000e+00 : f32
    %101 = vector.broadcast %cst_29 : f32 to vector<16x128xf32>
    %102 = arith.addf %101, %100 : vector<16x128xf32>
    %103 = arith.divf %101, %102 : vector<16x128xf32>
    %104 = vector.extract_strided_slice %91 {offsets = [0, 256], sizes = [16, 128], strides = [1, 1]} : vector<16x512xf32> to vector<16x128xf32>
    %105 = math.tanh %104 : vector<16x128xf32>
    %106 = vector.extract_strided_slice %91 {offsets = [0, 384], sizes = [16, 128], strides = [1, 1]} : vector<16x512xf32> to vector<16x128xf32>
    %107 = arith.negf %106 : vector<16x128xf32>
    %108 = math.exp %107 : vector<16x128xf32>
    %cst_30 = arith.constant 1.000000e+00 : f32
    %109 = vector.broadcast %cst_30 : f32 to vector<16x128xf32>
    %110 = arith.addf %109, %108 : vector<16x128xf32>
    %111 = arith.divf %109, %110 : vector<16x128xf32>
    %112 = arith.mulf %103, %78 : vector<16x128xf32>
    %113 = arith.mulf %97, %105 : vector<16x128xf32>
    %114 = arith.addf %112, %113 : vector<16x128xf32>
    %115 = math.tanh %114 : vector<16x128xf32>
    %116 = arith.mulf %111, %115 : vector<16x128xf32>
    %117 = arith.truncf %116 : vector<16x128xf32> to vector<16x128xbf16>
    %118 = arith.index_cast %85 : i32 to index
    %c0_31 = arith.constant 0 : index
    %119 = vector.load %arg12[%118, %c0_31] : memref<128x128xbf16, #tpu.memory_space<vmem>>, vector<16x128xbf16>
    tpu.vector_store %arg12[%118, %c0_31], %117 {strides = array<i32>} : memref<128x128xbf16, #tpu.memory_space<vmem>>, vector<16x128xbf16>,
    %c3_i32 = arith.constant 3 : i32
    %c16_i32_32 = arith.constant 16 : i32
    %120 = arith.muli %c3_i32, %c16_i32_32 : i32
    %121 = tpu.assume_multiple %120, 16 : i32
    %122 = arith.index_cast %121 : i32 to index
    %c0_33 = arith.constant 0 : index
    %123 = vector.load %arg11[%122, %c0_33] : memref<128x512xbf16, #tpu.memory_space<vmem>>, vector<16x512xbf16>
    %124 = arith.extf %123 : vector<16x512xbf16> to vector<16x512xf32>
    %125 = arith.truncf %116 : vector<16x128xf32> to vector<16x128xbf16>
    %cst_34 = arith.constant dense<0.000000e+00> : vector<16x512xf32>
    %126 = tpu.matmul %125, %9, %cst_34 {dimension_numbers = #tpu.dot_dimension_numbers<[1], [0], [0], [1], [0, 0, 1, 1], [], []>} : vector<16x128xbf16>, vector<128x512xbf16>, vector<16x512xf32> -> vector<16x512xf32>
    %127 = arith.addf %124, %126 : vector<16x512xf32>
    %128 = vector.extract_strided_slice %127 {offsets = [0, 0], sizes = [16, 128], strides = [1, 1]} : vector<16x512xf32> to vector<16x128xf32>
    %129 = arith.negf %128 : vector<16x128xf32>
    %130 = math.exp %129 : vector<16x128xf32>
    %cst_35 = arith.constant 1.000000e+00 : f32
    %131 = vector.broadcast %cst_35 : f32 to vector<16x128xf32>
    %132 = arith.addf %131, %130 : vector<16x128xf32>
    %133 = arith.divf %131, %132 : vector<16x128xf32>
    %134 = vector.extract_strided_slice %127 {offsets = [0, 128], sizes = [16, 128], strides = [1, 1]} : vector<16x512xf32> to vector<16x128xf32>
    %135 = arith.negf %134 : vector<16x128xf32>
    %136 = math.exp %135 : vector<16x128xf32>
    %cst_36 = arith.constant 1.000000e+00 : f32
    %137 = vector.broadcast %cst_36 : f32 to vector<16x128xf32>
    %138 = arith.addf %137, %136 : vector<16x128xf32>
    %139 = arith.divf %137, %138 : vector<16x128xf32>
    %140 = vector.extract_strided_slice %127 {offsets = [0, 256], sizes = [16, 128], strides = [1, 1]} : vector<16x512xf32> to vector<16x128xf32>
    %141 = math.tanh %140 : vector<16x128xf32>
    %142 = vector.extract_strided_slice %127 {offsets = [0, 384], sizes = [16, 128], strides = [1, 1]} : vector<16x512xf32> to vector<16x128xf32>
    %143 = arith.negf %142 : vector<16x128xf32>
    %144 = math.exp %143 : vector<16x128xf32>
    %cst_37 = arith.constant 1.000000e+00 : f32
    %145 = vector.broadcast %cst_37 : f32 to vector<16x128xf32>
    %146 = arith.addf %145, %144 : vector<16x128xf32>
    %147 = arith.divf %145, %146 : vector<16x128xf32>
    %148 = arith.mulf %139, %114 : vector<16x128xf32>
    %149 = arith.mulf %133, %141 : vector<16x128xf32>
    %150 = arith.addf %148, %149 : vector<16x128xf32>
    %151 = math.tanh %150 : vector<16x128xf32>
    %152 = arith.mulf %147, %151 : vector<16x128xf32>
    %153 = arith.truncf %152 : vector<16x128xf32> to vector<16x128xbf16>
    %154 = arith.index_cast %121 : i32 to index
    %c0_38 = arith.constant 0 : index
    %155 = vector.load %arg12[%154, %c0_38] : memref<128x128xbf16, #tpu.memory_space<vmem>>, vector<16x128xbf16>
    tpu.vector_store %arg12[%154, %c0_38], %153 {strides = array<i32>} : memref<128x128xbf16, #tpu.memory_space<vmem>>, vector<16x128xbf16>,
    %c4_i32 = arith.constant 4 : i32
    %c16_i32_39 = arith.constant 16 : i32
    %156 = arith.muli %c4_i32, %c16_i32_39 : i32
    %157 = tpu.assume_multiple %156, 16 : i32
    %158 = arith.index_cast %157 : i32 to index
    %c0_40 = arith.constant 0 : index
    %159 = vector.load %arg11[%158, %c0_40] : memref<128x512xbf16, #tpu.memory_space<vmem>>, vector<16x512xbf16>
    %160 = arith.extf %159 : vector<16x512xbf16> to vector<16x512xf32>
    %161 = arith.truncf %152 : vector<16x128xf32> to vector<16x128xbf16>
    %cst_41 = arith.constant dense<0.000000e+00> : vector<16x512xf32>
    %162 = tpu.matmul %161, %9, %cst_41 {dimension_numbers = #tpu.dot_dimension_numbers<[1], [0], [0], [1], [0, 0, 1, 1], [], []>} : vector<16x128xbf16>, vector<128x512xbf16>, vector<16x512xf32> -> vector<16x512xf32>
    %163 = arith.addf %160, %162 : vector<16x512xf32>
    %164 = vector.extract_strided_slice %163 {offsets = [0, 0], sizes = [16, 128], strides = [1, 1]} : vector<16x512xf32> to vector<16x128xf32>
    %165 = arith.negf %164 : vector<16x128xf32>
    %166 = math.exp %165 : vector<16x128xf32>
    %cst_42 = arith.constant 1.000000e+00 : f32
    %167 = vector.broadcast %cst_42 : f32 to vector<16x128xf32>
    %168 = arith.addf %167, %166 : vector<16x128xf32>
    %169 = arith.divf %167, %168 : vector<16x128xf32>
    %170 = vector.extract_strided_slice %163 {offsets = [0, 128], sizes = [16, 128], strides = [1, 1]} : vector<16x512xf32> to vector<16x128xf32>
    %171 = arith.negf %170 : vector<16x128xf32>
    %172 = math.exp %171 : vector<16x128xf32>
    %cst_43 = arith.constant 1.000000e+00 : f32
    %173 = vector.broadcast %cst_43 : f32 to vector<16x128xf32>
    %174 = arith.addf %173, %172 : vector<16x128xf32>
    %175 = arith.divf %173, %174 : vector<16x128xf32>
    %176 = vector.extract_strided_slice %163 {offsets = [0, 256], sizes = [16, 128], strides = [1, 1]} : vector<16x512xf32> to vector<16x128xf32>
    %177 = math.tanh %176 : vector<16x128xf32>
    %178 = vector.extract_strided_slice %163 {offsets = [0, 384], sizes = [16, 128], strides = [1, 1]} : vector<16x512xf32> to vector<16x128xf32>
    %179 = arith.negf %178 : vector<16x128xf32>
    %180 = math.exp %179 : vector<16x128xf32>
    %cst_44 = arith.constant 1.000000e+00 : f32
    %181 = vector.broadcast %cst_44 : f32 to vector<16x128xf32>
    %182 = arith.addf %181, %180 : vector<16x128xf32>
    %183 = arith.divf %181, %182 : vector<16x128xf32>
    %184 = arith.mulf %175, %150 : vector<16x128xf32>
    %185 = arith.mulf %169, %177 : vector<16x128xf32>
    %186 = arith.addf %184, %185 : vector<16x128xf32>
    %187 = math.tanh %186 : vector<16x128xf32>
    %188 = arith.mulf %183, %187 : vector<16x128xf32>
    %189 = arith.truncf %188 : vector<16x128xf32> to vector<16x128xbf16>
    %190 = arith.index_cast %157 : i32 to index
    %c0_45 = arith.constant 0 : index
    %191 = vector.load %arg12[%190, %c0_45] : memref<128x128xbf16, #tpu.memory_space<vmem>>, vector<16x128xbf16>
    tpu.vector_store %arg12[%190, %c0_45], %189 {strides = array<i32>} : memref<128x128xbf16, #tpu.memory_space<vmem>>, vector<16x128xbf16>,
    %c5_i32 = arith.constant 5 : i32
    %c16_i32_46 = arith.constant 16 : i32
    %192 = arith.muli %c5_i32, %c16_i32_46 : i32
    %193 = tpu.assume_multiple %192, 16 : i32
    %194 = arith.index_cast %193 : i32 to index
    %c0_47 = arith.constant 0 : index
    %195 = vector.load %arg11[%194, %c0_47] : memref<128x512xbf16, #tpu.memory_space<vmem>>, vector<16x512xbf16>
    %196 = arith.extf %195 : vector<16x512xbf16> to vector<16x512xf32>
    %197 = arith.truncf %188 : vector<16x128xf32> to vector<16x128xbf16>
    %cst_48 = arith.constant dense<0.000000e+00> : vector<16x512xf32>
    %198 = tpu.matmul %197, %9, %cst_48 {dimension_numbers = #tpu.dot_dimension_numbers<[1], [0], [0], [1], [0, 0, 1, 1], [], []>} : vector<16x128xbf16>, vector<128x512xbf16>, vector<16x512xf32> -> vector<16x512xf32>
    %199 = arith.addf %196, %198 : vector<16x512xf32>
    %200 = vector.extract_strided_slice %199 {offsets = [0, 0], sizes = [16, 128], strides = [1, 1]} : vector<16x512xf32> to vector<16x128xf32>
    %201 = arith.negf %200 : vector<16x128xf32>
    %202 = math.exp %201 : vector<16x128xf32>
    %cst_49 = arith.constant 1.000000e+00 : f32
    %203 = vector.broadcast %cst_49 : f32 to vector<16x128xf32>
    %204 = arith.addf %203, %202 : vector<16x128xf32>
    %205 = arith.divf %203, %204 : vector<16x128xf32>
    %206 = vector.extract_strided_slice %199 {offsets = [0, 128], sizes = [16, 128], strides = [1, 1]} : vector<16x512xf32> to vector<16x128xf32>
    %207 = arith.negf %206 : vector<16x128xf32>
    %208 = math.exp %207 : vector<16x128xf32>
    %cst_50 = arith.constant 1.000000e+00 : f32
    %209 = vector.broadcast %cst_50 : f32 to vector<16x128xf32>
    %210 = arith.addf %209, %208 : vector<16x128xf32>
    %211 = arith.divf %209, %210 : vector<16x128xf32>
    %212 = vector.extract_strided_slice %199 {offsets = [0, 256], sizes = [16, 128], strides = [1, 1]} : vector<16x512xf32> to vector<16x128xf32>
    %213 = math.tanh %212 : vector<16x128xf32>
    %214 = vector.extract_strided_slice %199 {offsets = [0, 384], sizes = [16, 128], strides = [1, 1]} : vector<16x512xf32> to vector<16x128xf32>
    %215 = arith.negf %214 : vector<16x128xf32>
    %216 = math.exp %215 : vector<16x128xf32>
    %cst_51 = arith.constant 1.000000e+00 : f32
    %217 = vector.broadcast %cst_51 : f32 to vector<16x128xf32>
    %218 = arith.addf %217, %216 : vector<16x128xf32>
    %219 = arith.divf %217, %218 : vector<16x128xf32>
    %220 = arith.mulf %211, %186 : vector<16x128xf32>
    %221 = arith.mulf %205, %213 : vector<16x128xf32>
    %222 = arith.addf %220, %221 : vector<16x128xf32>
    %223 = math.tanh %222 : vector<16x128xf32>
    %224 = arith.mulf %219, %223 : vector<16x128xf32>
    %225 = arith.truncf %224 : vector<16x128xf32> to vector<16x128xbf16>
    %226 = arith.index_cast %193 : i32 to index
    %c0_52 = arith.constant 0 : index
    %227 = vector.load %arg12[%226, %c0_52] : memref<128x128xbf16, #tpu.memory_space<vmem>>, vector<16x128xbf16>
    tpu.vector_store %arg12[%226, %c0_52], %225 {strides = array<i32>} : memref<128x128xbf16, #tpu.memory_space<vmem>>, vector<16x128xbf16>,
    %c6_i32 = arith.constant 6 : i32
    %c16_i32_53 = arith.constant 16 : i32
    %228 = arith.muli %c6_i32, %c16_i32_53 : i32
    %229 = tpu.assume_multiple %228, 16 : i32
    %230 = arith.index_cast %229 : i32 to index
    %c0_54 = arith.constant 0 : index
    %231 = vector.load %arg11[%230, %c0_54] : memref<128x512xbf16, #tpu.memory_space<vmem>>, vector<16x512xbf16>
    %232 = arith.extf %231 : vector<16x512xbf16> to vector<16x512xf32>
    %233 = arith.truncf %224 : vector<16x128xf32> to vector<16x128xbf16>
    %cst_55 = arith.constant dense<0.000000e+00> : vector<16x512xf32>
    %234 = tpu.matmul %233, %9, %cst_55 {dimension_numbers = #tpu.dot_dimension_numbers<[1], [0], [0], [1], [0, 0, 1, 1], [], []>} : vector<16x128xbf16>, vector<128x512xbf16>, vector<16x512xf32> -> vector<16x512xf32>
    %235 = arith.addf %232, %234 : vector<16x512xf32>
    %236 = vector.extract_strided_slice %235 {offsets = [0, 0], sizes = [16, 128], strides = [1, 1]} : vector<16x512xf32> to vector<16x128xf32>
    %237 = arith.negf %236 : vector<16x128xf32>
    %238 = math.exp %237 : vector<16x128xf32>
    %cst_56 = arith.constant 1.000000e+00 : f32
    %239 = vector.broadcast %cst_56 : f32 to vector<16x128xf32>
    %240 = arith.addf %239, %238 : vector<16x128xf32>
    %241 = arith.divf %239, %240 : vector<16x128xf32>
    %242 = vector.extract_strided_slice %235 {offsets = [0, 128], sizes = [16, 128], strides = [1, 1]} : vector<16x512xf32> to vector<16x128xf32>
    %243 = arith.negf %242 : vector<16x128xf32>
    %244 = math.exp %243 : vector<16x128xf32>
    %cst_57 = arith.constant 1.000000e+00 : f32
    %245 = vector.broadcast %cst_57 : f32 to vector<16x128xf32>
    %246 = arith.addf %245, %244 : vector<16x128xf32>
    %247 = arith.divf %245, %246 : vector<16x128xf32>
    %248 = vector.extract_strided_slice %235 {offsets = [0, 256], sizes = [16, 128], strides = [1, 1]} : vector<16x512xf32> to vector<16x128xf32>
    %249 = math.tanh %248 : vector<16x128xf32>
    %250 = vector.extract_strided_slice %235 {offsets = [0, 384], sizes = [16, 128], strides = [1, 1]} : vector<16x512xf32> to vector<16x128xf32>
    %251 = arith.negf %250 : vector<16x128xf32>
    %252 = math.exp %251 : vector<16x128xf32>
    %cst_58 = arith.constant 1.000000e+00 : f32
    %253 = vector.broadcast %cst_58 : f32 to vector<16x128xf32>
    %254 = arith.addf %253, %252 : vector<16x128xf32>
    %255 = arith.divf %253, %254 : vector<16x128xf32>
    %256 = arith.mulf %247, %222 : vector<16x128xf32>
    %257 = arith.mulf %241, %249 : vector<16x128xf32>
    %258 = arith.addf %256, %257 : vector<16x128xf32>
    %259 = math.tanh %258 : vector<16x128xf32>
    %260 = arith.mulf %255, %259 : vector<16x128xf32>
    %261 = arith.truncf %260 : vector<16x128xf32> to vector<16x128xbf16>
    %262 = arith.index_cast %229 : i32 to index
    %c0_59 = arith.constant 0 : index
    %263 = vector.load %arg12[%262, %c0_59] : memref<128x128xbf16, #tpu.memory_space<vmem>>, vector<16x128xbf16>
    tpu.vector_store %arg12[%262, %c0_59], %261 {strides = array<i32>} : memref<128x128xbf16, #tpu.memory_space<vmem>>, vector<16x128xbf16>,
    %c7_i32 = arith.constant 7 : i32
    %c16_i32_60 = arith.constant 16 : i32
    %264 = arith.muli %c7_i32, %c16_i32_60 : i32
    %265 = tpu.assume_multiple %264, 16 : i32
    %266 = arith.index_cast %265 : i32 to index
    %c0_61 = arith.constant 0 : index
    %267 = vector.load %arg11[%266, %c0_61] : memref<128x512xbf16, #tpu.memory_space<vmem>>, vector<16x512xbf16>
    %268 = arith.extf %267 : vector<16x512xbf16> to vector<16x512xf32>
    %269 = arith.truncf %260 : vector<16x128xf32> to vector<16x128xbf16>
    %cst_62 = arith.constant dense<0.000000e+00> : vector<16x512xf32>
    %270 = tpu.matmul %269, %9, %cst_62 {dimension_numbers = #tpu.dot_dimension_numbers<[1], [0], [0], [1], [0, 0, 1, 1], [], []>} : vector<16x128xbf16>, vector<128x512xbf16>, vector<16x512xf32> -> vector<16x512xf32>
    %271 = arith.addf %268, %270 : vector<16x512xf32>
    %272 = vector.extract_strided_slice %271 {offsets = [0, 0], sizes = [16, 128], strides = [1, 1]} : vector<16x512xf32> to vector<16x128xf32>
    %273 = arith.negf %272 : vector<16x128xf32>
    %274 = math.exp %273 : vector<16x128xf32>
    %cst_63 = arith.constant 1.000000e+00 : f32
    %275 = vector.broadcast %cst_63 : f32 to vector<16x128xf32>
    %276 = arith.addf %275, %274 : vector<16x128xf32>
    %277 = arith.divf %275, %276 : vector<16x128xf32>
    %278 = vector.extract_strided_slice %271 {offsets = [0, 128], sizes = [16, 128], strides = [1, 1]} : vector<16x512xf32> to vector<16x128xf32>
    %279 = arith.negf %278 : vector<16x128xf32>
    %280 = math.exp %279 : vector<16x128xf32>
    %cst_64 = arith.constant 1.000000e+00 : f32
    %281 = vector.broadcast %cst_64 : f32 to vector<16x128xf32>
    %282 = arith.addf %281, %280 : vector<16x128xf32>
    %283 = arith.divf %281, %282 : vector<16x128xf32>
    %284 = vector.extract_strided_slice %271 {offsets = [0, 256], sizes = [16, 128], strides = [1, 1]} : vector<16x512xf32> to vector<16x128xf32>
    %285 = math.tanh %284 : vector<16x128xf32>
    %286 = vector.extract_strided_slice %271 {offsets = [0, 384], sizes = [16, 128], strides = [1, 1]} : vector<16x512xf32> to vector<16x128xf32>
    %287 = arith.negf %286 : vector<16x128xf32>
    %288 = math.exp %287 : vector<16x128xf32>
    %cst_65 = arith.constant 1.000000e+00 : f32
    %289 = vector.broadcast %cst_65 : f32 to vector<16x128xf32>
    %290 = arith.addf %289, %288 : vector<16x128xf32>
    %291 = arith.divf %289, %290 : vector<16x128xf32>
    %292 = arith.mulf %283, %258 : vector<16x128xf32>
    %293 = arith.mulf %277, %285 : vector<16x128xf32>
    %294 = arith.addf %292, %293 : vector<16x128xf32>
    %295 = math.tanh %294 : vector<16x128xf32>
    %296 = arith.mulf %291, %295 : vector<16x128xf32>
    %297 = arith.truncf %296 : vector<16x128xf32> to vector<16x128xbf16>
    %298 = arith.index_cast %265 : i32 to index
    %c0_66 = arith.constant 0 : index
    %299 = vector.load %arg12[%298, %c0_66] : memref<128x128xbf16, #tpu.memory_space<vmem>>, vector<16x128xbf16>
    tpu.vector_store %arg12[%298, %c0_66], %297 {strides = array<i32>} : memref<128x128xbf16, #tpu.memory_space<vmem>>, vector<16x128xbf16>,
    %c8_i32 = arith.constant 8 : i32
    %c0_67 = arith.constant 0 : index
    %c0_68 = arith.constant 0 : index
    %300 = vector.load %arg12[%c0_67, %c0_68] : memref<128x128xbf16, #tpu.memory_space<vmem>>, vector<128x128xbf16>
    %c0_69 = arith.constant 0 : index
    %c0_70 = arith.constant 0 : index
    %301 = vector.load %arg5[%c0_69, %c0_70] : memref<128x512xbf16, #tpu.memory_space<vmem>>, vector<128x512xbf16>
    %cst_71 = arith.constant dense<0.000000e+00> : vector<128x512xf32>
    %302 = tpu.matmul %300, %301, %cst_71 {dimension_numbers = #tpu.dot_dimension_numbers<[1], [0], [0], [1], [0, 0, 1, 1], [], []>} : vector<128x128xbf16>, vector<128x512xbf16>, vector<128x512xf32> -> vector<128x512xf32>
    %c0_72 = arith.constant 0 : index
    %c0_73 = arith.constant 0 : index
    %303 = vector.load %arg7[%c0_72, %c0_73] : memref<1x512xf32, #tpu.memory_space<vmem>>, vector<1x512xf32>
    %304 = vector.broadcast %303 : vector<1x512xf32> to vector<128x512xf32>
    %305 = arith.addf %302, %304 : vector<128x512xf32>
    %306 = arith.truncf %305 : vector<128x512xf32> to vector<128x512xbf16>
    %c0_74 = arith.constant 0 : index
    %c0_75 = arith.constant 0 : index
    %307 = vector.load %arg11[%c0_74, %c0_75] : memref<128x512xbf16, #tpu.memory_space<vmem>>, vector<128x512xbf16>
    tpu.vector_store %arg11[%c0_74, %c0_75], %306 {strides = array<i32>} : memref<128x512xbf16, #tpu.memory_space<vmem>>, vector<128x512xbf16>,
    %c0_76 = arith.constant 0 : index
    %c0_77 = arith.constant 0 : index
    %308 = vector.load %arg6[%c0_76, %c0_77] : memref<128x512xbf16, #tpu.memory_space<vmem>>, vector<128x512xbf16>
    %cst_78 = arith.constant 0.000000e+00 : f32
    %309 = vector.broadcast %cst_78 : f32 to vector<16x128xf32>
    %cst_79 = arith.constant 0.000000e+00 : f32
    %310 = vector.broadcast %cst_79 : f32 to vector<16x128xf32>
    %c0_i32_80 = arith.constant 0 : i32
    %c16_i32_81 = arith.constant 16 : i32
    %311 = arith.muli %c0_i32_80, %c16_i32_81 : i32
    %312 = tpu.assume_multiple %311, 16 : i32
    %313 = arith.index_cast %312 : i32 to index
    %c0_82 = arith.constant 0 : index
    %314 = vector.load %arg11[%313, %c0_82] : memref<128x512xbf16, #tpu.memory_space<vmem>>, vector<16x512xbf16>
    %315 = arith.extf %314 : vector<16x512xbf16> to vector<16x512xf32>
    %316 = arith.truncf %309 : vector<16x128xf32> to vector<16x128xbf16>
    %cst_83 = arith.constant dense<0.000000e+00> : vector<16x512xf32>
    %317 = tpu.matmul %316, %308, %cst_83 {dimension_numbers = #tpu.dot_dimension_numbers<[1], [0], [0], [1], [0, 0, 1, 1], [], []>} : vector<16x128xbf16>, vector<128x512xbf16>, vector<16x512xf32> -> vector<16x512xf32>
    %318 = arith.addf %315, %317 : vector<16x512xf32>
    %319 = vector.extract_strided_slice %318 {offsets = [0, 0], sizes = [16, 128], strides = [1, 1]} : vector<16x512xf32> to vector<16x128xf32>
    %320 = arith.negf %319 : vector<16x128xf32>
    %321 = math.exp %320 : vector<16x128xf32>
    %cst_84 = arith.constant 1.000000e+00 : f32
    %322 = vector.broadcast %cst_84 : f32 to vector<16x128xf32>
    %323 = arith.addf %322, %321 : vector<16x128xf32>
    %324 = arith.divf %322, %323 : vector<16x128xf32>
    %325 = vector.extract_strided_slice %318 {offsets = [0, 128], sizes = [16, 128], strides = [1, 1]} : vector<16x512xf32> to vector<16x128xf32>
    %326 = arith.negf %325 : vector<16x128xf32>
    %327 = math.exp %326 : vector<16x128xf32>
    %cst_85 = arith.constant 1.000000e+00 : f32
    %328 = vector.broadcast %cst_85 : f32 to vector<16x128xf32>
    %329 = arith.addf %328, %327 : vector<16x128xf32>
    %330 = arith.divf %328, %329 : vector<16x128xf32>
    %331 = vector.extract_strided_slice %318 {offsets = [0, 256], sizes = [16, 128], strides = [1, 1]} : vector<16x512xf32> to vector<16x128xf32>
    %332 = math.tanh %331 : vector<16x128xf32>
    %333 = vector.extract_strided_slice %318 {offsets = [0, 384], sizes = [16, 128], strides = [1, 1]} : vector<16x512xf32> to vector<16x128xf32>
    %334 = arith.negf %333 : vector<16x128xf32>
    %335 = math.exp %334 : vector<16x128xf32>
    %cst_86 = arith.constant 1.000000e+00 : f32
    %336 = vector.broadcast %cst_86 : f32 to vector<16x128xf32>
    %337 = arith.addf %336, %335 : vector<16x128xf32>
    %338 = arith.divf %336, %337 : vector<16x128xf32>
    %339 = arith.mulf %330, %310 : vector<16x128xf32>
    %340 = arith.mulf %324, %332 : vector<16x128xf32>
    %341 = arith.addf %339, %340 : vector<16x128xf32>
    %342 = math.tanh %341 : vector<16x128xf32>
    %343 = arith.mulf %338, %342 : vector<16x128xf32>
    %c1_i32_87 = arith.constant 1 : i32
    %c16_i32_88 = arith.constant 16 : i32
    %344 = arith.muli %c1_i32_87, %c16_i32_88 : i32
    %345 = tpu.assume_multiple %344, 16 : i32
    %346 = arith.index_cast %345 : i32 to index
    %c0_89 = arith.constant 0 : index
    %347 = vector.load %arg11[%346, %c0_89] : memref<128x512xbf16, #tpu.memory_space<vmem>>, vector<16x512xbf16>
    %348 = arith.extf %347 : vector<16x512xbf16> to vector<16x512xf32>
    %349 = arith.truncf %343 : vector<16x128xf32> to vector<16x128xbf16>
    %cst_90 = arith.constant dense<0.000000e+00> : vector<16x512xf32>
    %350 = tpu.matmul %349, %308, %cst_90 {dimension_numbers = #tpu.dot_dimension_numbers<[1], [0], [0], [1], [0, 0, 1, 1], [], []>} : vector<16x128xbf16>, vector<128x512xbf16>, vector<16x512xf32> -> vector<16x512xf32>
    %351 = arith.addf %348, %350 : vector<16x512xf32>
    %352 = vector.extract_strided_slice %351 {offsets = [0, 0], sizes = [16, 128], strides = [1, 1]} : vector<16x512xf32> to vector<16x128xf32>
    %353 = arith.negf %352 : vector<16x128xf32>
    %354 = math.exp %353 : vector<16x128xf32>
    %cst_91 = arith.constant 1.000000e+00 : f32
    %355 = vector.broadcast %cst_91 : f32 to vector<16x128xf32>
    %356 = arith.addf %355, %354 : vector<16x128xf32>
    %357 = arith.divf %355, %356 : vector<16x128xf32>
    %358 = vector.extract_strided_slice %351 {offsets = [0, 128], sizes = [16, 128], strides = [1, 1]} : vector<16x512xf32> to vector<16x128xf32>
    %359 = arith.negf %358 : vector<16x128xf32>
    %360 = math.exp %359 : vector<16x128xf32>
    %cst_92 = arith.constant 1.000000e+00 : f32
    %361 = vector.broadcast %cst_92 : f32 to vector<16x128xf32>
    %362 = arith.addf %361, %360 : vector<16x128xf32>
    %363 = arith.divf %361, %362 : vector<16x128xf32>
    %364 = vector.extract_strided_slice %351 {offsets = [0, 256], sizes = [16, 128], strides = [1, 1]} : vector<16x512xf32> to vector<16x128xf32>
    %365 = math.tanh %364 : vector<16x128xf32>
    %366 = vector.extract_strided_slice %351 {offsets = [0, 384], sizes = [16, 128], strides = [1, 1]} : vector<16x512xf32> to vector<16x128xf32>
    %367 = arith.negf %366 : vector<16x128xf32>
    %368 = math.exp %367 : vector<16x128xf32>
    %cst_93 = arith.constant 1.000000e+00 : f32
    %369 = vector.broadcast %cst_93 : f32 to vector<16x128xf32>
    %370 = arith.addf %369, %368 : vector<16x128xf32>
    %371 = arith.divf %369, %370 : vector<16x128xf32>
    %372 = arith.mulf %363, %341 : vector<16x128xf32>
    %373 = arith.mulf %357, %365 : vector<16x128xf32>
    %374 = arith.addf %372, %373 : vector<16x128xf32>
    %375 = math.tanh %374 : vector<16x128xf32>
    %376 = arith.mulf %371, %375 : vector<16x128xf32>
    %c2_i32_94 = arith.constant 2 : i32
    %c16_i32_95 = arith.constant 16 : i32
    %377 = arith.muli %c2_i32_94, %c16_i32_95 : i32
    %378 = tpu.assume_multiple %377, 16 : i32
    %379 = arith.index_cast %378 : i32 to index
    %c0_96 = arith.constant 0 : index
    %380 = vector.load %arg11[%379, %c0_96] : memref<128x512xbf16, #tpu.memory_space<vmem>>, vector<16x512xbf16>
    %381 = arith.extf %380 : vector<16x512xbf16> to vector<16x512xf32>
    %382 = arith.truncf %376 : vector<16x128xf32> to vector<16x128xbf16>
    %cst_97 = arith.constant dense<0.000000e+00> : vector<16x512xf32>
    %383 = tpu.matmul %382, %308, %cst_97 {dimension_numbers = #tpu.dot_dimension_numbers<[1], [0], [0], [1], [0, 0, 1, 1], [], []>} : vector<16x128xbf16>, vector<128x512xbf16>, vector<16x512xf32> -> vector<16x512xf32>
    %384 = arith.addf %381, %383 : vector<16x512xf32>
    %385 = vector.extract_strided_slice %384 {offsets = [0, 0], sizes = [16, 128], strides = [1, 1]} : vector<16x512xf32> to vector<16x128xf32>
    %386 = arith.negf %385 : vector<16x128xf32>
    %387 = math.exp %386 : vector<16x128xf32>
    %cst_98 = arith.constant 1.000000e+00 : f32
    %388 = vector.broadcast %cst_98 : f32 to vector<16x128xf32>
    %389 = arith.addf %388, %387 : vector<16x128xf32>
    %390 = arith.divf %388, %389 : vector<16x128xf32>
    %391 = vector.extract_strided_slice %384 {offsets = [0, 128], sizes = [16, 128], strides = [1, 1]} : vector<16x512xf32> to vector<16x128xf32>
    %392 = arith.negf %391 : vector<16x128xf32>
    %393 = math.exp %392 : vector<16x128xf32>
    %cst_99 = arith.constant 1.000000e+00 : f32
    %394 = vector.broadcast %cst_99 : f32 to vector<16x128xf32>
    %395 = arith.addf %394, %393 : vector<16x128xf32>
    %396 = arith.divf %394, %395 : vector<16x128xf32>
    %397 = vector.extract_strided_slice %384 {offsets = [0, 256], sizes = [16, 128], strides = [1, 1]} : vector<16x512xf32> to vector<16x128xf32>
    %398 = math.tanh %397 : vector<16x128xf32>
    %399 = vector.extract_strided_slice %384 {offsets = [0, 384], sizes = [16, 128], strides = [1, 1]} : vector<16x512xf32> to vector<16x128xf32>
    %400 = arith.negf %399 : vector<16x128xf32>
    %401 = math.exp %400 : vector<16x128xf32>
    %cst_100 = arith.constant 1.000000e+00 : f32
    %402 = vector.broadcast %cst_100 : f32 to vector<16x128xf32>
    %403 = arith.addf %402, %401 : vector<16x128xf32>
    %404 = arith.divf %402, %403 : vector<16x128xf32>
    %405 = arith.mulf %396, %374 : vector<16x128xf32>
    %406 = arith.mulf %390, %398 : vector<16x128xf32>
    %407 = arith.addf %405, %406 : vector<16x128xf32>
    %408 = math.tanh %407 : vector<16x128xf32>
    %409 = arith.mulf %404, %408 : vector<16x128xf32>
    %c3_i32_101 = arith.constant 3 : i32
    %c16_i32_102 = arith.constant 16 : i32
    %410 = arith.muli %c3_i32_101, %c16_i32_102 : i32
    %411 = tpu.assume_multiple %410, 16 : i32
    %412 = arith.index_cast %411 : i32 to index
    %c0_103 = arith.constant 0 : index
    %413 = vector.load %arg11[%412, %c0_103] : memref<128x512xbf16, #tpu.memory_space<vmem>>, vector<16x512xbf16>
    %414 = arith.extf %413 : vector<16x512xbf16> to vector<16x512xf32>
    %415 = arith.truncf %409 : vector<16x128xf32> to vector<16x128xbf16>
    %cst_104 = arith.constant dense<0.000000e+00> : vector<16x512xf32>
    %416 = tpu.matmul %415, %308, %cst_104 {dimension_numbers = #tpu.dot_dimension_numbers<[1], [0], [0], [1], [0, 0, 1, 1], [], []>} : vector<16x128xbf16>, vector<128x512xbf16>, vector<16x512xf32> -> vector<16x512xf32>
    %417 = arith.addf %414, %416 : vector<16x512xf32>
    %418 = vector.extract_strided_slice %417 {offsets = [0, 0], sizes = [16, 128], strides = [1, 1]} : vector<16x512xf32> to vector<16x128xf32>
    %419 = arith.negf %418 : vector<16x128xf32>
    %420 = math.exp %419 : vector<16x128xf32>
    %cst_105 = arith.constant 1.000000e+00 : f32
    %421 = vector.broadcast %cst_105 : f32 to vector<16x128xf32>
    %422 = arith.addf %421, %420 : vector<16x128xf32>
    %423 = arith.divf %421, %422 : vector<16x128xf32>
    %424 = vector.extract_strided_slice %417 {offsets = [0, 128], sizes = [16, 128], strides = [1, 1]} : vector<16x512xf32> to vector<16x128xf32>
    %425 = arith.negf %424 : vector<16x128xf32>
    %426 = math.exp %425 : vector<16x128xf32>
    %cst_106 = arith.constant 1.000000e+00 : f32
    %427 = vector.broadcast %cst_106 : f32 to vector<16x128xf32>
    %428 = arith.addf %427, %426 : vector<16x128xf32>
    %429 = arith.divf %427, %428 : vector<16x128xf32>
    %430 = vector.extract_strided_slice %417 {offsets = [0, 256], sizes = [16, 128], strides = [1, 1]} : vector<16x512xf32> to vector<16x128xf32>
    %431 = math.tanh %430 : vector<16x128xf32>
    %432 = vector.extract_strided_slice %417 {offsets = [0, 384], sizes = [16, 128], strides = [1, 1]} : vector<16x512xf32> to vector<16x128xf32>
    %433 = arith.negf %432 : vector<16x128xf32>
    %434 = math.exp %433 : vector<16x128xf32>
    %cst_107 = arith.constant 1.000000e+00 : f32
    %435 = vector.broadcast %cst_107 : f32 to vector<16x128xf32>
    %436 = arith.addf %435, %434 : vector<16x128xf32>
    %437 = arith.divf %435, %436 : vector<16x128xf32>
    %438 = arith.mulf %429, %407 : vector<16x128xf32>
    %439 = arith.mulf %423, %431 : vector<16x128xf32>
    %440 = arith.addf %438, %439 : vector<16x128xf32>
    %441 = math.tanh %440 : vector<16x128xf32>
    %442 = arith.mulf %437, %441 : vector<16x128xf32>
    %c4_i32_108 = arith.constant 4 : i32
    %c16_i32_109 = arith.constant 16 : i32
    %443 = arith.muli %c4_i32_108, %c16_i32_109 : i32
    %444 = tpu.assume_multiple %443, 16 : i32
    %445 = arith.index_cast %444 : i32 to index
    %c0_110 = arith.constant 0 : index
    %446 = vector.load %arg11[%445, %c0_110] : memref<128x512xbf16, #tpu.memory_space<vmem>>, vector<16x512xbf16>
    %447 = arith.extf %446 : vector<16x512xbf16> to vector<16x512xf32>
    %448 = arith.truncf %442 : vector<16x128xf32> to vector<16x128xbf16>
    %cst_111 = arith.constant dense<0.000000e+00> : vector<16x512xf32>
    %449 = tpu.matmul %448, %308, %cst_111 {dimension_numbers = #tpu.dot_dimension_numbers<[1], [0], [0], [1], [0, 0, 1, 1], [], []>} : vector<16x128xbf16>, vector<128x512xbf16>, vector<16x512xf32> -> vector<16x512xf32>
    %450 = arith.addf %447, %449 : vector<16x512xf32>
    %451 = vector.extract_strided_slice %450 {offsets = [0, 0], sizes = [16, 128], strides = [1, 1]} : vector<16x512xf32> to vector<16x128xf32>
    %452 = arith.negf %451 : vector<16x128xf32>
    %453 = math.exp %452 : vector<16x128xf32>
    %cst_112 = arith.constant 1.000000e+00 : f32
    %454 = vector.broadcast %cst_112 : f32 to vector<16x128xf32>
    %455 = arith.addf %454, %453 : vector<16x128xf32>
    %456 = arith.divf %454, %455 : vector<16x128xf32>
    %457 = vector.extract_strided_slice %450 {offsets = [0, 128], sizes = [16, 128], strides = [1, 1]} : vector<16x512xf32> to vector<16x128xf32>
    %458 = arith.negf %457 : vector<16x128xf32>
    %459 = math.exp %458 : vector<16x128xf32>
    %cst_113 = arith.constant 1.000000e+00 : f32
    %460 = vector.broadcast %cst_113 : f32 to vector<16x128xf32>
    %461 = arith.addf %460, %459 : vector<16x128xf32>
    %462 = arith.divf %460, %461 : vector<16x128xf32>
    %463 = vector.extract_strided_slice %450 {offsets = [0, 256], sizes = [16, 128], strides = [1, 1]} : vector<16x512xf32> to vector<16x128xf32>
    %464 = math.tanh %463 : vector<16x128xf32>
    %465 = vector.extract_strided_slice %450 {offsets = [0, 384], sizes = [16, 128], strides = [1, 1]} : vector<16x512xf32> to vector<16x128xf32>
    %466 = arith.negf %465 : vector<16x128xf32>
    %467 = math.exp %466 : vector<16x128xf32>
    %cst_114 = arith.constant 1.000000e+00 : f32
    %468 = vector.broadcast %cst_114 : f32 to vector<16x128xf32>
    %469 = arith.addf %468, %467 : vector<16x128xf32>
    %470 = arith.divf %468, %469 : vector<16x128xf32>
    %471 = arith.mulf %462, %440 : vector<16x128xf32>
    %472 = arith.mulf %456, %464 : vector<16x128xf32>
    %473 = arith.addf %471, %472 : vector<16x128xf32>
    %474 = math.tanh %473 : vector<16x128xf32>
    %475 = arith.mulf %470, %474 : vector<16x128xf32>
    %c5_i32_115 = arith.constant 5 : i32
    %c16_i32_116 = arith.constant 16 : i32
    %476 = arith.muli %c5_i32_115, %c16_i32_116 : i32
    %477 = tpu.assume_multiple %476, 16 : i32
    %478 = arith.index_cast %477 : i32 to index
    %c0_117 = arith.constant 0 : index
    %479 = vector.load %arg11[%478, %c0_117] : memref<128x512xbf16, #tpu.memory_space<vmem>>, vector<16x512xbf16>
    %480 = arith.extf %479 : vector<16x512xbf16> to vector<16x512xf32>
    %481 = arith.truncf %475 : vector<16x128xf32> to vector<16x128xbf16>
    %cst_118 = arith.constant dense<0.000000e+00> : vector<16x512xf32>
    %482 = tpu.matmul %481, %308, %cst_118 {dimension_numbers = #tpu.dot_dimension_numbers<[1], [0], [0], [1], [0, 0, 1, 1], [], []>} : vector<16x128xbf16>, vector<128x512xbf16>, vector<16x512xf32> -> vector<16x512xf32>
    %483 = arith.addf %480, %482 : vector<16x512xf32>
    %484 = vector.extract_strided_slice %483 {offsets = [0, 0], sizes = [16, 128], strides = [1, 1]} : vector<16x512xf32> to vector<16x128xf32>
    %485 = arith.negf %484 : vector<16x128xf32>
    %486 = math.exp %485 : vector<16x128xf32>
    %cst_119 = arith.constant 1.000000e+00 : f32
    %487 = vector.broadcast %cst_119 : f32 to vector<16x128xf32>
    %488 = arith.addf %487, %486 : vector<16x128xf32>
    %489 = arith.divf %487, %488 : vector<16x128xf32>
    %490 = vector.extract_strided_slice %483 {offsets = [0, 128], sizes = [16, 128], strides = [1, 1]} : vector<16x512xf32> to vector<16x128xf32>
    %491 = arith.negf %490 : vector<16x128xf32>
    %492 = math.exp %491 : vector<16x128xf32>
    %cst_120 = arith.constant 1.000000e+00 : f32
    %493 = vector.broadcast %cst_120 : f32 to vector<16x128xf32>
    %494 = arith.addf %493, %492 : vector<16x128xf32>
    %495 = arith.divf %493, %494 : vector<16x128xf32>
    %496 = vector.extract_strided_slice %483 {offsets = [0, 256], sizes = [16, 128], strides = [1, 1]} : vector<16x512xf32> to vector<16x128xf32>
    %497 = math.tanh %496 : vector<16x128xf32>
    %498 = vector.extract_strided_slice %483 {offsets = [0, 384], sizes = [16, 128], strides = [1, 1]} : vector<16x512xf32> to vector<16x128xf32>
    %499 = arith.negf %498 : vector<16x128xf32>
    %500 = math.exp %499 : vector<16x128xf32>
    %cst_121 = arith.constant 1.000000e+00 : f32
    %501 = vector.broadcast %cst_121 : f32 to vector<16x128xf32>
    %502 = arith.addf %501, %500 : vector<16x128xf32>
    %503 = arith.divf %501, %502 : vector<16x128xf32>
    %504 = arith.mulf %495, %473 : vector<16x128xf32>
    %505 = arith.mulf %489, %497 : vector<16x128xf32>
    %506 = arith.addf %504, %505 : vector<16x128xf32>
    %507 = math.tanh %506 : vector<16x128xf32>
    %508 = arith.mulf %503, %507 : vector<16x128xf32>
    %c6_i32_122 = arith.constant 6 : i32
    %c16_i32_123 = arith.constant 16 : i32
    %509 = arith.muli %c6_i32_122, %c16_i32_123 : i32
    %510 = tpu.assume_multiple %509, 16 : i32
    %511 = arith.index_cast %510 : i32 to index
    %c0_124 = arith.constant 0 : index
    %512 = vector.load %arg11[%511, %c0_124] : memref<128x512xbf16, #tpu.memory_space<vmem>>, vector<16x512xbf16>
    %513 = arith.extf %512 : vector<16x512xbf16> to vector<16x512xf32>
    %514 = arith.truncf %508 : vector<16x128xf32> to vector<16x128xbf16>
    %cst_125 = arith.constant dense<0.000000e+00> : vector<16x512xf32>
    %515 = tpu.matmul %514, %308, %cst_125 {dimension_numbers = #tpu.dot_dimension_numbers<[1], [0], [0], [1], [0, 0, 1, 1], [], []>} : vector<16x128xbf16>, vector<128x512xbf16>, vector<16x512xf32> -> vector<16x512xf32>
    %516 = arith.addf %513, %515 : vector<16x512xf32>
    %517 = vector.extract_strided_slice %516 {offsets = [0, 0], sizes = [16, 128], strides = [1, 1]} : vector<16x512xf32> to vector<16x128xf32>
    %518 = arith.negf %517 : vector<16x128xf32>
    %519 = math.exp %518 : vector<16x128xf32>
    %cst_126 = arith.constant 1.000000e+00 : f32
    %520 = vector.broadcast %cst_126 : f32 to vector<16x128xf32>
    %521 = arith.addf %520, %519 : vector<16x128xf32>
    %522 = arith.divf %520, %521 : vector<16x128xf32>
    %523 = vector.extract_strided_slice %516 {offsets = [0, 128], sizes = [16, 128], strides = [1, 1]} : vector<16x512xf32> to vector<16x128xf32>
    %524 = arith.negf %523 : vector<16x128xf32>
    %525 = math.exp %524 : vector<16x128xf32>
    %cst_127 = arith.constant 1.000000e+00 : f32
    %526 = vector.broadcast %cst_127 : f32 to vector<16x128xf32>
    %527 = arith.addf %526, %525 : vector<16x128xf32>
    %528 = arith.divf %526, %527 : vector<16x128xf32>
    %529 = vector.extract_strided_slice %516 {offsets = [0, 256], sizes = [16, 128], strides = [1, 1]} : vector<16x512xf32> to vector<16x128xf32>
    %530 = math.tanh %529 : vector<16x128xf32>
    %531 = vector.extract_strided_slice %516 {offsets = [0, 384], sizes = [16, 128], strides = [1, 1]} : vector<16x512xf32> to vector<16x128xf32>
    %532 = arith.negf %531 : vector<16x128xf32>
    %533 = math.exp %532 : vector<16x128xf32>
    %cst_128 = arith.constant 1.000000e+00 : f32
    %534 = vector.broadcast %cst_128 : f32 to vector<16x128xf32>
    %535 = arith.addf %534, %533 : vector<16x128xf32>
    %536 = arith.divf %534, %535 : vector<16x128xf32>
    %537 = arith.mulf %528, %506 : vector<16x128xf32>
    %538 = arith.mulf %522, %530 : vector<16x128xf32>
    %539 = arith.addf %537, %538 : vector<16x128xf32>
    %540 = math.tanh %539 : vector<16x128xf32>
    %541 = arith.mulf %536, %540 : vector<16x128xf32>
    %c7_i32_129 = arith.constant 7 : i32
    %c16_i32_130 = arith.constant 16 : i32
    %542 = arith.muli %c7_i32_129, %c16_i32_130 : i32
    %543 = tpu.assume_multiple %542, 16 : i32
    %544 = arith.index_cast %543 : i32 to index
    %c0_131 = arith.constant 0 : index
    %545 = vector.load %arg11[%544, %c0_131] : memref<128x512xbf16, #tpu.memory_space<vmem>>, vector<16x512xbf16>
    %546 = arith.extf %545 : vector<16x512xbf16> to vector<16x512xf32>
    %547 = arith.truncf %541 : vector<16x128xf32> to vector<16x128xbf16>
    %cst_132 = arith.constant dense<0.000000e+00> : vector<16x512xf32>
    %548 = tpu.matmul %547, %308, %cst_132 {dimension_numbers = #tpu.dot_dimension_numbers<[1], [0], [0], [1], [0, 0, 1, 1], [], []>} : vector<16x128xbf16>, vector<128x512xbf16>, vector<16x512xf32> -> vector<16x512xf32>
    %549 = arith.addf %546, %548 : vector<16x512xf32>
    %550 = vector.extract_strided_slice %549 {offsets = [0, 0], sizes = [16, 128], strides = [1, 1]} : vector<16x512xf32> to vector<16x128xf32>
    %551 = arith.negf %550 : vector<16x128xf32>
    %552 = math.exp %551 : vector<16x128xf32>
    %cst_133 = arith.constant 1.000000e+00 : f32
    %553 = vector.broadcast %cst_133 : f32 to vector<16x128xf32>
    %554 = arith.addf %553, %552 : vector<16x128xf32>
    %555 = arith.divf %553, %554 : vector<16x128xf32>
    %556 = vector.extract_strided_slice %549 {offsets = [0, 128], sizes = [16, 128], strides = [1, 1]} : vector<16x512xf32> to vector<16x128xf32>
    %557 = arith.negf %556 : vector<16x128xf32>
    %558 = math.exp %557 : vector<16x128xf32>
    %cst_134 = arith.constant 1.000000e+00 : f32
    %559 = vector.broadcast %cst_134 : f32 to vector<16x128xf32>
    %560 = arith.addf %559, %558 : vector<16x128xf32>
    %561 = arith.divf %559, %560 : vector<16x128xf32>
    %562 = vector.extract_strided_slice %549 {offsets = [0, 256], sizes = [16, 128], strides = [1, 1]} : vector<16x512xf32> to vector<16x128xf32>
    %563 = math.tanh %562 : vector<16x128xf32>
    %564 = vector.extract_strided_slice %549 {offsets = [0, 384], sizes = [16, 128], strides = [1, 1]} : vector<16x512xf32> to vector<16x128xf32>
    %565 = arith.negf %564 : vector<16x128xf32>
    %566 = math.exp %565 : vector<16x128xf32>
    %cst_135 = arith.constant 1.000000e+00 : f32
    %567 = vector.broadcast %cst_135 : f32 to vector<16x128xf32>
    %568 = arith.addf %567, %566 : vector<16x128xf32>
    %569 = arith.divf %567, %568 : vector<16x128xf32>
    %570 = arith.mulf %561, %539 : vector<16x128xf32>
    %571 = arith.mulf %555, %563 : vector<16x128xf32>
    %572 = arith.addf %570, %571 : vector<16x128xf32>
    %573 = math.tanh %572 : vector<16x128xf32>
    %574 = arith.mulf %569, %573 : vector<16x128xf32>
    %c8_i32_136 = arith.constant 8 : i32
    %575 = arith.truncf %574 : vector<16x128xf32> to vector<16x128xbf16>
    %c0_137 = arith.constant 0 : index
    %c0_138 = arith.constant 0 : index
    %576 = vector.load %arg8[%c0_137, %c0_138] : memref<128x128xbf16, #tpu.memory_space<vmem>>, vector<128x128xbf16>
    %cst_139 = arith.constant dense<0.000000e+00> : vector<16x128xf32>
    %577 = tpu.matmul %575, %576, %cst_139 {dimension_numbers = #tpu.dot_dimension_numbers<[1], [0], [0], [1], [0, 0, 1, 1], [], []>} : vector<16x128xbf16>, vector<128x128xbf16>, vector<16x128xf32> -> vector<16x128xf32>
    %c0_140 = arith.constant 0 : index
    %c0_141 = arith.constant 0 : index
    %578 = vector.load %arg9[%c0_140, %c0_141] : memref<1x128xf32, #tpu.memory_space<vmem>>, vector<1x128xf32>
    %579 = vector.broadcast %578 : vector<1x128xf32> to vector<16x128xf32>
    %580 = arith.addf %577, %579 : vector<16x128xf32>
    %c0_142 = arith.constant 0 : index
    %c0_143 = arith.constant 0 : index
    %581 = vector.load %arg10[%c0_142, %c0_143] : memref<16x128xf32, #tpu.memory_space<vmem>>, vector<16x128xf32>
    tpu.vector_store %arg10[%c0_142, %c0_143], %580 {strides = array<i32>} : memref<16x128xf32, #tpu.memory_space<vmem>>, vector<16x128xf32>,
    return
  }
  func.func @transform_0(%arg0: i32) -> (i32, i32, i32) {
    %c0_i32 = arith.constant 0 : i32
    %c0_i32_0 = arith.constant 0 : i32
    %c0_i32_1 = arith.constant 0 : i32
    return %arg0, %c0_i32, %c0_i32_0 : i32, i32, i32
  }
  func.func @transform_1(%arg0: i32) -> (i32, i32) {
    %c0_i32 = arith.constant 0 : i32
    %c0_i32_0 = arith.constant 0 : i32
    %c0_i32_1 = arith.constant 0 : i32
    return %c0_i32, %c0_i32_0 : i32, i32
  }
  func.func @transform_2(%arg0: i32) -> (i32, i32) {
    %c0_i32 = arith.constant 0 : i32
    %c0_i32_0 = arith.constant 0 : i32
    %c0_i32_1 = arith.constant 0 : i32
    return %c0_i32, %c0_i32_0 : i32, i32
  }
  func.func @transform_3(%arg0: i32) -> (i32, i32) {
    %c0_i32 = arith.constant 0 : i32
    %c0_i32_0 = arith.constant 0 : i32
    %c0_i32_1 = arith.constant 0 : i32
    return %c0_i32, %c0_i32_0 : i32, i32
  }
  func.func @transform_4(%arg0: i32) -> (i32, i32) {
    %c0_i32 = arith.constant 0 : i32
    %c0_i32_0 = arith.constant 0 : i32
    %c0_i32_1 = arith.constant 0 : i32
    return %c0_i32, %c0_i32_0 : i32, i32
  }
  func.func @transform_5(%arg0: i32) -> (i32, i32) {
    %c0_i32 = arith.constant 0 : i32
    %c0_i32_0 = arith.constant 0 : i32
    %c0_i32_1 = arith.constant 0 : i32
    return %c0_i32, %c0_i32_0 : i32, i32
  }
  func.func @transform_6(%arg0: i32) -> (i32, i32) {
    %c0_i32 = arith.constant 0 : i32
    %c0_i32_0 = arith.constant 0 : i32
    %c0_i32_1 = arith.constant 0 : i32
    return %c0_i32, %c0_i32_0 : i32, i32
  }
  func.func @transform_7(%arg0: i32) -> (i32, i32) {
    %c0_i32 = arith.constant 0 : i32
    %c0_i32_0 = arith.constant 0 : i32
    %c0_i32_1 = arith.constant 0 : i32
    return %c0_i32, %c0_i32_0 : i32, i32
  }
  func.func @transform_8(%arg0: i32) -> (i32, i32) {
    %c0_i32 = arith.constant 0 : i32
    %c0_i32_0 = arith.constant 0 : i32
    %c0_i32_1 = arith.constant 0 : i32
    return %c0_i32, %c0_i32_0 : i32, i32
  }
  func.func @transform_9(%arg0: i32) -> (i32, i32) {
    %c0_i32 = arith.constant 0 : i32
    %c0_i32_0 = arith.constant 0 : i32
    return %arg0, %c0_i32 : i32, i32
  }
}

</mosaic_0001>

<llo_original>
// kernel: tpu_custom_call.1
$region0: #{tpu_custom_call.1}
  #allocation0 [shape = 'u32[]', space=smem, size = 0x4, offset = 0x4, fixed_abs, tag = 'smem constant byte address 0x4 - core index']
  #allocation1 [shape = 'u32[144,128]{1,0:T(1,128)}', space=vmem, size = 0x12000, scoped, tag = 'internal scratch']
  #allocation2 [shape = 'bf16[128,512]{1,0:T(8,128)(2,1)}', space=vmem, size = 0x20000, scoped, tag = 'scratch operand']
  #allocation3 [shape = 'bf16[128,128]{1,0:T(8,128)(2,1)}', space=vmem, size = 0x8000, scoped, tag = 'scratch operand']
  %s0 = inlined_call_operand.hbm [shape: bf16[1,128,128], index: 0, kind: input, shape index: {}]
  %s1 = inlined_call_operand.hbm [shape: bf16[128,512], index: 1, kind: input, shape index: {}]
  %s2 = inlined_call_operand.hbm [shape: bf16[128,512], index: 2, kind: input, shape index: {}]
  %s3 = inlined_call_operand.vmem [shape: f32[1,512], index: 3, kind: input, shape index: {}]
  %s4 = inlined_call_operand.hbm [shape: bf16[128,512], index: 4, kind: input, shape index: {}]
  %s5 = inlined_call_operand.hbm [shape: bf16[128,512], index: 5, kind: input, shape index: {}]
  %s6 = inlined_call_operand.vmem [shape: f32[1,512], index: 6, kind: input, shape index: {}]
  %s7 = inlined_call_operand.hbm [shape: bf16[128,128], index: 7, kind: input, shape index: {}]
  %s8 = inlined_call_operand.vmem [shape: f32[1,128], index: 8, kind: input, shape index: {}]
  %s9 = inlined_call_operand.hbm [shape: f32[16,128], index: 9, kind: output, shape index: {}]
  %s10 = sld [smem:[#allocation0]]
  $region70: #{tpu_custom_call.1} parent=0
    _
  %s12 = ssub.s32 1, %s10
  %s13 = scalar_select 0, %s12, %s10
  $region1: #{tpu_custom_call.1} parent=0
    #allocation4 [shape = 'u8[32768]{0}', space=vmem, size = 0x8000, scoped, tag = 'input window, operand 0, single buffered']
    #allocation5 [shape = 's32[1]{0}', space=sflag, size = 0x4, scoped, tag = 'scoped memory for tpu_custom_call.1']
    #allocation6 [shape = 's32[1]{0}', space=sflag, size = 0x4, scoped, tag = 'scoped memory for tpu_custom_call.1']
    #allocation7 [shape = 'u8[131072]{0}', space=vmem, size = 0x20000, scoped, tag = 'input window, operand 1, single buffered']
    #allocation8 [shape = 's32[1]{0}', space=sflag, size = 0x4, scoped, tag = 'scoped memory for tpu_custom_call.1']
    #allocation9 [shape = 'u8[131072]{0}', space=vmem, size = 0x20000, scoped, tag = 'input window, operand 2, single buffered']
    #allocation10 [shape = 'u8[131072]{0}', space=vmem, size = 0x20000, scoped, tag = 'input window, operand 4, single buffered']
    #allocation11 [shape = 's32[1]{0}', space=sflag, size = 0x4, scoped, tag = 'scoped memory for tpu_custom_call.1']
    #allocation12 [shape = 'u8[131072]{0}', space=vmem, size = 0x20000, scoped, tag = 'input window, operand 5, single buffered']
    #allocation13 [shape = 'u8[32768]{0}', space=vmem, size = 0x8000, scoped, tag = 'input window, operand 7, single buffered']
    #allocation14 [shape = 's32[1]{0}', space=sflag, size = 0x4, scoped, tag = 'scoped memory for tpu_custom_call.1']
    #allocation15 [shape = 'u8[8192]{0}', space=vmem, size = 0x2000, scoped, tag = 'output window, operand 0, single buffered']
    %14 = vsyncpa [#allocation5], 0
    %15 = vsyncpa [#allocation8], 0
    %16 = vsyncpa [#allocation11], 0
    %17 = vsyncpa [#allocation14], 0
    %18 = vsyncpa [#allocation6], 0
    // Predicated region
    $region2: #{tpu_custom_call.1} parent=1 // pred_check
      _
    $region3: #{tpu_custom_call.1} parent=1 // pred_check_branch
      %20 = sbr.rel (0) target = $region5
    $region4: #{tpu_custom_call.1} parent=1 // pred_region
      %s22 = ssub.s32 1024, 1024
      %23 = vsyncadd [#allocation5], %s22
      %s24 = sshll.u32 [#allocation4], 4
      %s25 = int_to_ptr.vmem [resolvable:$true] %s24
      %30 = dma.hbm_to_vmem [thread:$0]  %s0, 1024, %s25, [#allocation5], 64, 64, 4
    $region5: #{tpu_custom_call.1} parent=1 // pred_fallthru
      _
    // Predicated region
    $region6: #{tpu_custom_call.1} parent=1 // pred_check
      _
    $region7: #{tpu_custom_call.1} parent=1 // pred_check_branch
      %32 = sbr.rel (0) target = $region9
    $region8: #{tpu_custom_call.1} parent=1 // pred_region
      %s34 = ssub.s32 4096, 4096
      %35 = vsyncadd [#allocation8], %s34
      %s36 = sshll.u32 [#allocation7], 4
      %s37 = int_to_ptr.vmem [resolvable:$true] %s36
      %42 = dma.hbm_to_vmem [thread:$0]  %s1, 4096, %s37, [#allocation8], 256, 256, 16
    $region9: #{tpu_custom_call.1} parent=1 // pred_fallthru
      _
    // Predicated region
    $region10: #{tpu_custom_call.1} parent=1 // pred_check
      _
    $region11: #{tpu_custom_call.1} parent=1 // pred_check_branch
      %44 = sbr.rel (0) target = $region13
    $region12: #{tpu_custom_call.1} parent=1 // pred_region
      %s46 = ssub.s32 4096, 4096
      %47 = vsyncadd [#allocation8], %s46
      %s48 = sshll.u32 [#allocation9], 4
      %s49 = int_to_ptr.vmem [resolvable:$true] %s48
      %54 = dma.hbm_to_vmem [thread:$0]  %s2, 4096, %s49, [#allocation8], 256, 256, 16
    $region13: #{tpu_custom_call.1} parent=1 // pred_fallthru
      _
    // Predicated region
    $region14: #{tpu_custom_call.1} parent=1 // pred_check
      _
    $region15: #{tpu_custom_call.1} parent=1 // pred_check_branch
      %56 = sbr.rel (0) target = $region17
    $region16: #{tpu_custom_call.1} parent=1 // pred_region
      _
    $region17: #{tpu_custom_call.1} parent=1 // pred_fallthru
      _
    // Predicated region
    $region18: #{tpu_custom_call.1} parent=1 // pred_check
      _
    $region19: #{tpu_custom_call.1} parent=1 // pred_check_branch
      %58 = sbr.rel (0) target = $region21
    $region20: #{tpu_custom_call.1} parent=1 // pred_region
      %s60 = ssub.s32 4096, 4096
      %61 = vsyncadd [#allocation11], %s60
      %s62 = sshll.u32 [#allocation10], 4
      %s63 = int_to_ptr.vmem [resolvable:$true] %s62
      %68 = dma.hbm_to_vmem [thread:$0]  %s4, 4096, %s63, [#allocation11], 256, 256, 16
    $region21: #{tpu_custom_call.1} parent=1 // pred_fallthru
      _
    // Predicated region
    $region22: #{tpu_custom_call.1} parent=1 // pred_check
      _
    $region23: #{tpu_custom_call.1} parent=1 // pred_check_branch
      %70 = sbr.rel (0) target = $region25
    $region24: #{tpu_custom_call.1} parent=1 // pred_region
      %s72 = ssub.s32 4096, 4096
      %73 = vsyncadd [#allocation11], %s72
      %s74 = sshll.u32 [#allocation12], 4
      %s75 = int_to_ptr.vmem [resolvable:$true] %s74
      %80 = dma.hbm_to_vmem [thread:$0]  %s5, 4096, %s75, [#allocation11], 256, 256, 16
    $region25: #{tpu_custom_call.1} parent=1 // pred_fallthru
      _
    // Predicated region
    $region26: #{tpu_custom_call.1} parent=1 // pred_check
      _
    $region27: #{tpu_custom_call.1} parent=1 // pred_check_branch
      %82 = sbr.rel (0) target = $region29
    $region28: #{tpu_custom_call.1} parent=1 // pred_region
      _
    $region29: #{tpu_custom_call.1} parent=1 // pred_fallthru
      _
    // Predicated region
    $region30: #{tpu_custom_call.1} parent=1 // pred_check
      _
    $region31: #{tpu_custom_call.1} parent=1 // pred_check_branch
      %84 = sbr.rel (0) target = $region33
    $region32: #{tpu_custom_call.1} parent=1 // pred_region
      %s86 = ssub.s32 1024, 1024
      %87 = vsyncadd [#allocation14], %s86
      %s88 = sshll.u32 [#allocation13], 4
      %s89 = int_to_ptr.vmem [resolvable:$true] %s88
      %94 = dma.hbm_to_vmem [thread:$0]  %s7, 1024, %s89, [#allocation14], 64, 64, 4
    $region33: #{tpu_custom_call.1} parent=1 // pred_fallthru
      _
    // Predicated region
    $region34: #{tpu_custom_call.1} parent=1 // pred_check
      _
    $region35: #{tpu_custom_call.1} parent=1 // pred_check_branch
      %96 = sbr.rel (0) target = $region37
    $region36: #{tpu_custom_call.1} parent=1 // pred_region
      _
    $region37: #{tpu_custom_call.1} parent=1 // pred_fallthru
      _
    // Predicated region
    $region38: #{tpu_custom_call.1} parent=1 // pred_check
      _
    $region39: #{tpu_custom_call.1} parent=1 // pred_check_branch
      %98 = sbr.rel (0) target = $region41
    $region40: #{tpu_custom_call.1} parent=1 // pred_region
      %99 = dma.done [#allocation5], 1024
    $region41: #{tpu_custom_call.1} parent=1 // pred_fallthru
      _
    // Predicated region
    $region42: #{tpu_custom_call.1} parent=1 // pred_check
      _
    $region43: #{tpu_custom_call.1} parent=1 // pred_check_branch
      %101 = sbr.rel (0) target = $region45
    $region44: #{tpu_custom_call.1} parent=1 // pred_region
      %102 = dma.done [#allocation8], 4096
    $region45: #{tpu_custom_call.1} parent=1 // pred_fallthru
      _
    // Predicated region
    $region46: #{tpu_custom_call.1} parent=1 // pred_check
      _
    $region47: #{tpu_custom_call.1} parent=1 // pred_check_branch
      %104 = sbr.rel (0) target = $region49
    $region48: #{tpu_custom_call.1} parent=1 // pred_region
      %105 = dma.done [#allocation8], 4096
    $region49: #{tpu_custom_call.1} parent=1 // pred_fallthru
      _
    // Predicated region
    $region50: #{tpu_custom_call.1} parent=1 // pred_check
      _
    $region51: #{tpu_custom_call.1} parent=1 // pred_check_branch
      %107 = sbr.rel (0) target = $region53
    $region52: #{tpu_custom_call.1} parent=1 // pred_region
      %108 = dma.done [#allocation11], 4096
    $region53: #{tpu_custom_call.1} parent=1 // pred_fallthru
      _
    // Predicated region
    $region54: #{tpu_custom_call.1} parent=1 // pred_check
      _
    $region55: #{tpu_custom_call.1} parent=1 // pred_check_branch
      %110 = sbr.rel (0) target = $region57
    $region56: #{tpu_custom_call.1} parent=1 // pred_region
      %111 = dma.done [#allocation11], 4096
    $region57: #{tpu_custom_call.1} parent=1 // pred_fallthru
      _
    // Predicated region
    $region58: #{tpu_custom_call.1} parent=1 // pred_check
      _
    $region59: #{tpu_custom_call.1} parent=1 // pred_check_branch
      %113 = sbr.rel (0) target = $region61
    $region60: #{tpu_custom_call.1} parent=1 // pred_region
      %114 = dma.done [#allocation14], 1024
    $region61: #{tpu_custom_call.1} parent=1 // pred_fallthru
      _
    %v116 = vld [vmem:[#allocation4] sm:$0xf]
    %v117 = vld [vmem:[#allocation4 + $0x4] sm:$0xf]
    %v118 = vld [vmem:[#allocation4 + $0x8] sm:$0xf]
    %v119 = vld [vmem:[#allocation4 + $0xc] sm:$0xf]
    %v120 = vld [vmem:[#allocation4 + $0x10] sm:$0xf]
    %v121 = vld [vmem:[#allocation4 + $0x14] sm:$0xf]
    %v122 = vld [vmem:[#allocation4 + $0x18] sm:$0xf]
    %v123 = vld [vmem:[#allocation4 + $0x1c] sm:$0xf]
    %v124 = vld [vmem:[#allocation4 + $0x20] sm:$0xf]
    %v125 = vld [vmem:[#allocation4 + $0x24] sm:$0xf]
    %v126 = vld [vmem:[#allocation4 + $0x28] sm:$0xf]
    %v127 = vld [vmem:[#allocation4 + $0x2c] sm:$0xf]
    %v128 = vld [vmem:[#allocation4 + $0x30] sm:$0xf]
    %v129 = vld [vmem:[#allocation4 + $0x34] sm:$0xf]
    %v130 = vld [vmem:[#allocation4 + $0x38] sm:$0xf]
    %v131 = vld [vmem:[#allocation4 + $0x3c] sm:$0xf]
    %v132 = vld [vmem:[#allocation7] sm:$0xff]
    %v133 = vld [vmem:[#allocation7 + $0x8] sm:$0xff]
    %v134 = vld [vmem:[#allocation7 + $0x10] sm:$0xff]
    %v135 = vld [vmem:[#allocation7 + $0x18] sm:$0xff]
    %v136 = vld [vmem:[#allocation7 + $0x20] sm:$0xff]
    %v137 = vld [vmem:[#allocation7 + $0x28] sm:$0xff]
    %v138 = vld [vmem:[#allocation7 + $0x30] sm:$0xff]
    %v139 = vld [vmem:[#allocation7 + $0x38] sm:$0xff]
    %v140 = vld [vmem:[#allocation7 + $0x40] sm:$0xff]
    %v141 = vld [vmem:[#allocation7 + $0x48] sm:$0xff]
    %v142 = vld [vmem:[#allocation7 + $0x50] sm:$0xff]
    %v143 = vld [vmem:[#allocation7 + $0x58] sm:$0xff]
    %v144 = vld [vmem:[#allocation7 + $0x60] sm:$0xff]
    %v145 = vld [vmem:[#allocation7 + $0x68] sm:$0xff]
    %v146 = vld [vmem:[#allocation7 + $0x70] sm:$0xff]
    %v147 = vld [vmem:[#allocation7 + $0x78] sm:$0xff]
    %v148 = vld [vmem:[#allocation7 + $0x80] sm:$0xff]
    %v149 = vld [vmem:[#allocation7 + $0x88] sm:$0xff]
    %v150 = vld [vmem:[#allocation7 + $0x90] sm:$0xff]
    %v151 = vld [vmem:[#allocation7 + $0x98] sm:$0xff]
    %v152 = vld [vmem:[#allocation7 + $0xa0] sm:$0xff]
    %v153 = vld [vmem:[#allocation7 + $0xa8] sm:$0xff]
    %v154 = vld [vmem:[#allocation7 + $0xb0] sm:$0xff]
    %v155 = vld [vmem:[#allocation7 + $0xb8] sm:$0xff]
    %v156 = vld [vmem:[#allocation7 + $0xc0] sm:$0xff]
    %v157 = vld [vmem:[#allocation7 + $0xc8] sm:$0xff]
    %v158 = vld [vmem:[#allocation7 + $0xd0] sm:$0xff]
    %v159 = vld [vmem:[#allocation7 + $0xd8] sm:$0xff]
    %v160 = vld [vmem:[#allocation7 + $0xe0] sm:$0xff]
    %v161 = vld [vmem:[#allocation7 + $0xe8] sm:$0xff]
    %v162 = vld [vmem:[#allocation7 + $0xf0] sm:$0xff]
    %v163 = vld [vmem:[#allocation7 + $0xf8] sm:$0xff]
    %v164 = vld [vmem:[%s3] sm:$0xf]
    %v166 = vlaneseq
    %v167 = vshrl.u32 %v166, 7
    %v168 = vsub.s32 0, %v167
    %v169 = vrot.slane %v164, %v168
    %v170 = vlaneseq
    %v171 = vshrl.u32 %v170, 7
    %v172 = vsub.s32 1, %v171
    %v173 = vrot.slane %v164, %v172
    %v174 = vlaneseq
    %v175 = vshrl.u32 %v174, 7
    %v176 = vsub.s32 2, %v175
    %v177 = vrot.slane %v164, %v176
    %v178 = vlaneseq
    %v179 = vshrl.u32 %v178, 7
    %v180 = vsub.s32 3, %v179
    %v181 = vrot.slane %v164, %v180
    %v202 = vunpack.c.l.b16 %v116
    %v203 = vunpack.c.l.b16 %v117
    %v204 = vunpack.c.l.b16 %v118
    %v205 = vunpack.c.l.b16 %v119
    %v206 = vunpack.c.l.b16 %v120
    %v207 = vunpack.c.l.b16 %v121
    %v208 = vunpack.c.l.b16 %v122
    %v209 = vunpack.c.l.b16 %v123
    %v210 = vunpack.c.l.b16 %v124
    %v211 = vunpack.c.l.b16 %v125
    %v212 = vunpack.c.l.b16 %v126
    %v213 = vunpack.c.l.b16 %v127
    %v214 = vunpack.c.l.b16 %v128
    %v215 = vunpack.c.l.b16 %v129
    %v216 = vunpack.c.l.b16 %v130
    %v217 = vunpack.c.l.b16 %v131
    %v218 = vpack.c.b16 %v203, %v202
    %v219 = vpack.c.b16 %v205, %v204
    %v220 = vpack.c.b16 %v207, %v206
    %v221 = vpack.c.b16 %v209, %v208
    %v222 = vpack.c.b16 %v211, %v210
    %v223 = vpack.c.b16 %v213, %v212
    %v224 = vpack.c.b16 %v215, %v214
    %v225 = vpack.c.b16 %v217, %v216
    %v266 = vunpack.c.l.b16 %v132
    %v267 = vunpack.c.h.b16 %v132
    %v268 = vunpack.c.l.b16 %v133
    %v269 = vunpack.c.h.b16 %v133
    %v270 = vunpack.c.l.b16 %v134
    %v271 = vunpack.c.h.b16 %v134
    %v272 = vunpack.c.l.b16 %v135
    %v273 = vunpack.c.h.b16 %v135
    %v274 = vunpack.c.l.b16 %v136
    %v275 = vunpack.c.h.b16 %v136
    %v276 = vunpack.c.l.b16 %v137
    %v277 = vunpack.c.h.b16 %v137
    %v278 = vunpack.c.l.b16 %v138
    %v279 = vunpack.c.h.b16 %v138
    %v280 = vunpack.c.l.b16 %v139
    %v281 = vunpack.c.h.b16 %v139
    %v282 = vunpack.c.l.b16 %v140
    %v283 = vunpack.c.h.b16 %v140
    %v284 = vunpack.c.l.b16 %v141
    %v285 = vunpack.c.h.b16 %v141
    %v286 = vunpack.c.l.b16 %v142
    %v287 = vunpack.c.h.b16 %v142
    %v288 = vunpack.c.l.b16 %v143
    %v289 = vunpack.c.h.b16 %v143
    %v290 = vunpack.c.l.b16 %v144
    %v291 = vunpack.c.h.b16 %v144
    %v292 = vunpack.c.l.b16 %v145
    %v293 = vunpack.c.h.b16 %v145
    %v294 = vunpack.c.l.b16 %v146
    %v295 = vunpack.c.h.b16 %v146
    %v296 = vunpack.c.l.b16 %v147
    %v297 = vunpack.c.h.b16 %v147
    %v298 = vunpack.c.l.b16 %v148
    %v299 = vunpack.c.h.b16 %v148
    %v300 = vunpack.c.l.b16 %v149
    %v301 = vunpack.c.h.b16 %v149
    %v302 = vunpack.c.l.b16 %v150
    %v303 = vunpack.c.h.b16 %v150
    %v304 = vunpack.c.l.b16 %v151
    %v305 = vunpack.c.h.b16 %v151
    %v306 = vunpack.c.l.b16 %v152
    %v307 = vunpack.c.h.b16 %v152
    %v308 = vunpack.c.l.b16 %v153
    %v309 = vunpack.c.h.b16 %v153
    %v310 = vunpack.c.l.b16 %v154
    %v311 = vunpack.c.h.b16 %v154
    %v312 = vunpack.c.l.b16 %v155
    %v313 = vunpack.c.h.b16 %v155
    %v314 = vunpack.c.l.b16 %v156
    %v315 = vunpack.c.h.b16 %v156
    %v316 = vunpack.c.l.b16 %v157
    %v317 = vunpack.c.h.b16 %v157
    %v318 = vunpack.c.l.b16 %v158
    %v319 = vunpack.c.h.b16 %v158
    %v320 = vunpack.c.l.b16 %v159
    %v321 = vunpack.c.h.b16 %v159
    %v322 = vunpack.c.l.b16 %v160
    %v323 = vunpack.c.h.b16 %v160
    %v324 = vunpack.c.l.b16 %v161
    %v325 = vunpack.c.h.b16 %v161
    %v326 = vunpack.c.l.b16 %v162
    %v327 = vunpack.c.h.b16 %v162
    %v328 = vunpack.c.l.b16 %v163
    %v329 = vunpack.c.h.b16 %v163
    %v330 = vpack.c.b16 %v270, %v266
    %v331 = vpack.c.b16 %v271, %v267
    %v332 = vpack.c.b16 %v272, %v268
    %v333 = vpack.c.b16 %v273, %v269
    %v334 = vpack.c.b16 %v278, %v274
    %v335 = vpack.c.b16 %v279, %v275
    %v336 = vpack.c.b16 %v280, %v276
    %v337 = vpack.c.b16 %v281, %v277
    %v338 = vpack.c.b16 %v286, %v282
    %v339 = vpack.c.b16 %v287, %v283
    %v340 = vpack.c.b16 %v288, %v284
    %v341 = vpack.c.b16 %v289, %v285
    %v342 = vpack.c.b16 %v294, %v290
    %v343 = vpack.c.b16 %v295, %v291
    %v344 = vpack.c.b16 %v296, %v292
    %v345 = vpack.c.b16 %v297, %v293
    %v346 = vpack.c.b16 %v302, %v298
    %v347 = vpack.c.b16 %v303, %v299
    %v348 = vpack.c.b16 %v304, %v300
    %v349 = vpack.c.b16 %v305, %v301
    %v350 = vpack.c.b16 %v310, %v306
    %v351 = vpack.c.b16 %v311, %v307
    %v352 = vpack.c.b16 %v312, %v308
    %v353 = vpack.c.b16 %v313, %v309
    %v354 = vpack.c.b16 %v318, %v314
    %v355 = vpack.c.b16 %v319, %v315
    %v356 = vpack.c.b16 %v320, %v316
    %v357 = vpack.c.b16 %v321, %v317
    %v358 = vpack.c.b16 %v326, %v322
    %v359 = vpack.c.b16 %v327, %v323
    %v360 = vpack.c.b16 %v328, %v324
    %v361 = vpack.c.b16 %v329, %v325
    %394 = vmatprep.subr.bf16.mxu0 %v359
    %395 = vmatpush1.bf16.msra.mxu0 %v358
    %396 = vmatprep.subr.bf16.mxu0 %v355
    %397 = vmatpush1.bf16.msra.mxu0 %v354
    %398 = vmatprep.subr.bf16.mxu0 %v351
    %399 = vmatpush1.bf16.msra.mxu0 %v350
    %400 = vmatprep.subr.bf16.mxu0 %v347
    %401 = vmatpush1.bf16.msra.mxu0 %v346
    %402 = vmatprep.subr.bf16.mxu0 %v343
    %403 = vmatpush1.bf16.msra.mxu0 %v342
    %404 = vmatprep.subr.bf16.mxu0 %v339
    %405 = vmatpush1.bf16.msra.mxu0 %v338
    %406 = vmatprep.subr.bf16.mxu0 %v335
    %407 = vmatpush1.bf16.msra.mxu0 %v334
    %408 = vmatprep.subr.bf16.mxu0 %v331
    %409 = vmatpush1.bf16.msra.mxu0 %v330
    %410 = vmatprep.subr.bf16.mxu0 0
    %411 = vmatpush2.bf16.msra.mxu0 0
    %412 = vmatprep.subr.bf16.mxu0 0
    %413 = vmatpush2.bf16.msra.mxu0 0
    %414 = vmatprep.subr.bf16.mxu0 0
    %415 = vmatpush2.bf16.msra.mxu0 0
    %416 = vmatprep.subr.bf16.mxu0 0
    %417 = vmatpush2.bf16.msra.mxu0 0
    %418 = vmatprep.subr.bf16.mxu0 0
    %419 = vmatpush2.bf16.msra.mxu0 0
    %420 = vmatprep.subr.bf16.mxu0 0
    %421 = vmatpush2.bf16.msra.mxu0 0
    %422 = vmatprep.subr.bf16.mxu0 0
    %423 = vmatpush2.bf16.msra.mxu0 0
    %424 = vmatprep.subr.bf16.mxu0 0
    %425 = vmatpush2.bf16.msra.mxu0 0
    %426 = vmatprep.mubr.bf16.mxu0 0
    %427 = vmatmul.mubr.bf16.gmra.mxu0 %v218
    %v428 = vpop.f32.mrf.mxu0
    %v429 = vadd.f32 %v169, %v428
    %v430 = vpop.f32.mrf.mxu0
    %v431 = vadd.f32 %v173, %v430
    %v432 = vpop.f32.mrf.mxu0
    %v433 = vadd.f32 %v169, %v432
    %v434 = vpop.f32.mrf.mxu0
    %v435 = vadd.f32 %v173, %v434
    %436 = vmatprep.mubr.bf16.mxu0 0
    %437 = vmatmul.mubr.bf16.gmra.mxu0 %v219
    %v438 = vpop.f32.mrf.mxu0
    %v439 = vadd.f32 %v169, %v438
    %v440 = vpop.f32.mrf.mxu0
    %v441 = vadd.f32 %v173, %v440
    %v442 = vpop.f32.mrf.mxu0
    %v443 = vadd.f32 %v169, %v442
    %v444 = vpop.f32.mrf.mxu0
    %v445 = vadd.f32 %v173, %v444
    %446 = vmatprep.mubr.bf16.mxu0 0
    %447 = vmatmul.mubr.bf16.gmra.mxu0 %v220
    %v448 = vpop.f32.mrf.mxu0
    %v449 = vadd.f32 %v169, %v448
    %v450 = vpop.f32.mrf.mxu0
    %v451 = vadd.f32 %v173, %v450
    %v452 = vpop.f32.mrf.mxu0
    %v453 = vadd.f32 %v169, %v452
    %v454 = vpop.f32.mrf.mxu0
    %v455 = vadd.f32 %v173, %v454
    %456 = vmatprep.mubr.bf16.mxu0 0
    %457 = vmatmul.mubr.bf16.gmra.mxu0 %v221
    %v458 = vpop.f32.mrf.mxu0
    %v459 = vadd.f32 %v169, %v458
    %v460 = vpop.f32.mrf.mxu0
    %v461 = vadd.f32 %v173, %v460
    %v462 = vpop.f32.mrf.mxu0
    %v463 = vadd.f32 %v169, %v462
    %v464 = vpop.f32.mrf.mxu0
    %v465 = vadd.f32 %v173, %v464
    %466 = vmatprep.mubr.bf16.mxu0 0
    %467 = vmatmul.mubr.bf16.gmra.mxu0 %v222
    %v468 = vpop.f32.mrf.mxu0
    %v469 = vadd.f32 %v169, %v468
    %v470 = vpop.f32.mrf.mxu0
    %v471 = vadd.f32 %v173, %v470
    %v472 = vpop.f32.mrf.mxu0
    %v473 = vadd.f32 %v169, %v472
    %v474 = vpop.f32.mrf.mxu0
    %v475 = vadd.f32 %v173, %v474
    %476 = vmatprep.mubr.bf16.mxu0 0
    %477 = vmatmul.mubr.bf16.gmra.mxu0 %v223
    %v478 = vpop.f32.mrf.mxu0
    %v479 = vadd.f32 %v169, %v478
    %v480 = vpop.f32.mrf.mxu0
    %v481 = vadd.f32 %v173, %v480
    %v482 = vpop.f32.mrf.mxu0
    %v483 = vadd.f32 %v169, %v482
    %v484 = vpop.f32.mrf.mxu0
    %v485 = vadd.f32 %v173, %v484
    %486 = vmatprep.mubr.bf16.mxu0 0
    %487 = vmatmul.mubr.bf16.gmra.mxu0 %v224
    %v488 = vpop.f32.mrf.mxu0
    %v489 = vadd.f32 %v169, %v488
    %v490 = vpop.f32.mrf.mxu0
    %v491 = vadd.f32 %v173, %v490
    %v492 = vpop.f32.mrf.mxu0
    %v493 = vadd.f32 %v169, %v492
    %v494 = vpop.f32.mrf.mxu0
    %v495 = vadd.f32 %v173, %v494
    %496 = vmatprep.mubr.bf16.mxu0 0
    %497 = vmatmul.mubr.bf16.gmra.mxu0 %v225
    %v498 = vpop.f32.mrf.mxu0
    %v499 = vadd.f32 %v169, %v498
    %v500 = vpop.f32.mrf.mxu0
    %v501 = vadd.f32 %v173, %v500
    %v502 = vpop.f32.mrf.mxu0
    %v503 = vadd.f32 %v169, %v502
    %v504 = vpop.f32.mrf.mxu0
    %v505 = vadd.f32 %v173, %v504
    %506 = vdwg.mxu0
    %507 = vmatprep.subr.bf16.mxu0 %v361
    %508 = vmatpush1.bf16.msra.mxu0 %v360
    %509 = vmatprep.subr.bf16.mxu0 %v357
    %510 = vmatpush1.bf16.msra.mxu0 %v356
    %511 = vmatprep.subr.bf16.mxu0 %v353
    %512 = vmatpush1.bf16.msra.mxu0 %v352
    %513 = vmatprep.subr.bf16.mxu0 %v349
    %514 = vmatpush1.bf16.msra.mxu0 %v348
    %515 = vmatprep.subr.bf16.mxu0 %v345
    %516 = vmatpush1.bf16.msra.mxu0 %v344
    %517 = vmatprep.subr.bf16.mxu0 %v341
    %518 = vmatpush1.bf16.msra.mxu0 %v340
    %519 = vmatprep.subr.bf16.mxu0 %v337
    %520 = vmatpush1.bf16.msra.mxu0 %v336
    %521 = vmatprep.subr.bf16.mxu0 %v333
    %522 = vmatpush1.bf16.msra.mxu0 %v332
    %523 = vmatprep.subr.bf16.mxu0 0
    %524 = vmatpush2.bf16.msra.mxu0 0
    %525 = vmatprep.subr.bf16.mxu0 0
    %526 = vmatpush2.bf16.msra.mxu0 0
    %527 = vmatprep.subr.bf16.mxu0 0
    %528 = vmatpush2.bf16.msra.mxu0 0
    %529 = vmatprep.subr.bf16.mxu0 0
    %530 = vmatpush2.bf16.msra.mxu0 0
    %531 = vmatprep.subr.bf16.mxu0 0
    %532 = vmatpush2.bf16.msra.mxu0 0
    %533 = vmatprep.subr.bf16.mxu0 0
    %534 = vmatpush2.bf16.msra.mxu0 0
    %535 = vmatprep.subr.bf16.mxu0 0
    %536 = vmatpush2.bf16.msra.mxu0 0
    %537 = vmatprep.subr.bf16.mxu0 0
    %538 = vmatpush2.bf16.msra.mxu0 0
    %539 = vmatprep.mubr.bf16.mxu0 0
    %540 = vmatmul.mubr.bf16.gmra.mxu0 %v218
    %v541 = vpop.f32.mrf.mxu0
    %v542 = vadd.f32 %v177, %v541
    %v543 = vpop.f32.mrf.mxu0
    %v544 = vadd.f32 %v181, %v543
    %v545 = vpop.f32.mrf.mxu0
    %v546 = vadd.f32 %v177, %v545
    %v547 = vpop.f32.mrf.mxu0
    %v548 = vadd.f32 %v181, %v547
    %549 = vmatprep.mubr.bf16.mxu0 0
    %550 = vmatmul.mubr.bf16.gmra.mxu0 %v219
    %v551 = vpop.f32.mrf.mxu0
    %v552 = vadd.f32 %v177, %v551
    %v553 = vpop.f32.mrf.mxu0
    %v554 = vadd.f32 %v181, %v553
    %v555 = vpop.f32.mrf.mxu0
    %v556 = vadd.f32 %v177, %v555
    %v557 = vpop.f32.mrf.mxu0
    %v558 = vadd.f32 %v181, %v557
    %559 = vmatprep.mubr.bf16.mxu0 0
    %560 = vmatmul.mubr.bf16.gmra.mxu0 %v220
    %v561 = vpop.f32.mrf.mxu0
    %v562 = vadd.f32 %v177, %v561
    %v563 = vpop.f32.mrf.mxu0
    %v564 = vadd.f32 %v181, %v563
    %v565 = vpop.f32.mrf.mxu0
    %v566 = vadd.f32 %v177, %v565
    %v567 = vpop.f32.mrf.mxu0
    %v568 = vadd.f32 %v181, %v567
    %569 = vmatprep.mubr.bf16.mxu0 0
    %570 = vmatmul.mubr.bf16.gmra.mxu0 %v221
    %v571 = vpop.f32.mrf.mxu0
    %v572 = vadd.f32 %v177, %v571
    %v573 = vpop.f32.mrf.mxu0
    %v574 = vadd.f32 %v181, %v573
    %v575 = vpop.f32.mrf.mxu0
    %v576 = vadd.f32 %v177, %v575
    %v577 = vpop.f32.mrf.mxu0
    %v578 = vadd.f32 %v181, %v577
    %579 = vmatprep.mubr.bf16.mxu0 0
    %580 = vmatmul.mubr.bf16.gmra.mxu0 %v222
    %v581 = vpop.f32.mrf.mxu0
    %v582 = vadd.f32 %v177, %v581
    %v583 = vpop.f32.mrf.mxu0
    %v584 = vadd.f32 %v181, %v583
    %v585 = vpop.f32.mrf.mxu0
    %v586 = vadd.f32 %v177, %v585
    %v587 = vpop.f32.mrf.mxu0
    %v588 = vadd.f32 %v181, %v587
    %589 = vmatprep.mubr.bf16.mxu0 0
    %590 = vmatmul.mubr.bf16.gmra.mxu0 %v223
    %v591 = vpop.f32.mrf.mxu0
    %v592 = vadd.f32 %v177, %v591
    %v593 = vpop.f32.mrf.mxu0
    %v594 = vadd.f32 %v181, %v593
    %v595 = vpop.f32.mrf.mxu0
    %v596 = vadd.f32 %v177, %v595
    %v597 = vpop.f32.mrf.mxu0
    %v598 = vadd.f32 %v181, %v597
    %599 = vmatprep.mubr.bf16.mxu0 0
    %600 = vmatmul.mubr.bf16.gmra.mxu0 %v224
    %v601 = vpop.f32.mrf.mxu0
    %v602 = vadd.f32 %v177, %v601
    %v603 = vpop.f32.mrf.mxu0
    %v604 = vadd.f32 %v181, %v603
    %v605 = vpop.f32.mrf.mxu0
    %v606 = vadd.f32 %v177, %v605
    %v607 = vpop.f32.mrf.mxu0
    %v608 = vadd.f32 %v181, %v607
    %609 = vmatprep.mubr.bf16.mxu0 0
    %610 = vmatmul.mubr.bf16.gmra.mxu0 %v225
    %v611 = vpop.f32.mrf.mxu0
    %v612 = vadd.f32 %v177, %v611
    %v613 = vpop.f32.mrf.mxu0
    %v614 = vadd.f32 %v181, %v613
    %v615 = vpop.f32.mrf.mxu0
    %v616 = vadd.f32 %v177, %v615
    %v617 = vpop.f32.mrf.mxu0
    %v618 = vadd.f32 %v181, %v617
    %619 = vdwg.mxu0
    %v620 = vpack.c.bf16 %v433, %v429
    %v621 = vpack.c.bf16 %v435, %v431
    %v622 = vpack.c.bf16 %v546, %v542
    %v623 = vpack.c.bf16 %v548, %v544
    %v624 = vpack.c.bf16 %v443, %v439
    %v625 = vpack.c.bf16 %v445, %v441
    %v626 = vpack.c.bf16 %v556, %v552
    %v627 = vpack.c.bf16 %v558, %v554
    %v628 = vpack.c.bf16 %v453, %v449
    %v629 = vpack.c.bf16 %v455, %v451
    %v630 = vpack.c.bf16 %v566, %v562
    %v631 = vpack.c.bf16 %v568, %v564
    %v632 = vpack.c.bf16 %v463, %v459
    %v633 = vpack.c.bf16 %v465, %v461
    %v634 = vpack.c.bf16 %v576, %v572
    %v635 = vpack.c.bf16 %v578, %v574
    %v636 = vpack.c.bf16 %v473, %v469
    %v637 = vpack.c.bf16 %v475, %v471
    %v638 = vpack.c.bf16 %v586, %v582
    %v639 = vpack.c.bf16 %v588, %v584
    %v640 = vpack.c.bf16 %v483, %v479
    %v641 = vpack.c.bf16 %v485, %v481
    %v642 = vpack.c.bf16 %v596, %v592
    %v643 = vpack.c.bf16 %v598, %v594
    %v644 = vpack.c.bf16 %v493, %v489
    %v645 = vpack.c.bf16 %v495, %v491
    %v646 = vpack.c.bf16 %v606, %v602
    %v647 = vpack.c.bf16 %v608, %v604
    %v648 = vpack.c.bf16 %v503, %v499
    %v649 = vpack.c.bf16 %v505, %v501
    %v650 = vpack.c.bf16 %v616, %v612
    %v651 = vpack.c.bf16 %v618, %v614
    %v684 = vunpack.c.l.b16 %v620
    %v685 = vunpack.c.l.b16 %v621
    %v686 = vunpack.c.l.b16 %v622
    %v687 = vunpack.c.l.b16 %v623
    %v688 = vunpack.c.h.b16 %v620
    %v689 = vunpack.c.h.b16 %v621
    %v690 = vunpack.c.h.b16 %v622
    %v691 = vunpack.c.h.b16 %v623
    %v692 = vunpack.c.l.b16 %v624
    %v693 = vunpack.c.l.b16 %v625
    %v694 = vunpack.c.l.b16 %v626
    %v695 = vunpack.c.l.b16 %v627
    %v696 = vunpack.c.h.b16 %v624
    %v697 = vunpack.c.h.b16 %v625
    %v698 = vunpack.c.h.b16 %v626
    %v699 = vunpack.c.h.b16 %v627
    %v700 = vunpack.c.l.b16 %v628
    %v701 = vunpack.c.l.b16 %v629
    %v702 = vunpack.c.l.b16 %v630
    %v703 = vunpack.c.l.b16 %v631
    %v704 = vunpack.c.h.b16 %v628
    %v705 = vunpack.c.h.b16 %v629
    %v706 = vunpack.c.h.b16 %v630
    %v707 = vunpack.c.h.b16 %v631
    %v708 = vunpack.c.l.b16 %v632
    %v709 = vunpack.c.l.b16 %v633
    %v710 = vunpack.c.l.b16 %v634
    %v711 = vunpack.c.l.b16 %v635
    %v712 = vunpack.c.h.b16 %v632
    %v713 = vunpack.c.h.b16 %v633
    %v714 = vunpack.c.h.b16 %v634
    %v715 = vunpack.c.h.b16 %v635
    %v716 = vunpack.c.l.b16 %v636
    %v717 = vunpack.c.l.b16 %v637
    %v718 = vunpack.c.l.b16 %v638
    %v719 = vunpack.c.l.b16 %v639
    %v720 = vunpack.c.h.b16 %v636
    %v721 = vunpack.c.h.b16 %v637
    %v722 = vunpack.c.h.b16 %v638
    %v723 = vunpack.c.h.b16 %v639
    %v724 = vunpack.c.l.b16 %v640
    %v725 = vunpack.c.l.b16 %v641
    %v726 = vunpack.c.l.b16 %v642
    %v727 = vunpack.c.l.b16 %v643
    %v728 = vunpack.c.h.b16 %v640
    %v729 = vunpack.c.h.b16 %v641
    %v730 = vunpack.c.h.b16 %v642
    %v731 = vunpack.c.h.b16 %v643
    %v732 = vunpack.c.l.b16 %v644
    %v733 = vunpack.c.l.b16 %v645
    %v734 = vunpack.c.l.b16 %v646
    %v735 = vunpack.c.l.b16 %v647
    %v736 = vunpack.c.h.b16 %v644
    %v737 = vunpack.c.h.b16 %v645
    %v738 = vunpack.c.h.b16 %v646
    %v739 = vunpack.c.h.b16 %v647
    %v740 = vunpack.c.l.b16 %v648
    %v741 = vunpack.c.l.b16 %v649
    %v742 = vunpack.c.l.b16 %v650
    %v743 = vunpack.c.l.b16 %v651
    %v744 = vunpack.c.h.b16 %v648
    %v745 = vunpack.c.h.b16 %v649
    %v746 = vunpack.c.h.b16 %v650
    %v747 = vunpack.c.h.b16 %v651
    %v748 = vpack.c.b16 %v685, %v684
    %v749 = vpack.c.b16 %v687, %v686
    %v750 = vpack.c.b16 %v689, %v688
    %v751 = vpack.c.b16 %v691, %v690
    %v752 = vpack.c.b16 %v693, %v692
    %v753 = vpack.c.b16 %v695, %v694
    %v754 = vpack.c.b16 %v697, %v696
    %v755 = vpack.c.b16 %v699, %v698
    %v756 = vpack.c.b16 %v701, %v700
    %v757 = vpack.c.b16 %v703, %v702
    %v758 = vpack.c.b16 %v705, %v704
    %v759 = vpack.c.b16 %v707, %v706
    %v760 = vpack.c.b16 %v709, %v708
    %v761 = vpack.c.b16 %v711, %v710
    %v762 = vpack.c.b16 %v713, %v712
    %v763 = vpack.c.b16 %v715, %v714
    %v764 = vpack.c.b16 %v717, %v716
    %v765 = vpack.c.b16 %v719, %v718
    %v766 = vpack.c.b16 %v721, %v720
    %v767 = vpack.c.b16 %v723, %v722
    %v768 = vpack.c.b16 %v725, %v724
    %v769 = vpack.c.b16 %v727, %v726
    %v770 = vpack.c.b16 %v729, %v728
    %v771 = vpack.c.b16 %v731, %v730
    %v772 = vpack.c.b16 %v733, %v732
    %v773 = vpack.c.b16 %v735, %v734
    %v774 = vpack.c.b16 %v737, %v736
    %v775 = vpack.c.b16 %v739, %v738
    %v776 = vpack.c.b16 %v741, %v740
    %v777 = vpack.c.b16 %v743, %v742
    %v778 = vpack.c.b16 %v745, %v744
    %v779 = vpack.c.b16 %v747, %v746
    %812 = vst [vmem:[#allocation2] sm:$0xff] %v748
    %813 = vst [vmem:[#allocation2 + $0x8] sm:$0xff] %v749
    %814 = vst [vmem:[#allocation2 + $0x10] sm:$0xff] %v750
    %815 = vst [vmem:[#allocation2 + $0x18] sm:$0xff] %v751
    %816 = vst [vmem:[#allocation2 + $0x20] sm:$0xff] %v752
    %817 = vst [vmem:[#allocation2 + $0x28] sm:$0xff] %v753
    %818 = vst [vmem:[#allocation2 + $0x30] sm:$0xff] %v754
    %819 = vst [vmem:[#allocation2 + $0x38] sm:$0xff] %v755
    %820 = vst [vmem:[#allocation2 + $0x40] sm:$0xff] %v756
    %821 = vst [vmem:[#allocation2 + $0x48] sm:$0xff] %v757
    %822 = vst [vmem:[#allocation2 + $0x50] sm:$0xff] %v758
    %823 = vst [vmem:[#allocation2 + $0x58] sm:$0xff] %v759
    %824 = vst [vmem:[#allocation2 + $0x60] sm:$0xff] %v760
    %825 = vst [vmem:[#allocation2 + $0x68] sm:$0xff] %v761
    %826 = vst [vmem:[#allocation2 + $0x70] sm:$0xff] %v762
    %827 = vst [vmem:[#allocation2 + $0x78] sm:$0xff] %v763
    %828 = vst [vmem:[#allocation2 + $0x80] sm:$0xff] %v764
    %829 = vst [vmem:[#allocation2 + $0x88] sm:$0xff] %v765
    %830 = vst [vmem:[#allocation2 + $0x90] sm:$0xff] %v766
    %831 = vst [vmem:[#allocation2 + $0x98] sm:$0xff] %v767
    %832 = vst [vmem:[#allocation2 + $0xa0] sm:$0xff] %v768
    %833 = vst [vmem:[#allocation2 + $0xa8] sm:$0xff] %v769
    %834 = vst [vmem:[#allocation2 + $0xb0] sm:$0xff] %v770
    %835 = vst [vmem:[#allocation2 + $0xb8] sm:$0xff] %v771
    %836 = vst [vmem:[#allocation2 + $0xc0] sm:$0xff] %v772
    %837 = vst [vmem:[#allocation2 + $0xc8] sm:$0xff] %v773
    %838 = vst [vmem:[#allocation2 + $0xd0] sm:$0xff] %v774
    %839 = vst [vmem:[#allocation2 + $0xd8] sm:$0xff] %v775
    %840 = vst [vmem:[#allocation2 + $0xe0] sm:$0xff] %v776
    %841 = vst [vmem:[#allocation2 + $0xe8] sm:$0xff] %v777
    %842 = vst [vmem:[#allocation2 + $0xf0] sm:$0xff] %v778
    %843 = vst [vmem:[#allocation2 + $0xf8] sm:$0xff] %v779
    %v844 = vld [vmem:[#allocation9] sm:$0xff]
    %v845 = vld [vmem:[#allocation9 + $0x8] sm:$0xff]
    %v846 = vld [vmem:[#allocation9 + $0x10] sm:$0xff]
    %v847 = vld [vmem:[#allocation9 + $0x18] sm:$0xff]
    %v848 = vld [vmem:[#allocation9 + $0x20] sm:$0xff]
    %v849 = vld [vmem:[#allocation9 + $0x28] sm:$0xff]
    %v850 = vld [vmem:[#allocation9 + $0x30] sm:$0xff]
    %v851 = vld [vmem:[#allocation9 + $0x38] sm:$0xff]
    %v852 = vld [vmem:[#allocation9 + $0x40] sm:$0xff]
    %v853 = vld [vmem:[#allocation9 + $0x48] sm:$0xff]
    %v854 = vld [vmem:[#allocation9 + $0x50] sm:$0xff]
    %v855 = vld [vmem:[#allocation9 + $0x58] sm:$0xff]
    %v856 = vld [vmem:[#allocation9 + $0x60] sm:$0xff]
    %v857 = vld [vmem:[#allocation9 + $0x68] sm:$0xff]
    %v858 = vld [vmem:[#allocation9 + $0x70] sm:$0xff]
    %v859 = vld [vmem:[#allocation9 + $0x78] sm:$0xff]
    %v860 = vld [vmem:[#allocation9 + $0x80] sm:$0xff]
    %v861 = vld [vmem:[#allocation9 + $0x88] sm:$0xff]
    %v862 = vld [vmem:[#allocation9 + $0x90] sm:$0xff]
    %v863 = vld [vmem:[#allocation9 + $0x98] sm:$0xff]
    %v864 = vld [vmem:[#allocation9 + $0xa0] sm:$0xff]
    %v865 = vld [vmem:[#allocation9 + $0xa8] sm:$0xff]
    %v866 = vld [vmem:[#allocation9 + $0xb0] sm:$0xff]
    %v867 = vld [vmem:[#allocation9 + $0xb8] sm:$0xff]
    %v868 = vld [vmem:[#allocation9 + $0xc0] sm:$0xff]
    %v869 = vld [vmem:[#allocation9 + $0xc8] sm:$0xff]
    %v870 = vld [vmem:[#allocation9 + $0xd0] sm:$0xff]
    %v871 = vld [vmem:[#allocation9 + $0xd8] sm:$0xff]
    %v872 = vld [vmem:[#allocation9 + $0xe0] sm:$0xff]
    %v873 = vld [vmem:[#allocation9 + $0xe8] sm:$0xff]
    %v874 = vld [vmem:[#allocation9 + $0xf0] sm:$0xff]
    %v875 = vld [vmem:[#allocation9 + $0xf8] sm:$0xff]
    %s876 = smul.u32 0, 4
    %s877 = smul.addr %s876, 4
    %s878 = scalar_lea.vmem [#allocation2], %s877
    %v879 = vld [vmem:[%s878] sm:$0xff]
    %v880 = vld [vmem:[%s878 + $0x8] sm:$0xff]
    %v881 = vld [vmem:[%s878 + $0x10] sm:$0xff]
    %v882 = vld [vmem:[%s878 + $0x18] sm:$0xff]
    %v883 = vunpack.c.l.bf16 %v879
    %v884 = vunpack.c.h.bf16 %v879
    %v885 = vunpack.c.l.bf16 %v880
    %v886 = vunpack.c.h.bf16 %v880
    %v887 = vunpack.c.l.bf16 %v881
    %v888 = vunpack.c.h.bf16 %v881
    %v889 = vunpack.c.l.bf16 %v882
    %v890 = vunpack.c.h.bf16 %v882
    %v923 = vunpack.c.l.b16 %v844
    %v924 = vunpack.c.h.b16 %v844
    %v925 = vunpack.c.l.b16 %v845
    %v926 = vunpack.c.h.b16 %v845
    %v927 = vunpack.c.l.b16 %v846
    %v928 = vunpack.c.h.b16 %v846
    %v929 = vunpack.c.l.b16 %v847
    %v930 = vunpack.c.h.b16 %v847
    %v931 = vunpack.c.l.b16 %v848
    %v932 = vunpack.c.h.b16 %v848
    %v933 = vunpack.c.l.b16 %v849
    %v934 = vunpack.c.h.b16 %v849
    %v935 = vunpack.c.l.b16 %v850
    %v936 = vunpack.c.h.b16 %v850
    %v937 = vunpack.c.l.b16 %v851
    %v938 = vunpack.c.h.b16 %v851
    %v939 = vunpack.c.l.b16 %v852
    %v940 = vunpack.c.h.b16 %v852
    %v941 = vunpack.c.l.b16 %v853
    %v942 = vunpack.c.h.b16 %v853
    %v943 = vunpack.c.l.b16 %v854
    %v944 = vunpack.c.h.b16 %v854
    %v945 = vunpack.c.l.b16 %v855
    %v946 = vunpack.c.h.b16 %v855
    %v947 = vunpack.c.l.b16 %v856
    %v948 = vunpack.c.h.b16 %v856
    %v949 = vunpack.c.l.b16 %v857
    %v950 = vunpack.c.h.b16 %v857
    %v951 = vunpack.c.l.b16 %v858
    %v952 = vunpack.c.h.b16 %v858
    %v953 = vunpack.c.l.b16 %v859
    %v954 = vunpack.c.h.b16 %v859
    %v955 = vunpack.c.l.b16 %v860
    %v956 = vunpack.c.h.b16 %v860
    %v957 = vunpack.c.l.b16 %v861
    %v958 = vunpack.c.h.b16 %v861
    %v959 = vunpack.c.l.b16 %v862
    %v960 = vunpack.c.h.b16 %v862
    %v961 = vunpack.c.l.b16 %v863
    %v962 = vunpack.c.h.b16 %v863
    %v963 = vunpack.c.l.b16 %v864
    %v964 = vunpack.c.h.b16 %v864
    %v965 = vunpack.c.l.b16 %v865
    %v966 = vunpack.c.h.b16 %v865
    %v967 = vunpack.c.l.b16 %v866
    %v968 = vunpack.c.h.b16 %v866
    %v969 = vunpack.c.l.b16 %v867
    %v970 = vunpack.c.h.b16 %v867
    %v971 = vunpack.c.l.b16 %v868
    %v972 = vunpack.c.h.b16 %v868
    %v973 = vunpack.c.l.b16 %v869
    %v974 = vunpack.c.h.b16 %v869
    %v975 = vunpack.c.l.b16 %v870
    %v976 = vunpack.c.h.b16 %v870
    %v977 = vunpack.c.l.b16 %v871
    %v978 = vunpack.c.h.b16 %v871
    %v979 = vunpack.c.l.b16 %v872
    %v980 = vunpack.c.h.b16 %v872
    %v981 = vunpack.c.l.b16 %v873
    %v982 = vunpack.c.h.b16 %v873
    %v983 = vunpack.c.l.b16 %v874
    %v984 = vunpack.c.h.b16 %v874
    %v985 = vunpack.c.l.b16 %v875
    %v986 = vunpack.c.h.b16 %v875
    %v987 = vpack.c.b16 %v927, %v923
    %v988 = vpack.c.b16 %v928, %v924
    %v989 = vpack.c.b16 %v929, %v925
    %v990 = vpack.c.b16 %v930, %v926
    %v991 = vpack.c.b16 %v935, %v931
    %v992 = vpack.c.b16 %v936, %v932
    %v993 = vpack.c.b16 %v937, %v933
    %v994 = vpack.c.b16 %v938, %v934
    %v995 = vpack.c.b16 %v943, %v939
    %v996 = vpack.c.b16 %v944, %v940
    %v997 = vpack.c.b16 %v945, %v941
    %v998 = vpack.c.b16 %v946, %v942
    %v999 = vpack.c.b16 %v951, %v947
    %v1000 = vpack.c.b16 %v952, %v948
    %v1001 = vpack.c.b16 %v953, %v949
    %v1002 = vpack.c.b16 %v954, %v950
    %v1003 = vpack.c.b16 %v959, %v955
    %v1004 = vpack.c.b16 %v960, %v956
    %v1005 = vpack.c.b16 %v961, %v957
    %v1006 = vpack.c.b16 %v962, %v958
    %v1007 = vpack.c.b16 %v967, %v963
    %v1008 = vpack.c.b16 %v968, %v964
    %v1009 = vpack.c.b16 %v969, %v965
    %v1010 = vpack.c.b16 %v970, %v966
    %v1011 = vpack.c.b16 %v975, %v971
    %v1012 = vpack.c.b16 %v976, %v972
    %v1013 = vpack.c.b16 %v977, %v973
    %v1014 = vpack.c.b16 %v978, %v974
    %v1015 = vpack.c.b16 %v983, %v979
    %v1016 = vpack.c.b16 %v984, %v980
    %v1017 = vpack.c.b16 %v985, %v981
    %v1018 = vpack.c.b16 %v986, %v982
    %1051 = vmatprep.subr.bf16.mxu0 %v1016
    %1052 = vmatpush1.bf16.msra.mxu0 %v1015
    %1053 = vmatprep.subr.bf16.mxu0 %v1012
    %1054 = vmatpush1.bf16.msra.mxu0 %v1011
    %1055 = vmatprep.subr.bf16.mxu0 %v1008
    %1056 = vmatpush1.bf16.msra.mxu0 %v1007
    %1057 = vmatprep.subr.bf16.mxu0 %v1004
    %1058 = vmatpush1.bf16.msra.mxu0 %v1003
    %1059 = vmatprep.subr.bf16.mxu0 %v1000
    %1060 = vmatpush1.bf16.msra.mxu0 %v999
    %1061 = vmatprep.subr.bf16.mxu0 %v996
    %1062 = vmatpush1.bf16.msra.mxu0 %v995
    %1063 = vmatprep.subr.bf16.mxu0 %v992
    %1064 = vmatpush1.bf16.msra.mxu0 %v991
    %1065 = vmatprep.subr.bf16.mxu0 %v988
    %1066 = vmatpush1.bf16.msra.mxu0 %v987
    %1067 = vmatprep.subr.bf16.mxu0 0
    %1068 = vmatpush2.bf16.msra.mxu0 0
    %1069 = vmatprep.subr.bf16.mxu0 0
    %1070 = vmatpush2.bf16.msra.mxu0 0
    %1071 = vmatprep.subr.bf16.mxu0 0
    %1072 = vmatpush2.bf16.msra.mxu0 0
    %1073 = vmatprep.subr.bf16.mxu0 0
    %1074 = vmatpush2.bf16.msra.mxu0 0
    %1075 = vmatprep.subr.bf16.mxu0 0
    %1076 = vmatpush2.bf16.msra.mxu0 0
    %1077 = vmatprep.subr.bf16.mxu0 0
    %1078 = vmatpush2.bf16.msra.mxu0 0
    %1079 = vmatprep.subr.bf16.mxu0 0
    %1080 = vmatpush2.bf16.msra.mxu0 0
    %1081 = vmatprep.subr.bf16.mxu0 0
    %1082 = vmatpush2.bf16.msra.mxu0 0
    %1083 = vmatprep.mubr.bf16.mxu0 0
    %1084 = vmatmul.mubr.bf16.gmra.mxu0 0
    %v1085 = vpop.f32.mrf.mxu0
    %v1086 = vadd.f32 0.0, %v1085
    %v1087 = vpop.f32.mrf.mxu0
    %v1088 = vadd.f32 0.0, %v1087
    %v1089 = vpop.f32.mrf.mxu0
    %v1090 = vadd.f32 0.0, %v1089
    %v1091 = vpop.f32.mrf.mxu0
    %v1092 = vadd.f32 0.0, %v1091
    %1093 = vdwg.mxu0
    %1094 = vmatprep.subr.bf16.mxu0 %v1018
    %1095 = vmatpush1.bf16.msra.mxu0 %v1017
    %1096 = vmatprep.subr.bf16.mxu0 %v1014
    %1097 = vmatpush1.bf16.msra.mxu0 %v1013
    %1098 = vmatprep.subr.bf16.mxu0 %v1010
    %1099 = vmatpush1.bf16.msra.mxu0 %v1009
    %1100 = vmatprep.subr.bf16.mxu0 %v1006
    %1101 = vmatpush1.bf16.msra.mxu0 %v1005
    %1102 = vmatprep.subr.bf16.mxu0 %v1002
    %1103 = vmatpush1.bf16.msra.mxu0 %v1001
    %1104 = vmatprep.subr.bf16.mxu0 %v998
    %1105 = vmatpush1.bf16.msra.mxu0 %v997
    %1106 = vmatprep.subr.bf16.mxu0 %v994
    %1107 = vmatpush1.bf16.msra.mxu0 %v993
    %1108 = vmatprep.subr.bf16.mxu0 %v990
    %1109 = vmatpush1.bf16.msra.mxu0 %v989
    %1110 = vmatprep.subr.bf16.mxu0 0
    %1111 = vmatpush2.bf16.msra.mxu0 0
    %1112 = vmatprep.subr.bf16.mxu0 0
    %1113 = vmatpush2.bf16.msra.mxu0 0
    %1114 = vmatprep.subr.bf16.mxu0 0
    %1115 = vmatpush2.bf16.msra.mxu0 0
    %1116 = vmatprep.subr.bf16.mxu0 0
    %1117 = vmatpush2.bf16.msra.mxu0 0
    %1118 = vmatprep.subr.bf16.mxu0 0
    %1119 = vmatpush2.bf16.msra.mxu0 0
    %1120 = vmatprep.subr.bf16.mxu0 0
    %1121 = vmatpush2.bf16.msra.mxu0 0
    %1122 = vmatprep.subr.bf16.mxu0 0
    %1123 = vmatpush2.bf16.msra.mxu0 0
    %1124 = vmatprep.subr.bf16.mxu0 0
    %1125 = vmatpush2.bf16.msra.mxu0 0
    %1126 = vmatprep.mubr.bf16.mxu0 0
    %1127 = vmatmul.mubr.bf16.gmra.mxu0 0
    %v1128 = vpop.f32.mrf.mxu0
    %v1129 = vadd.f32 0.0, %v1128
    %v1130 = vpop.f32.mrf.mxu0
    %v1131 = vadd.f32 0.0, %v1130
    %v1132 = vpop.f32.mrf.mxu0
    %v1133 = vadd.f32 0.0, %v1132
    %v1134 = vpop.f32.mrf.mxu0
    %v1135 = vadd.f32 0.0, %v1134
    %1136 = vdwg.mxu0
    %v1137 = vadd.f32 %v883, %v1086
    %v1138 = vadd.f32 %v884, %v1088
    %v1139 = vadd.f32 %v885, %v1129
    %v1140 = vadd.f32 %v886, %v1131
    %v1141 = vadd.f32 %v887, %v1090
    %v1142 = vadd.f32 %v888, %v1092
    %v1143 = vadd.f32 %v889, %v1133
    %v1144 = vadd.f32 %v890, %v1135
    %v1145 = vxor.u32 %v1137, 2147483648
    %v1146 = vxor.u32 %v1141, 2147483648
    %v1147 = vmul.f32 %v1145, 1.442695
    %v1148 = vpow.pop %v1147
    %v1149 = vmul.f32 %v1146, 1.442695
    %v1150 = vpow.pop %v1149
    %v1151 = vadd.f32 %v1148, 1.0
    %v1152 = vadd.f32 %v1150, 1.0
    %v1153 = vrcp.pop %v1151
    %v1154 = vmul.f32 1.0, %v1153
    %v1155 = vrcp.pop %v1152
    %v1156 = vmul.f32 1.0, %v1155
    %v1157 = vxor.u32 %v1138, 2147483648
    %v1158 = vxor.u32 %v1142, 2147483648
    %v1159 = vmul.f32 %v1157, 1.442695
    %v1160 = vpow.pop %v1159
    %v1161 = vmul.f32 %v1158, 1.442695
    %v1162 = vpow.pop %v1161
    %v1163 = vadd.f32 %v1160, 1.0
    %v1164 = vadd.f32 %v1162, 1.0
    %v1165 = vrcp.pop %v1163
    %v1166 = vmul.f32 1.0, %v1165
    %v1167 = vrcp.pop %v1164
    %v1168 = vmul.f32 1.0, %v1167
    %v1169 = vtanh.pop %v1139
    %v1170 = vtanh.pop %v1143
    %v1171 = vxor.u32 %v1140, 2147483648
    %v1172 = vxor.u32 %v1144, 2147483648
    %v1173 = vmul.f32 %v1171, 1.442695
    %v1174 = vpow.pop %v1173
    %v1175 = vmul.f32 %v1172, 1.442695
    %v1176 = vpow.pop %v1175
    %v1177 = vadd.f32 %v1174, 1.0
    %v1178 = vadd.f32 %v1176, 1.0
    %v1179 = vrcp.pop %v1177
    %v1180 = vmul.f32 1.0, %v1179
    %v1181 = vrcp.pop %v1178
    %v1182 = vmul.f32 1.0, %v1181
    %v1183 = vmul.f32 %v1166, 0.0
    %v1184 = vmul.f32 %v1168, 0.0
    %v1185 = vmul.f32 %v1154, %v1169
    %v1186 = vmul.f32 %v1156, %v1170
    %v1187 = vadd.f32 %v1183, %v1185
    %v1188 = vadd.f32 %v1184, %v1186
    %v1189 = vtanh.pop %v1187
    %v1190 = vtanh.pop %v1188
    %v1191 = vmul.f32 %v1180, %v1189
    %v1192 = vmul.f32 %v1182, %v1190
    %v1193 = vpack.c.bf16 %v1192, %v1191
    %v1195 = vunpack.c.l.b16 %v1193
    %v1196 = vunpack.c.h.b16 %v1193
    %v1197 = vpack.c.b16 %v1195, %v1195
    %v1198 = vpack.c.b16 %v1196, %v1196
    %1201 = vst [vmem:[#allocation3] sm:$0xf] %v1197
    %1202 = vst [vmem:[#allocation3 + $0x4] sm:$0xf] %v1198
    %s1203 = smul.u32 2, 4
    %s1204 = smul.addr %s1203, 4
    %s1205 = scalar_lea.vmem [#allocation2], %s1204
    %v1206 = vld [vmem:[%s1205] sm:$0xff]
    %v1207 = vld [vmem:[%s1205 + $0x8] sm:$0xff]
    %v1208 = vld [vmem:[%s1205 + $0x10] sm:$0xff]
    %v1209 = vld [vmem:[%s1205 + $0x18] sm:$0xff]
    %v1210 = vunpack.c.l.bf16 %v1206
    %v1211 = vunpack.c.h.bf16 %v1206
    %v1212 = vunpack.c.l.bf16 %v1207
    %v1213 = vunpack.c.h.bf16 %v1207
    %v1214 = vunpack.c.l.bf16 %v1208
    %v1215 = vunpack.c.h.bf16 %v1208
    %v1216 = vunpack.c.l.bf16 %v1209
    %v1217 = vunpack.c.h.bf16 %v1209
    %1218 = vmatprep.subr.bf16.mxu0 %v1016
    %1219 = vmatpush1.bf16.msra.mxu0 %v1015
    %1220 = vmatprep.subr.bf16.mxu0 %v1012
    %1221 = vmatpush1.bf16.msra.mxu0 %v1011
    %1222 = vmatprep.subr.bf16.mxu0 %v1008
    %1223 = vmatpush1.bf16.msra.mxu0 %v1007
    %1224 = vmatprep.subr.bf16.mxu0 %v1004
    %1225 = vmatpush1.bf16.msra.mxu0 %v1003
    %1226 = vmatprep.subr.bf16.mxu0 %v1000
    %1227 = vmatpush1.bf16.msra.mxu0 %v999
    %1228 = vmatprep.subr.bf16.mxu0 %v996
    %1229 = vmatpush1.bf16.msra.mxu0 %v995
    %1230 = vmatprep.subr.bf16.mxu0 %v992
    %1231 = vmatpush1.bf16.msra.mxu0 %v991
    %1232 = vmatprep.subr.bf16.mxu0 %v988
    %1233 = vmatpush1.bf16.msra.mxu0 %v987
    %1234 = vmatprep.subr.bf16.mxu0 0
    %1235 = vmatpush2.bf16.msra.mxu0 0
    %1236 = vmatprep.subr.bf16.mxu0 0
    %1237 = vmatpush2.bf16.msra.mxu0 0
    %1238 = vmatprep.subr.bf16.mxu0 0
    %1239 = vmatpush2.bf16.msra.mxu0 0
    %1240 = vmatprep.subr.bf16.mxu0 0
    %1241 = vmatpush2.bf16.msra.mxu0 0
    %1242 = vmatprep.subr.bf16.mxu0 0
    %1243 = vmatpush2.bf16.msra.mxu0 0
    %1244 = vmatprep.subr.bf16.mxu0 0
    %1245 = vmatpush2.bf16.msra.mxu0 0
    %1246 = vmatprep.subr.bf16.mxu0 0
    %1247 = vmatpush2.bf16.msra.mxu0 0
    %1248 = vmatprep.subr.bf16.mxu0 0
    %1249 = vmatpush2.bf16.msra.mxu0 0
    %1250 = vmatprep.mubr.bf16.mxu0 0
    %1251 = vmatmul.mubr.bf16.gmra.mxu0 %v1193
    %v1252 = vpop.f32.mrf.mxu0
    %v1253 = vadd.f32 0.0, %v1252
    %v1254 = vpop.f32.mrf.mxu0
    %v1255 = vadd.f32 0.0, %v1254
    %v1256 = vpop.f32.mrf.mxu0
    %v1257 = vadd.f32 0.0, %v1256
    %v1258 = vpop.f32.mrf.mxu0
    %v1259 = vadd.f32 0.0, %v1258
    %1260 = vdwg.mxu0
    %1261 = vmatprep.subr.bf16.mxu0 %v1018
    %1262 = vmatpush1.bf16.msra.mxu0 %v1017
    %1263 = vmatprep.subr.bf16.mxu0 %v1014
    %1264 = vmatpush1.bf16.msra.mxu0 %v1013
    %1265 = vmatprep.subr.bf16.mxu0 %v1010
    %1266 = vmatpush1.bf16.msra.mxu0 %v1009
    %1267 = vmatprep.subr.bf16.mxu0 %v1006
    %1268 = vmatpush1.bf16.msra.mxu0 %v1005
    %1269 = vmatprep.subr.bf16.mxu0 %v1002
    %1270 = vmatpush1.bf16.msra.mxu0 %v1001
    %1271 = vmatprep.subr.bf16.mxu0 %v998
    %1272 = vmatpush1.bf16.msra.mxu0 %v997
    %1273 = vmatprep.subr.bf16.mxu0 %v994
    %1274 = vmatpush1.bf16.msra.mxu0 %v993
    %1275 = vmatprep.subr.bf16.mxu0 %v990
    %1276 = vmatpush1.bf16.msra.mxu0 %v989
    %1277 = vmatprep.subr.bf16.mxu0 0
    %1278 = vmatpush2.bf16.msra.mxu0 0
    %1279 = vmatprep.subr.bf16.mxu0 0
    %1280 = vmatpush2.bf16.msra.mxu0 0
    %1281 = vmatprep.subr.bf16.mxu0 0
    %1282 = vmatpush2.bf16.msra.mxu0 0
    %1283 = vmatprep.subr.bf16.mxu0 0
    %1284 = vmatpush2.bf16.msra.mxu0 0
    %1285 = vmatprep.subr.bf16.mxu0 0
    %1286 = vmatpush2.bf16.msra.mxu0 0
    %1287 = vmatprep.subr.bf16.mxu0 0
    %1288 = vmatpush2.bf16.msra.mxu0 0
    %1289 = vmatprep.subr.bf16.mxu0 0
    %1290 = vmatpush2.bf16.msra.mxu0 0
    %1291 = vmatprep.subr.bf16.mxu0 0
    %1292 = vmatpush2.bf16.msra.mxu0 0
    %1293 = vmatprep.mubr.bf16.mxu0 0
    %1294 = vmatmul.mubr.bf16.gmra.mxu0 %v1193
    %v1295 = vpop.f32.mrf.mxu0
    %v1296 = vadd.f32 0.0, %v1295
    %v1297 = vpop.f32.mrf.mxu0
    %v1298 = vadd.f32 0.0, %v1297
    %v1299 = vpop.f32.mrf.mxu0
    %v1300 = vadd.f32 0.0, %v1299
    %v1301 = vpop.f32.mrf.mxu0
    %v1302 = vadd.f32 0.0, %v1301
    %1303 = vdwg.mxu0
    %v1304 = vadd.f32 %v1210, %v1253
    %v1305 = vadd.f32 %v1211, %v1255
    %v1306 = vadd.f32 %v1212, %v1296
    %v1307 = vadd.f32 %v1213, %v1298
    %v1308 = vadd.f32 %v1214, %v1257
    %v1309 = vadd.f32 %v1215, %v1259
    %v1310 = vadd.f32 %v1216, %v1300
    %v1311 = vadd.f32 %v1217, %v1302
    %v1312 = vxor.u32 %v1304, 2147483648
    %v1313 = vxor.u32 %v1308, 2147483648
    %v1314 = vmul.f32 %v1312, 1.442695
    %v1315 = vpow.pop %v1314
    %v1316 = vmul.f32 %v1313, 1.442695
    %v1317 = vpow.pop %v1316
    %v1318 = vadd.f32 %v1315, 1.0
    %v1319 = vadd.f32 %v1317, 1.0
    %v1320 = vrcp.pop %v1318
    %v1321 = vmul.f32 1.0, %v1320
    %v1322 = vrcp.pop %v1319
    %v1323 = vmul.f32 1.0, %v1322
    %v1324 = vxor.u32 %v1305, 2147483648
    %v1325 = vxor.u32 %v1309, 2147483648
    %v1326 = vmul.f32 %v1324, 1.442695
    %v1327 = vpow.pop %v1326
    %v1328 = vmul.f32 %v1325, 1.442695
    %v1329 = vpow.pop %v1328
    %v1330 = vadd.f32 %v1327, 1.0
    %v1331 = vadd.f32 %v1329, 1.0
    %v1332 = vrcp.pop %v1330
    %v1333 = vmul.f32 1.0, %v1332
    %v1334 = vrcp.pop %v1331
    %v1335 = vmul.f32 1.0, %v1334
    %v1336 = vtanh.pop %v1306
    %v1337 = vtanh.pop %v1310
    %v1338 = vxor.u32 %v1307, 2147483648
    %v1339 = vxor.u32 %v1311, 2147483648
    %v1340 = vmul.f32 %v1338, 1.442695
    %v1341 = vpow.pop %v1340
    %v1342 = vmul.f32 %v1339, 1.442695
    %v1343 = vpow.pop %v1342
    %v1344 = vadd.f32 %v1341, 1.0
    %v1345 = vadd.f32 %v1343, 1.0
    %v1346 = vrcp.pop %v1344
    %v1347 = vmul.f32 1.0, %v1346
    %v1348 = vrcp.pop %v1345
    %v1349 = vmul.f32 1.0, %v1348
    %v1350 = vmul.f32 %v1333, %v1187
    %v1351 = vmul.f32 %v1335, %v1188
    %v1352 = vmul.f32 %v1321, %v1336
    %v1353 = vmul.f32 %v1323, %v1337
    %v1354 = vadd.f32 %v1350, %v1352
    %v1355 = vadd.f32 %v1351, %v1353
    %v1356 = vtanh.pop %v1354
    %v1357 = vtanh.pop %v1355
    %v1358 = vmul.f32 %v1347, %v1356
    %v1359 = vmul.f32 %v1349, %v1357
    %v1360 = vpack.c.bf16 %v1359, %v1358
    %v1362 = vunpack.c.l.b16 %v1360
    %v1363 = vunpack.c.h.b16 %v1360
    %v1364 = vpack.c.b16 %v1362, %v1362
    %v1365 = vpack.c.b16 %v1363, %v1363
    %s1368 = scalar_lea.vmem [#allocation3], 8
    %1369 = vst [vmem:[%s1368] sm:$0xf] %v1364
    %1370 = vst [vmem:[%s1368 + $0x4] sm:$0xf] %v1365
    %s1371 = smul.u32 4, 4
    %s1372 = smul.addr %s1371, 4
    %s1373 = scalar_lea.vmem [#allocation2], %s1372
    %v1374 = vld [vmem:[%s1373] sm:$0xff]
    %v1375 = vld [vmem:[%s1373 + $0x8] sm:$0xff]
    %v1376 = vld [vmem:[%s1373 + $0x10] sm:$0xff]
    %v1377 = vld [vmem:[%s1373 + $0x18] sm:$0xff]
    %v1378 = vunpack.c.l.bf16 %v1374
    %v1379 = vunpack.c.h.bf16 %v1374
    %v1380 = vunpack.c.l.bf16 %v1375
    %v1381 = vunpack.c.h.bf16 %v1375
    %v1382 = vunpack.c.l.bf16 %v1376
    %v1383 = vunpack.c.h.bf16 %v1376
    %v1384 = vunpack.c.l.bf16 %v1377
    %v1385 = vunpack.c.h.bf16 %v1377
    %1386 = vmatprep.subr.bf16.mxu0 %v1016
    %1387 = vmatpush1.bf16.msra.mxu0 %v1015
    %1388 = vmatprep.subr.bf16.mxu0 %v1012
    %1389 = vmatpush1.bf16.msra.mxu0 %v1011
    %1390 = vmatprep.subr.bf16.mxu0 %v1008
    %1391 = vmatpush1.bf16.msra.mxu0 %v1007
    %1392 = vmatprep.subr.bf16.mxu0 %v1004
    %1393 = vmatpush1.bf16.msra.mxu0 %v1003
    %1394 = vmatprep.subr.bf16.mxu0 %v1000
    %1395 = vmatpush1.bf16.msra.mxu0 %v999
    %1396 = vmatprep.subr.bf16.mxu0 %v996
    %1397 = vmatpush1.bf16.msra.mxu0 %v995
    %1398 = vmatprep.subr.bf16.mxu0 %v992
    %1399 = vmatpush1.bf16.msra.mxu0 %v991
    %1400 = vmatprep.subr.bf16.mxu0 %v988
    %1401 = vmatpush1.bf16.msra.mxu0 %v987
    %1402 = vmatprep.subr.bf16.mxu0 0
    %1403 = vmatpush2.bf16.msra.mxu0 0
    %1404 = vmatprep.subr.bf16.mxu0 0
    %1405 = vmatpush2.bf16.msra.mxu0 0
    %1406 = vmatprep.subr.bf16.mxu0 0
    %1407 = vmatpush2.bf16.msra.mxu0 0
    %1408 = vmatprep.subr.bf16.mxu0 0
    %1409 = vmatpush2.bf16.msra.mxu0 0
    %1410 = vmatprep.subr.bf16.mxu0 0
    %1411 = vmatpush2.bf16.msra.mxu0 0
    %1412 = vmatprep.subr.bf16.mxu0 0
    %1413 = vmatpush2.bf16.msra.mxu0 0
    %1414 = vmatprep.subr.bf16.mxu0 0
    %1415 = vmatpush2.bf16.msra.mxu0 0
    %1416 = vmatprep.subr.bf16.mxu0 0
    %1417 = vmatpush2.bf16.msra.mxu0 0
    %1418 = vmatprep.mubr.bf16.mxu0 0
    %1419 = vmatmul.mubr.bf16.gmra.mxu0 %v1360
    %v1420 = vpop.f32.mrf.mxu0
    %v1421 = vadd.f32 0.0, %v1420
    %v1422 = vpop.f32.mrf.mxu0
    %v1423 = vadd.f32 0.0, %v1422
    %v1424 = vpop.f32.mrf.mxu0
    %v1425 = vadd.f32 0.0, %v1424
    %v1426 = vpop.f32.mrf.mxu0
    %v1427 = vadd.f32 0.0, %v1426
    %1428 = vdwg.mxu0
    %1429 = vmatprep.subr.bf16.mxu0 %v1018
    %1430 = vmatpush1.bf16.msra.mxu0 %v1017
    %1431 = vmatprep.subr.bf16.mxu0 %v1014
    %1432 = vmatpush1.bf16.msra.mxu0 %v1013
    %1433 = vmatprep.subr.bf16.mxu0 %v1010
    %1434 = vmatpush1.bf16.msra.mxu0 %v1009
    %1435 = vmatprep.subr.bf16.mxu0 %v1006
    %1436 = vmatpush1.bf16.msra.mxu0 %v1005
    %1437 = vmatprep.subr.bf16.mxu0 %v1002
    %1438 = vmatpush1.bf16.msra.mxu0 %v1001
    %1439 = vmatprep.subr.bf16.mxu0 %v998
    %1440 = vmatpush1.bf16.msra.mxu0 %v997
    %1441 = vmatprep.subr.bf16.mxu0 %v994
    %1442 = vmatpush1.bf16.msra.mxu0 %v993
    %1443 = vmatprep.subr.bf16.mxu0 %v990
    %1444 = vmatpush1.bf16.msra.mxu0 %v989
    %1445 = vmatprep.subr.bf16.mxu0 0
    %1446 = vmatpush2.bf16.msra.mxu0 0
    %1447 = vmatprep.subr.bf16.mxu0 0
    %1448 = vmatpush2.bf16.msra.mxu0 0
    %1449 = vmatprep.subr.bf16.mxu0 0
    %1450 = vmatpush2.bf16.msra.mxu0 0
    %1451 = vmatprep.subr.bf16.mxu0 0
    %1452 = vmatpush2.bf16.msra.mxu0 0
    %1453 = vmatprep.subr.bf16.mxu0 0
    %1454 = vmatpush2.bf16.msra.mxu0 0
    %1455 = vmatprep.subr.bf16.mxu0 0
    %1456 = vmatpush2.bf16.msra.mxu0 0
    %1457 = vmatprep.subr.bf16.mxu0 0
    %1458 = vmatpush2.bf16.msra.mxu0 0
    %1459 = vmatprep.subr.bf16.mxu0 0
    %1460 = vmatpush2.bf16.msra.mxu0 0
    %1461 = vmatprep.mubr.bf16.mxu0 0
    %1462 = vmatmul.mubr.bf16.gmra.mxu0 %v1360
    %v1463 = vpop.f32.mrf.mxu0
    %v1464 = vadd.f32 0.0, %v1463
    %v1465 = vpop.f32.mrf.mxu0
    %v1466 = vadd.f32 0.0, %v1465
    %v1467 = vpop.f32.mrf.mxu0
    %v1468 = vadd.f32 0.0, %v1467
    %v1469 = vpop.f32.mrf.mxu0
    %v1470 = vadd.f32 0.0, %v1469
    %1471 = vdwg.mxu0
    %v1472 = vadd.f32 %v1378, %v1421
    %v1473 = vadd.f32 %v1379, %v1423
    %v1474 = vadd.f32 %v1380, %v1464
    %v1475 = vadd.f32 %v1381, %v1466
    %v1476 = vadd.f32 %v1382, %v1425
    %v1477 = vadd.f32 %v1383, %v1427
    %v1478 = vadd.f32 %v1384, %v1468
    %v1479 = vadd.f32 %v1385, %v1470
    %v1480 = vxor.u32 %v1472, 2147483648
    %v1481 = vxor.u32 %v1476, 2147483648
    %v1482 = vmul.f32 %v1480, 1.442695
    %v1483 = vpow.pop %v1482
    %v1484 = vmul.f32 %v1481, 1.442695
    %v1485 = vpow.pop %v1484
    %v1486 = vadd.f32 %v1483, 1.0
    %v1487 = vadd.f32 %v1485, 1.0
    %v1488 = vrcp.pop %v1486
    %v1489 = vmul.f32 1.0, %v1488
    %v1490 = vrcp.pop %v1487
    %v1491 = vmul.f32 1.0, %v1490
    %v1492 = vxor.u32 %v1473, 2147483648
    %v1493 = vxor.u32 %v1477, 2147483648
    %v1494 = vmul.f32 %v1492, 1.442695
    %v1495 = vpow.pop %v1494
    %v1496 = vmul.f32 %v1493, 1.442695
    %v1497 = vpow.pop %v1496
    %v1498 = vadd.f32 %v1495, 1.0
    %v1499 = vadd.f32 %v1497, 1.0
    %v1500 = vrcp.pop %v1498
    %v1501 = vmul.f32 1.0, %v1500
    %v1502 = vrcp.pop %v1499
    %v1503 = vmul.f32 1.0, %v1502
    %v1504 = vtanh.pop %v1474
    %v1505 = vtanh.pop %v1478
    %v1506 = vxor.u32 %v1475, 2147483648
    %v1507 = vxor.u32 %v1479, 2147483648
    %v1508 = vmul.f32 %v1506, 1.442695
    %v1509 = vpow.pop %v1508
    %v1510 = vmul.f32 %v1507, 1.442695
    %v1511 = vpow.pop %v1510
    %v1512 = vadd.f32 %v1509, 1.0
    %v1513 = vadd.f32 %v1511, 1.0
    %v1514 = vrcp.pop %v1512
    %v1515 = vmul.f32 1.0, %v1514
    %v1516 = vrcp.pop %v1513
    %v1517 = vmul.f32 1.0, %v1516
    %v1518 = vmul.f32 %v1501, %v1354
    %v1519 = vmul.f32 %v1503, %v1355
    %v1520 = vmul.f32 %v1489, %v1504
    %v1521 = vmul.f32 %v1491, %v1505
    %v1522 = vadd.f32 %v1518, %v1520
    %v1523 = vadd.f32 %v1519, %v1521
    %v1524 = vtanh.pop %v1522
    %v1525 = vtanh.pop %v1523
    %v1526 = vmul.f32 %v1515, %v1524
    %v1527 = vmul.f32 %v1517, %v1525
    %v1528 = vpack.c.bf16 %v1527, %v1526
    %v1530 = vunpack.c.l.b16 %v1528
    %v1531 = vunpack.c.h.b16 %v1528
    %v1532 = vpack.c.b16 %v1530, %v1530
    %v1533 = vpack.c.b16 %v1531, %v1531
    %s1536 = scalar_lea.vmem [#allocation3], 16
    %1537 = vst [vmem:[%s1536] sm:$0xf] %v1532
    %1538 = vst [vmem:[%s1536 + $0x4] sm:$0xf] %v1533
    %s1539 = smul.u32 6, 4
    %s1540 = smul.addr %s1539, 4
    %s1541 = scalar_lea.vmem [#allocation2], %s1540
    %v1542 = vld [vmem:[%s1541] sm:$0xff]
    %v1543 = vld [vmem:[%s1541 + $0x8] sm:$0xff]
    %v1544 = vld [vmem:[%s1541 + $0x10] sm:$0xff]
    %v1545 = vld [vmem:[%s1541 + $0x18] sm:$0xff]
    %v1546 = vunpack.c.l.bf16 %v1542
    %v1547 = vunpack.c.h.bf16 %v1542
    %v1548 = vunpack.c.l.bf16 %v1543
    %v1549 = vunpack.c.h.bf16 %v1543
    %v1550 = vunpack.c.l.bf16 %v1544
    %v1551 = vunpack.c.h.bf16 %v1544
    %v1552 = vunpack.c.l.bf16 %v1545
    %v1553 = vunpack.c.h.bf16 %v1545
    %1554 = vmatprep.subr.bf16.mxu0 %v1016
    %1555 = vmatpush1.bf16.msra.mxu0 %v1015
    %1556 = vmatprep.subr.bf16.mxu0 %v1012
    %1557 = vmatpush1.bf16.msra.mxu0 %v1011
    %1558 = vmatprep.subr.bf16.mxu0 %v1008
    %1559 = vmatpush1.bf16.msra.mxu0 %v1007
    %1560 = vmatprep.subr.bf16.mxu0 %v1004
    %1561 = vmatpush1.bf16.msra.mxu0 %v1003
    %1562 = vmatprep.subr.bf16.mxu0 %v1000
    %1563 = vmatpush1.bf16.msra.mxu0 %v999
    %1564 = vmatprep.subr.bf16.mxu0 %v996
    %1565 = vmatpush1.bf16.msra.mxu0 %v995
    %1566 = vmatprep.subr.bf16.mxu0 %v992
    %1567 = vmatpush1.bf16.msra.mxu0 %v991
    %1568 = vmatprep.subr.bf16.mxu0 %v988
    %1569 = vmatpush1.bf16.msra.mxu0 %v987
    %1570 = vmatprep.subr.bf16.mxu0 0
    %1571 = vmatpush2.bf16.msra.mxu0 0
    %1572 = vmatprep.subr.bf16.mxu0 0
    %1573 = vmatpush2.bf16.msra.mxu0 0
    %1574 = vmatprep.subr.bf16.mxu0 0
    %1575 = vmatpush2.bf16.msra.mxu0 0
    %1576 = vmatprep.subr.bf16.mxu0 0
    %1577 = vmatpush2.bf16.msra.mxu0 0
    %1578 = vmatprep.subr.bf16.mxu0 0
    %1579 = vmatpush2.bf16.msra.mxu0 0
    %1580 = vmatprep.subr.bf16.mxu0 0
    %1581 = vmatpush2.bf16.msra.mxu0 0
    %1582 = vmatprep.subr.bf16.mxu0 0
    %1583 = vmatpush2.bf16.msra.mxu0 0
    %1584 = vmatprep.subr.bf16.mxu0 0
    %1585 = vmatpush2.bf16.msra.mxu0 0
    %1586 = vmatprep.mubr.bf16.mxu0 0
    %1587 = vmatmul.mubr.bf16.gmra.mxu0 %v1528
    %v1588 = vpop.f32.mrf.mxu0
    %v1589 = vadd.f32 0.0, %v1588
    %v1590 = vpop.f32.mrf.mxu0
    %v1591 = vadd.f32 0.0, %v1590
    %v1592 = vpop.f32.mrf.mxu0
    %v1593 = vadd.f32 0.0, %v1592
    %v1594 = vpop.f32.mrf.mxu0
    %v1595 = vadd.f32 0.0, %v1594
    %1596 = vdwg.mxu0
    %1597 = vmatprep.subr.bf16.mxu0 %v1018
    %1598 = vmatpush1.bf16.msra.mxu0 %v1017
    %1599 = vmatprep.subr.bf16.mxu0 %v1014
    %1600 = vmatpush1.bf16.msra.mxu0 %v1013
    %1601 = vmatprep.subr.bf16.mxu0 %v1010
    %1602 = vmatpush1.bf16.msra.mxu0 %v1009
    %1603 = vmatprep.subr.bf16.mxu0 %v1006
    %1604 = vmatpush1.bf16.msra.mxu0 %v1005
    %1605 = vmatprep.subr.bf16.mxu0 %v1002
    %1606 = vmatpush1.bf16.msra.mxu0 %v1001
    %1607 = vmatprep.subr.bf16.mxu0 %v998
    %1608 = vmatpush1.bf16.msra.mxu0 %v997
    %1609 = vmatprep.subr.bf16.mxu0 %v994
    %1610 = vmatpush1.bf16.msra.mxu0 %v993
    %1611 = vmatprep.subr.bf16.mxu0 %v990
    %1612 = vmatpush1.bf16.msra.mxu0 %v989
    %1613 = vmatprep.subr.bf16.mxu0 0
    %1614 = vmatpush2.bf16.msra.mxu0 0
    %1615 = vmatprep.subr.bf16.mxu0 0
    %1616 = vmatpush2.bf16.msra.mxu0 0
    %1617 = vmatprep.subr.bf16.mxu0 0
    %1618 = vmatpush2.bf16.msra.mxu0 0
    %1619 = vmatprep.subr.bf16.mxu0 0
    %1620 = vmatpush2.bf16.msra.mxu0 0
    %1621 = vmatprep.subr.bf16.mxu0 0
    %1622 = vmatpush2.bf16.msra.mxu0 0
    %1623 = vmatprep.subr.bf16.mxu0 0
    %1624 = vmatpush2.bf16.msra.mxu0 0
    %1625 = vmatprep.subr.bf16.mxu0 0
    %1626 = vmatpush2.bf16.msra.mxu0 0
    %1627 = vmatprep.subr.bf16.mxu0 0
    %1628 = vmatpush2.bf16.msra.mxu0 0
    %1629 = vmatprep.mubr.bf16.mxu0 0
    %1630 = vmatmul.mubr.bf16.gmra.mxu0 %v1528
    %v1631 = vpop.f32.mrf.mxu0
    %v1632 = vadd.f32 0.0, %v1631
    %v1633 = vpop.f32.mrf.mxu0
    %v1634 = vadd.f32 0.0, %v1633
    %v1635 = vpop.f32.mrf.mxu0
    %v1636 = vadd.f32 0.0, %v1635
    %v1637 = vpop.f32.mrf.mxu0
    %v1638 = vadd.f32 0.0, %v1637
    %1639 = vdwg.mxu0
    %v1640 = vadd.f32 %v1546, %v1589
    %v1641 = vadd.f32 %v1547, %v1591
    %v1642 = vadd.f32 %v1548, %v1632
    %v1643 = vadd.f32 %v1549, %v1634
    %v1644 = vadd.f32 %v1550, %v1593
    %v1645 = vadd.f32 %v1551, %v1595
    %v1646 = vadd.f32 %v1552, %v1636
    %v1647 = vadd.f32 %v1553, %v1638
    %v1648 = vxor.u32 %v1640, 2147483648
    %v1649 = vxor.u32 %v1644, 2147483648
    %v1650 = vmul.f32 %v1648, 1.442695
    %v1651 = vpow.pop %v1650
    %v1652 = vmul.f32 %v1649, 1.442695
    %v1653 = vpow.pop %v1652
    %v1654 = vadd.f32 %v1651, 1.0
    %v1655 = vadd.f32 %v1653, 1.0
    %v1656 = vrcp.pop %v1654
    %v1657 = vmul.f32 1.0, %v1656
    %v1658 = vrcp.pop %v1655
    %v1659 = vmul.f32 1.0, %v1658
    %v1660 = vxor.u32 %v1641, 2147483648
    %v1661 = vxor.u32 %v1645, 2147483648
    %v1662 = vmul.f32 %v1660, 1.442695
    %v1663 = vpow.pop %v1662
    %v1664 = vmul.f32 %v1661, 1.442695
    %v1665 = vpow.pop %v1664
    %v1666 = vadd.f32 %v1663, 1.0
    %v1667 = vadd.f32 %v1665, 1.0
    %v1668 = vrcp.pop %v1666
    %v1669 = vmul.f32 1.0, %v1668
    %v1670 = vrcp.pop %v1667
    %v1671 = vmul.f32 1.0, %v1670
    %v1672 = vtanh.pop %v1642
    %v1673 = vtanh.pop %v1646
    %v1674 = vxor.u32 %v1643, 2147483648
    %v1675 = vxor.u32 %v1647, 2147483648
    %v1676 = vmul.f32 %v1674, 1.442695
    %v1677 = vpow.pop %v1676
    %v1678 = vmul.f32 %v1675, 1.442695
    %v1679 = vpow.pop %v1678
    %v1680 = vadd.f32 %v1677, 1.0
    %v1681 = vadd.f32 %v1679, 1.0
    %v1682 = vrcp.pop %v1680
    %v1683 = vmul.f32 1.0, %v1682
    %v1684 = vrcp.pop %v1681
    %v1685 = vmul.f32 1.0, %v1684
    %v1686 = vmul.f32 %v1669, %v1522
    %v1687 = vmul.f32 %v1671, %v1523
    %v1688 = vmul.f32 %v1657, %v1672
    %v1689 = vmul.f32 %v1659, %v1673
    %v1690 = vadd.f32 %v1686, %v1688
    %v1691 = vadd.f32 %v1687, %v1689
    %v1692 = vtanh.pop %v1690
    %v1693 = vtanh.pop %v1691
    %v1694 = vmul.f32 %v1683, %v1692
    %v1695 = vmul.f32 %v1685, %v1693
    %v1696 = vpack.c.bf16 %v1695, %v1694
    %v1698 = vunpack.c.l.b16 %v1696
    %v1699 = vunpack.c.h.b16 %v1696
    %v1700 = vpack.c.b16 %v1698, %v1698
    %v1701 = vpack.c.b16 %v1699, %v1699
    %s1704 = scalar_lea.vmem [#allocation3], 24
    %1705 = vst [vmem:[%s1704] sm:$0xf] %v1700
    %1706 = vst [vmem:[%s1704 + $0x4] sm:$0xf] %v1701
    %s1707 = smul.u32 8, 4
    %s1708 = smul.addr %s1707, 4
    %s1709 = scalar_lea.vmem [#allocation2], %s1708
    %v1710 = vld [vmem:[%s1709] sm:$0xff]
    %v1711 = vld [vmem:[%s1709 + $0x8] sm:$0xff]
    %v1712 = vld [vmem:[%s1709 + $0x10] sm:$0xff]
    %v1713 = vld [vmem:[%s1709 + $0x18] sm:$0xff]
    %v1714 = vunpack.c.l.bf16 %v1710
    %v1715 = vunpack.c.h.bf16 %v1710
    %v1716 = vunpack.c.l.bf16 %v1711
    %v1717 = vunpack.c.h.bf16 %v1711
    %v1718 = vunpack.c.l.bf16 %v1712
    %v1719 = vunpack.c.h.bf16 %v1712
    %v1720 = vunpack.c.l.bf16 %v1713
    %v1721 = vunpack.c.h.bf16 %v1713
    %1722 = vmatprep.subr.bf16.mxu0 %v1016
    %1723 = vmatpush1.bf16.msra.mxu0 %v1015
    %1724 = vmatprep.subr.bf16.mxu0 %v1012
    %1725 = vmatpush1.bf16.msra.mxu0 %v1011
    %1726 = vmatprep.subr.bf16.mxu0 %v1008
    %1727 = vmatpush1.bf16.msra.mxu0 %v1007
    %1728 = vmatprep.subr.bf16.mxu0 %v1004
    %1729 = vmatpush1.bf16.msra.mxu0 %v1003
    %1730 = vmatprep.subr.bf16.mxu0 %v1000
    %1731 = vmatpush1.bf16.msra.mxu0 %v999
    %1732 = vmatprep.subr.bf16.mxu0 %v996
    %1733 = vmatpush1.bf16.msra.mxu0 %v995
    %1734 = vmatprep.subr.bf16.mxu0 %v992
    %1735 = vmatpush1.bf16.msra.mxu0 %v991
    %1736 = vmatprep.subr.bf16.mxu0 %v988
    %1737 = vmatpush1.bf16.msra.mxu0 %v987
    %1738 = vmatprep.subr.bf16.mxu0 0
    %1739 = vmatpush2.bf16.msra.mxu0 0
    %1740 = vmatprep.subr.bf16.mxu0 0
    %1741 = vmatpush2.bf16.msra.mxu0 0
    %1742 = vmatprep.subr.bf16.mxu0 0
    %1743 = vmatpush2.bf16.msra.mxu0 0
    %1744 = vmatprep.subr.bf16.mxu0 0
    %1745 = vmatpush2.bf16.msra.mxu0 0
    %1746 = vmatprep.subr.bf16.mxu0 0
    %1747 = vmatpush2.bf16.msra.mxu0 0
    %1748 = vmatprep.subr.bf16.mxu0 0
    %1749 = vmatpush2.bf16.msra.mxu0 0
    %1750 = vmatprep.subr.bf16.mxu0 0
    %1751 = vmatpush2.bf16.msra.mxu0 0
    %1752 = vmatprep.subr.bf16.mxu0 0
    %1753 = vmatpush2.bf16.msra.mxu0 0
    %1754 = vmatprep.mubr.bf16.mxu0 0
    %1755 = vmatmul.mubr.bf16.gmra.mxu0 %v1696
    %v1756 = vpop.f32.mrf.mxu0
    %v1757 = vadd.f32 0.0, %v1756
    %v1758 = vpop.f32.mrf.mxu0
    %v1759 = vadd.f32 0.0, %v1758
    %v1760 = vpop.f32.mrf.mxu0
    %v1761 = vadd.f32 0.0, %v1760
    %v1762 = vpop.f32.mrf.mxu0
    %v1763 = vadd.f32 0.0, %v1762
    %1764 = vdwg.mxu0
    %1765 = vmatprep.subr.bf16.mxu0 %v1018
    %1766 = vmatpush1.bf16.msra.mxu0 %v1017
    %1767 = vmatprep.subr.bf16.mxu0 %v1014
    %1768 = vmatpush1.bf16.msra.mxu0 %v1013
    %1769 = vmatprep.subr.bf16.mxu0 %v1010
    %1770 = vmatpush1.bf16.msra.mxu0 %v1009
    %1771 = vmatprep.subr.bf16.mxu0 %v1006
    %1772 = vmatpush1.bf16.msra.mxu0 %v1005
    %1773 = vmatprep.subr.bf16.mxu0 %v1002
    %1774 = vmatpush1.bf16.msra.mxu0 %v1001
    %1775 = vmatprep.subr.bf16.mxu0 %v998
    %1776 = vmatpush1.bf16.msra.mxu0 %v997
    %1777 = vmatprep.subr.bf16.mxu0 %v994
    %1778 = vmatpush1.bf16.msra.mxu0 %v993
    %1779 = vmatprep.subr.bf16.mxu0 %v990
    %1780 = vmatpush1.bf16.msra.mxu0 %v989
    %1781 = vmatprep.subr.bf16.mxu0 0
    %1782 = vmatpush2.bf16.msra.mxu0 0
    %1783 = vmatprep.subr.bf16.mxu0 0
    %1784 = vmatpush2.bf16.msra.mxu0 0
    %1785 = vmatprep.subr.bf16.mxu0 0
    %1786 = vmatpush2.bf16.msra.mxu0 0
    %1787 = vmatprep.subr.bf16.mxu0 0
    %1788 = vmatpush2.bf16.msra.mxu0 0
    %1789 = vmatprep.subr.bf16.mxu0 0
    %1790 = vmatpush2.bf16.msra.mxu0 0
    %1791 = vmatprep.subr.bf16.mxu0 0
    %1792 = vmatpush2.bf16.msra.mxu0 0
    %1793 = vmatprep.subr.bf16.mxu0 0
    %1794 = vmatpush2.bf16.msra.mxu0 0
    %1795 = vmatprep.subr.bf16.mxu0 0
    %1796 = vmatpush2.bf16.msra.mxu0 0
    %1797 = vmatprep.mubr.bf16.mxu0 0
    %1798 = vmatmul.mubr.bf16.gmra.mxu0 %v1696
    %v1799 = vpop.f32.mrf.mxu0
    %v1800 = vadd.f32 0.0, %v1799
    %v1801 = vpop.f32.mrf.mxu0
    %v1802 = vadd.f32 0.0, %v1801
    %v1803 = vpop.f32.mrf.mxu0
    %v1804 = vadd.f32 0.0, %v1803
    %v1805 = vpop.f32.mrf.mxu0
    %v1806 = vadd.f32 0.0, %v1805
    %1807 = vdwg.mxu0
    %v1808 = vadd.f32 %v1714, %v1757
    %v1809 = vadd.f32 %v1715, %v1759
    %v1810 = vadd.f32 %v1716, %v1800
    %v1811 = vadd.f32 %v1717, %v1802
    %v1812 = vadd.f32 %v1718, %v1761
    %v1813 = vadd.f32 %v1719, %v1763
    %v1814 = vadd.f32 %v1720, %v1804
    %v1815 = vadd.f32 %v1721, %v1806
    %v1816 = vxor.u32 %v1808, 2147483648
    %v1817 = vxor.u32 %v1812, 2147483648
    %v1818 = vmul.f32 %v1816, 1.442695
    %v1819 = vpow.pop %v1818
    %v1820 = vmul.f32 %v1817, 1.442695
    %v1821 = vpow.pop %v1820
    %v1822 = vadd.f32 %v1819, 1.0
    %v1823 = vadd.f32 %v1821, 1.0
    %v1824 = vrcp.pop %v1822
    %v1825 = vmul.f32 1.0, %v1824
    %v1826 = vrcp.pop %v1823
    %v1827 = vmul.f32 1.0, %v1826
    %v1828 = vxor.u32 %v1809, 2147483648
    %v1829 = vxor.u32 %v1813, 2147483648
    %v1830 = vmul.f32 %v1828, 1.442695
    %v1831 = vpow.pop %v1830
    %v1832 = vmul.f32 %v1829, 1.442695
    %v1833 = vpow.pop %v1832
    %v1834 = vadd.f32 %v1831, 1.0
    %v1835 = vadd.f32 %v1833, 1.0
    %v1836 = vrcp.pop %v1834
    %v1837 = vmul.f32 1.0, %v1836
    %v1838 = vrcp.pop %v1835
    %v1839 = vmul.f32 1.0, %v1838
    %v1840 = vtanh.pop %v1810
    %v1841 = vtanh.pop %v1814
    %v1842 = vxor.u32 %v1811, 2147483648
    %v1843 = vxor.u32 %v1815, 2147483648
    %v1844 = vmul.f32 %v1842, 1.442695
    %v1845 = vpow.pop %v1844
    %v1846 = vmul.f32 %v1843, 1.442695
    %v1847 = vpow.pop %v1846
    %v1848 = vadd.f32 %v1845, 1.0
    %v1849 = vadd.f32 %v1847, 1.0
    %v1850 = vrcp.pop %v1848
    %v1851 = vmul.f32 1.0, %v1850
    %v1852 = vrcp.pop %v1849
    %v1853 = vmul.f32 1.0, %v1852
    %v1854 = vmul.f32 %v1837, %v1690
    %v1855 = vmul.f32 %v1839, %v1691
    %v1856 = vmul.f32 %v1825, %v1840
    %v1857 = vmul.f32 %v1827, %v1841
    %v1858 = vadd.f32 %v1854, %v1856
    %v1859 = vadd.f32 %v1855, %v1857
    %v1860 = vtanh.pop %v1858
    %v1861 = vtanh.pop %v1859
    %v1862 = vmul.f32 %v1851, %v1860
    %v1863 = vmul.f32 %v1853, %v1861
    %v1864 = vpack.c.bf16 %v1863, %v1862
    %v1866 = vunpack.c.l.b16 %v1864
    %v1867 = vunpack.c.h.b16 %v1864
    %v1868 = vpack.c.b16 %v1866, %v1866
    %v1869 = vpack.c.b16 %v1867, %v1867
    %s1872 = scalar_lea.vmem [#allocation3], 32
    %1873 = vst [vmem:[%s1872] sm:$0xf] %v1868
    %1874 = vst [vmem:[%s1872 + $0x4] sm:$0xf] %v1869
    %s1875 = smul.u32 10, 4
    %s1876 = smul.addr %s1875, 4
    %s1877 = scalar_lea.vmem [#allocation2], %s1876
    %v1878 = vld [vmem:[%s1877] sm:$0xff]
    %v1879 = vld [vmem:[%s1877 + $0x8] sm:$0xff]
    %v1880 = vld [vmem:[%s1877 + $0x10] sm:$0xff]
    %v1881 = vld [vmem:[%s1877 + $0x18] sm:$0xff]
    %v1882 = vunpack.c.l.bf16 %v1878
    %v1883 = vunpack.c.h.bf16 %v1878
    %v1884 = vunpack.c.l.bf16 %v1879
    %v1885 = vunpack.c.h.bf16 %v1879
    %v1886 = vunpack.c.l.bf16 %v1880
    %v1887 = vunpack.c.h.bf16 %v1880
    %v1888 = vunpack.c.l.bf16 %v1881
    %v1889 = vunpack.c.h.bf16 %v1881
    %1890 = vmatprep.subr.bf16.mxu0 %v1016
    %1891 = vmatpush1.bf16.msra.mxu0 %v1015
    %1892 = vmatprep.subr.bf16.mxu0 %v1012
    %1893 = vmatpush1.bf16.msra.mxu0 %v1011
    %1894 = vmatprep.subr.bf16.mxu0 %v1008
    %1895 = vmatpush1.bf16.msra.mxu0 %v1007
    %1896 = vmatprep.subr.bf16.mxu0 %v1004
    %1897 = vmatpush1.bf16.msra.mxu0 %v1003
    %1898 = vmatprep.subr.bf16.mxu0 %v1000
    %1899 = vmatpush1.bf16.msra.mxu0 %v999
    %1900 = vmatprep.subr.bf16.mxu0 %v996
    %1901 = vmatpush1.bf16.msra.mxu0 %v995
    %1902 = vmatprep.subr.bf16.mxu0 %v992
    %1903 = vmatpush1.bf16.msra.mxu0 %v991
    %1904 = vmatprep.subr.bf16.mxu0 %v988
    %1905 = vmatpush1.bf16.msra.mxu0 %v987
    %1906 = vmatprep.subr.bf16.mxu0 0
    %1907 = vmatpush2.bf16.msra.mxu0 0
    %1908 = vmatprep.subr.bf16.mxu0 0
    %1909 = vmatpush2.bf16.msra.mxu0 0
    %1910 = vmatprep.subr.bf16.mxu0 0
    %1911 = vmatpush2.bf16.msra.mxu0 0
    %1912 = vmatprep.subr.bf16.mxu0 0
    %1913 = vmatpush2.bf16.msra.mxu0 0
    %1914 = vmatprep.subr.bf16.mxu0 0
    %1915 = vmatpush2.bf16.msra.mxu0 0
    %1916 = vmatprep.subr.bf16.mxu0 0
    %1917 = vmatpush2.bf16.msra.mxu0 0
    %1918 = vmatprep.subr.bf16.mxu0 0
    %1919 = vmatpush2.bf16.msra.mxu0 0
    %1920 = vmatprep.subr.bf16.mxu0 0
    %1921 = vmatpush2.bf16.msra.mxu0 0
    %1922 = vmatprep.mubr.bf16.mxu0 0
    %1923 = vmatmul.mubr.bf16.gmra.mxu0 %v1864
    %v1924 = vpop.f32.mrf.mxu0
    %v1925 = vadd.f32 0.0, %v1924
    %v1926 = vpop.f32.mrf.mxu0
    %v1927 = vadd.f32 0.0, %v1926
    %v1928 = vpop.f32.mrf.mxu0
    %v1929 = vadd.f32 0.0, %v1928
    %v1930 = vpop.f32.mrf.mxu0
    %v1931 = vadd.f32 0.0, %v1930
    %1932 = vdwg.mxu0
    %1933 = vmatprep.subr.bf16.mxu0 %v1018
    %1934 = vmatpush1.bf16.msra.mxu0 %v1017
    %1935 = vmatprep.subr.bf16.mxu0 %v1014
    %1936 = vmatpush1.bf16.msra.mxu0 %v1013
    %1937 = vmatprep.subr.bf16.mxu0 %v1010
    %1938 = vmatpush1.bf16.msra.mxu0 %v1009
    %1939 = vmatprep.subr.bf16.mxu0 %v1006
    %1940 = vmatpush1.bf16.msra.mxu0 %v1005
    %1941 = vmatprep.subr.bf16.mxu0 %v1002
    %1942 = vmatpush1.bf16.msra.mxu0 %v1001
    %1943 = vmatprep.subr.bf16.mxu0 %v998
    %1944 = vmatpush1.bf16.msra.mxu0 %v997
    %1945 = vmatprep.subr.bf16.mxu0 %v994
    %1946 = vmatpush1.bf16.msra.mxu0 %v993
    %1947 = vmatprep.subr.bf16.mxu0 %v990
    %1948 = vmatpush1.bf16.msra.mxu0 %v989
    %1949 = vmatprep.subr.bf16.mxu0 0
    %1950 = vmatpush2.bf16.msra.mxu0 0
    %1951 = vmatprep.subr.bf16.mxu0 0
    %1952 = vmatpush2.bf16.msra.mxu0 0
    %1953 = vmatprep.subr.bf16.mxu0 0
    %1954 = vmatpush2.bf16.msra.mxu0 0
    %1955 = vmatprep.subr.bf16.mxu0 0
    %1956 = vmatpush2.bf16.msra.mxu0 0
    %1957 = vmatprep.subr.bf16.mxu0 0
    %1958 = vmatpush2.bf16.msra.mxu0 0
    %1959 = vmatprep.subr.bf16.mxu0 0
    %1960 = vmatpush2.bf16.msra.mxu0 0
    %1961 = vmatprep.subr.bf16.mxu0 0
    %1962 = vmatpush2.bf16.msra.mxu0 0
    %1963 = vmatprep.subr.bf16.mxu0 0
    %1964 = vmatpush2.bf16.msra.mxu0 0
    %1965 = vmatprep.mubr.bf16.mxu0 0
    %1966 = vmatmul.mubr.bf16.gmra.mxu0 %v1864
    %v1967 = vpop.f32.mrf.mxu0
    %v1968 = vadd.f32 0.0, %v1967
    %v1969 = vpop.f32.mrf.mxu0
    %v1970 = vadd.f32 0.0, %v1969
    %v1971 = vpop.f32.mrf.mxu0
    %v1972 = vadd.f32 0.0, %v1971
    %v1973 = vpop.f32.mrf.mxu0
    %v1974 = vadd.f32 0.0, %v1973
    %1975 = vdwg.mxu0
    %v1976 = vadd.f32 %v1882, %v1925
    %v1977 = vadd.f32 %v1883, %v1927
    %v1978 = vadd.f32 %v1884, %v1968
    %v1979 = vadd.f32 %v1885, %v1970
    %v1980 = vadd.f32 %v1886, %v1929
    %v1981 = vadd.f32 %v1887, %v1931
    %v1982 = vadd.f32 %v1888, %v1972
    %v1983 = vadd.f32 %v1889, %v1974
    %v1984 = vxor.u32 %v1976, 2147483648
    %v1985 = vxor.u32 %v1980, 2147483648
    %v1986 = vmul.f32 %v1984, 1.442695
    %v1987 = vpow.pop %v1986
    %v1988 = vmul.f32 %v1985, 1.442695
    %v1989 = vpow.pop %v1988
    %v1990 = vadd.f32 %v1987, 1.0
    %v1991 = vadd.f32 %v1989, 1.0
    %v1992 = vrcp.pop %v1990
    %v1993 = vmul.f32 1.0, %v1992
    %v1994 = vrcp.pop %v1991
    %v1995 = vmul.f32 1.0, %v1994
    %v1996 = vxor.u32 %v1977, 2147483648
    %v1997 = vxor.u32 %v1981, 2147483648
    %v1998 = vmul.f32 %v1996, 1.442695
    %v1999 = vpow.pop %v1998
    %v2000 = vmul.f32 %v1997, 1.442695
    %v2001 = vpow.pop %v2000
    %v2002 = vadd.f32 %v1999, 1.0
    %v2003 = vadd.f32 %v2001, 1.0
    %v2004 = vrcp.pop %v2002
    %v2005 = vmul.f32 1.0, %v2004
    %v2006 = vrcp.pop %v2003
    %v2007 = vmul.f32 1.0, %v2006
    %v2008 = vtanh.pop %v1978
    %v2009 = vtanh.pop %v1982
    %v2010 = vxor.u32 %v1979, 2147483648
    %v2011 = vxor.u32 %v1983, 2147483648
    %v2012 = vmul.f32 %v2010, 1.442695
    %v2013 = vpow.pop %v2012
    %v2014 = vmul.f32 %v2011, 1.442695
    %v2015 = vpow.pop %v2014
    %v2016 = vadd.f32 %v2013, 1.0
    %v2017 = vadd.f32 %v2015, 1.0
    %v2018 = vrcp.pop %v2016
    %v2019 = vmul.f32 1.0, %v2018
    %v2020 = vrcp.pop %v2017
    %v2021 = vmul.f32 1.0, %v2020
    %v2022 = vmul.f32 %v2005, %v1858
    %v2023 = vmul.f32 %v2007, %v1859
    %v2024 = vmul.f32 %v1993, %v2008
    %v2025 = vmul.f32 %v1995, %v2009
    %v2026 = vadd.f32 %v2022, %v2024
    %v2027 = vadd.f32 %v2023, %v2025
    %v2028 = vtanh.pop %v2026
    %v2029 = vtanh.pop %v2027
    %v2030 = vmul.f32 %v2019, %v2028
    %v2031 = vmul.f32 %v2021, %v2029
    %v2032 = vpack.c.bf16 %v2031, %v2030
    %v2034 = vunpack.c.l.b16 %v2032
    %v2035 = vunpack.c.h.b16 %v2032
    %v2036 = vpack.c.b16 %v2034, %v2034
    %v2037 = vpack.c.b16 %v2035, %v2035
    %s2040 = scalar_lea.vmem [#allocation3], 40
    %2041 = vst [vmem:[%s2040] sm:$0xf] %v2036
    %2042 = vst [vmem:[%s2040 + $0x4] sm:$0xf] %v2037
    %s2043 = smul.u32 12, 4
    %s2044 = smul.addr %s2043, 4
    %s2045 = scalar_lea.vmem [#allocation2], %s2044
    %v2046 = vld [vmem:[%s2045] sm:$0xff]
    %v2047 = vld [vmem:[%s2045 + $0x8] sm:$0xff]
    %v2048 = vld [vmem:[%s2045 + $0x10] sm:$0xff]
    %v2049 = vld [vmem:[%s2045 + $0x18] sm:$0xff]
    %v2050 = vunpack.c.l.bf16 %v2046
    %v2051 = vunpack.c.h.bf16 %v2046
    %v2052 = vunpack.c.l.bf16 %v2047
    %v2053 = vunpack.c.h.bf16 %v2047
    %v2054 = vunpack.c.l.bf16 %v2048
    %v2055 = vunpack.c.h.bf16 %v2048
    %v2056 = vunpack.c.l.bf16 %v2049
    %v2057 = vunpack.c.h.bf16 %v2049
    %2058 = vmatprep.subr.bf16.mxu0 %v1016
    %2059 = vmatpush1.bf16.msra.mxu0 %v1015
    %2060 = vmatprep.subr.bf16.mxu0 %v1012
    %2061 = vmatpush1.bf16.msra.mxu0 %v1011
    %2062 = vmatprep.subr.bf16.mxu0 %v1008
    %2063 = vmatpush1.bf16.msra.mxu0 %v1007
    %2064 = vmatprep.subr.bf16.mxu0 %v1004
    %2065 = vmatpush1.bf16.msra.mxu0 %v1003
    %2066 = vmatprep.subr.bf16.mxu0 %v1000
    %2067 = vmatpush1.bf16.msra.mxu0 %v999
    %2068 = vmatprep.subr.bf16.mxu0 %v996
    %2069 = vmatpush1.bf16.msra.mxu0 %v995
    %2070 = vmatprep.subr.bf16.mxu0 %v992
    %2071 = vmatpush1.bf16.msra.mxu0 %v991
    %2072 = vmatprep.subr.bf16.mxu0 %v988
    %2073 = vmatpush1.bf16.msra.mxu0 %v987
    %2074 = vmatprep.subr.bf16.mxu0 0
    %2075 = vmatpush2.bf16.msra.mxu0 0
    %2076 = vmatprep.subr.bf16.mxu0 0
    %2077 = vmatpush2.bf16.msra.mxu0 0
    %2078 = vmatprep.subr.bf16.mxu0 0
    %2079 = vmatpush2.bf16.msra.mxu0 0
    %2080 = vmatprep.subr.bf16.mxu0 0
    %2081 = vmatpush2.bf16.msra.mxu0 0
    %2082 = vmatprep.subr.bf16.mxu0 0
    %2083 = vmatpush2.bf16.msra.mxu0 0
    %2084 = vmatprep.subr.bf16.mxu0 0
    %2085 = vmatpush2.bf16.msra.mxu0 0
    %2086 = vmatprep.subr.bf16.mxu0 0
    %2087 = vmatpush2.bf16.msra.mxu0 0
    %2088 = vmatprep.subr.bf16.mxu0 0
    %2089 = vmatpush2.bf16.msra.mxu0 0
    %2090 = vmatprep.mubr.bf16.mxu0 0
    %2091 = vmatmul.mubr.bf16.gmra.mxu0 %v2032
    %v2092 = vpop.f32.mrf.mxu0
    %v2093 = vadd.f32 0.0, %v2092
    %v2094 = vpop.f32.mrf.mxu0
    %v2095 = vadd.f32 0.0, %v2094
    %v2096 = vpop.f32.mrf.mxu0
    %v2097 = vadd.f32 0.0, %v2096
    %v2098 = vpop.f32.mrf.mxu0
    %v2099 = vadd.f32 0.0, %v2098
    %2100 = vdwg.mxu0
    %2101 = vmatprep.subr.bf16.mxu0 %v1018
    %2102 = vmatpush1.bf16.msra.mxu0 %v1017
    %2103 = vmatprep.subr.bf16.mxu0 %v1014
    %2104 = vmatpush1.bf16.msra.mxu0 %v1013
    %2105 = vmatprep.subr.bf16.mxu0 %v1010
    %2106 = vmatpush1.bf16.msra.mxu0 %v1009
    %2107 = vmatprep.subr.bf16.mxu0 %v1006
    %2108 = vmatpush1.bf16.msra.mxu0 %v1005
    %2109 = vmatprep.subr.bf16.mxu0 %v1002
    %2110 = vmatpush1.bf16.msra.mxu0 %v1001
    %2111 = vmatprep.subr.bf16.mxu0 %v998
    %2112 = vmatpush1.bf16.msra.mxu0 %v997
    %2113 = vmatprep.subr.bf16.mxu0 %v994
    %2114 = vmatpush1.bf16.msra.mxu0 %v993
    %2115 = vmatprep.subr.bf16.mxu0 %v990
    %2116 = vmatpush1.bf16.msra.mxu0 %v989
    %2117 = vmatprep.subr.bf16.mxu0 0
    %2118 = vmatpush2.bf16.msra.mxu0 0
    %2119 = vmatprep.subr.bf16.mxu0 0
    %2120 = vmatpush2.bf16.msra.mxu0 0
    %2121 = vmatprep.subr.bf16.mxu0 0
    %2122 = vmatpush2.bf16.msra.mxu0 0
    %2123 = vmatprep.subr.bf16.mxu0 0
    %2124 = vmatpush2.bf16.msra.mxu0 0
    %2125 = vmatprep.subr.bf16.mxu0 0
    %2126 = vmatpush2.bf16.msra.mxu0 0
    %2127 = vmatprep.subr.bf16.mxu0 0
    %2128 = vmatpush2.bf16.msra.mxu0 0
    %2129 = vmatprep.subr.bf16.mxu0 0
    %2130 = vmatpush2.bf16.msra.mxu0 0
    %2131 = vmatprep.subr.bf16.mxu0 0
    %2132 = vmatpush2.bf16.msra.mxu0 0
    %2133 = vmatprep.mubr.bf16.mxu0 0
    %2134 = vmatmul.mubr.bf16.gmra.mxu0 %v2032
    %v2135 = vpop.f32.mrf.mxu0
    %v2136 = vadd.f32 0.0, %v2135
    %v2137 = vpop.f32.mrf.mxu0
    %v2138 = vadd.f32 0.0, %v2137
    %v2139 = vpop.f32.mrf.mxu0
    %v2140 = vadd.f32 0.0, %v2139
    %v2141 = vpop.f32.mrf.mxu0
    %v2142 = vadd.f32 0.0, %v2141
    %2143 = vdwg.mxu0
    %v2144 = vadd.f32 %v2050, %v2093
    %v2145 = vadd.f32 %v2051, %v2095
    %v2146 = vadd.f32 %v2052, %v2136
    %v2147 = vadd.f32 %v2053, %v2138
    %v2148 = vadd.f32 %v2054, %v2097
    %v2149 = vadd.f32 %v2055, %v2099
    %v2150 = vadd.f32 %v2056, %v2140
    %v2151 = vadd.f32 %v2057, %v2142
    %v2152 = vxor.u32 %v2144, 2147483648
    %v2153 = vxor.u32 %v2148, 2147483648
    %v2154 = vmul.f32 %v2152, 1.442695
    %v2155 = vpow.pop %v2154
    %v2156 = vmul.f32 %v2153, 1.442695
    %v2157 = vpow.pop %v2156
    %v2158 = vadd.f32 %v2155, 1.0
    %v2159 = vadd.f32 %v2157, 1.0
    %v2160 = vrcp.pop %v2158
    %v2161 = vmul.f32 1.0, %v2160
    %v2162 = vrcp.pop %v2159
    %v2163 = vmul.f32 1.0, %v2162
    %v2164 = vxor.u32 %v2145, 2147483648
    %v2165 = vxor.u32 %v2149, 2147483648
    %v2166 = vmul.f32 %v2164, 1.442695
    %v2167 = vpow.pop %v2166
    %v2168 = vmul.f32 %v2165, 1.442695
    %v2169 = vpow.pop %v2168
    %v2170 = vadd.f32 %v2167, 1.0
    %v2171 = vadd.f32 %v2169, 1.0
    %v2172 = vrcp.pop %v2170
    %v2173 = vmul.f32 1.0, %v2172
    %v2174 = vrcp.pop %v2171
    %v2175 = vmul.f32 1.0, %v2174
    %v2176 = vtanh.pop %v2146
    %v2177 = vtanh.pop %v2150
    %v2178 = vxor.u32 %v2147, 2147483648
    %v2179 = vxor.u32 %v2151, 2147483648
    %v2180 = vmul.f32 %v2178, 1.442695
    %v2181 = vpow.pop %v2180
    %v2182 = vmul.f32 %v2179, 1.442695
    %v2183 = vpow.pop %v2182
    %v2184 = vadd.f32 %v2181, 1.0
    %v2185 = vadd.f32 %v2183, 1.0
    %v2186 = vrcp.pop %v2184
    %v2187 = vmul.f32 1.0, %v2186
    %v2188 = vrcp.pop %v2185
    %v2189 = vmul.f32 1.0, %v2188
    %v2190 = vmul.f32 %v2173, %v2026
    %v2191 = vmul.f32 %v2175, %v2027
    %v2192 = vmul.f32 %v2161, %v2176
    %v2193 = vmul.f32 %v2163, %v2177
    %v2194 = vadd.f32 %v2190, %v2192
    %v2195 = vadd.f32 %v2191, %v2193
    %v2196 = vtanh.pop %v2194
    %v2197 = vtanh.pop %v2195
    %v2198 = vmul.f32 %v2187, %v2196
    %v2199 = vmul.f32 %v2189, %v2197
    %v2200 = vpack.c.bf16 %v2199, %v2198
    %v2202 = vunpack.c.l.b16 %v2200
    %v2203 = vunpack.c.h.b16 %v2200
    %v2204 = vpack.c.b16 %v2202, %v2202
    %v2205 = vpack.c.b16 %v2203, %v2203
    %s2208 = scalar_lea.vmem [#allocation3], 48
    %2209 = vst [vmem:[%s2208] sm:$0xf] %v2204
    %2210 = vst [vmem:[%s2208 + $0x4] sm:$0xf] %v2205
    %s2211 = smul.u32 14, 4
    %s2212 = smul.addr %s2211, 4
    %s2213 = scalar_lea.vmem [#allocation2], %s2212
    %v2214 = vld [vmem:[%s2213] sm:$0xff]
    %v2215 = vld [vmem:[%s2213 + $0x8] sm:$0xff]
    %v2216 = vld [vmem:[%s2213 + $0x10] sm:$0xff]
    %v2217 = vld [vmem:[%s2213 + $0x18] sm:$0xff]
    %v2218 = vunpack.c.l.bf16 %v2214
    %v2219 = vunpack.c.h.bf16 %v2214
    %v2220 = vunpack.c.l.bf16 %v2215
    %v2221 = vunpack.c.h.bf16 %v2215
    %v2222 = vunpack.c.l.bf16 %v2216
    %v2223 = vunpack.c.h.bf16 %v2216
    %v2224 = vunpack.c.l.bf16 %v2217
    %v2225 = vunpack.c.h.bf16 %v2217
    %2226 = vmatprep.subr.bf16.mxu0 %v1016
    %2227 = vmatpush1.bf16.msra.mxu0 %v1015
    %2228 = vmatprep.subr.bf16.mxu0 %v1012
    %2229 = vmatpush1.bf16.msra.mxu0 %v1011
    %2230 = vmatprep.subr.bf16.mxu0 %v1008
    %2231 = vmatpush1.bf16.msra.mxu0 %v1007
    %2232 = vmatprep.subr.bf16.mxu0 %v1004
    %2233 = vmatpush1.bf16.msra.mxu0 %v1003
    %2234 = vmatprep.subr.bf16.mxu0 %v1000
    %2235 = vmatpush1.bf16.msra.mxu0 %v999
    %2236 = vmatprep.subr.bf16.mxu0 %v996
    %2237 = vmatpush1.bf16.msra.mxu0 %v995
    %2238 = vmatprep.subr.bf16.mxu0 %v992
    %2239 = vmatpush1.bf16.msra.mxu0 %v991
    %2240 = vmatprep.subr.bf16.mxu0 %v988
    %2241 = vmatpush1.bf16.msra.mxu0 %v987
    %2242 = vmatprep.subr.bf16.mxu0 0
    %2243 = vmatpush2.bf16.msra.mxu0 0
    %2244 = vmatprep.subr.bf16.mxu0 0
    %2245 = vmatpush2.bf16.msra.mxu0 0
    %2246 = vmatprep.subr.bf16.mxu0 0
    %2247 = vmatpush2.bf16.msra.mxu0 0
    %2248 = vmatprep.subr.bf16.mxu0 0
    %2249 = vmatpush2.bf16.msra.mxu0 0
    %2250 = vmatprep.subr.bf16.mxu0 0
    %2251 = vmatpush2.bf16.msra.mxu0 0
    %2252 = vmatprep.subr.bf16.mxu0 0
    %2253 = vmatpush2.bf16.msra.mxu0 0
    %2254 = vmatprep.subr.bf16.mxu0 0
    %2255 = vmatpush2.bf16.msra.mxu0 0
    %2256 = vmatprep.subr.bf16.mxu0 0
    %2257 = vmatpush2.bf16.msra.mxu0 0
    %2258 = vmatprep.mubr.bf16.mxu0 0
    %2259 = vmatmul.mubr.bf16.gmra.mxu0 %v2200
    %v2260 = vpop.f32.mrf.mxu0
    %v2261 = vadd.f32 0.0, %v2260
    %v2262 = vpop.f32.mrf.mxu0
    %v2263 = vadd.f32 0.0, %v2262
    %v2264 = vpop.f32.mrf.mxu0
    %v2265 = vadd.f32 0.0, %v2264
    %v2266 = vpop.f32.mrf.mxu0
    %v2267 = vadd.f32 0.0, %v2266
    %2268 = vdwg.mxu0
    %2269 = vmatprep.subr.bf16.mxu0 %v1018
    %2270 = vmatpush1.bf16.msra.mxu0 %v1017
    %2271 = vmatprep.subr.bf16.mxu0 %v1014
    %2272 = vmatpush1.bf16.msra.mxu0 %v1013
    %2273 = vmatprep.subr.bf16.mxu0 %v1010
    %2274 = vmatpush1.bf16.msra.mxu0 %v1009
    %2275 = vmatprep.subr.bf16.mxu0 %v1006
    %2276 = vmatpush1.bf16.msra.mxu0 %v1005
    %2277 = vmatprep.subr.bf16.mxu0 %v1002
    %2278 = vmatpush1.bf16.msra.mxu0 %v1001
    %2279 = vmatprep.subr.bf16.mxu0 %v998
    %2280 = vmatpush1.bf16.msra.mxu0 %v997
    %2281 = vmatprep.subr.bf16.mxu0 %v994
    %2282 = vmatpush1.bf16.msra.mxu0 %v993
    %2283 = vmatprep.subr.bf16.mxu0 %v990
    %2284 = vmatpush1.bf16.msra.mxu0 %v989
    %2285 = vmatprep.subr.bf16.mxu0 0
    %2286 = vmatpush2.bf16.msra.mxu0 0
    %2287 = vmatprep.subr.bf16.mxu0 0
    %2288 = vmatpush2.bf16.msra.mxu0 0
    %2289 = vmatprep.subr.bf16.mxu0 0
    %2290 = vmatpush2.bf16.msra.mxu0 0
    %2291 = vmatprep.subr.bf16.mxu0 0
    %2292 = vmatpush2.bf16.msra.mxu0 0
    %2293 = vmatprep.subr.bf16.mxu0 0
    %2294 = vmatpush2.bf16.msra.mxu0 0
    %2295 = vmatprep.subr.bf16.mxu0 0
    %2296 = vmatpush2.bf16.msra.mxu0 0
    %2297 = vmatprep.subr.bf16.mxu0 0
    %2298 = vmatpush2.bf16.msra.mxu0 0
    %2299 = vmatprep.subr.bf16.mxu0 0
    %2300 = vmatpush2.bf16.msra.mxu0 0
    %2301 = vmatprep.mubr.bf16.mxu0 0
    %2302 = vmatmul.mubr.bf16.gmra.mxu0 %v2200
    %v2303 = vpop.f32.mrf.mxu0
    %v2304 = vadd.f32 0.0, %v2303
    %v2305 = vpop.f32.mrf.mxu0
    %v2306 = vadd.f32 0.0, %v2305
    %v2307 = vpop.f32.mrf.mxu0
    %v2308 = vadd.f32 0.0, %v2307
    %v2309 = vpop.f32.mrf.mxu0
    %v2310 = vadd.f32 0.0, %v2309
    %2311 = vdwg.mxu0
    %v2312 = vadd.f32 %v2218, %v2261
    %v2313 = vadd.f32 %v2219, %v2263
    %v2314 = vadd.f32 %v2220, %v2304
    %v2315 = vadd.f32 %v2221, %v2306
    %v2316 = vadd.f32 %v2222, %v2265
    %v2317 = vadd.f32 %v2223, %v2267
    %v2318 = vadd.f32 %v2224, %v2308
    %v2319 = vadd.f32 %v2225, %v2310
    %v2320 = vxor.u32 %v2312, 2147483648
    %v2321 = vxor.u32 %v2316, 2147483648
    %v2322 = vmul.f32 %v2320, 1.442695
    %v2323 = vpow.pop %v2322
    %v2324 = vmul.f32 %v2321, 1.442695
    %v2325 = vpow.pop %v2324
    %v2326 = vadd.f32 %v2323, 1.0
    %v2327 = vadd.f32 %v2325, 1.0
    %v2328 = vrcp.pop %v2326
    %v2329 = vmul.f32 1.0, %v2328
    %v2330 = vrcp.pop %v2327
    %v2331 = vmul.f32 1.0, %v2330
    %v2332 = vxor.u32 %v2313, 2147483648
    %v2333 = vxor.u32 %v2317, 2147483648
    %v2334 = vmul.f32 %v2332, 1.442695
    %v2335 = vpow.pop %v2334
    %v2336 = vmul.f32 %v2333, 1.442695
    %v2337 = vpow.pop %v2336
    %v2338 = vadd.f32 %v2335, 1.0
    %v2339 = vadd.f32 %v2337, 1.0
    %v2340 = vrcp.pop %v2338
    %v2341 = vmul.f32 1.0, %v2340
    %v2342 = vrcp.pop %v2339
    %v2343 = vmul.f32 1.0, %v2342
    %v2344 = vtanh.pop %v2314
    %v2345 = vtanh.pop %v2318
    %v2346 = vxor.u32 %v2315, 2147483648
    %v2347 = vxor.u32 %v2319, 2147483648
    %v2348 = vmul.f32 %v2346, 1.442695
    %v2349 = vpow.pop %v2348
    %v2350 = vmul.f32 %v2347, 1.442695
    %v2351 = vpow.pop %v2350
    %v2352 = vadd.f32 %v2349, 1.0
    %v2353 = vadd.f32 %v2351, 1.0
    %v2354 = vrcp.pop %v2352
    %v2355 = vmul.f32 1.0, %v2354
    %v2356 = vrcp.pop %v2353
    %v2357 = vmul.f32 1.0, %v2356
    %v2358 = vmul.f32 %v2341, %v2194
    %v2359 = vmul.f32 %v2343, %v2195
    %v2360 = vmul.f32 %v2329, %v2344
    %v2361 = vmul.f32 %v2331, %v2345
    %v2362 = vadd.f32 %v2358, %v2360
    %v2363 = vadd.f32 %v2359, %v2361
    %v2364 = vtanh.pop %v2362
    %v2365 = vtanh.pop %v2363
    %v2366 = vmul.f32 %v2355, %v2364
    %v2367 = vmul.f32 %v2357, %v2365
    %v2368 = vpack.c.bf16 %v2367, %v2366
    %v2370 = vunpack.c.l.b16 %v2368
    %v2371 = vunpack.c.h.b16 %v2368
    %v2372 = vpack.c.b16 %v2370, %v2370
    %v2373 = vpack.c.b16 %v2371, %v2371
    %s2376 = scalar_lea.vmem [#allocation3], 56
    %2377 = vst [vmem:[%s2376] sm:$0xf] %v2372
    %2378 = vst [vmem:[%s2376 + $0x4] sm:$0xf] %v2373
    %v2379 = vld [vmem:[#allocation3] sm:$0xf]
    %v2380 = vld [vmem:[#allocation3 + $0x4] sm:$0xf]
    %v2381 = vld [vmem:[#allocation3 + $0x8] sm:$0xf]
    %v2382 = vld [vmem:[#allocation3 + $0xc] sm:$0xf]
    %v2383 = vld [vmem:[#allocation3 + $0x10] sm:$0xf]
    %v2384 = vld [vmem:[#allocation3 + $0x14] sm:$0xf]
    %v2385 = vld [vmem:[#allocation3 + $0x18] sm:$0xf]
    %v2386 = vld [vmem:[#allocation3 + $0x1c] sm:$0xf]
    %v2387 = vld [vmem:[#allocation3 + $0x20] sm:$0xf]
    %v2388 = vld [vmem:[#allocation3 + $0x24] sm:$0xf]
    %v2389 = vld [vmem:[#allocation3 + $0x28] sm:$0xf]
    %v2390 = vld [vmem:[#allocation3 + $0x2c] sm:$0xf]
    %v2391 = vld [vmem:[#allocation3 + $0x30] sm:$0xf]
    %v2392 = vld [vmem:[#allocation3 + $0x34] sm:$0xf]
    %v2393 = vld [vmem:[#allocation3 + $0x38] sm:$0xf]
    %v2394 = vld [vmem:[#allocation3 + $0x3c] sm:$0xf]
    %v2395 = vld [vmem:[#allocation10] sm:$0xff]
    %v2396 = vld [vmem:[#allocation10 + $0x8] sm:$0xff]
    %v2397 = vld [vmem:[#allocation10 + $0x10] sm:$0xff]
    %v2398 = vld [vmem:[#allocation10 + $0x18] sm:$0xff]
    %v2399 = vld [vmem:[#allocation10 + $0x20] sm:$0xff]
    %v2400 = vld [vmem:[#allocation10 + $0x28] sm:$0xff]
    %v2401 = vld [vmem:[#allocation10 + $0x30] sm:$0xff]
    %v2402 = vld [vmem:[#allocation10 + $0x38] sm:$0xff]
    %v2403 = vld [vmem:[#allocation10 + $0x40] sm:$0xff]
    %v2404 = vld [vmem:[#allocation10 + $0x48] sm:$0xff]
    %v2405 = vld [vmem:[#allocation10 + $0x50] sm:$0xff]
    %v2406 = vld [vmem:[#allocation10 + $0x58] sm:$0xff]
    %v2407 = vld [vmem:[#allocation10 + $0x60] sm:$0xff]
    %v2408 = vld [vmem:[#allocation10 + $0x68] sm:$0xff]
    %v2409 = vld [vmem:[#allocation10 + $0x70] sm:$0xff]
    %v2410 = vld [vmem:[#allocation10 + $0x78] sm:$0xff]
    %v2411 = vld [vmem:[#allocation10 + $0x80] sm:$0xff]
    %v2412 = vld [vmem:[#allocation10 + $0x88] sm:$0xff]
    %v2413 = vld [vmem:[#allocation10 + $0x90] sm:$0xff]
    %v2414 = vld [vmem:[#allocation10 + $0x98] sm:$0xff]
    %v2415 = vld [vmem:[#allocation10 + $0xa0] sm:$0xff]
    %v2416 = vld [vmem:[#allocation10 + $0xa8] sm:$0xff]
    %v2417 = vld [vmem:[#allocation10 + $0xb0] sm:$0xff]
    %v2418 = vld [vmem:[#allocation10 + $0xb8] sm:$0xff]
    %v2419 = vld [vmem:[#allocation10 + $0xc0] sm:$0xff]
    %v2420 = vld [vmem:[#allocation10 + $0xc8] sm:$0xff]
    %v2421 = vld [vmem:[#allocation10 + $0xd0] sm:$0xff]
    %v2422 = vld [vmem:[#allocation10 + $0xd8] sm:$0xff]
    %v2423 = vld [vmem:[#allocation10 + $0xe0] sm:$0xff]
    %v2424 = vld [vmem:[#allocation10 + $0xe8] sm:$0xff]
    %v2425 = vld [vmem:[#allocation10 + $0xf0] sm:$0xff]
    %v2426 = vld [vmem:[#allocation10 + $0xf8] sm:$0xff]
    %v2427 = vld [vmem:[%s6] sm:$0xf]
    %v2429 = vlaneseq
    %v2430 = vshrl.u32 %v2429, 7
    %v2431 = vsub.s32 0, %v2430
    %v2432 = vrot.slane %v2427, %v2431
    %v2433 = vlaneseq
    %v2434 = vshrl.u32 %v2433, 7
    %v2435 = vsub.s32 1, %v2434
    %v2436 = vrot.slane %v2427, %v2435
    %v2437 = vlaneseq
    %v2438 = vshrl.u32 %v2437, 7
    %v2439 = vsub.s32 2, %v2438
    %v2440 = vrot.slane %v2427, %v2439
    %v2441 = vlaneseq
    %v2442 = vshrl.u32 %v2441, 7
    %v2443 = vsub.s32 3, %v2442
    %v2444 = vrot.slane %v2427, %v2443
    %v2465 = vunpack.c.l.b16 %v2379
    %v2466 = vunpack.c.l.b16 %v2380
    %v2467 = vunpack.c.l.b16 %v2381
    %v2468 = vunpack.c.l.b16 %v2382
    %v2469 = vunpack.c.l.b16 %v2383
    %v2470 = vunpack.c.l.b16 %v2384
    %v2471 = vunpack.c.l.b16 %v2385
    %v2472 = vunpack.c.l.b16 %v2386
    %v2473 = vunpack.c.l.b16 %v2387
    %v2474 = vunpack.c.l.b16 %v2388
    %v2475 = vunpack.c.l.b16 %v2389
    %v2476 = vunpack.c.l.b16 %v2390
    %v2477 = vunpack.c.l.b16 %v2391
    %v2478 = vunpack.c.l.b16 %v2392
    %v2479 = vunpack.c.l.b16 %v2393
    %v2480 = vunpack.c.l.b16 %v2394
    %v2481 = vpack.c.b16 %v2466, %v2465
    %v2482 = vpack.c.b16 %v2468, %v2467
    %v2483 = vpack.c.b16 %v2470, %v2469
    %v2484 = vpack.c.b16 %v2472, %v2471
    %v2485 = vpack.c.b16 %v2474, %v2473
    %v2486 = vpack.c.b16 %v2476, %v2475
    %v2487 = vpack.c.b16 %v2478, %v2477
    %v2488 = vpack.c.b16 %v2480, %v2479
    %v2529 = vunpack.c.l.b16 %v2395
    %v2530 = vunpack.c.h.b16 %v2395
    %v2531 = vunpack.c.l.b16 %v2396
    %v2532 = vunpack.c.h.b16 %v2396
    %v2533 = vunpack.c.l.b16 %v2397
    %v2534 = vunpack.c.h.b16 %v2397
    %v2535 = vunpack.c.l.b16 %v2398
    %v2536 = vunpack.c.h.b16 %v2398
    %v2537 = vunpack.c.l.b16 %v2399
    %v2538 = vunpack.c.h.b16 %v2399
    %v2539 = vunpack.c.l.b16 %v2400
    %v2540 = vunpack.c.h.b16 %v2400
    %v2541 = vunpack.c.l.b16 %v2401
    %v2542 = vunpack.c.h.b16 %v2401
    %v2543 = vunpack.c.l.b16 %v2402
    %v2544 = vunpack.c.h.b16 %v2402
    %v2545 = vunpack.c.l.b16 %v2403
    %v2546 = vunpack.c.h.b16 %v2403
    %v2547 = vunpack.c.l.b16 %v2404
    %v2548 = vunpack.c.h.b16 %v2404
    %v2549 = vunpack.c.l.b16 %v2405
    %v2550 = vunpack.c.h.b16 %v2405
    %v2551 = vunpack.c.l.b16 %v2406
    %v2552 = vunpack.c.h.b16 %v2406
    %v2553 = vunpack.c.l.b16 %v2407
    %v2554 = vunpack.c.h.b16 %v2407
    %v2555 = vunpack.c.l.b16 %v2408
    %v2556 = vunpack.c.h.b16 %v2408
    %v2557 = vunpack.c.l.b16 %v2409
    %v2558 = vunpack.c.h.b16 %v2409
    %v2559 = vunpack.c.l.b16 %v2410
    %v2560 = vunpack.c.h.b16 %v2410
    %v2561 = vunpack.c.l.b16 %v2411
    %v2562 = vunpack.c.h.b16 %v2411
    %v2563 = vunpack.c.l.b16 %v2412
    %v2564 = vunpack.c.h.b16 %v2412
    %v2565 = vunpack.c.l.b16 %v2413
    %v2566 = vunpack.c.h.b16 %v2413
    %v2567 = vunpack.c.l.b16 %v2414
    %v2568 = vunpack.c.h.b16 %v2414
    %v2569 = vunpack.c.l.b16 %v2415
    %v2570 = vunpack.c.h.b16 %v2415
    %v2571 = vunpack.c.l.b16 %v2416
    %v2572 = vunpack.c.h.b16 %v2416
    %v2573 = vunpack.c.l.b16 %v2417
    %v2574 = vunpack.c.h.b16 %v2417
    %v2575 = vunpack.c.l.b16 %v2418
    %v2576 = vunpack.c.h.b16 %v2418
    %v2577 = vunpack.c.l.b16 %v2419
    %v2578 = vunpack.c.h.b16 %v2419
    %v2579 = vunpack.c.l.b16 %v2420
    %v2580 = vunpack.c.h.b16 %v2420
    %v2581 = vunpack.c.l.b16 %v2421
    %v2582 = vunpack.c.h.b16 %v2421
    %v2583 = vunpack.c.l.b16 %v2422
    %v2584 = vunpack.c.h.b16 %v2422
    %v2585 = vunpack.c.l.b16 %v2423
    %v2586 = vunpack.c.h.b16 %v2423
    %v2587 = vunpack.c.l.b16 %v2424
    %v2588 = vunpack.c.h.b16 %v2424
    %v2589 = vunpack.c.l.b16 %v2425
    %v2590 = vunpack.c.h.b16 %v2425
    %v2591 = vunpack.c.l.b16 %v2426
    %v2592 = vunpack.c.h.b16 %v2426
    %v2593 = vpack.c.b16 %v2533, %v2529
    %v2594 = vpack.c.b16 %v2534, %v2530
    %v2595 = vpack.c.b16 %v2535, %v2531
    %v2596 = vpack.c.b16 %v2536, %v2532
    %v2597 = vpack.c.b16 %v2541, %v2537
    %v2598 = vpack.c.b16 %v2542, %v2538
    %v2599 = vpack.c.b16 %v2543, %v2539
    %v2600 = vpack.c.b16 %v2544, %v2540
    %v2601 = vpack.c.b16 %v2549, %v2545
    %v2602 = vpack.c.b16 %v2550, %v2546
    %v2603 = vpack.c.b16 %v2551, %v2547
    %v2604 = vpack.c.b16 %v2552, %v2548
    %v2605 = vpack.c.b16 %v2557, %v2553
    %v2606 = vpack.c.b16 %v2558, %v2554
    %v2607 = vpack.c.b16 %v2559, %v2555
    %v2608 = vpack.c.b16 %v2560, %v2556
    %v2609 = vpack.c.b16 %v2565, %v2561
    %v2610 = vpack.c.b16 %v2566, %v2562
    %v2611 = vpack.c.b16 %v2567, %v2563
    %v2612 = vpack.c.b16 %v2568, %v2564
    %v2613 = vpack.c.b16 %v2573, %v2569
    %v2614 = vpack.c.b16 %v2574, %v2570
    %v2615 = vpack.c.b16 %v2575, %v2571
    %v2616 = vpack.c.b16 %v2576, %v2572
    %v2617 = vpack.c.b16 %v2581, %v2577
    %v2618 = vpack.c.b16 %v2582, %v2578
    %v2619 = vpack.c.b16 %v2583, %v2579
    %v2620 = vpack.c.b16 %v2584, %v2580
    %v2621 = vpack.c.b16 %v2589, %v2585
    %v2622 = vpack.c.b16 %v2590, %v2586
    %v2623 = vpack.c.b16 %v2591, %v2587
    %v2624 = vpack.c.b16 %v2592, %v2588
    %2657 = vmatprep.subr.bf16.mxu0 %v2622
    %2658 = vmatpush1.bf16.msra.mxu0 %v2621
    %2659 = vmatprep.subr.bf16.mxu0 %v2618
    %2660 = vmatpush1.bf16.msra.mxu0 %v2617
    %2661 = vmatprep.subr.bf16.mxu0 %v2614
    %2662 = vmatpush1.bf16.msra.mxu0 %v2613
    %2663 = vmatprep.subr.bf16.mxu0 %v2610
    %2664 = vmatpush1.bf16.msra.mxu0 %v2609
    %2665 = vmatprep.subr.bf16.mxu0 %v2606
    %2666 = vmatpush1.bf16.msra.mxu0 %v2605
    %2667 = vmatprep.subr.bf16.mxu0 %v2602
    %2668 = vmatpush1.bf16.msra.mxu0 %v2601
    %2669 = vmatprep.subr.bf16.mxu0 %v2598
    %2670 = vmatpush1.bf16.msra.mxu0 %v2597
    %2671 = vmatprep.subr.bf16.mxu0 %v2594
    %2672 = vmatpush1.bf16.msra.mxu0 %v2593
    %2673 = vmatprep.subr.bf16.mxu0 0
    %2674 = vmatpush2.bf16.msra.mxu0 0
    %2675 = vmatprep.subr.bf16.mxu0 0
    %2676 = vmatpush2.bf16.msra.mxu0 0
    %2677 = vmatprep.subr.bf16.mxu0 0
    %2678 = vmatpush2.bf16.msra.mxu0 0
    %2679 = vmatprep.subr.bf16.mxu0 0
    %2680 = vmatpush2.bf16.msra.mxu0 0
    %2681 = vmatprep.subr.bf16.mxu0 0
    %2682 = vmatpush2.bf16.msra.mxu0 0
    %2683 = vmatprep.subr.bf16.mxu0 0
    %2684 = vmatpush2.bf16.msra.mxu0 0
    %2685 = vmatprep.subr.bf16.mxu0 0
    %2686 = vmatpush2.bf16.msra.mxu0 0
    %2687 = vmatprep.subr.bf16.mxu0 0
    %2688 = vmatpush2.bf16.msra.mxu0 0
    %2689 = vmatprep.mubr.bf16.mxu0 0
    %2690 = vmatmul.mubr.bf16.gmra.mxu0 %v2481
    %v2691 = vpop.f32.mrf.mxu0
    %v2692 = vadd.f32 %v2432, %v2691
    %v2693 = vpop.f32.mrf.mxu0
    %v2694 = vadd.f32 %v2436, %v2693
    %v2695 = vpop.f32.mrf.mxu0
    %v2696 = vadd.f32 %v2432, %v2695
    %v2697 = vpop.f32.mrf.mxu0
    %v2698 = vadd.f32 %v2436, %v2697
    %2699 = vmatprep.mubr.bf16.mxu0 0
    %2700 = vmatmul.mubr.bf16.gmra.mxu0 %v2482
    %v2701 = vpop.f32.mrf.mxu0
    %v2702 = vadd.f32 %v2432, %v2701
    %v2703 = vpop.f32.mrf.mxu0
    %v2704 = vadd.f32 %v2436, %v2703
    %v2705 = vpop.f32.mrf.mxu0
    %v2706 = vadd.f32 %v2432, %v2705
    %v2707 = vpop.f32.mrf.mxu0
    %v2708 = vadd.f32 %v2436, %v2707
    %2709 = vmatprep.mubr.bf16.mxu0 0
    %2710 = vmatmul.mubr.bf16.gmra.mxu0 %v2483
    %v2711 = vpop.f32.mrf.mxu0
    %v2712 = vadd.f32 %v2432, %v2711
    %v2713 = vpop.f32.mrf.mxu0
    %v2714 = vadd.f32 %v2436, %v2713
    %v2715 = vpop.f32.mrf.mxu0
    %v2716 = vadd.f32 %v2432, %v2715
    %v2717 = vpop.f32.mrf.mxu0
    %v2718 = vadd.f32 %v2436, %v2717
    %2719 = vmatprep.mubr.bf16.mxu0 0
    %2720 = vmatmul.mubr.bf16.gmra.mxu0 %v2484
    %v2721 = vpop.f32.mrf.mxu0
    %v2722 = vadd.f32 %v2432, %v2721
    %v2723 = vpop.f32.mrf.mxu0
    %v2724 = vadd.f32 %v2436, %v2723
    %v2725 = vpop.f32.mrf.mxu0
    %v2726 = vadd.f32 %v2432, %v2725
    %v2727 = vpop.f32.mrf.mxu0
    %v2728 = vadd.f32 %v2436, %v2727
    %2729 = vmatprep.mubr.bf16.mxu0 0
    %2730 = vmatmul.mubr.bf16.gmra.mxu0 %v2485
    %v2731 = vpop.f32.mrf.mxu0
    %v2732 = vadd.f32 %v2432, %v2731
    %v2733 = vpop.f32.mrf.mxu0
    %v2734 = vadd.f32 %v2436, %v2733
    %v2735 = vpop.f32.mrf.mxu0
    %v2736 = vadd.f32 %v2432, %v2735
    %v2737 = vpop.f32.mrf.mxu0
    %v2738 = vadd.f32 %v2436, %v2737
    %2739 = vmatprep.mubr.bf16.mxu0 0
    %2740 = vmatmul.mubr.bf16.gmra.mxu0 %v2486
    %v2741 = vpop.f32.mrf.mxu0
    %v2742 = vadd.f32 %v2432, %v2741
    %v2743 = vpop.f32.mrf.mxu0
    %v2744 = vadd.f32 %v2436, %v2743
    %v2745 = vpop.f32.mrf.mxu0
    %v2746 = vadd.f32 %v2432, %v2745
    %v2747 = vpop.f32.mrf.mxu0
    %v2748 = vadd.f32 %v2436, %v2747
    %2749 = vmatprep.mubr.bf16.mxu0 0
    %2750 = vmatmul.mubr.bf16.gmra.mxu0 %v2487
    %v2751 = vpop.f32.mrf.mxu0
    %v2752 = vadd.f32 %v2432, %v2751
    %v2753 = vpop.f32.mrf.mxu0
    %v2754 = vadd.f32 %v2436, %v2753
    %v2755 = vpop.f32.mrf.mxu0
    %v2756 = vadd.f32 %v2432, %v2755
    %v2757 = vpop.f32.mrf.mxu0
    %v2758 = vadd.f32 %v2436, %v2757
    %2759 = vmatprep.mubr.bf16.mxu0 0
    %2760 = vmatmul.mubr.bf16.gmra.mxu0 %v2488
    %v2761 = vpop.f32.mrf.mxu0
    %v2762 = vadd.f32 %v2432, %v2761
    %v2763 = vpop.f32.mrf.mxu0
    %v2764 = vadd.f32 %v2436, %v2763
    %v2765 = vpop.f32.mrf.mxu0
    %v2766 = vadd.f32 %v2432, %v2765
    %v2767 = vpop.f32.mrf.mxu0
    %v2768 = vadd.f32 %v2436, %v2767
    %2769 = vdwg.mxu0
    %2770 = vmatprep.subr.bf16.mxu0 %v2624
    %2771 = vmatpush1.bf16.msra.mxu0 %v2623
    %2772 = vmatprep.subr.bf16.mxu0 %v2620
    %2773 = vmatpush1.bf16.msra.mxu0 %v2619
    %2774 = vmatprep.subr.bf16.mxu0 %v2616
    %2775 = vmatpush1.bf16.msra.mxu0 %v2615
    %2776 = vmatprep.subr.bf16.mxu0 %v2612
    %2777 = vmatpush1.bf16.msra.mxu0 %v2611
    %2778 = vmatprep.subr.bf16.mxu0 %v2608
    %2779 = vmatpush1.bf16.msra.mxu0 %v2607
    %2780 = vmatprep.subr.bf16.mxu0 %v2604
    %2781 = vmatpush1.bf16.msra.mxu0 %v2603
    %2782 = vmatprep.subr.bf16.mxu0 %v2600
    %2783 = vmatpush1.bf16.msra.mxu0 %v2599
    %2784 = vmatprep.subr.bf16.mxu0 %v2596
    %2785 = vmatpush1.bf16.msra.mxu0 %v2595
    %2786 = vmatprep.subr.bf16.mxu0 0
    %2787 = vmatpush2.bf16.msra.mxu0 0
    %2788 = vmatprep.subr.bf16.mxu0 0
    %2789 = vmatpush2.bf16.msra.mxu0 0
    %2790 = vmatprep.subr.bf16.mxu0 0
    %2791 = vmatpush2.bf16.msra.mxu0 0
    %2792 = vmatprep.subr.bf16.mxu0 0
    %2793 = vmatpush2.bf16.msra.mxu0 0
    %2794 = vmatprep.subr.bf16.mxu0 0
    %2795 = vmatpush2.bf16.msra.mxu0 0
    %2796 = vmatprep.subr.bf16.mxu0 0
    %2797 = vmatpush2.bf16.msra.mxu0 0
    %2798 = vmatprep.subr.bf16.mxu0 0
    %2799 = vmatpush2.bf16.msra.mxu0 0
    %2800 = vmatprep.subr.bf16.mxu0 0
    %2801 = vmatpush2.bf16.msra.mxu0 0
    %2802 = vmatprep.mubr.bf16.mxu0 0
    %2803 = vmatmul.mubr.bf16.gmra.mxu0 %v2481
    %v2804 = vpop.f32.mrf.mxu0
    %v2805 = vadd.f32 %v2440, %v2804
    %v2806 = vpop.f32.mrf.mxu0
    %v2807 = vadd.f32 %v2444, %v2806
    %v2808 = vpop.f32.mrf.mxu0
    %v2809 = vadd.f32 %v2440, %v2808
    %v2810 = vpop.f32.mrf.mxu0
    %v2811 = vadd.f32 %v2444, %v2810
    %2812 = vmatprep.mubr.bf16.mxu0 0
    %2813 = vmatmul.mubr.bf16.gmra.mxu0 %v2482
    %v2814 = vpop.f32.mrf.mxu0
    %v2815 = vadd.f32 %v2440, %v2814
    %v2816 = vpop.f32.mrf.mxu0
    %v2817 = vadd.f32 %v2444, %v2816
    %v2818 = vpop.f32.mrf.mxu0
    %v2819 = vadd.f32 %v2440, %v2818
    %v2820 = vpop.f32.mrf.mxu0
    %v2821 = vadd.f32 %v2444, %v2820
    %2822 = vmatprep.mubr.bf16.mxu0 0
    %2823 = vmatmul.mubr.bf16.gmra.mxu0 %v2483
    %v2824 = vpop.f32.mrf.mxu0
    %v2825 = vadd.f32 %v2440, %v2824
    %v2826 = vpop.f32.mrf.mxu0
    %v2827 = vadd.f32 %v2444, %v2826
    %v2828 = vpop.f32.mrf.mxu0
    %v2829 = vadd.f32 %v2440, %v2828
    %v2830 = vpop.f32.mrf.mxu0
    %v2831 = vadd.f32 %v2444, %v2830
    %2832 = vmatprep.mubr.bf16.mxu0 0
    %2833 = vmatmul.mubr.bf16.gmra.mxu0 %v2484
    %v2834 = vpop.f32.mrf.mxu0
    %v2835 = vadd.f32 %v2440, %v2834
    %v2836 = vpop.f32.mrf.mxu0
    %v2837 = vadd.f32 %v2444, %v2836
    %v2838 = vpop.f32.mrf.mxu0
    %v2839 = vadd.f32 %v2440, %v2838
    %v2840 = vpop.f32.mrf.mxu0
    %v2841 = vadd.f32 %v2444, %v2840
    %2842 = vmatprep.mubr.bf16.mxu0 0
    %2843 = vmatmul.mubr.bf16.gmra.mxu0 %v2485
    %v2844 = vpop.f32.mrf.mxu0
    %v2845 = vadd.f32 %v2440, %v2844
    %v2846 = vpop.f32.mrf.mxu0
    %v2847 = vadd.f32 %v2444, %v2846
    %v2848 = vpop.f32.mrf.mxu0
    %v2849 = vadd.f32 %v2440, %v2848
    %v2850 = vpop.f32.mrf.mxu0
    %v2851 = vadd.f32 %v2444, %v2850
    %2852 = vmatprep.mubr.bf16.mxu0 0
    %2853 = vmatmul.mubr.bf16.gmra.mxu0 %v2486
    %v2854 = vpop.f32.mrf.mxu0
    %v2855 = vadd.f32 %v2440, %v2854
    %v2856 = vpop.f32.mrf.mxu0
    %v2857 = vadd.f32 %v2444, %v2856
    %v2858 = vpop.f32.mrf.mxu0
    %v2859 = vadd.f32 %v2440, %v2858
    %v2860 = vpop.f32.mrf.mxu0
    %v2861 = vadd.f32 %v2444, %v2860
    %2862 = vmatprep.mubr.bf16.mxu0 0
    %2863 = vmatmul.mubr.bf16.gmra.mxu0 %v2487
    %v2864 = vpop.f32.mrf.mxu0
    %v2865 = vadd.f32 %v2440, %v2864
    %v2866 = vpop.f32.mrf.mxu0
    %v2867 = vadd.f32 %v2444, %v2866
    %v2868 = vpop.f32.mrf.mxu0
    %v2869 = vadd.f32 %v2440, %v2868
    %v2870 = vpop.f32.mrf.mxu0
    %v2871 = vadd.f32 %v2444, %v2870
    %2872 = vmatprep.mubr.bf16.mxu0 0
    %2873 = vmatmul.mubr.bf16.gmra.mxu0 %v2488
    %v2874 = vpop.f32.mrf.mxu0
    %v2875 = vadd.f32 %v2440, %v2874
    %v2876 = vpop.f32.mrf.mxu0
    %v2877 = vadd.f32 %v2444, %v2876
    %v2878 = vpop.f32.mrf.mxu0
    %v2879 = vadd.f32 %v2440, %v2878
    %v2880 = vpop.f32.mrf.mxu0
    %v2881 = vadd.f32 %v2444, %v2880
    %2882 = vdwg.mxu0
    %v2883 = vpack.c.bf16 %v2696, %v2692
    %v2884 = vpack.c.bf16 %v2698, %v2694
    %v2885 = vpack.c.bf16 %v2809, %v2805
    %v2886 = vpack.c.bf16 %v2811, %v2807
    %v2887 = vpack.c.bf16 %v2706, %v2702
    %v2888 = vpack.c.bf16 %v2708, %v2704
    %v2889 = vpack.c.bf16 %v2819, %v2815
    %v2890 = vpack.c.bf16 %v2821, %v2817
    %v2891 = vpack.c.bf16 %v2716, %v2712
    %v2892 = vpack.c.bf16 %v2718, %v2714
    %v2893 = vpack.c.bf16 %v2829, %v2825
    %v2894 = vpack.c.bf16 %v2831, %v2827
    %v2895 = vpack.c.bf16 %v2726, %v2722
    %v2896 = vpack.c.bf16 %v2728, %v2724
    %v2897 = vpack.c.bf16 %v2839, %v2835
    %v2898 = vpack.c.bf16 %v2841, %v2837
    %v2899 = vpack.c.bf16 %v2736, %v2732
    %v2900 = vpack.c.bf16 %v2738, %v2734
    %v2901 = vpack.c.bf16 %v2849, %v2845
    %v2902 = vpack.c.bf16 %v2851, %v2847
    %v2903 = vpack.c.bf16 %v2746, %v2742
    %v2904 = vpack.c.bf16 %v2748, %v2744
    %v2905 = vpack.c.bf16 %v2859, %v2855
    %v2906 = vpack.c.bf16 %v2861, %v2857
    %v2907 = vpack.c.bf16 %v2756, %v2752
    %v2908 = vpack.c.bf16 %v2758, %v2754
    %v2909 = vpack.c.bf16 %v2869, %v2865
    %v2910 = vpack.c.bf16 %v2871, %v2867
    %v2911 = vpack.c.bf16 %v2766, %v2762
    %v2912 = vpack.c.bf16 %v2768, %v2764
    %v2913 = vpack.c.bf16 %v2879, %v2875
    %v2914 = vpack.c.bf16 %v2881, %v2877
    %v2947 = vunpack.c.l.b16 %v2883
    %v2948 = vunpack.c.l.b16 %v2884
    %v2949 = vunpack.c.l.b16 %v2885
    %v2950 = vunpack.c.l.b16 %v2886
    %v2951 = vunpack.c.h.b16 %v2883
    %v2952 = vunpack.c.h.b16 %v2884
    %v2953 = vunpack.c.h.b16 %v2885
    %v2954 = vunpack.c.h.b16 %v2886
    %v2955 = vunpack.c.l.b16 %v2887
    %v2956 = vunpack.c.l.b16 %v2888
    %v2957 = vunpack.c.l.b16 %v2889
    %v2958 = vunpack.c.l.b16 %v2890
    %v2959 = vunpack.c.h.b16 %v2887
    %v2960 = vunpack.c.h.b16 %v2888
    %v2961 = vunpack.c.h.b16 %v2889
    %v2962 = vunpack.c.h.b16 %v2890
    %v2963 = vunpack.c.l.b16 %v2891
    %v2964 = vunpack.c.l.b16 %v2892
    %v2965 = vunpack.c.l.b16 %v2893
    %v2966 = vunpack.c.l.b16 %v2894
    %v2967 = vunpack.c.h.b16 %v2891
    %v2968 = vunpack.c.h.b16 %v2892
    %v2969 = vunpack.c.h.b16 %v2893
    %v2970 = vunpack.c.h.b16 %v2894
    %v2971 = vunpack.c.l.b16 %v2895
    %v2972 = vunpack.c.l.b16 %v2896
    %v2973 = vunpack.c.l.b16 %v2897
    %v2974 = vunpack.c.l.b16 %v2898
    %v2975 = vunpack.c.h.b16 %v2895
    %v2976 = vunpack.c.h.b16 %v2896
    %v2977 = vunpack.c.h.b16 %v2897
    %v2978 = vunpack.c.h.b16 %v2898
    %v2979 = vunpack.c.l.b16 %v2899
    %v2980 = vunpack.c.l.b16 %v2900
    %v2981 = vunpack.c.l.b16 %v2901
    %v2982 = vunpack.c.l.b16 %v2902
    %v2983 = vunpack.c.h.b16 %v2899
    %v2984 = vunpack.c.h.b16 %v2900
    %v2985 = vunpack.c.h.b16 %v2901
    %v2986 = vunpack.c.h.b16 %v2902
    %v2987 = vunpack.c.l.b16 %v2903
    %v2988 = vunpack.c.l.b16 %v2904
    %v2989 = vunpack.c.l.b16 %v2905
    %v2990 = vunpack.c.l.b16 %v2906
    %v2991 = vunpack.c.h.b16 %v2903
    %v2992 = vunpack.c.h.b16 %v2904
    %v2993 = vunpack.c.h.b16 %v2905
    %v2994 = vunpack.c.h.b16 %v2906
    %v2995 = vunpack.c.l.b16 %v2907
    %v2996 = vunpack.c.l.b16 %v2908
    %v2997 = vunpack.c.l.b16 %v2909
    %v2998 = vunpack.c.l.b16 %v2910
    %v2999 = vunpack.c.h.b16 %v2907
    %v3000 = vunpack.c.h.b16 %v2908
    %v3001 = vunpack.c.h.b16 %v2909
    %v3002 = vunpack.c.h.b16 %v2910
    %v3003 = vunpack.c.l.b16 %v2911
    %v3004 = vunpack.c.l.b16 %v2912
    %v3005 = vunpack.c.l.b16 %v2913
    %v3006 = vunpack.c.l.b16 %v2914
    %v3007 = vunpack.c.h.b16 %v2911
    %v3008 = vunpack.c.h.b16 %v2912
    %v3009 = vunpack.c.h.b16 %v2913
    %v3010 = vunpack.c.h.b16 %v2914
    %v3011 = vpack.c.b16 %v2948, %v2947
    %v3012 = vpack.c.b16 %v2950, %v2949
    %v3013 = vpack.c.b16 %v2952, %v2951
    %v3014 = vpack.c.b16 %v2954, %v2953
    %v3015 = vpack.c.b16 %v2956, %v2955
    %v3016 = vpack.c.b16 %v2958, %v2957
    %v3017 = vpack.c.b16 %v2960, %v2959
    %v3018 = vpack.c.b16 %v2962, %v2961
    %v3019 = vpack.c.b16 %v2964, %v2963
    %v3020 = vpack.c.b16 %v2966, %v2965
    %v3021 = vpack.c.b16 %v2968, %v2967
    %v3022 = vpack.c.b16 %v2970, %v2969
    %v3023 = vpack.c.b16 %v2972, %v2971
    %v3024 = vpack.c.b16 %v2974, %v2973
    %v3025 = vpack.c.b16 %v2976, %v2975
    %v3026 = vpack.c.b16 %v2978, %v2977
    %v3027 = vpack.c.b16 %v2980, %v2979
    %v3028 = vpack.c.b16 %v2982, %v2981
    %v3029 = vpack.c.b16 %v2984, %v2983
    %v3030 = vpack.c.b16 %v2986, %v2985
    %v3031 = vpack.c.b16 %v2988, %v2987
    %v3032 = vpack.c.b16 %v2990, %v2989
    %v3033 = vpack.c.b16 %v2992, %v2991
    %v3034 = vpack.c.b16 %v2994, %v2993
    %v3035 = vpack.c.b16 %v2996, %v2995
    %v3036 = vpack.c.b16 %v2998, %v2997
    %v3037 = vpack.c.b16 %v3000, %v2999
    %v3038 = vpack.c.b16 %v3002, %v3001
    %v3039 = vpack.c.b16 %v3004, %v3003
    %v3040 = vpack.c.b16 %v3006, %v3005
    %v3041 = vpack.c.b16 %v3008, %v3007
    %v3042 = vpack.c.b16 %v3010, %v3009
    %3075 = vst [vmem:[#allocation2] sm:$0xff] %v3011
    %3076 = vst [vmem:[#allocation2 + $0x8] sm:$0xff] %v3012
    %3077 = vst [vmem:[#allocation2 + $0x10] sm:$0xff] %v3013
    %3078 = vst [vmem:[#allocation2 + $0x18] sm:$0xff] %v3014
    %3079 = vst [vmem:[#allocation2 + $0x20] sm:$0xff] %v3015
    %3080 = vst [vmem:[#allocation2 + $0x28] sm:$0xff] %v3016
    %3081 = vst [vmem:[#allocation2 + $0x30] sm:$0xff] %v3017
    %3082 = vst [vmem:[#allocation2 + $0x38] sm:$0xff] %v3018
    %3083 = vst [vmem:[#allocation2 + $0x40] sm:$0xff] %v3019
    %3084 = vst [vmem:[#allocation2 + $0x48] sm:$0xff] %v3020
    %3085 = vst [vmem:[#allocation2 + $0x50] sm:$0xff] %v3021
    %3086 = vst [vmem:[#allocation2 + $0x58] sm:$0xff] %v3022
    %3087 = vst [vmem:[#allocation2 + $0x60] sm:$0xff] %v3023
    %3088 = vst [vmem:[#allocation2 + $0x68] sm:$0xff] %v3024
    %3089 = vst [vmem:[#allocation2 + $0x70] sm:$0xff] %v3025
    %3090 = vst [vmem:[#allocation2 + $0x78] sm:$0xff] %v3026
    %3091 = vst [vmem:[#allocation2 + $0x80] sm:$0xff] %v3027
    %3092 = vst [vmem:[#allocation2 + $0x88] sm:$0xff] %v3028
    %3093 = vst [vmem:[#allocation2 + $0x90] sm:$0xff] %v3029
    %3094 = vst [vmem:[#allocation2 + $0x98] sm:$0xff] %v3030
    %3095 = vst [vmem:[#allocation2 + $0xa0] sm:$0xff] %v3031
    %3096 = vst [vmem:[#allocation2 + $0xa8] sm:$0xff] %v3032
    %3097 = vst [vmem:[#allocation2 + $0xb0] sm:$0xff] %v3033
    %3098 = vst [vmem:[#allocation2 + $0xb8] sm:$0xff] %v3034
    %3099 = vst [vmem:[#allocation2 + $0xc0] sm:$0xff] %v3035
    %3100 = vst [vmem:[#allocation2 + $0xc8] sm:$0xff] %v3036
    %3101 = vst [vmem:[#allocation2 + $0xd0] sm:$0xff] %v3037
    %3102 = vst [vmem:[#allocation2 + $0xd8] sm:$0xff] %v3038
    %3103 = vst [vmem:[#allocation2 + $0xe0] sm:$0xff] %v3039
    %3104 = vst [vmem:[#allocation2 + $0xe8] sm:$0xff] %v3040
    %3105 = vst [vmem:[#allocation2 + $0xf0] sm:$0xff] %v3041
    %3106 = vst [vmem:[#allocation2 + $0xf8] sm:$0xff] %v3042
    %v3107 = vld [vmem:[#allocation12] sm:$0xff]
    %v3108 = vld [vmem:[#allocation12 + $0x8] sm:$0xff]
    %v3109 = vld [vmem:[#allocation12 + $0x10] sm:$0xff]
    %v3110 = vld [vmem:[#allocation12 + $0x18] sm:$0xff]
    %v3111 = vld [vmem:[#allocation12 + $0x20] sm:$0xff]
    %v3112 = vld [vmem:[#allocation12 + $0x28] sm:$0xff]
    %v3113 = vld [vmem:[#allocation12 + $0x30] sm:$0xff]
    %v3114 = vld [vmem:[#allocation12 + $0x38] sm:$0xff]
    %v3115 = vld [vmem:[#allocation12 + $0x40] sm:$0xff]
    %v3116 = vld [vmem:[#allocation12 + $0x48] sm:$0xff]
    %v3117 = vld [vmem:[#allocation12 + $0x50] sm:$0xff]
    %v3118 = vld [vmem:[#allocation12 + $0x58] sm:$0xff]
    %v3119 = vld [vmem:[#allocation12 + $0x60] sm:$0xff]
    %v3120 = vld [vmem:[#allocation12 + $0x68] sm:$0xff]
    %v3121 = vld [vmem:[#allocation12 + $0x70] sm:$0xff]
    %v3122 = vld [vmem:[#allocation12 + $0x78] sm:$0xff]
    %v3123 = vld [vmem:[#allocation12 + $0x80] sm:$0xff]
    %v3124 = vld [vmem:[#allocation12 + $0x88] sm:$0xff]
    %v3125 = vld [vmem:[#allocation12 + $0x90] sm:$0xff]
    %v3126 = vld [vmem:[#allocation12 + $0x98] sm:$0xff]
    %v3127 = vld [vmem:[#allocation12 + $0xa0] sm:$0xff]
    %v3128 = vld [vmem:[#allocation12 + $0xa8] sm:$0xff]
    %v3129 = vld [vmem:[#allocation12 + $0xb0] sm:$0xff]
    %v3130 = vld [vmem:[#allocation12 + $0xb8] sm:$0xff]
    %v3131 = vld [vmem:[#allocation12 + $0xc0] sm:$0xff]
    %v3132 = vld [vmem:[#allocation12 + $0xc8] sm:$0xff]
    %v3133 = vld [vmem:[#allocation12 + $0xd0] sm:$0xff]
    %v3134 = vld [vmem:[#allocation12 + $0xd8] sm:$0xff]
    %v3135 = vld [vmem:[#allocation12 + $0xe0] sm:$0xff]
    %v3136 = vld [vmem:[#allocation12 + $0xe8] sm:$0xff]
    %v3137 = vld [vmem:[#allocation12 + $0xf0] sm:$0xff]
    %v3138 = vld [vmem:[#allocation12 + $0xf8] sm:$0xff]
    %v3139 = vld [vmem:[%s878] sm:$0xff]
    %v3140 = vld [vmem:[%s878 + $0x8] sm:$0xff]
    %v3141 = vld [vmem:[%s878 + $0x10] sm:$0xff]
    %v3142 = vld [vmem:[%s878 + $0x18] sm:$0xff]
    %v3143 = vunpack.c.l.bf16 %v3139
    %v3144 = vunpack.c.h.bf16 %v3139
    %v3145 = vunpack.c.l.bf16 %v3140
    %v3146 = vunpack.c.h.bf16 %v3140
    %v3147 = vunpack.c.l.bf16 %v3141
    %v3148 = vunpack.c.h.bf16 %v3141
    %v3149 = vunpack.c.l.bf16 %v3142
    %v3150 = vunpack.c.h.bf16 %v3142
    %v3183 = vunpack.c.l.b16 %v3107
    %v3184 = vunpack.c.h.b16 %v3107
    %v3185 = vunpack.c.l.b16 %v3108
    %v3186 = vunpack.c.h.b16 %v3108
    %v3187 = vunpack.c.l.b16 %v3109
    %v3188 = vunpack.c.h.b16 %v3109
    %v3189 = vunpack.c.l.b16 %v3110
    %v3190 = vunpack.c.h.b16 %v3110
    %v3191 = vunpack.c.l.b16 %v3111
    %v3192 = vunpack.c.h.b16 %v3111
    %v3193 = vunpack.c.l.b16 %v3112
    %v3194 = vunpack.c.h.b16 %v3112
    %v3195 = vunpack.c.l.b16 %v3113
    %v3196 = vunpack.c.h.b16 %v3113
    %v3197 = vunpack.c.l.b16 %v3114
    %v3198 = vunpack.c.h.b16 %v3114
    %v3199 = vunpack.c.l.b16 %v3115
    %v3200 = vunpack.c.h.b16 %v3115
    %v3201 = vunpack.c.l.b16 %v3116
    %v3202 = vunpack.c.h.b16 %v3116
    %v3203 = vunpack.c.l.b16 %v3117
    %v3204 = vunpack.c.h.b16 %v3117
    %v3205 = vunpack.c.l.b16 %v3118
    %v3206 = vunpack.c.h.b16 %v3118
    %v3207 = vunpack.c.l.b16 %v3119
    %v3208 = vunpack.c.h.b16 %v3119
    %v3209 = vunpack.c.l.b16 %v3120
    %v3210 = vunpack.c.h.b16 %v3120
    %v3211 = vunpack.c.l.b16 %v3121
    %v3212 = vunpack.c.h.b16 %v3121
    %v3213 = vunpack.c.l.b16 %v3122
    %v3214 = vunpack.c.h.b16 %v3122
    %v3215 = vunpack.c.l.b16 %v3123
    %v3216 = vunpack.c.h.b16 %v3123
    %v3217 = vunpack.c.l.b16 %v3124
    %v3218 = vunpack.c.h.b16 %v3124
    %v3219 = vunpack.c.l.b16 %v3125
    %v3220 = vunpack.c.h.b16 %v3125
    %v3221 = vunpack.c.l.b16 %v3126
    %v3222 = vunpack.c.h.b16 %v3126
    %v3223 = vunpack.c.l.b16 %v3127
    %v3224 = vunpack.c.h.b16 %v3127
    %v3225 = vunpack.c.l.b16 %v3128
    %v3226 = vunpack.c.h.b16 %v3128
    %v3227 = vunpack.c.l.b16 %v3129
    %v3228 = vunpack.c.h.b16 %v3129
    %v3229 = vunpack.c.l.b16 %v3130
    %v3230 = vunpack.c.h.b16 %v3130
    %v3231 = vunpack.c.l.b16 %v3131
    %v3232 = vunpack.c.h.b16 %v3131
    %v3233 = vunpack.c.l.b16 %v3132
    %v3234 = vunpack.c.h.b16 %v3132
    %v3235 = vunpack.c.l.b16 %v3133
    %v3236 = vunpack.c.h.b16 %v3133
    %v3237 = vunpack.c.l.b16 %v3134
    %v3238 = vunpack.c.h.b16 %v3134
    %v3239 = vunpack.c.l.b16 %v3135
    %v3240 = vunpack.c.h.b16 %v3135
    %v3241 = vunpack.c.l.b16 %v3136
    %v3242 = vunpack.c.h.b16 %v3136
    %v3243 = vunpack.c.l.b16 %v3137
    %v3244 = vunpack.c.h.b16 %v3137
    %v3245 = vunpack.c.l.b16 %v3138
    %v3246 = vunpack.c.h.b16 %v3138
    %v3247 = vpack.c.b16 %v3187, %v3183
    %v3248 = vpack.c.b16 %v3188, %v3184
    %v3249 = vpack.c.b16 %v3189, %v3185
    %v3250 = vpack.c.b16 %v3190, %v3186
    %v3251 = vpack.c.b16 %v3195, %v3191
    %v3252 = vpack.c.b16 %v3196, %v3192
    %v3253 = vpack.c.b16 %v3197, %v3193
    %v3254 = vpack.c.b16 %v3198, %v3194
    %v3255 = vpack.c.b16 %v3203, %v3199
    %v3256 = vpack.c.b16 %v3204, %v3200
    %v3257 = vpack.c.b16 %v3205, %v3201
    %v3258 = vpack.c.b16 %v3206, %v3202
    %v3259 = vpack.c.b16 %v3211, %v3207
    %v3260 = vpack.c.b16 %v3212, %v3208
    %v3261 = vpack.c.b16 %v3213, %v3209
    %v3262 = vpack.c.b16 %v3214, %v3210
    %v3263 = vpack.c.b16 %v3219, %v3215
    %v3264 = vpack.c.b16 %v3220, %v3216
    %v3265 = vpack.c.b16 %v3221, %v3217
    %v3266 = vpack.c.b16 %v3222, %v3218
    %v3267 = vpack.c.b16 %v3227, %v3223
    %v3268 = vpack.c.b16 %v3228, %v3224
    %v3269 = vpack.c.b16 %v3229, %v3225
    %v3270 = vpack.c.b16 %v3230, %v3226
    %v3271 = vpack.c.b16 %v3235, %v3231
    %v3272 = vpack.c.b16 %v3236, %v3232
    %v3273 = vpack.c.b16 %v3237, %v3233
    %v3274 = vpack.c.b16 %v3238, %v3234
    %v3275 = vpack.c.b16 %v3243, %v3239
    %v3276 = vpack.c.b16 %v3244, %v3240
    %v3277 = vpack.c.b16 %v3245, %v3241
    %v3278 = vpack.c.b16 %v3246, %v3242
    %3311 = vmatprep.subr.bf16.mxu0 %v3276
    %3312 = vmatpush1.bf16.msra.mxu0 %v3275
    %3313 = vmatprep.subr.bf16.mxu0 %v3272
    %3314 = vmatpush1.bf16.msra.mxu0 %v3271
    %3315 = vmatprep.subr.bf16.mxu0 %v3268
    %3316 = vmatpush1.bf16.msra.mxu0 %v3267
    %3317 = vmatprep.subr.bf16.mxu0 %v3264
    %3318 = vmatpush1.bf16.msra.mxu0 %v3263
    %3319 = vmatprep.subr.bf16.mxu0 %v3260
    %3320 = vmatpush1.bf16.msra.mxu0 %v3259
    %3321 = vmatprep.subr.bf16.mxu0 %v3256
    %3322 = vmatpush1.bf16.msra.mxu0 %v3255
    %3323 = vmatprep.subr.bf16.mxu0 %v3252
    %3324 = vmatpush1.bf16.msra.mxu0 %v3251
    %3325 = vmatprep.subr.bf16.mxu0 %v3248
    %3326 = vmatpush1.bf16.msra.mxu0 %v3247
    %3327 = vmatprep.subr.bf16.mxu0 0
    %3328 = vmatpush2.bf16.msra.mxu0 0
    %3329 = vmatprep.subr.bf16.mxu0 0
    %3330 = vmatpush2.bf16.msra.mxu0 0
    %3331 = vmatprep.subr.bf16.mxu0 0
    %3332 = vmatpush2.bf16.msra.mxu0 0
    %3333 = vmatprep.subr.bf16.mxu0 0
    %3334 = vmatpush2.bf16.msra.mxu0 0
    %3335 = vmatprep.subr.bf16.mxu0 0
    %3336 = vmatpush2.bf16.msra.mxu0 0
    %3337 = vmatprep.subr.bf16.mxu0 0
    %3338 = vmatpush2.bf16.msra.mxu0 0
    %3339 = vmatprep.subr.bf16.mxu0 0
    %3340 = vmatpush2.bf16.msra.mxu0 0
    %3341 = vmatprep.subr.bf16.mxu0 0
    %3342 = vmatpush2.bf16.msra.mxu0 0
    %3343 = vmatprep.mubr.bf16.mxu0 0
    %3344 = vmatmul.mubr.bf16.gmra.mxu0 0
    %v3345 = vpop.f32.mrf.mxu0
    %v3346 = vadd.f32 0.0, %v3345
    %v3347 = vpop.f32.mrf.mxu0
    %v3348 = vadd.f32 0.0, %v3347
    %v3349 = vpop.f32.mrf.mxu0
    %v3350 = vadd.f32 0.0, %v3349
    %v3351 = vpop.f32.mrf.mxu0
    %v3352 = vadd.f32 0.0, %v3351
    %3353 = vdwg.mxu0
    %3354 = vmatprep.subr.bf16.mxu0 %v3278
    %3355 = vmatpush1.bf16.msra.mxu0 %v3277
    %3356 = vmatprep.subr.bf16.mxu0 %v3274
    %3357 = vmatpush1.bf16.msra.mxu0 %v3273
    %3358 = vmatprep.subr.bf16.mxu0 %v3270
    %3359 = vmatpush1.bf16.msra.mxu0 %v3269
    %3360 = vmatprep.subr.bf16.mxu0 %v3266
    %3361 = vmatpush1.bf16.msra.mxu0 %v3265
    %3362 = vmatprep.subr.bf16.mxu0 %v3262
    %3363 = vmatpush1.bf16.msra.mxu0 %v3261
    %3364 = vmatprep.subr.bf16.mxu0 %v3258
    %3365 = vmatpush1.bf16.msra.mxu0 %v3257
    %3366 = vmatprep.subr.bf16.mxu0 %v3254
    %3367 = vmatpush1.bf16.msra.mxu0 %v3253
    %3368 = vmatprep.subr.bf16.mxu0 %v3250
    %3369 = vmatpush1.bf16.msra.mxu0 %v3249
    %3370 = vmatprep.subr.bf16.mxu0 0
    %3371 = vmatpush2.bf16.msra.mxu0 0
    %3372 = vmatprep.subr.bf16.mxu0 0
    %3373 = vmatpush2.bf16.msra.mxu0 0
    %3374 = vmatprep.subr.bf16.mxu0 0
    %3375 = vmatpush2.bf16.msra.mxu0 0
    %3376 = vmatprep.subr.bf16.mxu0 0
    %3377 = vmatpush2.bf16.msra.mxu0 0
    %3378 = vmatprep.subr.bf16.mxu0 0
    %3379 = vmatpush2.bf16.msra.mxu0 0
    %3380 = vmatprep.subr.bf16.mxu0 0
    %3381 = vmatpush2.bf16.msra.mxu0 0
    %3382 = vmatprep.subr.bf16.mxu0 0
    %3383 = vmatpush2.bf16.msra.mxu0 0
    %3384 = vmatprep.subr.bf16.mxu0 0
    %3385 = vmatpush2.bf16.msra.mxu0 0
    %3386 = vmatprep.mubr.bf16.mxu0 0
    %3387 = vmatmul.mubr.bf16.gmra.mxu0 0
    %v3388 = vpop.f32.mrf.mxu0
    %v3389 = vadd.f32 0.0, %v3388
    %v3390 = vpop.f32.mrf.mxu0
    %v3391 = vadd.f32 0.0, %v3390
    %v3392 = vpop.f32.mrf.mxu0
    %v3393 = vadd.f32 0.0, %v3392
    %v3394 = vpop.f32.mrf.mxu0
    %v3395 = vadd.f32 0.0, %v3394
    %3396 = vdwg.mxu0
    %v3397 = vadd.f32 %v3143, %v3346
    %v3398 = vadd.f32 %v3144, %v3348
    %v3399 = vadd.f32 %v3145, %v3389
    %v3400 = vadd.f32 %v3146, %v3391
    %v3401 = vadd.f32 %v3147, %v3350
    %v3402 = vadd.f32 %v3148, %v3352
    %v3403 = vadd.f32 %v3149, %v3393
    %v3404 = vadd.f32 %v3150, %v3395
    %v3405 = vxor.u32 %v3397, 2147483648
    %v3406 = vxor.u32 %v3401, 2147483648
    %v3407 = vmul.f32 %v3405, 1.442695
    %v3408 = vpow.pop %v3407
    %v3409 = vmul.f32 %v3406, 1.442695
    %v3410 = vpow.pop %v3409
    %v3411 = vadd.f32 %v3408, 1.0
    %v3412 = vadd.f32 %v3410, 1.0
    %v3413 = vrcp.pop %v3411
    %v3414 = vmul.f32 1.0, %v3413
    %v3415 = vrcp.pop %v3412
    %v3416 = vmul.f32 1.0, %v3415
    %v3417 = vxor.u32 %v3398, 2147483648
    %v3418 = vxor.u32 %v3402, 2147483648
    %v3419 = vmul.f32 %v3417, 1.442695
    %v3420 = vpow.pop %v3419
    %v3421 = vmul.f32 %v3418, 1.442695
    %v3422 = vpow.pop %v3421
    %v3423 = vadd.f32 %v3420, 1.0
    %v3424 = vadd.f32 %v3422, 1.0
    %v3425 = vrcp.pop %v3423
    %v3426 = vmul.f32 1.0, %v3425
    %v3427 = vrcp.pop %v3424
    %v3428 = vmul.f32 1.0, %v3427
    %v3429 = vtanh.pop %v3399
    %v3430 = vtanh.pop %v3403
    %v3431 = vxor.u32 %v3400, 2147483648
    %v3432 = vxor.u32 %v3404, 2147483648
    %v3433 = vmul.f32 %v3431, 1.442695
    %v3434 = vpow.pop %v3433
    %v3435 = vmul.f32 %v3432, 1.442695
    %v3436 = vpow.pop %v3435
    %v3437 = vadd.f32 %v3434, 1.0
    %v3438 = vadd.f32 %v3436, 1.0
    %v3439 = vrcp.pop %v3437
    %v3440 = vmul.f32 1.0, %v3439
    %v3441 = vrcp.pop %v3438
    %v3442 = vmul.f32 1.0, %v3441
    %v3443 = vmul.f32 %v3426, 0.0
    %v3444 = vmul.f32 %v3428, 0.0
    %v3445 = vmul.f32 %v3414, %v3429
    %v3446 = vmul.f32 %v3416, %v3430
    %v3447 = vadd.f32 %v3443, %v3445
    %v3448 = vadd.f32 %v3444, %v3446
    %v3449 = vtanh.pop %v3447
    %v3450 = vtanh.pop %v3448
    %v3451 = vmul.f32 %v3440, %v3449
    %v3452 = vmul.f32 %v3442, %v3450
    %v3453 = vld [vmem:[%s1205] sm:$0xff]
    %v3454 = vld [vmem:[%s1205 + $0x8] sm:$0xff]
    %v3455 = vld [vmem:[%s1205 + $0x10] sm:$0xff]
    %v3456 = vld [vmem:[%s1205 + $0x18] sm:$0xff]
    %v3457 = vunpack.c.l.bf16 %v3453
    %v3458 = vunpack.c.h.bf16 %v3453
    %v3459 = vunpack.c.l.bf16 %v3454
    %v3460 = vunpack.c.h.bf16 %v3454
    %v3461 = vunpack.c.l.bf16 %v3455
    %v3462 = vunpack.c.h.bf16 %v3455
    %v3463 = vunpack.c.l.bf16 %v3456
    %v3464 = vunpack.c.h.bf16 %v3456
    %v3465 = vpack.c.bf16 %v3452, %v3451
    %3466 = vmatprep.subr.bf16.mxu0 %v3276
    %3467 = vmatpush1.bf16.msra.mxu0 %v3275
    %3468 = vmatprep.subr.bf16.mxu0 %v3272
    %3469 = vmatpush1.bf16.msra.mxu0 %v3271
    %3470 = vmatprep.subr.bf16.mxu0 %v3268
    %3471 = vmatpush1.bf16.msra.mxu0 %v3267
    %3472 = vmatprep.subr.bf16.mxu0 %v3264
    %3473 = vmatpush1.bf16.msra.mxu0 %v3263
    %3474 = vmatprep.subr.bf16.mxu0 %v3260
    %3475 = vmatpush1.bf16.msra.mxu0 %v3259
    %3476 = vmatprep.subr.bf16.mxu0 %v3256
    %3477 = vmatpush1.bf16.msra.mxu0 %v3255
    %3478 = vmatprep.subr.bf16.mxu0 %v3252
    %3479 = vmatpush1.bf16.msra.mxu0 %v3251
    %3480 = vmatprep.subr.bf16.mxu0 %v3248
    %3481 = vmatpush1.bf16.msra.mxu0 %v3247
    %3482 = vmatprep.subr.bf16.mxu0 0
    %3483 = vmatpush2.bf16.msra.mxu0 0
    %3484 = vmatprep.subr.bf16.mxu0 0
    %3485 = vmatpush2.bf16.msra.mxu0 0
    %3486 = vmatprep.subr.bf16.mxu0 0
    %3487 = vmatpush2.bf16.msra.mxu0 0
    %3488 = vmatprep.subr.bf16.mxu0 0
    %3489 = vmatpush2.bf16.msra.mxu0 0
    %3490 = vmatprep.subr.bf16.mxu0 0
    %3491 = vmatpush2.bf16.msra.mxu0 0
    %3492 = vmatprep.subr.bf16.mxu0 0
    %3493 = vmatpush2.bf16.msra.mxu0 0
    %3494 = vmatprep.subr.bf16.mxu0 0
    %3495 = vmatpush2.bf16.msra.mxu0 0
    %3496 = vmatprep.subr.bf16.mxu0 0
    %3497 = vmatpush2.bf16.msra.mxu0 0
    %3498 = vmatprep.mubr.bf16.mxu0 0
    %3499 = vmatmul.mubr.bf16.gmra.mxu0 %v3465
    %v3500 = vpop.f32.mrf.mxu0
    %v3501 = vadd.f32 0.0, %v3500
    %v3502 = vpop.f32.mrf.mxu0
    %v3503 = vadd.f32 0.0, %v3502
    %v3504 = vpop.f32.mrf.mxu0
    %v3505 = vadd.f32 0.0, %v3504
    %v3506 = vpop.f32.mrf.mxu0
    %v3507 = vadd.f32 0.0, %v3506
    %3508 = vdwg.mxu0
    %3509 = vmatprep.subr.bf16.mxu0 %v3278
    %3510 = vmatpush1.bf16.msra.mxu0 %v3277
    %3511 = vmatprep.subr.bf16.mxu0 %v3274
    %3512 = vmatpush1.bf16.msra.mxu0 %v3273
    %3513 = vmatprep.subr.bf16.mxu0 %v3270
    %3514 = vmatpush1.bf16.msra.mxu0 %v3269
    %3515 = vmatprep.subr.bf16.mxu0 %v3266
    %3516 = vmatpush1.bf16.msra.mxu0 %v3265
    %3517 = vmatprep.subr.bf16.mxu0 %v3262
    %3518 = vmatpush1.bf16.msra.mxu0 %v3261
    %3519 = vmatprep.subr.bf16.mxu0 %v3258
    %3520 = vmatpush1.bf16.msra.mxu0 %v3257
    %3521 = vmatprep.subr.bf16.mxu0 %v3254
    %3522 = vmatpush1.bf16.msra.mxu0 %v3253
    %3523 = vmatprep.subr.bf16.mxu0 %v3250
    %3524 = vmatpush1.bf16.msra.mxu0 %v3249
    %3525 = vmatprep.subr.bf16.mxu0 0
    %3526 = vmatpush2.bf16.msra.mxu0 0
    %3527 = vmatprep.subr.bf16.mxu0 0
    %3528 = vmatpush2.bf16.msra.mxu0 0
    %3529 = vmatprep.subr.bf16.mxu0 0
    %3530 = vmatpush2.bf16.msra.mxu0 0
    %3531 = vmatprep.subr.bf16.mxu0 0
    %3532 = vmatpush2.bf16.msra.mxu0 0
    %3533 = vmatprep.subr.bf16.mxu0 0
    %3534 = vmatpush2.bf16.msra.mxu0 0
    %3535 = vmatprep.subr.bf16.mxu0 0
    %3536 = vmatpush2.bf16.msra.mxu0 0
    %3537 = vmatprep.subr.bf16.mxu0 0
    %3538 = vmatpush2.bf16.msra.mxu0 0
    %3539 = vmatprep.subr.bf16.mxu0 0
    %3540 = vmatpush2.bf16.msra.mxu0 0
    %3541 = vmatprep.mubr.bf16.mxu0 0
    %3542 = vmatmul.mubr.bf16.gmra.mxu0 %v3465
    %v3543 = vpop.f32.mrf.mxu0
    %v3544 = vadd.f32 0.0, %v3543
    %v3545 = vpop.f32.mrf.mxu0
    %v3546 = vadd.f32 0.0, %v3545
    %v3547 = vpop.f32.mrf.mxu0
    %v3548 = vadd.f32 0.0, %v3547
    %v3549 = vpop.f32.mrf.mxu0
    %v3550 = vadd.f32 0.0, %v3549
    %3551 = vdwg.mxu0
    %v3552 = vadd.f32 %v3457, %v3501
    %v3553 = vadd.f32 %v3458, %v3503
    %v3554 = vadd.f32 %v3459, %v3544
    %v3555 = vadd.f32 %v3460, %v3546
    %v3556 = vadd.f32 %v3461, %v3505
    %v3557 = vadd.f32 %v3462, %v3507
    %v3558 = vadd.f32 %v3463, %v3548
    %v3559 = vadd.f32 %v3464, %v3550
    %v3560 = vxor.u32 %v3552, 2147483648
    %v3561 = vxor.u32 %v3556, 2147483648
    %v3562 = vmul.f32 %v3560, 1.442695
    %v3563 = vpow.pop %v3562
    %v3564 = vmul.f32 %v3561, 1.442695
    %v3565 = vpow.pop %v3564
    %v3566 = vadd.f32 %v3563, 1.0
    %v3567 = vadd.f32 %v3565, 1.0
    %v3568 = vrcp.pop %v3566
    %v3569 = vmul.f32 1.0, %v3568
    %v3570 = vrcp.pop %v3567
    %v3571 = vmul.f32 1.0, %v3570
    %v3572 = vxor.u32 %v3553, 2147483648
    %v3573 = vxor.u32 %v3557, 2147483648
    %v3574 = vmul.f32 %v3572, 1.442695
    %v3575 = vpow.pop %v3574
    %v3576 = vmul.f32 %v3573, 1.442695
    %v3577 = vpow.pop %v3576
    %v3578 = vadd.f32 %v3575, 1.0
    %v3579 = vadd.f32 %v3577, 1.0
    %v3580 = vrcp.pop %v3578
    %v3581 = vmul.f32 1.0, %v3580
    %v3582 = vrcp.pop %v3579
    %v3583 = vmul.f32 1.0, %v3582
    %v3584 = vtanh.pop %v3554
    %v3585 = vtanh.pop %v3558
    %v3586 = vxor.u32 %v3555, 2147483648
    %v3587 = vxor.u32 %v3559, 2147483648
    %v3588 = vmul.f32 %v3586, 1.442695
    %v3589 = vpow.pop %v3588
    %v3590 = vmul.f32 %v3587, 1.442695
    %v3591 = vpow.pop %v3590
    %v3592 = vadd.f32 %v3589, 1.0
    %v3593 = vadd.f32 %v3591, 1.0
    %v3594 = vrcp.pop %v3592
    %v3595 = vmul.f32 1.0, %v3594
    %v3596 = vrcp.pop %v3593
    %v3597 = vmul.f32 1.0, %v3596
    %v3598 = vmul.f32 %v3581, %v3447
    %v3599 = vmul.f32 %v3583, %v3448
    %v3600 = vmul.f32 %v3569, %v3584
    %v3601 = vmul.f32 %v3571, %v3585
    %v3602 = vadd.f32 %v3598, %v3600
    %v3603 = vadd.f32 %v3599, %v3601
    %v3604 = vtanh.pop %v3602
    %v3605 = vtanh.pop %v3603
    %v3606 = vmul.f32 %v3595, %v3604
    %v3607 = vmul.f32 %v3597, %v3605
    %v3608 = vld [vmem:[%s1373] sm:$0xff]
    %v3609 = vld [vmem:[%s1373 + $0x8] sm:$0xff]
    %v3610 = vld [vmem:[%s1373 + $0x10] sm:$0xff]
    %v3611 = vld [vmem:[%s1373 + $0x18] sm:$0xff]
    %v3612 = vunpack.c.l.bf16 %v3608
    %v3613 = vunpack.c.h.bf16 %v3608
    %v3614 = vunpack.c.l.bf16 %v3609
    %v3615 = vunpack.c.h.bf16 %v3609
    %v3616 = vunpack.c.l.bf16 %v3610
    %v3617 = vunpack.c.h.bf16 %v3610
    %v3618 = vunpack.c.l.bf16 %v3611
    %v3619 = vunpack.c.h.bf16 %v3611
    %v3620 = vpack.c.bf16 %v3607, %v3606
    %3621 = vmatprep.subr.bf16.mxu0 %v3276
    %3622 = vmatpush1.bf16.msra.mxu0 %v3275
    %3623 = vmatprep.subr.bf16.mxu0 %v3272
    %3624 = vmatpush1.bf16.msra.mxu0 %v3271
    %3625 = vmatprep.subr.bf16.mxu0 %v3268
    %3626 = vmatpush1.bf16.msra.mxu0 %v3267
    %3627 = vmatprep.subr.bf16.mxu0 %v3264
    %3628 = vmatpush1.bf16.msra.mxu0 %v3263
    %3629 = vmatprep.subr.bf16.mxu0 %v3260
    %3630 = vmatpush1.bf16.msra.mxu0 %v3259
    %3631 = vmatprep.subr.bf16.mxu0 %v3256
    %3632 = vmatpush1.bf16.msra.mxu0 %v3255
    %3633 = vmatprep.subr.bf16.mxu0 %v3252
    %3634 = vmatpush1.bf16.msra.mxu0 %v3251
    %3635 = vmatprep.subr.bf16.mxu0 %v3248
    %3636 = vmatpush1.bf16.msra.mxu0 %v3247
    %3637 = vmatprep.subr.bf16.mxu0 0
    %3638 = vmatpush2.bf16.msra.mxu0 0
    %3639 = vmatprep.subr.bf16.mxu0 0
    %3640 = vmatpush2.bf16.msra.mxu0 0
    %3641 = vmatprep.subr.bf16.mxu0 0
    %3642 = vmatpush2.bf16.msra.mxu0 0
    %3643 = vmatprep.subr.bf16.mxu0 0
    %3644 = vmatpush2.bf16.msra.mxu0 0
    %3645 = vmatprep.subr.bf16.mxu0 0
    %3646 = vmatpush2.bf16.msra.mxu0 0
    %3647 = vmatprep.subr.bf16.mxu0 0
    %3648 = vmatpush2.bf16.msra.mxu0 0
    %3649 = vmatprep.subr.bf16.mxu0 0
    %3650 = vmatpush2.bf16.msra.mxu0 0
    %3651 = vmatprep.subr.bf16.mxu0 0
    %3652 = vmatpush2.bf16.msra.mxu0 0
    %3653 = vmatprep.mubr.bf16.mxu0 0
    %3654 = vmatmul.mubr.bf16.gmra.mxu0 %v3620
    %v3655 = vpop.f32.mrf.mxu0
    %v3656 = vadd.f32 0.0, %v3655
    %v3657 = vpop.f32.mrf.mxu0
    %v3658 = vadd.f32 0.0, %v3657
    %v3659 = vpop.f32.mrf.mxu0
    %v3660 = vadd.f32 0.0, %v3659
    %v3661 = vpop.f32.mrf.mxu0
    %v3662 = vadd.f32 0.0, %v3661
    %3663 = vdwg.mxu0
    %3664 = vmatprep.subr.bf16.mxu0 %v3278
    %3665 = vmatpush1.bf16.msra.mxu0 %v3277
    %3666 = vmatprep.subr.bf16.mxu0 %v3274
    %3667 = vmatpush1.bf16.msra.mxu0 %v3273
    %3668 = vmatprep.subr.bf16.mxu0 %v3270
    %3669 = vmatpush1.bf16.msra.mxu0 %v3269
    %3670 = vmatprep.subr.bf16.mxu0 %v3266
    %3671 = vmatpush1.bf16.msra.mxu0 %v3265
    %3672 = vmatprep.subr.bf16.mxu0 %v3262
    %3673 = vmatpush1.bf16.msra.mxu0 %v3261
    %3674 = vmatprep.subr.bf16.mxu0 %v3258
    %3675 = vmatpush1.bf16.msra.mxu0 %v3257
    %3676 = vmatprep.subr.bf16.mxu0 %v3254
    %3677 = vmatpush1.bf16.msra.mxu0 %v3253
    %3678 = vmatprep.subr.bf16.mxu0 %v3250
    %3679 = vmatpush1.bf16.msra.mxu0 %v3249
    %3680 = vmatprep.subr.bf16.mxu0 0
    %3681 = vmatpush2.bf16.msra.mxu0 0
    %3682 = vmatprep.subr.bf16.mxu0 0
    %3683 = vmatpush2.bf16.msra.mxu0 0
    %3684 = vmatprep.subr.bf16.mxu0 0
    %3685 = vmatpush2.bf16.msra.mxu0 0
    %3686 = vmatprep.subr.bf16.mxu0 0
    %3687 = vmatpush2.bf16.msra.mxu0 0
    %3688 = vmatprep.subr.bf16.mxu0 0
    %3689 = vmatpush2.bf16.msra.mxu0 0
    %3690 = vmatprep.subr.bf16.mxu0 0
    %3691 = vmatpush2.bf16.msra.mxu0 0
    %3692 = vmatprep.subr.bf16.mxu0 0
    %3693 = vmatpush2.bf16.msra.mxu0 0
    %3694 = vmatprep.subr.bf16.mxu0 0
    %3695 = vmatpush2.bf16.msra.mxu0 0
    %3696 = vmatprep.mubr.bf16.mxu0 0
    %3697 = vmatmul.mubr.bf16.gmra.mxu0 %v3620
    %v3698 = vpop.f32.mrf.mxu0
    %v3699 = vadd.f32 0.0, %v3698
    %v3700 = vpop.f32.mrf.mxu0
    %v3701 = vadd.f32 0.0, %v3700
    %v3702 = vpop.f32.mrf.mxu0
    %v3703 = vadd.f32 0.0, %v3702
    %v3704 = vpop.f32.mrf.mxu0
    %v3705 = vadd.f32 0.0, %v3704
    %3706 = vdwg.mxu0
    %v3707 = vadd.f32 %v3612, %v3656
    %v3708 = vadd.f32 %v3613, %v3658
    %v3709 = vadd.f32 %v3614, %v3699
    %v3710 = vadd.f32 %v3615, %v3701
    %v3711 = vadd.f32 %v3616, %v3660
    %v3712 = vadd.f32 %v3617, %v3662
    %v3713 = vadd.f32 %v3618, %v3703
    %v3714 = vadd.f32 %v3619, %v3705
    %v3715 = vxor.u32 %v3707, 2147483648
    %v3716 = vxor.u32 %v3711, 2147483648
    %v3717 = vmul.f32 %v3715, 1.442695
    %v3718 = vpow.pop %v3717
    %v3719 = vmul.f32 %v3716, 1.442695
    %v3720 = vpow.pop %v3719
    %v3721 = vadd.f32 %v3718, 1.0
    %v3722 = vadd.f32 %v3720, 1.0
    %v3723 = vrcp.pop %v3721
    %v3724 = vmul.f32 1.0, %v3723
    %v3725 = vrcp.pop %v3722
    %v3726 = vmul.f32 1.0, %v3725
    %v3727 = vxor.u32 %v3708, 2147483648
    %v3728 = vxor.u32 %v3712, 2147483648
    %v3729 = vmul.f32 %v3727, 1.442695
    %v3730 = vpow.pop %v3729
    %v3731 = vmul.f32 %v3728, 1.442695
    %v3732 = vpow.pop %v3731
    %v3733 = vadd.f32 %v3730, 1.0
    %v3734 = vadd.f32 %v3732, 1.0
    %v3735 = vrcp.pop %v3733
    %v3736 = vmul.f32 1.0, %v3735
    %v3737 = vrcp.pop %v3734
    %v3738 = vmul.f32 1.0, %v3737
    %v3739 = vtanh.pop %v3709
    %v3740 = vtanh.pop %v3713
    %v3741 = vxor.u32 %v3710, 2147483648
    %v3742 = vxor.u32 %v3714, 2147483648
    %v3743 = vmul.f32 %v3741, 1.442695
    %v3744 = vpow.pop %v3743
    %v3745 = vmul.f32 %v3742, 1.442695
    %v3746 = vpow.pop %v3745
    %v3747 = vadd.f32 %v3744, 1.0
    %v3748 = vadd.f32 %v3746, 1.0
    %v3749 = vrcp.pop %v3747
    %v3750 = vmul.f32 1.0, %v3749
    %v3751 = vrcp.pop %v3748
    %v3752 = vmul.f32 1.0, %v3751
    %v3753 = vmul.f32 %v3736, %v3602
    %v3754 = vmul.f32 %v3738, %v3603
    %v3755 = vmul.f32 %v3724, %v3739
    %v3756 = vmul.f32 %v3726, %v3740
    %v3757 = vadd.f32 %v3753, %v3755
    %v3758 = vadd.f32 %v3754, %v3756
    %v3759 = vtanh.pop %v3757
    %v3760 = vtanh.pop %v3758
    %v3761 = vmul.f32 %v3750, %v3759
    %v3762 = vmul.f32 %v3752, %v3760
    %v3763 = vld [vmem:[%s1541] sm:$0xff]
    %v3764 = vld [vmem:[%s1541 + $0x8] sm:$0xff]
    %v3765 = vld [vmem:[%s1541 + $0x10] sm:$0xff]
    %v3766 = vld [vmem:[%s1541 + $0x18] sm:$0xff]
    %v3767 = vunpack.c.l.bf16 %v3763
    %v3768 = vunpack.c.h.bf16 %v3763
    %v3769 = vunpack.c.l.bf16 %v3764
    %v3770 = vunpack.c.h.bf16 %v3764
    %v3771 = vunpack.c.l.bf16 %v3765
    %v3772 = vunpack.c.h.bf16 %v3765
    %v3773 = vunpack.c.l.bf16 %v3766
    %v3774 = vunpack.c.h.bf16 %v3766
    %v3775 = vpack.c.bf16 %v3762, %v3761
    %3776 = vmatprep.subr.bf16.mxu0 %v3276
    %3777 = vmatpush1.bf16.msra.mxu0 %v3275
    %3778 = vmatprep.subr.bf16.mxu0 %v3272
    %3779 = vmatpush1.bf16.msra.mxu0 %v3271
    %3780 = vmatprep.subr.bf16.mxu0 %v3268
    %3781 = vmatpush1.bf16.msra.mxu0 %v3267
    %3782 = vmatprep.subr.bf16.mxu0 %v3264
    %3783 = vmatpush1.bf16.msra.mxu0 %v3263
    %3784 = vmatprep.subr.bf16.mxu0 %v3260
    %3785 = vmatpush1.bf16.msra.mxu0 %v3259
    %3786 = vmatprep.subr.bf16.mxu0 %v3256
    %3787 = vmatpush1.bf16.msra.mxu0 %v3255
    %3788 = vmatprep.subr.bf16.mxu0 %v3252
    %3789 = vmatpush1.bf16.msra.mxu0 %v3251
    %3790 = vmatprep.subr.bf16.mxu0 %v3248
    %3791 = vmatpush1.bf16.msra.mxu0 %v3247
    %3792 = vmatprep.subr.bf16.mxu0 0
    %3793 = vmatpush2.bf16.msra.mxu0 0
    %3794 = vmatprep.subr.bf16.mxu0 0
    %3795 = vmatpush2.bf16.msra.mxu0 0
    %3796 = vmatprep.subr.bf16.mxu0 0
    %3797 = vmatpush2.bf16.msra.mxu0 0
    %3798 = vmatprep.subr.bf16.mxu0 0
    %3799 = vmatpush2.bf16.msra.mxu0 0
    %3800 = vmatprep.subr.bf16.mxu0 0
    %3801 = vmatpush2.bf16.msra.mxu0 0
    %3802 = vmatprep.subr.bf16.mxu0 0
    %3803 = vmatpush2.bf16.msra.mxu0 0
    %3804 = vmatprep.subr.bf16.mxu0 0
    %3805 = vmatpush2.bf16.msra.mxu0 0
    %3806 = vmatprep.subr.bf16.mxu0 0
    %3807 = vmatpush2.bf16.msra.mxu0 0
    %3808 = vmatprep.mubr.bf16.mxu0 0
    %3809 = vmatmul.mubr.bf16.gmra.mxu0 %v3775
    %v3810 = vpop.f32.mrf.mxu0
    %v3811 = vadd.f32 0.0, %v3810
    %v3812 = vpop.f32.mrf.mxu0
    %v3813 = vadd.f32 0.0, %v3812
    %v3814 = vpop.f32.mrf.mxu0
    %v3815 = vadd.f32 0.0, %v3814
    %v3816 = vpop.f32.mrf.mxu0
    %v3817 = vadd.f32 0.0, %v3816
    %3818 = vdwg.mxu0
    %3819 = vmatprep.subr.bf16.mxu0 %v3278
    %3820 = vmatpush1.bf16.msra.mxu0 %v3277
    %3821 = vmatprep.subr.bf16.mxu0 %v3274
    %3822 = vmatpush1.bf16.msra.mxu0 %v3273
    %3823 = vmatprep.subr.bf16.mxu0 %v3270
    %3824 = vmatpush1.bf16.msra.mxu0 %v3269
    %3825 = vmatprep.subr.bf16.mxu0 %v3266
    %3826 = vmatpush1.bf16.msra.mxu0 %v3265
    %3827 = vmatprep.subr.bf16.mxu0 %v3262
    %3828 = vmatpush1.bf16.msra.mxu0 %v3261
    %3829 = vmatprep.subr.bf16.mxu0 %v3258
    %3830 = vmatpush1.bf16.msra.mxu0 %v3257
    %3831 = vmatprep.subr.bf16.mxu0 %v3254
    %3832 = vmatpush1.bf16.msra.mxu0 %v3253
    %3833 = vmatprep.subr.bf16.mxu0 %v3250
    %3834 = vmatpush1.bf16.msra.mxu0 %v3249
    %3835 = vmatprep.subr.bf16.mxu0 0
    %3836 = vmatpush2.bf16.msra.mxu0 0
    %3837 = vmatprep.subr.bf16.mxu0 0
    %3838 = vmatpush2.bf16.msra.mxu0 0
    %3839 = vmatprep.subr.bf16.mxu0 0
    %3840 = vmatpush2.bf16.msra.mxu0 0
    %3841 = vmatprep.subr.bf16.mxu0 0
    %3842 = vmatpush2.bf16.msra.mxu0 0
    %3843 = vmatprep.subr.bf16.mxu0 0
    %3844 = vmatpush2.bf16.msra.mxu0 0
    %3845 = vmatprep.subr.bf16.mxu0 0
    %3846 = vmatpush2.bf16.msra.mxu0 0
    %3847 = vmatprep.subr.bf16.mxu0 0
    %3848 = vmatpush2.bf16.msra.mxu0 0
    %3849 = vmatprep.subr.bf16.mxu0 0
    %3850 = vmatpush2.bf16.msra.mxu0 0
    %3851 = vmatprep.mubr.bf16.mxu0 0
    %3852 = vmatmul.mubr.bf16.gmra.mxu0 %v3775
    %v3853 = vpop.f32.mrf.mxu0
    %v3854 = vadd.f32 0.0, %v3853
    %v3855 = vpop.f32.mrf.mxu0
    %v3856 = vadd.f32 0.0, %v3855
    %v3857 = vpop.f32.mrf.mxu0
    %v3858 = vadd.f32 0.0, %v3857
    %v3859 = vpop.f32.mrf.mxu0
    %v3860 = vadd.f32 0.0, %v3859
    %3861 = vdwg.mxu0
    %v3862 = vadd.f32 %v3767, %v3811
    %v3863 = vadd.f32 %v3768, %v3813
    %v3864 = vadd.f32 %v3769, %v3854
    %v3865 = vadd.f32 %v3770, %v3856
    %v3866 = vadd.f32 %v3771, %v3815
    %v3867 = vadd.f32 %v3772, %v3817
    %v3868 = vadd.f32 %v3773, %v3858
    %v3869 = vadd.f32 %v3774, %v3860
    %v3870 = vxor.u32 %v3862, 2147483648
    %v3871 = vxor.u32 %v3866, 2147483648
    %v3872 = vmul.f32 %v3870, 1.442695
    %v3873 = vpow.pop %v3872
    %v3874 = vmul.f32 %v3871, 1.442695
    %v3875 = vpow.pop %v3874
    %v3876 = vadd.f32 %v3873, 1.0
    %v3877 = vadd.f32 %v3875, 1.0
    %v3878 = vrcp.pop %v3876
    %v3879 = vmul.f32 1.0, %v3878
    %v3880 = vrcp.pop %v3877
    %v3881 = vmul.f32 1.0, %v3880
    %v3882 = vxor.u32 %v3863, 2147483648
    %v3883 = vxor.u32 %v3867, 2147483648
    %v3884 = vmul.f32 %v3882, 1.442695
    %v3885 = vpow.pop %v3884
    %v3886 = vmul.f32 %v3883, 1.442695
    %v3887 = vpow.pop %v3886
    %v3888 = vadd.f32 %v3885, 1.0
    %v3889 = vadd.f32 %v3887, 1.0
    %v3890 = vrcp.pop %v3888
    %v3891 = vmul.f32 1.0, %v3890
    %v3892 = vrcp.pop %v3889
    %v3893 = vmul.f32 1.0, %v3892
    %v3894 = vtanh.pop %v3864
    %v3895 = vtanh.pop %v3868
    %v3896 = vxor.u32 %v3865, 2147483648
    %v3897 = vxor.u32 %v3869, 2147483648
    %v3898 = vmul.f32 %v3896, 1.442695
    %v3899 = vpow.pop %v3898
    %v3900 = vmul.f32 %v3897, 1.442695
    %v3901 = vpow.pop %v3900
    %v3902 = vadd.f32 %v3899, 1.0
    %v3903 = vadd.f32 %v3901, 1.0
    %v3904 = vrcp.pop %v3902
    %v3905 = vmul.f32 1.0, %v3904
    %v3906 = vrcp.pop %v3903
    %v3907 = vmul.f32 1.0, %v3906
    %v3908 = vmul.f32 %v3891, %v3757
    %v3909 = vmul.f32 %v3893, %v3758
    %v3910 = vmul.f32 %v3879, %v3894
    %v3911 = vmul.f32 %v3881, %v3895
    %v3912 = vadd.f32 %v3908, %v3910
    %v3913 = vadd.f32 %v3909, %v3911
    %v3914 = vtanh.pop %v3912
    %v3915 = vtanh.pop %v3913
    %v3916 = vmul.f32 %v3905, %v3914
    %v3917 = vmul.f32 %v3907, %v3915
    %v3918 = vld [vmem:[%s1709] sm:$0xff]
    %v3919 = vld [vmem:[%s1709 + $0x8] sm:$0xff]
    %v3920 = vld [vmem:[%s1709 + $0x10] sm:$0xff]
    %v3921 = vld [vmem:[%s1709 + $0x18] sm:$0xff]
    %v3922 = vunpack.c.l.bf16 %v3918
    %v3923 = vunpack.c.h.bf16 %v3918
    %v3924 = vunpack.c.l.bf16 %v3919
    %v3925 = vunpack.c.h.bf16 %v3919
    %v3926 = vunpack.c.l.bf16 %v3920
    %v3927 = vunpack.c.h.bf16 %v3920
    %v3928 = vunpack.c.l.bf16 %v3921
    %v3929 = vunpack.c.h.bf16 %v3921
    %v3930 = vpack.c.bf16 %v3917, %v3916
    %3931 = vmatprep.subr.bf16.mxu0 %v3276
    %3932 = vmatpush1.bf16.msra.mxu0 %v3275
    %3933 = vmatprep.subr.bf16.mxu0 %v3272
    %3934 = vmatpush1.bf16.msra.mxu0 %v3271
    %3935 = vmatprep.subr.bf16.mxu0 %v3268
    %3936 = vmatpush1.bf16.msra.mxu0 %v3267
    %3937 = vmatprep.subr.bf16.mxu0 %v3264
    %3938 = vmatpush1.bf16.msra.mxu0 %v3263
    %3939 = vmatprep.subr.bf16.mxu0 %v3260
    %3940 = vmatpush1.bf16.msra.mxu0 %v3259
    %3941 = vmatprep.subr.bf16.mxu0 %v3256
    %3942 = vmatpush1.bf16.msra.mxu0 %v3255
    %3943 = vmatprep.subr.bf16.mxu0 %v3252
    %3944 = vmatpush1.bf16.msra.mxu0 %v3251
    %3945 = vmatprep.subr.bf16.mxu0 %v3248
    %3946 = vmatpush1.bf16.msra.mxu0 %v3247
    %3947 = vmatprep.subr.bf16.mxu0 0
    %3948 = vmatpush2.bf16.msra.mxu0 0
    %3949 = vmatprep.subr.bf16.mxu0 0
    %3950 = vmatpush2.bf16.msra.mxu0 0
    %3951 = vmatprep.subr.bf16.mxu0 0
    %3952 = vmatpush2.bf16.msra.mxu0 0
    %3953 = vmatprep.subr.bf16.mxu0 0
    %3954 = vmatpush2.bf16.msra.mxu0 0
    %3955 = vmatprep.subr.bf16.mxu0 0
    %3956 = vmatpush2.bf16.msra.mxu0 0
    %3957 = vmatprep.subr.bf16.mxu0 0
    %3958 = vmatpush2.bf16.msra.mxu0 0
    %3959 = vmatprep.subr.bf16.mxu0 0
    %3960 = vmatpush2.bf16.msra.mxu0 0
    %3961 = vmatprep.subr.bf16.mxu0 0
    %3962 = vmatpush2.bf16.msra.mxu0 0
    %3963 = vmatprep.mubr.bf16.mxu0 0
    %3964 = vmatmul.mubr.bf16.gmra.mxu0 %v3930
    %v3965 = vpop.f32.mrf.mxu0
    %v3966 = vadd.f32 0.0, %v3965
    %v3967 = vpop.f32.mrf.mxu0
    %v3968 = vadd.f32 0.0, %v3967
    %v3969 = vpop.f32.mrf.mxu0
    %v3970 = vadd.f32 0.0, %v3969
    %v3971 = vpop.f32.mrf.mxu0
    %v3972 = vadd.f32 0.0, %v3971
    %3973 = vdwg.mxu0
    %3974 = vmatprep.subr.bf16.mxu0 %v3278
    %3975 = vmatpush1.bf16.msra.mxu0 %v3277
    %3976 = vmatprep.subr.bf16.mxu0 %v3274
    %3977 = vmatpush1.bf16.msra.mxu0 %v3273
    %3978 = vmatprep.subr.bf16.mxu0 %v3270
    %3979 = vmatpush1.bf16.msra.mxu0 %v3269
    %3980 = vmatprep.subr.bf16.mxu0 %v3266
    %3981 = vmatpush1.bf16.msra.mxu0 %v3265
    %3982 = vmatprep.subr.bf16.mxu0 %v3262
    %3983 = vmatpush1.bf16.msra.mxu0 %v3261
    %3984 = vmatprep.subr.bf16.mxu0 %v3258
    %3985 = vmatpush1.bf16.msra.mxu0 %v3257
    %3986 = vmatprep.subr.bf16.mxu0 %v3254
    %3987 = vmatpush1.bf16.msra.mxu0 %v3253
    %3988 = vmatprep.subr.bf16.mxu0 %v3250
    %3989 = vmatpush1.bf16.msra.mxu0 %v3249
    %3990 = vmatprep.subr.bf16.mxu0 0
    %3991 = vmatpush2.bf16.msra.mxu0 0
    %3992 = vmatprep.subr.bf16.mxu0 0
    %3993 = vmatpush2.bf16.msra.mxu0 0
    %3994 = vmatprep.subr.bf16.mxu0 0
    %3995 = vmatpush2.bf16.msra.mxu0 0
    %3996 = vmatprep.subr.bf16.mxu0 0
    %3997 = vmatpush2.bf16.msra.mxu0 0
    %3998 = vmatprep.subr.bf16.mxu0 0
    %3999 = vmatpush2.bf16.msra.mxu0 0
    %4000 = vmatprep.subr.bf16.mxu0 0
    %4001 = vmatpush2.bf16.msra.mxu0 0
    %4002 = vmatprep.subr.bf16.mxu0 0
    %4003 = vmatpush2.bf16.msra.mxu0 0
    %4004 = vmatprep.subr.bf16.mxu0 0
    %4005 = vmatpush2.bf16.msra.mxu0 0
    %4006 = vmatprep.mubr.bf16.mxu0 0
    %4007 = vmatmul.mubr.bf16.gmra.mxu0 %v3930
    %v4008 = vpop.f32.mrf.mxu0
    %v4009 = vadd.f32 0.0, %v4008
    %v4010 = vpop.f32.mrf.mxu0
    %v4011 = vadd.f32 0.0, %v4010
    %v4012 = vpop.f32.mrf.mxu0
    %v4013 = vadd.f32 0.0, %v4012
    %v4014 = vpop.f32.mrf.mxu0
    %v4015 = vadd.f32 0.0, %v4014
    %4016 = vdwg.mxu0
    %v4017 = vadd.f32 %v3922, %v3966
    %v4018 = vadd.f32 %v3923, %v3968
    %v4019 = vadd.f32 %v3924, %v4009
    %v4020 = vadd.f32 %v3925, %v4011
    %v4021 = vadd.f32 %v3926, %v3970
    %v4022 = vadd.f32 %v3927, %v3972
    %v4023 = vadd.f32 %v3928, %v4013
    %v4024 = vadd.f32 %v3929, %v4015
    %v4025 = vxor.u32 %v4017, 2147483648
    %v4026 = vxor.u32 %v4021, 2147483648
    %v4027 = vmul.f32 %v4025, 1.442695
    %v4028 = vpow.pop %v4027
    %v4029 = vmul.f32 %v4026, 1.442695
    %v4030 = vpow.pop %v4029
    %v4031 = vadd.f32 %v4028, 1.0
    %v4032 = vadd.f32 %v4030, 1.0
    %v4033 = vrcp.pop %v4031
    %v4034 = vmul.f32 1.0, %v4033
    %v4035 = vrcp.pop %v4032
    %v4036 = vmul.f32 1.0, %v4035
    %v4037 = vxor.u32 %v4018, 2147483648
    %v4038 = vxor.u32 %v4022, 2147483648
    %v4039 = vmul.f32 %v4037, 1.442695
    %v4040 = vpow.pop %v4039
    %v4041 = vmul.f32 %v4038, 1.442695
    %v4042 = vpow.pop %v4041
    %v4043 = vadd.f32 %v4040, 1.0
    %v4044 = vadd.f32 %v4042, 1.0
    %v4045 = vrcp.pop %v4043
    %v4046 = vmul.f32 1.0, %v4045
    %v4047 = vrcp.pop %v4044
    %v4048 = vmul.f32 1.0, %v4047
    %v4049 = vtanh.pop %v4019
    %v4050 = vtanh.pop %v4023
    %v4051 = vxor.u32 %v4020, 2147483648
    %v4052 = vxor.u32 %v4024, 2147483648
    %v4053 = vmul.f32 %v4051, 1.442695
    %v4054 = vpow.pop %v4053
    %v4055 = vmul.f32 %v4052, 1.442695
    %v4056 = vpow.pop %v4055
    %v4057 = vadd.f32 %v4054, 1.0
    %v4058 = vadd.f32 %v4056, 1.0
    %v4059 = vrcp.pop %v4057
    %v4060 = vmul.f32 1.0, %v4059
    %v4061 = vrcp.pop %v4058
    %v4062 = vmul.f32 1.0, %v4061
    %v4063 = vmul.f32 %v4046, %v3912
    %v4064 = vmul.f32 %v4048, %v3913
    %v4065 = vmul.f32 %v4034, %v4049
    %v4066 = vmul.f32 %v4036, %v4050
    %v4067 = vadd.f32 %v4063, %v4065
    %v4068 = vadd.f32 %v4064, %v4066
    %v4069 = vtanh.pop %v4067
    %v4070 = vtanh.pop %v4068
    %v4071 = vmul.f32 %v4060, %v4069
    %v4072 = vmul.f32 %v4062, %v4070
    %v4073 = vld [vmem:[%s1877] sm:$0xff]
    %v4074 = vld [vmem:[%s1877 + $0x8] sm:$0xff]
    %v4075 = vld [vmem:[%s1877 + $0x10] sm:$0xff]
    %v4076 = vld [vmem:[%s1877 + $0x18] sm:$0xff]
    %v4077 = vunpack.c.l.bf16 %v4073
    %v4078 = vunpack.c.h.bf16 %v4073
    %v4079 = vunpack.c.l.bf16 %v4074
    %v4080 = vunpack.c.h.bf16 %v4074
    %v4081 = vunpack.c.l.bf16 %v4075
    %v4082 = vunpack.c.h.bf16 %v4075
    %v4083 = vunpack.c.l.bf16 %v4076
    %v4084 = vunpack.c.h.bf16 %v4076
    %v4085 = vpack.c.bf16 %v4072, %v4071
    %4086 = vmatprep.subr.bf16.mxu0 %v3276
    %4087 = vmatpush1.bf16.msra.mxu0 %v3275
    %4088 = vmatprep.subr.bf16.mxu0 %v3272
    %4089 = vmatpush1.bf16.msra.mxu0 %v3271
    %4090 = vmatprep.subr.bf16.mxu0 %v3268
    %4091 = vmatpush1.bf16.msra.mxu0 %v3267
    %4092 = vmatprep.subr.bf16.mxu0 %v3264
    %4093 = vmatpush1.bf16.msra.mxu0 %v3263
    %4094 = vmatprep.subr.bf16.mxu0 %v3260
    %4095 = vmatpush1.bf16.msra.mxu0 %v3259
    %4096 = vmatprep.subr.bf16.mxu0 %v3256
    %4097 = vmatpush1.bf16.msra.mxu0 %v3255
    %4098 = vmatprep.subr.bf16.mxu0 %v3252
    %4099 = vmatpush1.bf16.msra.mxu0 %v3251
    %4100 = vmatprep.subr.bf16.mxu0 %v3248
    %4101 = vmatpush1.bf16.msra.mxu0 %v3247
    %4102 = vmatprep.subr.bf16.mxu0 0
    %4103 = vmatpush2.bf16.msra.mxu0 0
    %4104 = vmatprep.subr.bf16.mxu0 0
    %4105 = vmatpush2.bf16.msra.mxu0 0
    %4106 = vmatprep.subr.bf16.mxu0 0
    %4107 = vmatpush2.bf16.msra.mxu0 0
    %4108 = vmatprep.subr.bf16.mxu0 0
    %4109 = vmatpush2.bf16.msra.mxu0 0
    %4110 = vmatprep.subr.bf16.mxu0 0
    %4111 = vmatpush2.bf16.msra.mxu0 0
    %4112 = vmatprep.subr.bf16.mxu0 0
    %4113 = vmatpush2.bf16.msra.mxu0 0
    %4114 = vmatprep.subr.bf16.mxu0 0
    %4115 = vmatpush2.bf16.msra.mxu0 0
    %4116 = vmatprep.subr.bf16.mxu0 0
    %4117 = vmatpush2.bf16.msra.mxu0 0
    %4118 = vmatprep.mubr.bf16.mxu0 0
    %4119 = vmatmul.mubr.bf16.gmra.mxu0 %v4085
    %v4120 = vpop.f32.mrf.mxu0
    %v4121 = vadd.f32 0.0, %v4120
    %v4122 = vpop.f32.mrf.mxu0
    %v4123 = vadd.f32 0.0, %v4122
    %v4124 = vpop.f32.mrf.mxu0
    %v4125 = vadd.f32 0.0, %v4124
    %v4126 = vpop.f32.mrf.mxu0
    %v4127 = vadd.f32 0.0, %v4126
    %4128 = vdwg.mxu0
    %4129 = vmatprep.subr.bf16.mxu0 %v3278
    %4130 = vmatpush1.bf16.msra.mxu0 %v3277
    %4131 = vmatprep.subr.bf16.mxu0 %v3274
    %4132 = vmatpush1.bf16.msra.mxu0 %v3273
    %4133 = vmatprep.subr.bf16.mxu0 %v3270
    %4134 = vmatpush1.bf16.msra.mxu0 %v3269
    %4135 = vmatprep.subr.bf16.mxu0 %v3266
    %4136 = vmatpush1.bf16.msra.mxu0 %v3265
    %4137 = vmatprep.subr.bf16.mxu0 %v3262
    %4138 = vmatpush1.bf16.msra.mxu0 %v3261
    %4139 = vmatprep.subr.bf16.mxu0 %v3258
    %4140 = vmatpush1.bf16.msra.mxu0 %v3257
    %4141 = vmatprep.subr.bf16.mxu0 %v3254
    %4142 = vmatpush1.bf16.msra.mxu0 %v3253
    %4143 = vmatprep.subr.bf16.mxu0 %v3250
    %4144 = vmatpush1.bf16.msra.mxu0 %v3249
    %4145 = vmatprep.subr.bf16.mxu0 0
    %4146 = vmatpush2.bf16.msra.mxu0 0
    %4147 = vmatprep.subr.bf16.mxu0 0
    %4148 = vmatpush2.bf16.msra.mxu0 0
    %4149 = vmatprep.subr.bf16.mxu0 0
    %4150 = vmatpush2.bf16.msra.mxu0 0
    %4151 = vmatprep.subr.bf16.mxu0 0
    %4152 = vmatpush2.bf16.msra.mxu0 0
    %4153 = vmatprep.subr.bf16.mxu0 0
    %4154 = vmatpush2.bf16.msra.mxu0 0
    %4155 = vmatprep.subr.bf16.mxu0 0
    %4156 = vmatpush2.bf16.msra.mxu0 0
    %4157 = vmatprep.subr.bf16.mxu0 0
    %4158 = vmatpush2.bf16.msra.mxu0 0
    %4159 = vmatprep.subr.bf16.mxu0 0
    %4160 = vmatpush2.bf16.msra.mxu0 0
    %4161 = vmatprep.mubr.bf16.mxu0 0
    %4162 = vmatmul.mubr.bf16.gmra.mxu0 %v4085
    %v4163 = vpop.f32.mrf.mxu0
    %v4164 = vadd.f32 0.0, %v4163
    %v4165 = vpop.f32.mrf.mxu0
    %v4166 = vadd.f32 0.0, %v4165
    %v4167 = vpop.f32.mrf.mxu0
    %v4168 = vadd.f32 0.0, %v4167
    %v4169 = vpop.f32.mrf.mxu0
    %v4170 = vadd.f32 0.0, %v4169
    %4171 = vdwg.mxu0
    %v4172 = vadd.f32 %v4077, %v4121
    %v4173 = vadd.f32 %v4078, %v4123
    %v4174 = vadd.f32 %v4079, %v4164
    %v4175 = vadd.f32 %v4080, %v4166
    %v4176 = vadd.f32 %v4081, %v4125
    %v4177 = vadd.f32 %v4082, %v4127
    %v4178 = vadd.f32 %v4083, %v4168
    %v4179 = vadd.f32 %v4084, %v4170
    %v4180 = vxor.u32 %v4172, 2147483648
    %v4181 = vxor.u32 %v4176, 2147483648
    %v4182 = vmul.f32 %v4180, 1.442695
    %v4183 = vpow.pop %v4182
    %v4184 = vmul.f32 %v4181, 1.442695
    %v4185 = vpow.pop %v4184
    %v4186 = vadd.f32 %v4183, 1.0
    %v4187 = vadd.f32 %v4185, 1.0
    %v4188 = vrcp.pop %v4186
    %v4189 = vmul.f32 1.0, %v4188
    %v4190 = vrcp.pop %v4187
    %v4191 = vmul.f32 1.0, %v4190
    %v4192 = vxor.u32 %v4173, 2147483648
    %v4193 = vxor.u32 %v4177, 2147483648
    %v4194 = vmul.f32 %v4192, 1.442695
    %v4195 = vpow.pop %v4194
    %v4196 = vmul.f32 %v4193, 1.442695
    %v4197 = vpow.pop %v4196
    %v4198 = vadd.f32 %v4195, 1.0
    %v4199 = vadd.f32 %v4197, 1.0
    %v4200 = vrcp.pop %v4198
    %v4201 = vmul.f32 1.0, %v4200
    %v4202 = vrcp.pop %v4199
    %v4203 = vmul.f32 1.0, %v4202
    %v4204 = vtanh.pop %v4174
    %v4205 = vtanh.pop %v4178
    %v4206 = vxor.u32 %v4175, 2147483648
    %v4207 = vxor.u32 %v4179, 2147483648
    %v4208 = vmul.f32 %v4206, 1.442695
    %v4209 = vpow.pop %v4208
    %v4210 = vmul.f32 %v4207, 1.442695
    %v4211 = vpow.pop %v4210
    %v4212 = vadd.f32 %v4209, 1.0
    %v4213 = vadd.f32 %v4211, 1.0
    %v4214 = vrcp.pop %v4212
    %v4215 = vmul.f32 1.0, %v4214
    %v4216 = vrcp.pop %v4213
    %v4217 = vmul.f32 1.0, %v4216
    %v4218 = vmul.f32 %v4201, %v4067
    %v4219 = vmul.f32 %v4203, %v4068
    %v4220 = vmul.f32 %v4189, %v4204
    %v4221 = vmul.f32 %v4191, %v4205
    %v4222 = vadd.f32 %v4218, %v4220
    %v4223 = vadd.f32 %v4219, %v4221
    %v4224 = vtanh.pop %v4222
    %v4225 = vtanh.pop %v4223
    %v4226 = vmul.f32 %v4215, %v4224
    %v4227 = vmul.f32 %v4217, %v4225
    %v4228 = vld [vmem:[%s2045] sm:$0xff]
    %v4229 = vld [vmem:[%s2045 + $0x8] sm:$0xff]
    %v4230 = vld [vmem:[%s2045 + $0x10] sm:$0xff]
    %v4231 = vld [vmem:[%s2045 + $0x18] sm:$0xff]
    %v4232 = vunpack.c.l.bf16 %v4228
    %v4233 = vunpack.c.h.bf16 %v4228
    %v4234 = vunpack.c.l.bf16 %v4229
    %v4235 = vunpack.c.h.bf16 %v4229
    %v4236 = vunpack.c.l.bf16 %v4230
    %v4237 = vunpack.c.h.bf16 %v4230
    %v4238 = vunpack.c.l.bf16 %v4231
    %v4239 = vunpack.c.h.bf16 %v4231
    %v4240 = vpack.c.bf16 %v4227, %v4226
    %4241 = vmatprep.subr.bf16.mxu0 %v3276
    %4242 = vmatpush1.bf16.msra.mxu0 %v3275
    %4243 = vmatprep.subr.bf16.mxu0 %v3272
    %4244 = vmatpush1.bf16.msra.mxu0 %v3271
    %4245 = vmatprep.subr.bf16.mxu0 %v3268
    %4246 = vmatpush1.bf16.msra.mxu0 %v3267
    %4247 = vmatprep.subr.bf16.mxu0 %v3264
    %4248 = vmatpush1.bf16.msra.mxu0 %v3263
    %4249 = vmatprep.subr.bf16.mxu0 %v3260
    %4250 = vmatpush1.bf16.msra.mxu0 %v3259
    %4251 = vmatprep.subr.bf16.mxu0 %v3256
    %4252 = vmatpush1.bf16.msra.mxu0 %v3255
    %4253 = vmatprep.subr.bf16.mxu0 %v3252
    %4254 = vmatpush1.bf16.msra.mxu0 %v3251
    %4255 = vmatprep.subr.bf16.mxu0 %v3248
    %4256 = vmatpush1.bf16.msra.mxu0 %v3247
    %4257 = vmatprep.subr.bf16.mxu0 0
    %4258 = vmatpush2.bf16.msra.mxu0 0
    %4259 = vmatprep.subr.bf16.mxu0 0
    %4260 = vmatpush2.bf16.msra.mxu0 0
    %4261 = vmatprep.subr.bf16.mxu0 0
    %4262 = vmatpush2.bf16.msra.mxu0 0
    %4263 = vmatprep.subr.bf16.mxu0 0
    %4264 = vmatpush2.bf16.msra.mxu0 0
    %4265 = vmatprep.subr.bf16.mxu0 0
    %4266 = vmatpush2.bf16.msra.mxu0 0
    %4267 = vmatprep.subr.bf16.mxu0 0
    %4268 = vmatpush2.bf16.msra.mxu0 0
    %4269 = vmatprep.subr.bf16.mxu0 0
    %4270 = vmatpush2.bf16.msra.mxu0 0
    %4271 = vmatprep.subr.bf16.mxu0 0
    %4272 = vmatpush2.bf16.msra.mxu0 0
    %4273 = vmatprep.mubr.bf16.mxu0 0
    %4274 = vmatmul.mubr.bf16.gmra.mxu0 %v4240
    %v4275 = vpop.f32.mrf.mxu0
    %v4276 = vadd.f32 0.0, %v4275
    %v4277 = vpop.f32.mrf.mxu0
    %v4278 = vadd.f32 0.0, %v4277
    %v4279 = vpop.f32.mrf.mxu0
    %v4280 = vadd.f32 0.0, %v4279
    %v4281 = vpop.f32.mrf.mxu0
    %v4282 = vadd.f32 0.0, %v4281
    %4283 = vdwg.mxu0
    %4284 = vmatprep.subr.bf16.mxu0 %v3278
    %4285 = vmatpush1.bf16.msra.mxu0 %v3277
    %4286 = vmatprep.subr.bf16.mxu0 %v3274
    %4287 = vmatpush1.bf16.msra.mxu0 %v3273
    %4288 = vmatprep.subr.bf16.mxu0 %v3270
    %4289 = vmatpush1.bf16.msra.mxu0 %v3269
    %4290 = vmatprep.subr.bf16.mxu0 %v3266
    %4291 = vmatpush1.bf16.msra.mxu0 %v3265
    %4292 = vmatprep.subr.bf16.mxu0 %v3262
    %4293 = vmatpush1.bf16.msra.mxu0 %v3261
    %4294 = vmatprep.subr.bf16.mxu0 %v3258
    %4295 = vmatpush1.bf16.msra.mxu0 %v3257
    %4296 = vmatprep.subr.bf16.mxu0 %v3254
    %4297 = vmatpush1.bf16.msra.mxu0 %v3253
    %4298 = vmatprep.subr.bf16.mxu0 %v3250
    %4299 = vmatpush1.bf16.msra.mxu0 %v3249
    %4300 = vmatprep.subr.bf16.mxu0 0
    %4301 = vmatpush2.bf16.msra.mxu0 0
    %4302 = vmatprep.subr.bf16.mxu0 0
    %4303 = vmatpush2.bf16.msra.mxu0 0
    %4304 = vmatprep.subr.bf16.mxu0 0
    %4305 = vmatpush2.bf16.msra.mxu0 0
    %4306 = vmatprep.subr.bf16.mxu0 0
    %4307 = vmatpush2.bf16.msra.mxu0 0
    %4308 = vmatprep.subr.bf16.mxu0 0
    %4309 = vmatpush2.bf16.msra.mxu0 0
    %4310 = vmatprep.subr.bf16.mxu0 0
    %4311 = vmatpush2.bf16.msra.mxu0 0
    %4312 = vmatprep.subr.bf16.mxu0 0
    %4313 = vmatpush2.bf16.msra.mxu0 0
    %4314 = vmatprep.subr.bf16.mxu0 0
    %4315 = vmatpush2.bf16.msra.mxu0 0
    %4316 = vmatprep.mubr.bf16.mxu0 0
    %4317 = vmatmul.mubr.bf16.gmra.mxu0 %v4240
    %v4318 = vpop.f32.mrf.mxu0
    %v4319 = vadd.f32 0.0, %v4318
    %v4320 = vpop.f32.mrf.mxu0
    %v4321 = vadd.f32 0.0, %v4320
    %v4322 = vpop.f32.mrf.mxu0
    %v4323 = vadd.f32 0.0, %v4322
    %v4324 = vpop.f32.mrf.mxu0
    %v4325 = vadd.f32 0.0, %v4324
    %4326 = vdwg.mxu0
    %v4327 = vadd.f32 %v4232, %v4276
    %v4328 = vadd.f32 %v4233, %v4278
    %v4329 = vadd.f32 %v4234, %v4319
    %v4330 = vadd.f32 %v4235, %v4321
    %v4331 = vadd.f32 %v4236, %v4280
    %v4332 = vadd.f32 %v4237, %v4282
    %v4333 = vadd.f32 %v4238, %v4323
    %v4334 = vadd.f32 %v4239, %v4325
    %v4335 = vxor.u32 %v4327, 2147483648
    %v4336 = vxor.u32 %v4331, 2147483648
    %v4337 = vmul.f32 %v4335, 1.442695
    %v4338 = vpow.pop %v4337
    %v4339 = vmul.f32 %v4336, 1.442695
    %v4340 = vpow.pop %v4339
    %v4341 = vadd.f32 %v4338, 1.0
    %v4342 = vadd.f32 %v4340, 1.0
    %v4343 = vrcp.pop %v4341
    %v4344 = vmul.f32 1.0, %v4343
    %v4345 = vrcp.pop %v4342
    %v4346 = vmul.f32 1.0, %v4345
    %v4347 = vxor.u32 %v4328, 2147483648
    %v4348 = vxor.u32 %v4332, 2147483648
    %v4349 = vmul.f32 %v4347, 1.442695
    %v4350 = vpow.pop %v4349
    %v4351 = vmul.f32 %v4348, 1.442695
    %v4352 = vpow.pop %v4351
    %v4353 = vadd.f32 %v4350, 1.0
    %v4354 = vadd.f32 %v4352, 1.0
    %v4355 = vrcp.pop %v4353
    %v4356 = vmul.f32 1.0, %v4355
    %v4357 = vrcp.pop %v4354
    %v4358 = vmul.f32 1.0, %v4357
    %v4359 = vtanh.pop %v4329
    %v4360 = vtanh.pop %v4333
    %v4361 = vxor.u32 %v4330, 2147483648
    %v4362 = vxor.u32 %v4334, 2147483648
    %v4363 = vmul.f32 %v4361, 1.442695
    %v4364 = vpow.pop %v4363
    %v4365 = vmul.f32 %v4362, 1.442695
    %v4366 = vpow.pop %v4365
    %v4367 = vadd.f32 %v4364, 1.0
    %v4368 = vadd.f32 %v4366, 1.0
    %v4369 = vrcp.pop %v4367
    %v4370 = vmul.f32 1.0, %v4369
    %v4371 = vrcp.pop %v4368
    %v4372 = vmul.f32 1.0, %v4371
    %v4373 = vmul.f32 %v4356, %v4222
    %v4374 = vmul.f32 %v4358, %v4223
    %v4375 = vmul.f32 %v4344, %v4359
    %v4376 = vmul.f32 %v4346, %v4360
    %v4377 = vadd.f32 %v4373, %v4375
    %v4378 = vadd.f32 %v4374, %v4376
    %v4379 = vtanh.pop %v4377
    %v4380 = vtanh.pop %v4378
    %v4381 = vmul.f32 %v4370, %v4379
    %v4382 = vmul.f32 %v4372, %v4380
    %v4383 = vld [vmem:[%s2213] sm:$0xff]
    %v4384 = vld [vmem:[%s2213 + $0x8] sm:$0xff]
    %v4385 = vld [vmem:[%s2213 + $0x10] sm:$0xff]
    %v4386 = vld [vmem:[%s2213 + $0x18] sm:$0xff]
    %v4387 = vunpack.c.l.bf16 %v4383
    %v4388 = vunpack.c.h.bf16 %v4383
    %v4389 = vunpack.c.l.bf16 %v4384
    %v4390 = vunpack.c.h.bf16 %v4384
    %v4391 = vunpack.c.l.bf16 %v4385
    %v4392 = vunpack.c.h.bf16 %v4385
    %v4393 = vunpack.c.l.bf16 %v4386
    %v4394 = vunpack.c.h.bf16 %v4386
    %v4395 = vpack.c.bf16 %v4382, %v4381
    %4396 = vmatprep.subr.bf16.mxu0 %v3276
    %4397 = vmatpush1.bf16.msra.mxu0 %v3275
    %4398 = vmatprep.subr.bf16.mxu0 %v3272
    %4399 = vmatpush1.bf16.msra.mxu0 %v3271
    %4400 = vmatprep.subr.bf16.mxu0 %v3268
    %4401 = vmatpush1.bf16.msra.mxu0 %v3267
    %4402 = vmatprep.subr.bf16.mxu0 %v3264
    %4403 = vmatpush1.bf16.msra.mxu0 %v3263
    %4404 = vmatprep.subr.bf16.mxu0 %v3260
    %4405 = vmatpush1.bf16.msra.mxu0 %v3259
    %4406 = vmatprep.subr.bf16.mxu0 %v3256
    %4407 = vmatpush1.bf16.msra.mxu0 %v3255
    %4408 = vmatprep.subr.bf16.mxu0 %v3252
    %4409 = vmatpush1.bf16.msra.mxu0 %v3251
    %4410 = vmatprep.subr.bf16.mxu0 %v3248
    %4411 = vmatpush1.bf16.msra.mxu0 %v3247
    %4412 = vmatprep.subr.bf16.mxu0 0
    %4413 = vmatpush2.bf16.msra.mxu0 0
    %4414 = vmatprep.subr.bf16.mxu0 0
    %4415 = vmatpush2.bf16.msra.mxu0 0
    %4416 = vmatprep.subr.bf16.mxu0 0
    %4417 = vmatpush2.bf16.msra.mxu0 0
    %4418 = vmatprep.subr.bf16.mxu0 0
    %4419 = vmatpush2.bf16.msra.mxu0 0
    %4420 = vmatprep.subr.bf16.mxu0 0
    %4421 = vmatpush2.bf16.msra.mxu0 0
    %4422 = vmatprep.subr.bf16.mxu0 0
    %4423 = vmatpush2.bf16.msra.mxu0 0
    %4424 = vmatprep.subr.bf16.mxu0 0
    %4425 = vmatpush2.bf16.msra.mxu0 0
    %4426 = vmatprep.subr.bf16.mxu0 0
    %4427 = vmatpush2.bf16.msra.mxu0 0
    %4428 = vmatprep.mubr.bf16.mxu0 0
    %4429 = vmatmul.mubr.bf16.gmra.mxu0 %v4395
    %v4430 = vpop.f32.mrf.mxu0
    %v4431 = vadd.f32 0.0, %v4430
    %v4432 = vpop.f32.mrf.mxu0
    %v4433 = vadd.f32 0.0, %v4432
    %v4434 = vpop.f32.mrf.mxu0
    %v4435 = vadd.f32 0.0, %v4434
    %v4436 = vpop.f32.mrf.mxu0
    %v4437 = vadd.f32 0.0, %v4436
    %4438 = vdwg.mxu0
    %4439 = vmatprep.subr.bf16.mxu0 %v3278
    %4440 = vmatpush1.bf16.msra.mxu0 %v3277
    %4441 = vmatprep.subr.bf16.mxu0 %v3274
    %4442 = vmatpush1.bf16.msra.mxu0 %v3273
    %4443 = vmatprep.subr.bf16.mxu0 %v3270
    %4444 = vmatpush1.bf16.msra.mxu0 %v3269
    %4445 = vmatprep.subr.bf16.mxu0 %v3266
    %4446 = vmatpush1.bf16.msra.mxu0 %v3265
    %4447 = vmatprep.subr.bf16.mxu0 %v3262
    %4448 = vmatpush1.bf16.msra.mxu0 %v3261
    %4449 = vmatprep.subr.bf16.mxu0 %v3258
    %4450 = vmatpush1.bf16.msra.mxu0 %v3257
    %4451 = vmatprep.subr.bf16.mxu0 %v3254
    %4452 = vmatpush1.bf16.msra.mxu0 %v3253
    %4453 = vmatprep.subr.bf16.mxu0 %v3250
    %4454 = vmatpush1.bf16.msra.mxu0 %v3249
    %4455 = vmatprep.subr.bf16.mxu0 0
    %4456 = vmatpush2.bf16.msra.mxu0 0
    %4457 = vmatprep.subr.bf16.mxu0 0
    %4458 = vmatpush2.bf16.msra.mxu0 0
    %4459 = vmatprep.subr.bf16.mxu0 0
    %4460 = vmatpush2.bf16.msra.mxu0 0
    %4461 = vmatprep.subr.bf16.mxu0 0
    %4462 = vmatpush2.bf16.msra.mxu0 0
    %4463 = vmatprep.subr.bf16.mxu0 0
    %4464 = vmatpush2.bf16.msra.mxu0 0
    %4465 = vmatprep.subr.bf16.mxu0 0
    %4466 = vmatpush2.bf16.msra.mxu0 0
    %4467 = vmatprep.subr.bf16.mxu0 0
    %4468 = vmatpush2.bf16.msra.mxu0 0
    %4469 = vmatprep.subr.bf16.mxu0 0
    %4470 = vmatpush2.bf16.msra.mxu0 0
    %4471 = vmatprep.mubr.bf16.mxu0 0
    %4472 = vmatmul.mubr.bf16.gmra.mxu0 %v4395
    %v4473 = vpop.f32.mrf.mxu0
    %v4474 = vadd.f32 0.0, %v4473
    %v4475 = vpop.f32.mrf.mxu0
    %v4476 = vadd.f32 0.0, %v4475
    %v4477 = vpop.f32.mrf.mxu0
    %v4478 = vadd.f32 0.0, %v4477
    %v4479 = vpop.f32.mrf.mxu0
    %v4480 = vadd.f32 0.0, %v4479
    %4481 = vdwg.mxu0
    %v4482 = vadd.f32 %v4387, %v4431
    %v4483 = vadd.f32 %v4388, %v4433
    %v4484 = vadd.f32 %v4389, %v4474
    %v4485 = vadd.f32 %v4390, %v4476
    %v4486 = vadd.f32 %v4391, %v4435
    %v4487 = vadd.f32 %v4392, %v4437
    %v4488 = vadd.f32 %v4393, %v4478
    %v4489 = vadd.f32 %v4394, %v4480
    %v4490 = vxor.u32 %v4482, 2147483648
    %v4491 = vxor.u32 %v4486, 2147483648
    %v4492 = vmul.f32 %v4490, 1.442695
    %v4493 = vpow.pop %v4492
    %v4494 = vmul.f32 %v4491, 1.442695
    %v4495 = vpow.pop %v4494
    %v4496 = vadd.f32 %v4493, 1.0
    %v4497 = vadd.f32 %v4495, 1.0
    %v4498 = vrcp.pop %v4496
    %v4499 = vmul.f32 1.0, %v4498
    %v4500 = vrcp.pop %v4497
    %v4501 = vmul.f32 1.0, %v4500
    %v4502 = vxor.u32 %v4483, 2147483648
    %v4503 = vxor.u32 %v4487, 2147483648
    %v4504 = vmul.f32 %v4502, 1.442695
    %v4505 = vpow.pop %v4504
    %v4506 = vmul.f32 %v4503, 1.442695
    %v4507 = vpow.pop %v4506
    %v4508 = vadd.f32 %v4505, 1.0
    %v4509 = vadd.f32 %v4507, 1.0
    %v4510 = vrcp.pop %v4508
    %v4511 = vmul.f32 1.0, %v4510
    %v4512 = vrcp.pop %v4509
    %v4513 = vmul.f32 1.0, %v4512
    %v4514 = vtanh.pop %v4484
    %v4515 = vtanh.pop %v4488
    %v4516 = vxor.u32 %v4485, 2147483648
    %v4517 = vxor.u32 %v4489, 2147483648
    %v4518 = vmul.f32 %v4516, 1.442695
    %v4519 = vpow.pop %v4518
    %v4520 = vmul.f32 %v4517, 1.442695
    %v4521 = vpow.pop %v4520
    %v4522 = vadd.f32 %v4519, 1.0
    %v4523 = vadd.f32 %v4521, 1.0
    %v4524 = vrcp.pop %v4522
    %v4525 = vmul.f32 1.0, %v4524
    %v4526 = vrcp.pop %v4523
    %v4527 = vmul.f32 1.0, %v4526
    %v4528 = vmul.f32 %v4511, %v4377
    %v4529 = vmul.f32 %v4513, %v4378
    %v4530 = vmul.f32 %v4499, %v4514
    %v4531 = vmul.f32 %v4501, %v4515
    %v4532 = vadd.f32 %v4528, %v4530
    %v4533 = vadd.f32 %v4529, %v4531
    %v4534 = vtanh.pop %v4532
    %v4535 = vtanh.pop %v4533
    %v4536 = vmul.f32 %v4525, %v4534
    %v4537 = vmul.f32 %v4527, %v4535
    %v4538 = vpack.c.bf16 %v4537, %v4536
    %v4539 = vld [vmem:[#allocation13] sm:$0xf]
    %v4540 = vld [vmem:[#allocation13 + $0x4] sm:$0xf]
    %v4541 = vld [vmem:[#allocation13 + $0x8] sm:$0xf]
    %v4542 = vld [vmem:[#allocation13 + $0xc] sm:$0xf]
    %v4543 = vld [vmem:[#allocation13 + $0x10] sm:$0xf]
    %v4544 = vld [vmem:[#allocation13 + $0x14] sm:$0xf]
    %v4545 = vld [vmem:[#allocation13 + $0x18] sm:$0xf]
    %v4546 = vld [vmem:[#allocation13 + $0x1c] sm:$0xf]
    %v4547 = vld [vmem:[#allocation13 + $0x20] sm:$0xf]
    %v4548 = vld [vmem:[#allocation13 + $0x24] sm:$0xf]
    %v4549 = vld [vmem:[#allocation13 + $0x28] sm:$0xf]
    %v4550 = vld [vmem:[#allocation13 + $0x2c] sm:$0xf]
    %v4551 = vld [vmem:[#allocation13 + $0x30] sm:$0xf]
    %v4552 = vld [vmem:[#allocation13 + $0x34] sm:$0xf]
    %v4553 = vld [vmem:[#allocation13 + $0x38] sm:$0xf]
    %v4554 = vld [vmem:[#allocation13 + $0x3c] sm:$0xf]
    %v4555 = vld [vmem:[%s8] sm:$0x1]
    %v4557 = vlaneseq
    %v4558 = vshrl.u32 %v4557, 7
    %v4559 = vsub.s32 0, %v4558
    %v4560 = vrot.slane %v4555, %v4559
    %v4578 = vunpack.c.l.b16 %v4539
    %v4579 = vunpack.c.l.b16 %v4540
    %v4580 = vunpack.c.l.b16 %v4541
    %v4581 = vunpack.c.l.b16 %v4542
    %v4582 = vunpack.c.l.b16 %v4543
    %v4583 = vunpack.c.l.b16 %v4544
    %v4584 = vunpack.c.l.b16 %v4545
    %v4585 = vunpack.c.l.b16 %v4546
    %v4586 = vunpack.c.l.b16 %v4547
    %v4587 = vunpack.c.l.b16 %v4548
    %v4588 = vunpack.c.l.b16 %v4549
    %v4589 = vunpack.c.l.b16 %v4550
    %v4590 = vunpack.c.l.b16 %v4551
    %v4591 = vunpack.c.l.b16 %v4552
    %v4592 = vunpack.c.l.b16 %v4553
    %v4593 = vunpack.c.l.b16 %v4554
    %v4594 = vpack.c.b16 %v4579, %v4578
    %v4595 = vpack.c.b16 %v4581, %v4580
    %v4596 = vpack.c.b16 %v4583, %v4582
    %v4597 = vpack.c.b16 %v4585, %v4584
    %v4598 = vpack.c.b16 %v4587, %v4586
    %v4599 = vpack.c.b16 %v4589, %v4588
    %v4600 = vpack.c.b16 %v4591, %v4590
    %v4601 = vpack.c.b16 %v4593, %v4592
    %4610 = vmatprep.subr.bf16.mxu0 0
    %4611 = vmatpush1.bf16.msra.mxu0 %v4601
    %4612 = vmatprep.subr.bf16.mxu0 0
    %4613 = vmatpush1.bf16.msra.mxu0 %v4600
    %4614 = vmatprep.subr.bf16.mxu0 0
    %4615 = vmatpush1.bf16.msra.mxu0 %v4599
    %4616 = vmatprep.subr.bf16.mxu0 0
    %4617 = vmatpush1.bf16.msra.mxu0 %v4598
    %4618 = vmatprep.subr.bf16.mxu0 0
    %4619 = vmatpush1.bf16.msra.mxu0 %v4597
    %4620 = vmatprep.subr.bf16.mxu0 0
    %4621 = vmatpush1.bf16.msra.mxu0 %v4596
    %4622 = vmatprep.subr.bf16.mxu0 0
    %4623 = vmatpush1.bf16.msra.mxu0 %v4595
    %4624 = vmatprep.subr.bf16.mxu0 0
    %4625 = vmatpush1.bf16.msra.mxu0 %v4594
    %4626 = vmatprep.subr.bf16.mxu0 0
    %4627 = vmatpush2.bf16.msra.mxu0 0
    %4628 = vmatprep.subr.bf16.mxu0 0
    %4629 = vmatpush2.bf16.msra.mxu0 0
    %4630 = vmatprep.subr.bf16.mxu0 0
    %4631 = vmatpush2.bf16.msra.mxu0 0
    %4632 = vmatprep.subr.bf16.mxu0 0
    %4633 = vmatpush2.bf16.msra.mxu0 0
    %4634 = vmatprep.subr.bf16.mxu0 0
    %4635 = vmatpush2.bf16.msra.mxu0 0
    %4636 = vmatprep.subr.bf16.mxu0 0
    %4637 = vmatpush2.bf16.msra.mxu0 0
    %4638 = vmatprep.subr.bf16.mxu0 0
    %4639 = vmatpush2.bf16.msra.mxu0 0
    %4640 = vmatprep.subr.bf16.mxu0 0
    %4641 = vmatpush2.bf16.msra.mxu0 0
    %4642 = vmatprep.mubr.bf16.mxu0 0
    %4643 = vmatmul.mubr.bf16.gmra.mxu0 %v4538
    %v4644 = vpop.f32.mrf.mxu0
    %v4645 = vadd.f32 %v4560, %v4644
    %v4646 = vpop.f32.mrf.mxu0
    %v4647 = vpop.f32.mrf.mxu0
    %v4648 = vadd.f32 %v4560, %v4647
    %v4649 = vpop.f32.mrf.mxu0
    %4650 = vdwg.mxu0
    %4651 = vst [vmem:[#allocation15] sm:$0xff] %v4645
    %4652 = vst [vmem:[#allocation15 + $0x8] sm:$0xff] %v4648
    // Predicated region
    $region62: #{tpu_custom_call.1} parent=1 // pred_check
      _
    $region63: #{tpu_custom_call.1} parent=1 // pred_check_branch
      %4654 = sbr.rel (0) target = $region65
    $region64: #{tpu_custom_call.1} parent=1 // pred_region
      %s4656 = ssub.s32 256, 256
      %4657 = vsyncadd [#allocation6], %s4656
      %s4658 = sshll.u32 [#allocation15], 4
      %s4659 = int_to_ptr.vmem [resolvable:$true] %s4658
      %4664 = dma.vmem_to_hbm [thread:$0]  %s4659, 256, %s9, [#allocation6], 128, 128, 8
    $region65: #{tpu_custom_call.1} parent=1 // pred_fallthru
      _
    // Predicated region
    $region66: #{tpu_custom_call.1} parent=1 // pred_check
      _
    $region67: #{tpu_custom_call.1} parent=1 // pred_check_branch
      %4666 = sbr.rel (0) target = $region69
    $region68: #{tpu_custom_call.1} parent=1 // pred_region
      %4667 = dma.done [#allocation6], 256
    $region69: #{tpu_custom_call.1} parent=1 // pred_fallthru
      _
    %4668 = vsyncpa [#allocation5], 1
    %4669 = vsyncpa [#allocation8], 1
    %4670 = vsyncpa [#allocation11], 1
    %4671 = vsyncpa [#allocation14], 1
    %4672 = vsyncpa [#allocation6], 1

// kernel: tpu_custom_call.1
$region0: #{tpu_custom_call.1}
  #allocation0 [shape = 'u32[]', space=smem, size = 0x4, offset = 0x4, fixed_abs, tag = 'smem constant byte address 0x4 - core index']
  #allocation1 [shape = 'u32[144,128]{1,0:T(1,128)}', space=vmem, size = 0x12000, scoped, tag = 'internal scratch']
  #allocation2 [shape = 'bf16[128,512]{1,0:T(8,128)(2,1)}', space=vmem, size = 0x20000, scoped, tag = 'scratch operand']
  #allocation3 [shape = 'bf16[128,128]{1,0:T(8,128)(2,1)}', space=vmem, size = 0x8000, scoped, tag = 'scratch operand']
  %s0 = inlined_call_operand.hbm [shape: bf16[1,128,128], index: 0, kind: input, shape index: {}]
  %s1 = inlined_call_operand.hbm [shape: bf16[128,512], index: 1, kind: input, shape index: {}]
  %s2 = inlined_call_operand.hbm [shape: bf16[128,512], index: 2, kind: input, shape index: {}]
  %s3 = inlined_call_operand.vmem [shape: f32[1,512], index: 3, kind: input, shape index: {}]
  %s4 = inlined_call_operand.hbm [shape: bf16[128,512], index: 4, kind: input, shape index: {}]
  %s5 = inlined_call_operand.hbm [shape: bf16[128,512], index: 5, kind: input, shape index: {}]
  %s6 = inlined_call_operand.vmem [shape: f32[1,512], index: 6, kind: input, shape index: {}]
  %s7 = inlined_call_operand.hbm [shape: bf16[128,128], index: 7, kind: input, shape index: {}]
  %s8 = inlined_call_operand.vmem [shape: f32[1,128], index: 8, kind: input, shape index: {}]
  %s9 = inlined_call_operand.hbm [shape: f32[16,128], index: 9, kind: output, shape index: {}]
  %s10 = sld [smem:[#allocation0]]
  $region70: #{tpu_custom_call.1} parent=0
    _
  %s12 = ssub.s32 1, %s10
  %s13 = scalar_select 0, %s12, %s10
  $region1: #{tpu_custom_call.1} parent=0
    #allocation4 [shape = 'u8[32768]{0}', space=vmem, size = 0x8000, scoped, tag = 'input window, operand 0, single buffered']
    #allocation5 [shape = 's32[1]{0}', space=sflag, size = 0x4, scoped, tag = 'scoped memory for tpu_custom_call.1']
    #allocation6 [shape = 's32[1]{0}', space=sflag, size = 0x4, scoped, tag = 'scoped memory for tpu_custom_call.1']
    #allocation7 [shape = 'u8[131072]{0}', space=vmem, size = 0x20000, scoped, tag = 'input window, operand 1, single buffered']
    #allocation8 [shape = 's32[1]{0}', space=sflag, size = 0x4, scoped, tag = 'scoped memory for tpu_custom_call.1']
    #allocation9 [shape = 'u8[131072]{0}', space=vmem, size = 0x20000, scoped, tag = 'input window, operand 2, single buffered']
    #allocation10 [shape = 'u8[131072]{0}', space=vmem, size = 0x20000, scoped, tag = 'input window, operand 4, single buffered']
    #allocation11 [shape = 's32[1]{0}', space=sflag, size = 0x4, scoped, tag = 'scoped memory for tpu_custom_call.1']
    #allocation12 [shape = 'u8[131072]{0}', space=vmem, size = 0x20000, scoped, tag = 'input window, operand 5, single buffered']
    #allocation13 [shape = 'u8[32768]{0}', space=vmem, size = 0x8000, scoped, tag = 'input window, operand 7, single buffered']
    #allocation14 [shape = 's32[1]{0}', space=sflag, size = 0x4, scoped, tag = 'scoped memory for tpu_custom_call.1']
    #allocation15 [shape = 'u8[8192]{0}', space=vmem, size = 0x2000, scoped, tag = 'output window, operand 0, single buffered']
    %14 = vsyncpa [#allocation5], 0
    %15 = vsyncpa [#allocation8], 0
    %16 = vsyncpa [#allocation11], 0
    %17 = vsyncpa [#allocation14], 0
    %18 = vsyncpa [#allocation6], 0
    // Predicated region
    $region2: #{tpu_custom_call.1} parent=1 // pred_check
      _
    $region3: #{tpu_custom_call.1} parent=1 // pred_check_branch
      %20 = sbr.rel (0) target = $region5
    $region4: #{tpu_custom_call.1} parent=1 // pred_region
      %s22 = ssub.s32 1024, 1024
      %23 = vsyncadd [#allocation5], %s22
      %s24 = sshll.u32 [#allocation4], 4
      %s25 = int_to_ptr.vmem [resolvable:$true] %s24
      %30 = dma.hbm_to_vmem [thread:$0]  %s0, 1024, %s25, [#allocation5], 64, 64, 4
    $region5: #{tpu_custom_call.1} parent=1 // pred_fallthru
      _
    // Predicated region
    $region6: #{tpu_custom_call.1} parent=1 // pred_check
      _
    $region7: #{tpu_custom_call.1} parent=1 // pred_check_branch
      %32 = sbr.rel (0) target = $region9
    $region8: #{tpu_custom_call.1} parent=1 // pred_region
      %s34 = ssub.s32 4096, 4096
      %35 = vsyncadd [#allocation8], %s34
      %s36 = sshll.u32 [#allocation7], 4
      %s37 = int_to_ptr.vmem [resolvable:$true] %s36
      %42 = dma.hbm_to_vmem [thread:$0]  %s1, 4096, %s37, [#allocation8], 256, 256, 16
    $region9: #{tpu_custom_call.1} parent=1 // pred_fallthru
      _
    // Predicated region
    $region10: #{tpu_custom_call.1} parent=1 // pred_check
      _
    $region11: #{tpu_custom_call.1} parent=1 // pred_check_branch
      %44 = sbr.rel (0) target = $region13
    $region12: #{tpu_custom_call.1} parent=1 // pred_region
      %s46 = ssub.s32 4096, 4096
      %47 = vsyncadd [#allocation8], %s46
      %s48 = sshll.u32 [#allocation9], 4
      %s49 = int_to_ptr.vmem [resolvable:$true] %s48
      %54 = dma.hbm_to_vmem [thread:$0]  %s2, 4096, %s49, [#allocation8], 256, 256, 16
    $region13: #{tpu_custom_call.1} parent=1 // pred_fallthru
      _
    // Predicated region
    $region14: #{tpu_custom_call.1} parent=1 // pred_check
      _
    $region15: #{tpu_custom_call.1} parent=1 // pred_check_branch
      %56 = sbr.rel (0) target = $region17
    $region16: #{tpu_custom_call.1} parent=1 // pred_region
      _
    $region17: #{tpu_custom_call.1} parent=1 // pred_fallthru
      _
    // Predicated region
    $region18: #{tpu_custom_call.1} parent=1 // pred_check
      _
    $region19: #{tpu_custom_call.1} parent=1 // pred_check_branch
      %58 = sbr.rel (0) target = $region21
    $region20: #{tpu_custom_call.1} parent=1 // pred_region
      %s60 = ssub.s32 4096, 4096
      %61 = vsyncadd [#allocation11], %s60
      %s62 = sshll.u32 [#allocation10], 4
      %s63 = int_to_ptr.vmem [resolvable:$true] %s62
      %68 = dma.hbm_to_vmem [thread:$0]  %s4, 4096, %s63, [#allocation11], 256, 256, 16
    $region21: #{tpu_custom_call.1} parent=1 // pred_fallthru
      _
    // Predicated region
    $region22: #{tpu_custom_call.1} parent=1 // pred_check
      _
    $region23: #{tpu_custom_call.1} parent=1 // pred_check_branch
      %70 = sbr.rel (0) target = $region25
    $region24: #{tpu_custom_call.1} parent=1 // pred_region
      %s72 = ssub.s32 4096, 4096
      %73 = vsyncadd [#allocation11], %s72
      %s74 = sshll.u32 [#allocation12], 4
      %s75 = int_to_ptr.vmem [resolvable:$true] %s74
      %80 = dma.hbm_to_vmem [thread:$0]  %s5, 4096, %s75, [#allocation11], 256, 256, 16
    $region25: #{tpu_custom_call.1} parent=1 // pred_fallthru
      _
    // Predicated region
    $region26: #{tpu_custom_call.1} parent=1 // pred_check
      _
    $region27: #{tpu_custom_call.1} parent=1 // pred_check_branch
      %82 = sbr.rel (0) target = $region29
    $region28: #{tpu_custom_call.1} parent=1 // pred_region
      _
    $region29: #{tpu_custom_call.1} parent=1 // pred_fallthru
      _
    // Predicated region
    $region30: #{tpu_custom_call.1} parent=1 // pred_check
      _
    $region31: #{tpu_custom_call.1} parent=1 // pred_check_branch
      %84 = sbr.rel (0) target = $region33
    $region32: #{tpu_custom_call.1} parent=1 // pred_region
      %s86 = ssub.s32 1024, 1024
      %87 = vsyncadd [#allocation14], %s86
      %s88 = sshll.u32 [#allocation13], 4
      %s89 = int_to_ptr.vmem [resolvable:$true] %s88
      %94 = dma.hbm_to_vmem [thread:$0]  %s7, 1024, %s89, [#allocation14], 64, 64, 4
    $region33: #{tpu_custom_call.1} parent=1 // pred_fallthru
      _
    // Predicated region
    $region34: #{tpu_custom_call.1} parent=1 // pred_check
      _
    $region35: #{tpu_custom_call.1} parent=1 // pred_check_branch
      %96 = sbr.rel (0) target = $region37
    $region36: #{tpu_custom_call.1} parent=1 // pred_region
      _
    $region37: #{tpu_custom_call.1} parent=1 // pred_fallthru
      _
    // Predicated region
    $region38: #{tpu_custom_call.1} parent=1 // pred_check
      _
    $region39: #{tpu_custom_call.1} parent=1 // pred_check_branch
      %98 = sbr.rel (0) target = $region41
    $region40: #{tpu_custom_call.1} parent=1 // pred_region
      %99 = dma.done [#allocation5], 1024
    $region41: #{tpu_custom_call.1} parent=1 // pred_fallthru
      _
    // Predicated region
    $region42: #{tpu_custom_call.1} parent=1 // pred_check
      _
    $region43: #{tpu_custom_call.1} parent=1 // pred_check_branch
      %101 = sbr.rel (0) target = $region45
    $region44: #{tpu_custom_call.1} parent=1 // pred_region
      %102 = dma.done [#allocation8], 4096
    $region45: #{tpu_custom_call.1} parent=1 // pred_fallthru
      _
    // Predicated region
    $region46: #{tpu_custom_call.1} parent=1 // pred_check
      _
    $region47: #{tpu_custom_call.1} parent=1 // pred_check_branch
      %104 = sbr.rel (0) target = $region49
    $region48: #{tpu_custom_call.1} parent=1 // pred_region
      %105 = dma.done [#allocation8], 4096
    $region49: #{tpu_custom_call.1} parent=1 // pred_fallthru
      _
    // Predicated region
    $region50: #{tpu_custom_call.1} parent=1 // pred_check
      _
    $region51: #{tpu_custom_call.1} parent=1 // pred_check_branch
      %107 = sbr.rel (0) target = $region53
    $region52: #{tpu_custom_call.1} parent=1 // pred_region
      %108 = dma.done [#allocation11], 4096
    $region53: #{tpu_custom_call.1} parent=1 // pred_fallthru
      _
    // Predicated region
    $region54: #{tpu_custom_call.1} parent=1 // pred_check
      _
    $region55: #{tpu_custom_call.1} parent=1 // pred_check_branch
      %110 = sbr.rel (0) target = $region57
    $region56: #{tpu_custom_call.1} parent=1 // pred_region
      %111 = dma.done [#allocation11], 4096
    $region57: #{tpu_custom_call.1} parent=1 // pred_fallthru
      _
    // Predicated region
    $region58: #{tpu_custom_call.1} parent=1 // pred_check
      _
    $region59: #{tpu_custom_call.1} parent=1 // pred_check_branch
      %113 = sbr.rel (0) target = $region61
    $region60: #{tpu_custom_call.1} parent=1 // pred_region
      %114 = dma.done [#allocation14], 1024
    $region61: #{tpu_custom_call.1} parent=1 // pred_fallthru
      _
    %v116 = vld [vmem:[#allocation4] sm:$0xf]
    %v117 = vld [vmem:[#allocation4 + $0x4] sm:$0xf]
    %v118 = vld [vmem:[#allocation4 + $0x8] sm:$0xf]
    %v119 = vld [vmem:[#allocation4 + $0xc] sm:$0xf]
    %v120 = vld [vmem:[#allocation4 + $0x10] sm:$0xf]
    %v121 = vld [vmem:[#allocation4 + $0x14] sm:$0xf]
    %v122 = vld [vmem:[#allocation4 + $0x18] sm:$0xf]
    %v123 = vld [vmem:[#allocation4 + $0x1c] sm:$0xf]
    %v124 = vld [vmem:[#allocation4 + $0x20] sm:$0xf]
    %v125 = vld [vmem:[#allocation4 + $0x24] sm:$0xf]
    %v126 = vld [vmem:[#allocation4 + $0x28] sm:$0xf]
    %v127 = vld [vmem:[#allocation4 + $0x2c] sm:$0xf]
    %v128 = vld [vmem:[#allocation4 + $0x30] sm:$0xf]
    %v129 = vld [vmem:[#allocation4 + $0x34] sm:$0xf]
    %v130 = vld [vmem:[#allocation4 + $0x38] sm:$0xf]
    %v131 = vld [vmem:[#allocation4 + $0x3c] sm:$0xf]
    %v132 = vld [vmem:[#allocation7] sm:$0xff]
    %v133 = vld [vmem:[#allocation7 + $0x8] sm:$0xff]
    %v134 = vld [vmem:[#allocation7 + $0x10] sm:$0xff]
    %v135 = vld [vmem:[#allocation7 + $0x18] sm:$0xff]
    %v136 = vld [vmem:[#allocation7 + $0x20] sm:$0xff]
    %v137 = vld [vmem:[#allocation7 + $0x28] sm:$0xff]
    %v138 = vld [vmem:[#allocation7 + $0x30] sm:$0xff]
    %v139 = vld [vmem:[#allocation7 + $0x38] sm:$0xff]
    %v140 = vld [vmem:[#allocation7 + $0x40] sm:$0xff]
    %v141 = vld [vmem:[#allocation7 + $0x48] sm:$0xff]
    %v142 = vld [vmem:[#allocation7 + $0x50] sm:$0xff]
    %v143 = vld [vmem:[#allocation7 + $0x58] sm:$0xff]
    %v144 = vld [vmem:[#allocation7 + $0x60] sm:$0xff]
    %v145 = vld [vmem:[#allocation7 + $0x68] sm:$0xff]
    %v146 = vld [vmem:[#allocation7 + $0x70] sm:$0xff]
    %v147 = vld [vmem:[#allocation7 + $0x78] sm:$0xff]
    %v148 = vld [vmem:[#allocation7 + $0x80] sm:$0xff]
    %v149 = vld [vmem:[#allocation7 + $0x88] sm:$0xff]
    %v150 = vld [vmem:[#allocation7 + $0x90] sm:$0xff]
    %v151 = vld [vmem:[#allocation7 + $0x98] sm:$0xff]
    %v152 = vld [vmem:[#allocation7 + $0xa0] sm:$0xff]
    %v153 = vld [vmem:[#allocation7 + $0xa8] sm:$0xff]
    %v154 = vld [vmem:[#allocation7 + $0xb0] sm:$0xff]
    %v155 = vld [vmem:[#allocation7 + $0xb8] sm:$0xff]
    %v156 = vld [vmem:[#allocation7 + $0xc0] sm:$0xff]
    %v157 = vld [vmem:[#allocation7 + $0xc8] sm:$0xff]
    %v158 = vld [vmem:[#allocation7 + $0xd0] sm:$0xff]
    %v159 = vld [vmem:[#allocation7 + $0xd8] sm:$0xff]
    %v160 = vld [vmem:[#allocation7 + $0xe0] sm:$0xff]
    %v161 = vld [vmem:[#allocation7 + $0xe8] sm:$0xff]
    %v162 = vld [vmem:[#allocation7 + $0xf0] sm:$0xff]
    %v163 = vld [vmem:[#allocation7 + $0xf8] sm:$0xff]
    %v164 = vld [vmem:[%s3] sm:$0xf]
    %v166 = vlaneseq
    %v167 = vshrl.u32 %v166, 7
    %v168 = vsub.s32 0, %v167
    %v169 = vrot.slane %v164, %v168
    %v170 = vlaneseq
    %v171 = vshrl.u32 %v170, 7
    %v172 = vsub.s32 1, %v171
    %v173 = vrot.slane %v164, %v172
    %v174 = vlaneseq
    %v175 = vshrl.u32 %v174, 7
    %v176 = vsub.s32 2, %v175
    %v177 = vrot.slane %v164, %v176
    %v178 = vlaneseq
    %v179 = vshrl.u32 %v178, 7
    %v180 = vsub.s32 3, %v179
    %v181 = vrot.slane %v164, %v180
    %v202 = vunpack.c.l.b16 %v116
    %v203 = vunpack.c.l.b16 %v117
    %v204 = vunpack.c.l.b16 %v118
    %v205 = vunpack.c.l.b16 %v119
    %v206 = vunpack.c.l.b16 %v120
    %v207 = vunpack.c.l.b16 %v121
    %v208 = vunpack.c.l.b16 %v122
    %v209 = vunpack.c.l.b16 %v123
    %v210 = vunpack.c.l.b16 %v124
    %v211 = vunpack.c.l.b16 %v125
    %v212 = vunpack.c.l.b16 %v126
    %v213 = vunpack.c.l.b16 %v127
    %v214 = vunpack.c.l.b16 %v128
    %v215 = vunpack.c.l.b16 %v129
    %v216 = vunpack.c.l.b16 %v130
    %v217 = vunpack.c.l.b16 %v131
    %v218 = vpack.c.b16 %v203, %v202
    %v219 = vpack.c.b16 %v205, %v204
    %v220 = vpack.c.b16 %v207, %v206
    %v221 = vpack.c.b16 %v209, %v208
    %v222 = vpack.c.b16 %v211, %v210
    %v223 = vpack.c.b16 %v213, %v212
    %v224 = vpack.c.b16 %v215, %v214
    %v225 = vpack.c.b16 %v217, %v216
    %v266 = vunpack.c.l.b16 %v132
    %v267 = vunpack.c.h.b16 %v132
    %v268 = vunpack.c.l.b16 %v133
    %v269 = vunpack.c.h.b16 %v133
    %v270 = vunpack.c.l.b16 %v134
    %v271 = vunpack.c.h.b16 %v134
    %v272 = vunpack.c.l.b16 %v135
    %v273 = vunpack.c.h.b16 %v135
    %v274 = vunpack.c.l.b16 %v136
    %v275 = vunpack.c.h.b16 %v136
    %v276 = vunpack.c.l.b16 %v137
    %v277 = vunpack.c.h.b16 %v137
    %v278 = vunpack.c.l.b16 %v138
    %v279 = vunpack.c.h.b16 %v138
    %v280 = vunpack.c.l.b16 %v139
    %v281 = vunpack.c.h.b16 %v139
    %v282 = vunpack.c.l.b16 %v140
    %v283 = vunpack.c.h.b16 %v140
    %v284 = vunpack.c.l.b16 %v141
    %v285 = vunpack.c.h.b16 %v141
    %v286 = vunpack.c.l.b16 %v142
    %v287 = vunpack.c.h.b16 %v142
    %v288 = vunpack.c.l.b16 %v143
    %v289 = vunpack.c.h.b16 %v143
    %v290 = vunpack.c.l.b16 %v144
    %v291 = vunpack.c.h.b16 %v144
    %v292 = vunpack.c.l.b16 %v145
    %v293 = vunpack.c.h.b16 %v145
    %v294 = vunpack.c.l.b16 %v146
    %v295 = vunpack.c.h.b16 %v146
    %v296 = vunpack.c.l.b16 %v147
    %v297 = vunpack.c.h.b16 %v147
    %v298 = vunpack.c.l.b16 %v148
    %v299 = vunpack.c.h.b16 %v148
    %v300 = vunpack.c.l.b16 %v149
    %v301 = vunpack.c.h.b16 %v149
    %v302 = vunpack.c.l.b16 %v150
    %v303 = vunpack.c.h.b16 %v150
    %v304 = vunpack.c.l.b16 %v151
    %v305 = vunpack.c.h.b16 %v151
    %v306 = vunpack.c.l.b16 %v152
    %v307 = vunpack.c.h.b16 %v152
    %v308 = vunpack.c.l.b16 %v153
    %v309 = vunpack.c.h.b16 %v153
    %v310 = vunpack.c.l.b16 %v154
    %v311 = vunpack.c.h.b16 %v154
    %v312 = vunpack.c.l.b16 %v155
    %v313 = vunpack.c.h.b16 %v155
    %v314 = vunpack.c.l.b16 %v156
    %v315 = vunpack.c.h.b16 %v156
    %v316 = vunpack.c.l.b16 %v157
    %v317 = vunpack.c.h.b16 %v157
    %v318 = vunpack.c.l.b16 %v158
    %v319 = vunpack.c.h.b16 %v158
    %v320 = vunpack.c.l.b16 %v159
    %v321 = vunpack.c.h.b16 %v159
    %v322 = vunpack.c.l.b16 %v160
    %v323 = vunpack.c.h.b16 %v160
    %v324 = vunpack.c.l.b16 %v161
    %v325 = vunpack.c.h.b16 %v161
    %v326 = vunpack.c.l.b16 %v162
    %v327 = vunpack.c.h.b16 %v162
    %v328 = vunpack.c.l.b16 %v163
    %v329 = vunpack.c.h.b16 %v163
    %v330 = vpack.c.b16 %v270, %v266
    %v331 = vpack.c.b16 %v271, %v267
    %v332 = vpack.c.b16 %v272, %v268
    %v333 = vpack.c.b16 %v273, %v269
    %v334 = vpack.c.b16 %v278, %v274
    %v335 = vpack.c.b16 %v279, %v275
    %v336 = vpack.c.b16 %v280, %v276
    %v337 = vpack.c.b16 %v281, %v277
    %v338 = vpack.c.b16 %v286, %v282
    %v339 = vpack.c.b16 %v287, %v283
    %v340 = vpack.c.b16 %v288, %v284
    %v341 = vpack.c.b16 %v289, %v285
    %v342 = vpack.c.b16 %v294, %v290
    %v343 = vpack.c.b16 %v295, %v291
    %v344 = vpack.c.b16 %v296, %v292
    %v345 = vpack.c.b16 %v297, %v293
    %v346 = vpack.c.b16 %v302, %v298
    %v347 = vpack.c.b16 %v303, %v299
    %v348 = vpack.c.b16 %v304, %v300
    %v349 = vpack.c.b16 %v305, %v301
    %v350 = vpack.c.b16 %v310, %v306
    %v351 = vpack.c.b16 %v311, %v307
    %v352 = vpack.c.b16 %v312, %v308
    %v353 = vpack.c.b16 %v313, %v309
    %v354 = vpack.c.b16 %v318, %v314
    %v355 = vpack.c.b16 %v319, %v315
    %v356 = vpack.c.b16 %v320, %v316
    %v357 = vpack.c.b16 %v321, %v317
    %v358 = vpack.c.b16 %v326, %v322
    %v359 = vpack.c.b16 %v327, %v323
    %v360 = vpack.c.b16 %v328, %v324
    %v361 = vpack.c.b16 %v329, %v325
    %394 = vmatprep.subr.bf16.mxu0 %v359
    %395 = vmatpush1.bf16.msra.mxu0 %v358
    %396 = vmatprep.subr.bf16.mxu0 %v355
    %397 = vmatpush1.bf16.msra.mxu0 %v354
    %398 = vmatprep.subr.bf16.mxu0 %v351
    %399 = vmatpush1.bf16.msra.mxu0 %v350
    %400 = vmatprep.subr.bf16.mxu0 %v347
    %401 = vmatpush1.bf16.msra.mxu0 %v346
    %402 = vmatprep.subr.bf16.mxu0 %v343
    %403 = vmatpush1.bf16.msra.mxu0 %v342
    %404 = vmatprep.subr.bf16.mxu0 %v339
    %405 = vmatpush1.bf16.msra.mxu0 %v338
    %406 = vmatprep.subr.bf16.mxu0 %v335
    %407 = vmatpush1.bf16.msra.mxu0 %v334
    %408 = vmatprep.subr.bf16.mxu0 %v331
    %409 = vmatpush1.bf16.msra.mxu0 %v330
    %410 = vmatprep.subr.bf16.mxu0 0
    %411 = vmatpush2.bf16.msra.mxu0 0
    %412 = vmatprep.subr.bf16.mxu0 0
    %413 = vmatpush2.bf16.msra.mxu0 0
    %414 = vmatprep.subr.bf16.mxu0 0
    %415 = vmatpush2.bf16.msra.mxu0 0
    %416 = vmatprep.subr.bf16.mxu0 0
    %417 = vmatpush2.bf16.msra.mxu0 0
    %418 = vmatprep.subr.bf16.mxu0 0
    %419 = vmatpush2.bf16.msra.mxu0 0
    %420 = vmatprep.subr.bf16.mxu0 0
    %421 = vmatpush2.bf16.msra.mxu0 0
    %422 = vmatprep.subr.bf16.mxu0 0
    %423 = vmatpush2.bf16.msra.mxu0 0
    %424 = vmatprep.subr.bf16.mxu0 0
    %425 = vmatpush2.bf16.msra.mxu0 0
    %426 = vmatprep.mubr.bf16.mxu0 0
    %427 = vmatmul.mubr.bf16.gmra.mxu0 %v218
    %v428 = vpop.f32.mrf.mxu0
    %v429 = vadd.f32 %v169, %v428
    %v430 = vpop.f32.mrf.mxu0
    %v431 = vadd.f32 %v173, %v430
    %v432 = vpop.f32.mrf.mxu0
    %v433 = vadd.f32 %v169, %v432
    %v434 = vpop.f32.mrf.mxu0
    %v435 = vadd.f32 %v173, %v434
    %436 = vmatprep.mubr.bf16.mxu0 0
    %437 = vmatmul.mubr.bf16.gmra.mxu0 %v219
    %v438 = vpop.f32.mrf.mxu0
    %v439 = vadd.f32 %v169, %v438
    %v440 = vpop.f32.mrf.mxu0
    %v441 = vadd.f32 %v173, %v440
    %v442 = vpop.f32.mrf.mxu0
    %v443 = vadd.f32 %v169, %v442
    %v444 = vpop.f32.mrf.mxu0
    %v445 = vadd.f32 %v173, %v444
    %446 = vmatprep.mubr.bf16.mxu0 0
    %447 = vmatmul.mubr.bf16.gmra.mxu0 %v220
    %v448 = vpop.f32.mrf.mxu0
    %v449 = vadd.f32 %v169, %v448
    %v450 = vpop.f32.mrf.mxu0
    %v451 = vadd.f32 %v173, %v450
    %v452 = vpop.f32.mrf.mxu0
    %v453 = vadd.f32 %v169, %v452
    %v454 = vpop.f32.mrf.mxu0
    %v455 = vadd.f32 %v173, %v454
    %456 = vmatprep.mubr.bf16.mxu0 0
    %457 = vmatmul.mubr.bf16.gmra.mxu0 %v221
    %v458 = vpop.f32.mrf.mxu0
    %v459 = vadd.f32 %v169, %v458
    %v460 = vpop.f32.mrf.mxu0
    %v461 = vadd.f32 %v173, %v460
    %v462 = vpop.f32.mrf.mxu0
    %v463 = vadd.f32 %v169, %v462
    %v464 = vpop.f32.mrf.mxu0
    %v465 = vadd.f32 %v173, %v464
    %466 = vmatprep.mubr.bf16.mxu0 0
    %467 = vmatmul.mubr.bf16.gmra.mxu0 %v222
    %v468 = vpop.f32.mrf.mxu0
    %v469 = vadd.f32 %v169, %v468
    %v470 = vpop.f32.mrf.mxu0
    %v471 = vadd.f32 %v173, %v470
    %v472 = vpop.f32.mrf.mxu0
    %v473 = vadd.f32 %v169, %v472
    %v474 = vpop.f32.mrf.mxu0
    %v475 = vadd.f32 %v173, %v474
    %476 = vmatprep.mubr.bf16.mxu0 0
    %477 = vmatmul.mubr.bf16.gmra.mxu0 %v223
    %v478 = vpop.f32.mrf.mxu0
    %v479 = vadd.f32 %v169, %v478
    %v480 = vpop.f32.mrf.mxu0
    %v481 = vadd.f32 %v173, %v480
    %v482 = vpop.f32.mrf.mxu0
    %v483 = vadd.f32 %v169, %v482
    %v484 = vpop.f32.mrf.mxu0
    %v485 = vadd.f32 %v173, %v484
    %486 = vmatprep.mubr.bf16.mxu0 0
    %487 = vmatmul.mubr.bf16.gmra.mxu0 %v224
    %v488 = vpop.f32.mrf.mxu0
    %v489 = vadd.f32 %v169, %v488
    %v490 = vpop.f32.mrf.mxu0
    %v491 = vadd.f32 %v173, %v490
    %v492 = vpop.f32.mrf.mxu0
    %v493 = vadd.f32 %v169, %v492
    %v494 = vpop.f32.mrf.mxu0
    %v495 = vadd.f32 %v173, %v494
    %496 = vmatprep.mubr.bf16.mxu0 0
    %497 = vmatmul.mubr.bf16.gmra.mxu0 %v225
    %v498 = vpop.f32.mrf.mxu0
    %v499 = vadd.f32 %v169, %v498
    %v500 = vpop.f32.mrf.mxu0
    %v501 = vadd.f32 %v173, %v500
    %v502 = vpop.f32.mrf.mxu0
    %v503 = vadd.f32 %v169, %v502
    %v504 = vpop.f32.mrf.mxu0
    %v505 = vadd.f32 %v173, %v504
    %506 = vdwg.mxu0
    %507 = vmatprep.subr.bf16.mxu0 %v361
    %508 = vmatpush1.bf16.msra.mxu0 %v360
    %509 = vmatprep.subr.bf16.mxu0 %v357
    %510 = vmatpush1.bf16.msra.mxu0 %v356
    %511 = vmatprep.subr.bf16.mxu0 %v353
    %512 = vmatpush1.bf16.msra.mxu0 %v352
    %513 = vmatprep.subr.bf16.mxu0 %v349
    %514 = vmatpush1.bf16.msra.mxu0 %v348
    %515 = vmatprep.subr.bf16.mxu0 %v345
    %516 = vmatpush1.bf16.msra.mxu0 %v344
    %517 = vmatprep.subr.bf16.mxu0 %v341
    %518 = vmatpush1.bf16.msra.mxu0 %v340
    %519 = vmatprep.subr.bf16.mxu0 %v337
    %520 = vmatpush1.bf16.msra.mxu0 %v336
    %521 = vmatprep.subr.bf16.mxu0 %v333
    %522 = vmatpush1.bf16.msra.mxu0 %v332
    %523 = vmatprep.subr.bf16.mxu0 0
    %524 = vmatpush2.bf16.msra.mxu0 0
    %525 = vmatprep.subr.bf16.mxu0 0
    %526 = vmatpush2.bf16.msra.mxu0 0
    %527 = vmatprep.subr.bf16.mxu0 0
    %528 = vmatpush2.bf16.msra.mxu0 0
    %529 = vmatprep.subr.bf16.mxu0 0
    %530 = vmatpush2.bf16.msra.mxu0 0
    %531 = vmatprep.subr.bf16.mxu0 0
    %532 = vmatpush2.bf16.msra.mxu0 0
    %533 = vmatprep.subr.bf16.mxu0 0
    %534 = vmatpush2.bf16.msra.mxu0 0
    %535 = vmatprep.subr.bf16.mxu0 0
    %536 = vmatpush2.bf16.msra.mxu0 0
    %537 = vmatprep.subr.bf16.mxu0 0
    %538 = vmatpush2.bf16.msra.mxu0 0
    %539 = vmatprep.mubr.bf16.mxu0 0
    %540 = vmatmul.mubr.bf16.gmra.mxu0 %v218
    %v541 = vpop.f32.mrf.mxu0
    %v542 = vadd.f32 %v177, %v541
    %v543 = vpop.f32.mrf.mxu0
    %v544 = vadd.f32 %v181, %v543
    %v545 = vpop.f32.mrf.mxu0
    %v546 = vadd.f32 %v177, %v545
    %v547 = vpop.f32.mrf.mxu0
    %v548 = vadd.f32 %v181, %v547
    %549 = vmatprep.mubr.bf16.mxu0 0
    %550 = vmatmul.mubr.bf16.gmra.mxu0 %v219
    %v551 = vpop.f32.mrf.mxu0
    %v552 = vadd.f32 %v177, %v551
    %v553 = vpop.f32.mrf.mxu0
    %v554 = vadd.f32 %v181, %v553
    %v555 = vpop.f32.mrf.mxu0
    %v556 = vadd.f32 %v177, %v555
    %v557 = vpop.f32.mrf.mxu0
    %v558 = vadd.f32 %v181, %v557
    %559 = vmatprep.mubr.bf16.mxu0 0
    %560 = vmatmul.mubr.bf16.gmra.mxu0 %v220
    %v561 = vpop.f32.mrf.mxu0
    %v562 = vadd.f32 %v177, %v561
    %v563 = vpop.f32.mrf.mxu0
    %v564 = vadd.f32 %v181, %v563
    %v565 = vpop.f32.mrf.mxu0
    %v566 = vadd.f32 %v177, %v565
    %v567 = vpop.f32.mrf.mxu0
    %v568 = vadd.f32 %v181, %v567
    %569 = vmatprep.mubr.bf16.mxu0 0
    %570 = vmatmul.mubr.bf16.gmra.mxu0 %v221
    %v571 = vpop.f32.mrf.mxu0
    %v572 = vadd.f32 %v177, %v571
    %v573 = vpop.f32.mrf.mxu0
    %v574 = vadd.f32 %v181, %v573
    %v575 = vpop.f32.mrf.mxu0
    %v576 = vadd.f32 %v177, %v575
    %v577 = vpop.f32.mrf.mxu0
    %v578 = vadd.f32 %v181, %v577
    %579 = vmatprep.mubr.bf16.mxu0 0
    %580 = vmatmul.mubr.bf16.gmra.mxu0 %v222
    %v581 = vpop.f32.mrf.mxu0
    %v582 = vadd.f32 %v177, %v581
    %v583 = vpop.f32.mrf.mxu0
    %v584 = vadd.f32 %v181, %v583
    %v585 = vpop.f32.mrf.mxu0
    %v586 = vadd.f32 %v177, %v585
    %v587 = vpop.f32.mrf.mxu0
    %v588 = vadd.f32 %v181, %v587
    %589 = vmatprep.mubr.bf16.mxu0 0
    %590 = vmatmul.mubr.bf16.gmra.mxu0 %v223
    %v591 = vpop.f32.mrf.mxu0
    %v592 = vadd.f32 %v177, %v591
    %v593 = vpop.f32.mrf.mxu0
    %v594 = vadd.f32 %v181, %v593
    %v595 = vpop.f32.mrf.mxu0
    %v596 = vadd.f32 %v177, %v595
    %v597 = vpop.f32.mrf.mxu0
    %v598 = vadd.f32 %v181, %v597
    %599 = vmatprep.mubr.bf16.mxu0 0
    %600 = vmatmul.mubr.bf16.gmra.mxu0 %v224
    %v601 = vpop.f32.mrf.mxu0
    %v602 = vadd.f32 %v177, %v601
    %v603 = vpop.f32.mrf.mxu0
    %v604 = vadd.f32 %v181, %v603
    %v605 = vpop.f32.mrf.mxu0
    %v606 = vadd.f32 %v177, %v605
    %v607 = vpop.f32.mrf.mxu0
    %v608 = vadd.f32 %v181, %v607
    %609 = vmatprep.mubr.bf16.mxu0 0
    %610 = vmatmul.mubr.bf16.gmra.mxu0 %v225
    %v611 = vpop.f32.mrf.mxu0
    %v612 = vadd.f32 %v177, %v611
    %v613 = vpop.f32.mrf.mxu0
    %v614 = vadd.f32 %v181, %v613
    %v615 = vpop.f32.mrf.mxu0
    %v616 = vadd.f32 %v177, %v615
    %v617 = vpop.f32.mrf.mxu0
    %v618 = vadd.f32 %v181, %v617
    %619 = vdwg.mxu0
    %v620 = vpack.c.bf16 %v433, %v429
    %v621 = vpack.c.bf16 %v435, %v431
    %v622 = vpack.c.bf16 %v546, %v542
    %v623 = vpack.c.bf16 %v548, %v544
    %v624 = vpack.c.bf16 %v443, %v439
    %v625 = vpack.c.bf16 %v445, %v441
    %v626 = vpack.c.bf16 %v556, %v552
    %v627 = vpack.c.bf16 %v558, %v554
    %v628 = vpack.c.bf16 %v453, %v449
    %v629 = vpack.c.bf16 %v455, %v451
    %v630 = vpack.c.bf16 %v566, %v562
    %v631 = vpack.c.bf16 %v568, %v564
    %v632 = vpack.c.bf16 %v463, %v459
    %v633 = vpack.c.bf16 %v465, %v461
    %v634 = vpack.c.bf16 %v576, %v572
    %v635 = vpack.c.bf16 %v578, %v574
    %v636 = vpack.c.bf16 %v473, %v469
    %v637 = vpack.c.bf16 %v475, %v471
    %v638 = vpack.c.bf16 %v586, %v582
    %v639 = vpack.c.bf16 %v588, %v584
    %v640 = vpack.c.bf16 %v483, %v479
    %v641 = vpack.c.bf16 %v485, %v481
    %v642 = vpack.c.bf16 %v596, %v592
    %v643 = vpack.c.bf16 %v598, %v594
    %v644 = vpack.c.bf16 %v493, %v489
    %v645 = vpack.c.bf16 %v495, %v491
    %v646 = vpack.c.bf16 %v606, %v602
    %v647 = vpack.c.bf16 %v608, %v604
    %v648 = vpack.c.bf16 %v503, %v499
    %v649 = vpack.c.bf16 %v505, %v501
    %v650 = vpack.c.bf16 %v616, %v612
    %v651 = vpack.c.bf16 %v618, %v614
    %v684 = vunpack.c.l.b16 %v620
    %v685 = vunpack.c.l.b16 %v621
    %v686 = vunpack.c.l.b16 %v622
    %v687 = vunpack.c.l.b16 %v623
    %v688 = vunpack.c.h.b16 %v620
    %v689 = vunpack.c.h.b16 %v621
    %v690 = vunpack.c.h.b16 %v622
    %v691 = vunpack.c.h.b16 %v623
    %v692 = vunpack.c.l.b16 %v624
    %v693 = vunpack.c.l.b16 %v625
    %v694 = vunpack.c.l.b16 %v626
    %v695 = vunpack.c.l.b16 %v627
    %v696 = vunpack.c.h.b16 %v624
    %v697 = vunpack.c.h.b16 %v625
    %v698 = vunpack.c.h.b16 %v626
    %v699 = vunpack.c.h.b16 %v627
    %v700 = vunpack.c.l.b16 %v628
    %v701 = vunpack.c.l.b16 %v629
    %v702 = vunpack.c.l.b16 %v630
    %v703 = vunpack.c.l.b16 %v631
    %v704 = vunpack.c.h.b16 %v628
    %v705 = vunpack.c.h.b16 %v629
    %v706 = vunpack.c.h.b16 %v630
    %v707 = vunpack.c.h.b16 %v631
    %v708 = vunpack.c.l.b16 %v632
    %v709 = vunpack.c.l.b16 %v633
    %v710 = vunpack.c.l.b16 %v634
    %v711 = vunpack.c.l.b16 %v635
    %v712 = vunpack.c.h.b16 %v632
    %v713 = vunpack.c.h.b16 %v633
    %v714 = vunpack.c.h.b16 %v634
    %v715 = vunpack.c.h.b16 %v635
    %v716 = vunpack.c.l.b16 %v636
    %v717 = vunpack.c.l.b16 %v637
    %v718 = vunpack.c.l.b16 %v638
    %v719 = vunpack.c.l.b16 %v639
    %v720 = vunpack.c.h.b16 %v636
    %v721 = vunpack.c.h.b16 %v637
    %v722 = vunpack.c.h.b16 %v638
    %v723 = vunpack.c.h.b16 %v639
    %v724 = vunpack.c.l.b16 %v640
    %v725 = vunpack.c.l.b16 %v641
    %v726 = vunpack.c.l.b16 %v642
    %v727 = vunpack.c.l.b16 %v643
    %v728 = vunpack.c.h.b16 %v640
    %v729 = vunpack.c.h.b16 %v641
    %v730 = vunpack.c.h.b16 %v642
    %v731 = vunpack.c.h.b16 %v643
    %v732 = vunpack.c.l.b16 %v644
    %v733 = vunpack.c.l.b16 %v645
    %v734 = vunpack.c.l.b16 %v646
    %v735 = vunpack.c.l.b16 %v647
    %v736 = vunpack.c.h.b16 %v644
    %v737 = vunpack.c.h.b16 %v645
    %v738 = vunpack.c.h.b16 %v646
    %v739 = vunpack.c.h.b16 %v647
    %v740 = vunpack.c.l.b16 %v648
    %v741 = vunpack.c.l.b16 %v649
    %v742 = vunpack.c.l.b16 %v650
    %v743 = vunpack.c.l.b16 %v651
    %v744 = vunpack.c.h.b16 %v648
    %v745 = vunpack.c.h.b16 %v649
    %v746 = vunpack.c.h.b16 %v650
    %v747 = vunpack.c.h.b16 %v651
    %v748 = vpack.c.b16 %v685, %v684
    %v749 = vpack.c.b16 %v687, %v686
    %v750 = vpack.c.b16 %v689, %v688
    %v751 = vpack.c.b16 %v691, %v690
    %v752 = vpack.c.b16 %v693, %v692
    %v753 = vpack.c.b16 %v695, %v694
    %v754 = vpack.c.b16 %v697, %v696
    %v755 = vpack.c.b16 %v699, %v698
    %v756 = vpack.c.b16 %v701, %v700
    %v757 = vpack.c.b16 %v703, %v702
    %v758 = vpack.c.b16 %v705, %v704
    %v759 = vpack.c.b16 %v707, %v706
    %v760 = vpack.c.b16 %v709, %v708
    %v761 = vpack.c.b16 %v711, %v710
    %v762 = vpack.c.b16 %v713, %v712
    %v763 = vpack.c.b16 %v715, %v714
    %v764 = vpack.c.b16 %v717, %v716
    %v765 = vpack.c.b16 %v719, %v718
    %v766 = vpack.c.b16 %v721, %v720
    %v767 = vpack.c.b16 %v723, %v722
    %v768 = vpack.c.b16 %v725, %v724
    %v769 = vpack.c.b16 %v727, %v726
    %v770 = vpack.c.b16 %v729, %v728
    %v771 = vpack.c.b16 %v731, %v730
    %v772 = vpack.c.b16 %v733, %v732
    %v773 = vpack.c.b16 %v735, %v734
    %v774 = vpack.c.b16 %v737, %v736
    %v775 = vpack.c.b16 %v739, %v738
    %v776 = vpack.c.b16 %v741, %v740
    %v777 = vpack.c.b16 %v743, %v742
    %v778 = vpack.c.b16 %v745, %v744
    %v779 = vpack.c.b16 %v747, %v746
    %812 = vst [vmem:[#allocation2] sm:$0xff] %v748
    %813 = vst [vmem:[#allocation2 + $0x8] sm:$0xff] %v749
    %814 = vst [vmem:[#allocation2 + $0x10] sm:$0xff] %v750
    %815 = vst [vmem:[#allocation2 + $0x18] sm:$0xff] %v751
    %816 = vst [vmem:[#allocation2 + $0x20] sm:$0xff] %v752
    %817 = vst [vmem:[#allocation2 + $0x28] sm:$0xff] %v753
    %818 = vst [vmem:[#allocation2 + $0x30] sm:$0xff] %v754
    %819 = vst [vmem:[#allocation2 + $0x38] sm:$0xff] %v755
    %820 = vst [vmem:[#allocation2 + $0x40] sm:$0xff] %v756
    %821 = vst [vmem:[#allocation2 + $0x48] sm:$0xff] %v757
    %822 = vst [vmem:[#allocation2 + $0x50] sm:$0xff] %v758
    %823 = vst [vmem:[#allocation2 + $0x58] sm:$0xff] %v759
    %824 = vst [vmem:[#allocation2 + $0x60] sm:$0xff] %v760
    %825 = vst [vmem:[#allocation2 + $0x68] sm:$0xff] %v761
    %826 = vst [vmem:[#allocation2 + $0x70] sm:$0xff] %v762
    %827 = vst [vmem:[#allocation2 + $0x78] sm:$0xff] %v763
    %828 = vst [vmem:[#allocation2 + $0x80] sm:$0xff] %v764
    %829 = vst [vmem:[#allocation2 + $0x88] sm:$0xff] %v765
    %830 = vst [vmem:[#allocation2 + $0x90] sm:$0xff] %v766
    %831 = vst [vmem:[#allocation2 + $0x98] sm:$0xff] %v767
    %832 = vst [vmem:[#allocation2 + $0xa0] sm:$0xff] %v768
    %833 = vst [vmem:[#allocation2 + $0xa8] sm:$0xff] %v769
    %834 = vst [vmem:[#allocation2 + $0xb0] sm:$0xff] %v770
    %835 = vst [vmem:[#allocation2 + $0xb8] sm:$0xff] %v771
    %836 = vst [vmem:[#allocation2 + $0xc0] sm:$0xff] %v772
    %837 = vst [vmem:[#allocation2 + $0xc8] sm:$0xff] %v773
    %838 = vst [vmem:[#allocation2 + $0xd0] sm:$0xff] %v774
    %839 = vst [vmem:[#allocation2 + $0xd8] sm:$0xff] %v775
    %840 = vst [vmem:[#allocation2 + $0xe0] sm:$0xff] %v776
    %841 = vst [vmem:[#allocation2 + $0xe8] sm:$0xff] %v777
    %842 = vst [vmem:[#allocation2 + $0xf0] sm:$0xff] %v778
    %843 = vst [vmem:[#allocation2 + $0xf8] sm:$0xff] %v779
    %v844 = vld [vmem:[#allocation9] sm:$0xff]
    %v845 = vld [vmem:[#allocation9 + $0x8] sm:$0xff]
    %v846 = vld [vmem:[#allocation9 + $0x10] sm:$0xff]
    %v847 = vld [vmem:[#allocation9 + $0x18] sm:$0xff]
    %v848 = vld [vmem:[#allocation9 + $0x20] sm:$0xff]
    %v849 = vld [vmem:[#allocation9 + $0x28] sm:$0xff]
    %v850 = vld [vmem:[#allocation9 + $0x30] sm:$0xff]
    %v851 = vld [vmem:[#allocation9 + $0x38] sm:$0xff]
    %v852 = vld [vmem:[#allocation9 + $0x40] sm:$0xff]
    %v853 = vld [vmem:[#allocation9 + $0x48] sm:$0xff]
    %v854 = vld [vmem:[#allocation9 + $0x50] sm:$0xff]
    %v855 = vld [vmem:[#allocation9 + $0x58] sm:$0xff]
    %v856 = vld [vmem:[#allocation9 + $0x60] sm:$0xff]
    %v857 = vld [vmem:[#allocation9 + $0x68] sm:$0xff]
    %v858 = vld [vmem:[#allocation9 + $0x70] sm:$0xff]
    %v859 = vld [vmem:[#allocation9 + $0x78] sm:$0xff]
    %v860 = vld [vmem:[#allocation9 + $0x80] sm:$0xff]
    %v861 = vld [vmem:[#allocation9 + $0x88] sm:$0xff]
    %v862 = vld [vmem:[#allocation9 + $0x90] sm:$0xff]
    %v863 = vld [vmem:[#allocation9 + $0x98] sm:$0xff]
    %v864 = vld [vmem:[#allocation9 + $0xa0] sm:$0xff]
    %v865 = vld [vmem:[#allocation9 + $0xa8] sm:$0xff]
    %v866 = vld [vmem:[#allocation9 + $0xb0] sm:$0xff]
    %v867 = vld [vmem:[#allocation9 + $0xb8] sm:$0xff]
    %v868 = vld [vmem:[#allocation9 + $0xc0] sm:$0xff]
    %v869 = vld [vmem:[#allocation9 + $0xc8] sm:$0xff]
    %v870 = vld [vmem:[#allocation9 + $0xd0] sm:$0xff]
    %v871 = vld [vmem:[#allocation9 + $0xd8] sm:$0xff]
    %v872 = vld [vmem:[#allocation9 + $0xe0] sm:$0xff]
    %v873 = vld [vmem:[#allocation9 + $0xe8] sm:$0xff]
    %v874 = vld [vmem:[#allocation9 + $0xf0] sm:$0xff]
    %v875 = vld [vmem:[#allocation9 + $0xf8] sm:$0xff]
    %s876 = smul.u32 0, 4
    %s877 = smul.addr %s876, 4
    %s878 = scalar_lea.vmem [#allocation2], %s877
    %v879 = vld [vmem:[%s878] sm:$0xff]
    %v880 = vld [vmem:[%s878 + $0x8] sm:$0xff]
    %v881 = vld [vmem:[%s878 + $0x10] sm:$0xff]
    %v882 = vld [vmem:[%s878 + $0x18] sm:$0xff]
    %v883 = vunpack.c.l.bf16 %v879
    %v884 = vunpack.c.h.bf16 %v879
    %v885 = vunpack.c.l.bf16 %v880
    %v886 = vunpack.c.h.bf16 %v880
    %v887 = vunpack.c.l.bf16 %v881
    %v888 = vunpack.c.h.bf16 %v881
    %v889 = vunpack.c.l.bf16 %v882
    %v890 = vunpack.c.h.bf16 %v882
    %v923 = vunpack.c.l.b16 %v844
    %v924 = vunpack.c.h.b16 %v844
    %v925 = vunpack.c.l.b16 %v845
    %v926 = vunpack.c.h.b16 %v845
    %v927 = vunpack.c.l.b16 %v846
    %v928 = vunpack.c.h.b16 %v846
    %v929 = vunpack.c.l.b16 %v847
    %v930 = vunpack.c.h.b16 %v847
    %v931 = vunpack.c.l.b16 %v848
    %v932 = vunpack.c.h.b16 %v848
    %v933 = vunpack.c.l.b16 %v849
    %v934 = vunpack.c.h.b16 %v849
    %v935 = vunpack.c.l.b16 %v850
    %v936 = vunpack.c.h.b16 %v850
    %v937 = vunpack.c.l.b16 %v851
    %v938 = vunpack.c.h.b16 %v851
    %v939 = vunpack.c.l.b16 %v852
    %v940 = vunpack.c.h.b16 %v852
    %v941 = vunpack.c.l.b16 %v853
    %v942 = vunpack.c.h.b16 %v853
    %v943 = vunpack.c.l.b16 %v854
    %v944 = vunpack.c.h.b16 %v854
    %v945 = vunpack.c.l.b16 %v855
    %v946 = vunpack.c.h.b16 %v855
    %v947 = vunpack.c.l.b16 %v856
    %v948 = vunpack.c.h.b16 %v856
    %v949 = vunpack.c.l.b16 %v857
    %v950 = vunpack.c.h.b16 %v857
    %v951 = vunpack.c.l.b16 %v858
    %v952 = vunpack.c.h.b16 %v858
    %v953 = vunpack.c.l.b16 %v859
    %v954 = vunpack.c.h.b16 %v859
    %v955 = vunpack.c.l.b16 %v860
    %v956 = vunpack.c.h.b16 %v860
    %v957 = vunpack.c.l.b16 %v861
    %v958 = vunpack.c.h.b16 %v861
    %v959 = vunpack.c.l.b16 %v862
    %v960 = vunpack.c.h.b16 %v862
    %v961 = vunpack.c.l.b16 %v863
    %v962 = vunpack.c.h.b16 %v863
    %v963 = vunpack.c.l.b16 %v864
    %v964 = vunpack.c.h.b16 %v864
    %v965 = vunpack.c.l.b16 %v865
    %v966 = vunpack.c.h.b16 %v865
    %v967 = vunpack.c.l.b16 %v866
    %v968 = vunpack.c.h.b16 %v866
    %v969 = vunpack.c.l.b16 %v867
    %v970 = vunpack.c.h.b16 %v867
    %v971 = vunpack.c.l.b16 %v868
    %v972 = vunpack.c.h.b16 %v868
    %v973 = vunpack.c.l.b16 %v869
    %v974 = vunpack.c.h.b16 %v869
    %v975 = vunpack.c.l.b16 %v870
    %v976 = vunpack.c.h.b16 %v870
    %v977 = vunpack.c.l.b16 %v871
    %v978 = vunpack.c.h.b16 %v871
    %v979 = vunpack.c.l.b16 %v872
    %v980 = vunpack.c.h.b16 %v872
    %v981 = vunpack.c.l.b16 %v873
    %v982 = vunpack.c.h.b16 %v873
    %v983 = vunpack.c.l.b16 %v874
    %v984 = vunpack.c.h.b16 %v874
    %v985 = vunpack.c.l.b16 %v875
    %v986 = vunpack.c.h.b16 %v875
    %v987 = vpack.c.b16 %v927, %v923
    %v988 = vpack.c.b16 %v928, %v924
    %v989 = vpack.c.b16 %v929, %v925
    %v990 = vpack.c.b16 %v930, %v926
    %v991 = vpack.c.b16 %v935, %v931
    %v992 = vpack.c.b16 %v936, %v932
    %v993 = vpack.c.b16 %v937, %v933
    %v994 = vpack.c.b16 %v938, %v934
    %v995 = vpack.c.b16 %v943, %v939
    %v996 = vpack.c.b16 %v944, %v940
    %v997 = vpack.c.b16 %v945, %v941
    %v998 = vpack.c.b16 %v946, %v942
    %v999 = vpack.c.b16 %v951, %v947
    %v1000 = vpack.c.b16 %v952, %v948
    %v1001 = vpack.c.b16 %v953, %v949
    %v1002 = vpack.c.b16 %v954, %v950
    %v1003 = vpack.c.b16 %v959, %v955
    %v1004 = vpack.c.b16 %v960, %v956
    %v1005 = vpack.c.b16 %v961, %v957
    %v1006 = vpack.c.b16 %v962, %v958
    %v1007 = vpack.c.b16 %v967, %v963
    %v1008 = vpack.c.b16 %v968, %v964
    %v1009 = vpack.c.b16 %v969, %v965
    %v1010 = vpack.c.b16 %v970, %v966
    %v1011 = vpack.c.b16 %v975, %v971
    %v1012 = vpack.c.b16 %v976, %v972
    %v1013 = vpack.c.b16 %v977, %v973
    %v1014 = vpack.c.b16 %v978, %v974
    %v1015 = vpack.c.b16 %v983, %v979
    %v1016 = vpack.c.b16 %v984, %v980
    %v1017 = vpack.c.b16 %v985, %v981
    %v1018 = vpack.c.b16 %v986, %v982
    %1051 = vmatprep.subr.bf16.mxu0 %v1016
    %1052 = vmatpush1.bf16.msra.mxu0 %v1015
    %1053 = vmatprep.subr.bf16.mxu0 %v1012
    %1054 = vmatpush1.bf16.msra.mxu0 %v1011
    %1055 = vmatprep.subr.bf16.mxu0 %v1008
    %1056 = vmatpush1.bf16.msra.mxu0 %v1007
    %1057 = vmatprep.subr.bf16.mxu0 %v1004
    %1058 = vmatpush1.bf16.msra.mxu0 %v1003
    %1059 = vmatprep.subr.bf16.mxu0 %v1000
    %1060 = vmatpush1.bf16.msra.mxu0 %v999
    %1061 = vmatprep.subr.bf16.mxu0 %v996
    %1062 = vmatpush1.bf16.msra.mxu0 %v995
    %1063 = vmatprep.subr.bf16.mxu0 %v992
    %1064 = vmatpush1.bf16.msra.mxu0 %v991
    %1065 = vmatprep.subr.bf16.mxu0 %v988
    %1066 = vmatpush1.bf16.msra.mxu0 %v987
    %1067 = vmatprep.subr.bf16.mxu0 0
    %1068 = vmatpush2.bf16.msra.mxu0 0
    %1069 = vmatprep.subr.bf16.mxu0 0
    %1070 = vmatpush2.bf16.msra.mxu0 0
    %1071 = vmatprep.subr.bf16.mxu0 0
    %1072 = vmatpush2.bf16.msra.mxu0 0
    %1073 = vmatprep.subr.bf16.mxu0 0
    %1074 = vmatpush2.bf16.msra.mxu0 0
    %1075 = vmatprep.subr.bf16.mxu0 0
    %1076 = vmatpush2.bf16.msra.mxu0 0
    %1077 = vmatprep.subr.bf16.mxu0 0
    %1078 = vmatpush2.bf16.msra.mxu0 0
    %1079 = vmatprep.subr.bf16.mxu0 0
    %1080 = vmatpush2.bf16.msra.mxu0 0
    %1081 = vmatprep.subr.bf16.mxu0 0
    %1082 = vmatpush2.bf16.msra.mxu0 0
    %1083 = vmatprep.mubr.bf16.mxu0 0
    %1084 = vmatmul.mubr.bf16.gmra.mxu0 0
    %v1085 = vpop.f32.mrf.mxu0
    %v1086 = vadd.f32 0.0, %v1085
    %v1087 = vpop.f32.mrf.mxu0
    %v1088 = vadd.f32 0.0, %v1087
    %v1089 = vpop.f32.mrf.mxu0
    %v1090 = vadd.f32 0.0, %v1089
    %v1091 = vpop.f32.mrf.mxu0
    %v1092 = vadd.f32 0.0, %v1091
    %1093 = vdwg.mxu0
    %1094 = vmatprep.subr.bf16.mxu0 %v1018
    %1095 = vmatpush1.bf16.msra.mxu0 %v1017
    %1096 = vmatprep.subr.bf16.mxu0 %v1014
    %1097 = vmatpush1.bf16.msra.mxu0 %v1013
    %1098 = vmatprep.subr.bf16.mxu0 %v1010
    %1099 = vmatpush1.bf16.msra.mxu0 %v1009
    %1100 = vmatprep.subr.bf16.mxu0 %v1006
    %1101 = vmatpush1.bf16.msra.mxu0 %v1005
    %1102 = vmatprep.subr.bf16.mxu0 %v1002
    %1103 = vmatpush1.bf16.msra.mxu0 %v1001
    %1104 = vmatprep.subr.bf16.mxu0 %v998
    %1105 = vmatpush1.bf16.msra.mxu0 %v997
    %1106 = vmatprep.subr.bf16.mxu0 %v994
    %1107 = vmatpush1.bf16.msra.mxu0 %v993
    %1108 = vmatprep.subr.bf16.mxu0 %v990
    %1109 = vmatpush1.bf16.msra.mxu0 %v989
    %1110 = vmatprep.subr.bf16.mxu0 0
    %1111 = vmatpush2.bf16.msra.mxu0 0
    %1112 = vmatprep.subr.bf16.mxu0 0
    %1113 = vmatpush2.bf16.msra.mxu0 0
    %1114 = vmatprep.subr.bf16.mxu0 0
    %1115 = vmatpush2.bf16.msra.mxu0 0
    %1116 = vmatprep.subr.bf16.mxu0 0
    %1117 = vmatpush2.bf16.msra.mxu0 0
    %1118 = vmatprep.subr.bf16.mxu0 0
    %1119 = vmatpush2.bf16.msra.mxu0 0
    %1120 = vmatprep.subr.bf16.mxu0 0
    %1121 = vmatpush2.bf16.msra.mxu0 0
    %1122 = vmatprep.subr.bf16.mxu0 0
    %1123 = vmatpush2.bf16.msra.mxu0 0
    %1124 = vmatprep.subr.bf16.mxu0 0
    %1125 = vmatpush2.bf16.msra.mxu0 0
    %1126 = vmatprep.mubr.bf16.mxu0 0
    %1127 = vmatmul.mubr.bf16.gmra.mxu0 0
    %v1128 = vpop.f32.mrf.mxu0
    %v1129 = vadd.f32 0.0, %v1128
    %v1130 = vpop.f32.mrf.mxu0
    %v1131 = vadd.f32 0.0, %v1130
    %v1132 = vpop.f32.mrf.mxu0
    %v1133 = vadd.f32 0.0, %v1132
    %v1134 = vpop.f32.mrf.mxu0
    %v1135 = vadd.f32 0.0, %v1134
    %1136 = vdwg.mxu0
    %v1137 = vadd.f32 %v883, %v1086
    %v1138 = vadd.f32 %v884, %v1088
    %v1139 = vadd.f32 %v885, %v1129
    %v1140 = vadd.f32 %v886, %v1131
    %v1141 = vadd.f32 %v887, %v1090
    %v1142 = vadd.f32 %v888, %v1092
    %v1143 = vadd.f32 %v889, %v1133
    %v1144 = vadd.f32 %v890, %v1135
    %v1145 = vxor.u32 %v1137, 2147483648
    %v1146 = vxor.u32 %v1141, 2147483648
    %v1147 = vmul.f32 %v1145, 1.442695
    %v1148 = vpow.pop %v1147
    %v1149 = vmul.f32 %v1146, 1.442695
    %v1150 = vpow.pop %v1149
    %v1151 = vadd.f32 %v1148, 1.0
    %v1152 = vadd.f32 %v1150, 1.0
    %v1153 = vrcp.pop %v1151
    %v1154 = vmul.f32 1.0, %v1153
    %v1155 = vrcp.pop %v1152
    %v1156 = vmul.f32 1.0, %v1155
    %v1157 = vxor.u32 %v1138, 2147483648
    %v1158 = vxor.u32 %v1142, 2147483648
    %v1159 = vmul.f32 %v1157, 1.442695
    %v1160 = vpow.pop %v1159
    %v1161 = vmul.f32 %v1158, 1.442695
    %v1162 = vpow.pop %v1161
    %v1163 = vadd.f32 %v1160, 1.0
    %v1164 = vadd.f32 %v1162, 1.0
    %v1165 = vrcp.pop %v1163
    %v1166 = vmul.f32 1.0, %v1165
    %v1167 = vrcp.pop %v1164
    %v1168 = vmul.f32 1.0, %v1167
    %v1169 = vtanh.pop %v1139
    %v1170 = vtanh.pop %v1143
    %v1171 = vxor.u32 %v1140, 2147483648
    %v1172 = vxor.u32 %v1144, 2147483648
    %v1173 = vmul.f32 %v1171, 1.442695
    %v1174 = vpow.pop %v1173
    %v1175 = vmul.f32 %v1172, 1.442695
    %v1176 = vpow.pop %v1175
    %v1177 = vadd.f32 %v1174, 1.0
    %v1178 = vadd.f32 %v1176, 1.0
    %v1179 = vrcp.pop %v1177
    %v1180 = vmul.f32 1.0, %v1179
    %v1181 = vrcp.pop %v1178
    %v1182 = vmul.f32 1.0, %v1181
    %v1183 = vmul.f32 %v1166, 0.0
    %v1184 = vmul.f32 %v1168, 0.0
    %v1185 = vmul.f32 %v1154, %v1169
    %v1186 = vmul.f32 %v1156, %v1170
    %v1187 = vadd.f32 %v1183, %v1185
    %v1188 = vadd.f32 %v1184, %v1186
    %v1189 = vtanh.pop %v1187
    %v1190 = vtanh.pop %v1188
    %v1191 = vmul.f32 %v1180, %v1189
    %v1192 = vmul.f32 %v1182, %v1190
    %v1193 = vpack.c.bf16 %v1192, %v1191
    %v1195 = vunpack.c.l.b16 %v1193
    %v1196 = vunpack.c.h.b16 %v1193
    %v1197 = vpack.c.b16 %v1195, %v1195
    %v1198 = vpack.c.b16 %v1196, %v1196
    %1201 = vst [vmem:[#allocation3] sm:$0xf] %v1197
    %1202 = vst [vmem:[#allocation3 + $0x4] sm:$0xf] %v1198
    %s1203 = smul.u32 2, 4
    %s1204 = smul.addr %s1203, 4
    %s1205 = scalar_lea.vmem [#allocation2], %s1204
    %v1206 = vld [vmem:[%s1205] sm:$0xff]
    %v1207 = vld [vmem:[%s1205 + $0x8] sm:$0xff]
    %v1208 = vld [vmem:[%s1205 + $0x10] sm:$0xff]
    %v1209 = vld [vmem:[%s1205 + $0x18] sm:$0xff]
    %v1210 = vunpack.c.l.bf16 %v1206
    %v1211 = vunpack.c.h.bf16 %v1206
    %v1212 = vunpack.c.l.bf16 %v1207
    %v1213 = vunpack.c.h.bf16 %v1207
    %v1214 = vunpack.c.l.bf16 %v1208
    %v1215 = vunpack.c.h.bf16 %v1208
    %v1216 = vunpack.c.l.bf16 %v1209
    %v1217 = vunpack.c.h.bf16 %v1209
    %1218 = vmatprep.subr.bf16.mxu0 %v1016
    %1219 = vmatpush1.bf16.msra.mxu0 %v1015
    %1220 = vmatprep.subr.bf16.mxu0 %v1012
    %1221 = vmatpush1.bf16.msra.mxu0 %v1011
    %1222 = vmatprep.subr.bf16.mxu0 %v1008
    %1223 = vmatpush1.bf16.msra.mxu0 %v1007
    %1224 = vmatprep.subr.bf16.mxu0 %v1004
    %1225 = vmatpush1.bf16.msra.mxu0 %v1003
    %1226 = vmatprep.subr.bf16.mxu0 %v1000
    %1227 = vmatpush1.bf16.msra.mxu0 %v999
    %1228 = vmatprep.subr.bf16.mxu0 %v996
    %1229 = vmatpush1.bf16.msra.mxu0 %v995
    %1230 = vmatprep.subr.bf16.mxu0 %v992
    %1231 = vmatpush1.bf16.msra.mxu0 %v991
    %1232 = vmatprep.subr.bf16.mxu0 %v988
    %1233 = vmatpush1.bf16.msra.mxu0 %v987
    %1234 = vmatprep.subr.bf16.mxu0 0
    %1235 = vmatpush2.bf16.msra.mxu0 0
    %1236 = vmatprep.subr.bf16.mxu0 0
    %1237 = vmatpush2.bf16.msra.mxu0 0
    %1238 = vmatprep.subr.bf16.mxu0 0
    %1239 = vmatpush2.bf16.msra.mxu0 0
    %1240 = vmatprep.subr.bf16.mxu0 0
    %1241 = vmatpush2.bf16.msra.mxu0 0
    %1242 = vmatprep.subr.bf16.mxu0 0
    %1243 = vmatpush2.bf16.msra.mxu0 0
    %1244 = vmatprep.subr.bf16.mxu0 0
    %1245 = vmatpush2.bf16.msra.mxu0 0
    %1246 = vmatprep.subr.bf16.mxu0 0
    %1247 = vmatpush2.bf16.msra.mxu0 0
    %1248 = vmatprep.subr.bf16.mxu0 0
    %1249 = vmatpush2.bf16.msra.mxu0 0
    %1250 = vmatprep.mubr.bf16.mxu0 0
    %1251 = vmatmul.mubr.bf16.gmra.mxu0 %v1193
    %v1252 = vpop.f32.mrf.mxu0
    %v1253 = vadd.f32 0.0, %v1252
    %v1254 = vpop.f32.mrf.mxu0
    %v1255 = vadd.f32 0.0, %v1254
    %v1256 = vpop.f32.mrf.mxu0
    %v1257 = vadd.f32 0.0, %v1256
    %v1258 = vpop.f32.mrf.mxu0
    %v1259 = vadd.f32 0.0, %v1258
    %1260 = vdwg.mxu0
    %1261 = vmatprep.subr.bf16.mxu0 %v1018
    %1262 = vmatpush1.bf16.msra.mxu0 %v1017
    %1263 = vmatprep.subr.bf16.mxu0 %v1014
    %1264 = vmatpush1.bf16.msra.mxu0 %v1013
    %1265 = vmatprep.subr.bf16.mxu0 %v1010
    %1266 = vmatpush1.bf16.msra.mxu0 %v1009
    %1267 = vmatprep.subr.bf16.mxu0 %v1006
    %1268 = vmatpush1.bf16.msra.mxu0 %v1005
    %1269 = vmatprep.subr.bf16.mxu0 %v1002
    %1270 = vmatpush1.bf16.msra.mxu0 %v1001
    %1271 = vmatprep.subr.bf16.mxu0 %v998
    %1272 = vmatpush1.bf16.msra.mxu0 %v997
    %1273 = vmatprep.subr.bf16.mxu0 %v994
    %1274 = vmatpush1.bf16.msra.mxu0 %v993
    %1275 = vmatprep.subr.bf16.mxu0 %v990
    %1276 = vmatpush1.bf16.msra.mxu0 %v989
    %1277 = vmatprep.subr.bf16.mxu0 0
    %1278 = vmatpush2.bf16.msra.mxu0 0
    %1279 = vmatprep.subr.bf16.mxu0 0
    %1280 = vmatpush2.bf16.msra.mxu0 0
    %1281 = vmatprep.subr.bf16.mxu0 0
    %1282 = vmatpush2.bf16.msra.mxu0 0
    %1283 = vmatprep.subr.bf16.mxu0 0
    %1284 = vmatpush2.bf16.msra.mxu0 0
    %1285 = vmatprep.subr.bf16.mxu0 0
    %1286 = vmatpush2.bf16.msra.mxu0 0
    %1287 = vmatprep.subr.bf16.mxu0 0
    %1288 = vmatpush2.bf16.msra.mxu0 0
    %1289 = vmatprep.subr.bf16.mxu0 0
    %1290 = vmatpush2.bf16.msra.mxu0 0
    %1291 = vmatprep.subr.bf16.mxu0 0
    %1292 = vmatpush2.bf16.msra.mxu0 0
    %1293 = vmatprep.mubr.bf16.mxu0 0
    %1294 = vmatmul.mubr.bf16.gmra.mxu0 %v1193
    %v1295 = vpop.f32.mrf.mxu0
    %v1296 = vadd.f32 0.0, %v1295
    %v1297 = vpop.f32.mrf.mxu0
    %v1298 = vadd.f32 0.0, %v1297
    %v1299 = vpop.f32.mrf.mxu0
    %v1300 = vadd.f32 0.0, %v1299
    %v1301 = vpop.f32.mrf.mxu0
    %v1302 = vadd.f32 0.0, %v1301
    %1303 = vdwg.mxu0
    %v1304 = vadd.f32 %v1210, %v1253
    %v1305 = vadd.f32 %v1211, %v1255
    %v1306 = vadd.f32 %v1212, %v1296
    %v1307 = vadd.f32 %v1213, %v1298
    %v1308 = vadd.f32 %v1214, %v1257
    %v1309 = vadd.f32 %v1215, %v1259
    %v1310 = vadd.f32 %v1216, %v1300
    %v1311 = vadd.f32 %v1217, %v1302
    %v1312 = vxor.u32 %v1304, 2147483648
    %v1313 = vxor.u32 %v1308, 2147483648
    %v1314 = vmul.f32 %v1312, 1.442695
    %v1315 = vpow.pop %v1314
    %v1316 = vmul.f32 %v1313, 1.442695
    %v1317 = vpow.pop %v1316
    %v1318 = vadd.f32 %v1315, 1.0
    %v1319 = vadd.f32 %v1317, 1.0
    %v1320 = vrcp.pop %v1318
    %v1321 = vmul.f32 1.0, %v1320
    %v1322 = vrcp.pop %v1319
    %v1323 = vmul.f32 1.0, %v1322
    %v1324 = vxor.u32 %v1305, 2147483648
    %v1325 = vxor.u32 %v1309, 2147483648
    %v1326 = vmul.f32 %v1324, 1.442695
    %v1327 = vpow.pop %v1326
    %v1328 = vmul.f32 %v1325, 1.442695
    %v1329 = vpow.pop %v1328
    %v1330 = vadd.f32 %v1327, 1.0
    %v1331 = vadd.f32 %v1329, 1.0
    %v1332 = vrcp.pop %v1330
    %v1333 = vmul.f32 1.0, %v1332
    %v1334 = vrcp.pop %v1331
    %v1335 = vmul.f32 1.0, %v1334
    %v1336 = vtanh.pop %v1306
    %v1337 = vtanh.pop %v1310
    %v1338 = vxor.u32 %v1307, 2147483648
    %v1339 = vxor.u32 %v1311, 2147483648
    %v1340 = vmul.f32 %v1338, 1.442695
    %v1341 = vpow.pop %v1340
    %v1342 = vmul.f32 %v1339, 1.442695
    %v1343 = vpow.pop %v1342
    %v1344 = vadd.f32 %v1341, 1.0
    %v1345 = vadd.f32 %v1343, 1.0
    %v1346 = vrcp.pop %v1344
    %v1347 = vmul.f32 1.0, %v1346
    %v1348 = vrcp.pop %v1345
    %v1349 = vmul.f32 1.0, %v1348
    %v1350 = vmul.f32 %v1333, %v1187
    %v1351 = vmul.f32 %v1335, %v1188
    %v1352 = vmul.f32 %v1321, %v1336
    %v1353 = vmul.f32 %v1323, %v1337
    %v1354 = vadd.f32 %v1350, %v1352
    %v1355 = vadd.f32 %v1351, %v1353
    %v1356 = vtanh.pop %v1354
    %v1357 = vtanh.pop %v1355
    %v1358 = vmul.f32 %v1347, %v1356
    %v1359 = vmul.f32 %v1349, %v1357
    %v1360 = vpack.c.bf16 %v1359, %v1358
    %v1362 = vunpack.c.l.b16 %v1360
    %v1363 = vunpack.c.h.b16 %v1360
    %v1364 = vpack.c.b16 %v1362, %v1362
    %v1365 = vpack.c.b16 %v1363, %v1363
    %s1368 = scalar_lea.vmem [#allocation3], 8
    %1369 = vst [vmem:[%s1368] sm:$0xf] %v1364
    %1370 = vst [vmem:[%s1368 + $0x4] sm:$0xf] %v1365
    %s1371 = smul.u32 4, 4
    %s1372 = smul.addr %s1371, 4
    %s1373 = scalar_lea.vmem [#allocation2], %s1372
    %v1374 = vld [vmem:[%s1373] sm:$0xff]
    %v1375 = vld [vmem:[%s1373 + $0x8] sm:$0xff]
    %v1376 = vld [vmem:[%s1373 + $0x10] sm:$0xff]
    %v1377 = vld [vmem:[%s1373 + $0x18] sm:$0xff]
    %v1378 = vunpack.c.l.bf16 %v1374
    %v1379 = vunpack.c.h.bf16 %v1374
    %v1380 = vunpack.c.l.bf16 %v1375
    %v1381 = vunpack.c.h.bf16 %v1375
    %v1382 = vunpack.c.l.bf16 %v1376
    %v1383 = vunpack.c.h.bf16 %v1376
    %v1384 = vunpack.c.l.bf16 %v1377
    %v1385 = vunpack.c.h.bf16 %v1377
    %1386 = vmatprep.subr.bf16.mxu0 %v1016
    %1387 = vmatpush1.bf16.msra.mxu0 %v1015
    %1388 = vmatprep.subr.bf16.mxu0 %v1012
    %1389 = vmatpush1.bf16.msra.mxu0 %v1011
    %1390 = vmatprep.subr.bf16.mxu0 %v1008
    %1391 = vmatpush1.bf16.msra.mxu0 %v1007
    %1392 = vmatprep.subr.bf16.mxu0 %v1004
    %1393 = vmatpush1.bf16.msra.mxu0 %v1003
    %1394 = vmatprep.subr.bf16.mxu0 %v1000
    %1395 = vmatpush1.bf16.msra.mxu0 %v999
    %1396 = vmatprep.subr.bf16.mxu0 %v996
    %1397 = vmatpush1.bf16.msra.mxu0 %v995
    %1398 = vmatprep.subr.bf16.mxu0 %v992
    %1399 = vmatpush1.bf16.msra.mxu0 %v991
    %1400 = vmatprep.subr.bf16.mxu0 %v988
    %1401 = vmatpush1.bf16.msra.mxu0 %v987
    %1402 = vmatprep.subr.bf16.mxu0 0
    %1403 = vmatpush2.bf16.msra.mxu0 0
    %1404 = vmatprep.subr.bf16.mxu0 0
    %1405 = vmatpush2.bf16.msra.mxu0 0
    %1406 = vmatprep.subr.bf16.mxu0 0
    %1407 = vmatpush2.bf16.msra.mxu0 0
    %1408 = vmatprep.subr.bf16.mxu0 0
    %1409 = vmatpush2.bf16.msra.mxu0 0
    %1410 = vmatprep.subr.bf16.mxu0 0
    %1411 = vmatpush2.bf16.msra.mxu0 0
    %1412 = vmatprep.subr.bf16.mxu0 0
    %1413 = vmatpush2.bf16.msra.mxu0 0
    %1414 = vmatprep.subr.bf16.mxu0 0
    %1415 = vmatpush2.bf16.msra.mxu0 0
    %1416 = vmatprep.subr.bf16.mxu0 0
    %1417 = vmatpush2.bf16.msra.mxu0 0
    %1418 = vmatprep.mubr.bf16.mxu0 0
    %1419 = vmatmul.mubr.bf16.gmra.mxu0 %v1360
    %v1420 = vpop.f32.mrf.mxu0
    %v1421 = vadd.f32 0.0, %v1420
    %v1422 = vpop.f32.mrf.mxu0
    %v1423 = vadd.f32 0.0, %v1422
    %v1424 = vpop.f32.mrf.mxu0
    %v1425 = vadd.f32 0.0, %v1424
    %v1426 = vpop.f32.mrf.mxu0
    %v1427 = vadd.f32 0.0, %v1426
    %1428 = vdwg.mxu0
    %1429 = vmatprep.subr.bf16.mxu0 %v1018
    %1430 = vmatpush1.bf16.msra.mxu0 %v1017
    %1431 = vmatprep.subr.bf16.mxu0 %v1014
    %1432 = vmatpush1.bf16.msra.mxu0 %v1013
    %1433 = vmatprep.subr.bf16.mxu0 %v1010
    %1434 = vmatpush1.bf16.msra.mxu0 %v1009
    %1435 = vmatprep.subr.bf16.mxu0 %v1006
    %1436 = vmatpush1.bf16.msra.mxu0 %v1005
    %1437 = vmatprep.subr.bf16.mxu0 %v1002
    %1438 = vmatpush1.bf16.msra.mxu0 %v1001
    %1439 = vmatprep.subr.bf16.mxu0 %v998
    %1440 = vmatpush1.bf16.msra.mxu0 %v997
    %1441 = vmatprep.subr.bf16.mxu0 %v994
    %1442 = vmatpush1.bf16.msra.mxu0 %v993
    %1443 = vmatprep.subr.bf16.mxu0 %v990
    %1444 = vmatpush1.bf16.msra.mxu0 %v989
    %1445 = vmatprep.subr.bf16.mxu0 0
    %1446 = vmatpush2.bf16.msra.mxu0 0
    %1447 = vmatprep.subr.bf16.mxu0 0
    %1448 = vmatpush2.bf16.msra.mxu0 0
    %1449 = vmatprep.subr.bf16.mxu0 0
    %1450 = vmatpush2.bf16.msra.mxu0 0
    %1451 = vmatprep.subr.bf16.mxu0 0
    %1452 = vmatpush2.bf16.msra.mxu0 0
    %1453 = vmatprep.subr.bf16.mxu0 0
    %1454 = vmatpush2.bf16.msra.mxu0 0
    %1455 = vmatprep.subr.bf16.mxu0 0
    %1456 = vmatpush2.bf16.msra.mxu0 0
    %1457 = vmatprep.subr.bf16.mxu0 0
    %1458 = vmatpush2.bf16.msra.mxu0 0
    %1459 = vmatprep.subr.bf16.mxu0 0
    %1460 = vmatpush2.bf16.msra.mxu0 0
    %1461 = vmatprep.mubr.bf16.mxu0 0
    %1462 = vmatmul.mubr.bf16.gmra.mxu0 %v1360
    %v1463 = vpop.f32.mrf.mxu0
    %v1464 = vadd.f32 0.0, %v1463
    %v1465 = vpop.f32.mrf.mxu0
    %v1466 = vadd.f32 0.0, %v1465
    %v1467 = vpop.f32.mrf.mxu0
    %v1468 = vadd.f32 0.0, %v1467
    %v1469 = vpop.f32.mrf.mxu0
    %v1470 = vadd.f32 0.0, %v1469
    %1471 = vdwg.mxu0
    %v1472 = vadd.f32 %v1378, %v1421
    %v1473 = vadd.f32 %v1379, %v1423
    %v1474 = vadd.f32 %v1380, %v1464
    %v1475 = vadd.f32 %v1381, %v1466
    %v1476 = vadd.f32 %v1382, %v1425
    %v1477 = vadd.f32 %v1383, %v1427
    %v1478 = vadd.f32 %v1384, %v1468
    %v1479 = vadd.f32 %v1385, %v1470
    %v1480 = vxor.u32 %v1472, 2147483648
    %v1481 = vxor.u32 %v1476, 2147483648
    %v1482 = vmul.f32 %v1480, 1.442695
    %v1483 = vpow.pop %v1482
    %v1484 = vmul.f32 %v1481, 1.442695
    %v1485 = vpow.pop %v1484
    %v1486 = vadd.f32 %v1483, 1.0
    %v1487 = vadd.f32 %v1485, 1.0
    %v1488 = vrcp.pop %v1486
    %v1489 = vmul.f32 1.0, %v1488
    %v1490 = vrcp.pop %v1487
    %v1491 = vmul.f32 1.0, %v1490
    %v1492 = vxor.u32 %v1473, 2147483648
    %v1493 = vxor.u32 %v1477, 2147483648
    %v1494 = vmul.f32 %v1492, 1.442695
    %v1495 = vpow.pop %v1494
    %v1496 = vmul.f32 %v1493, 1.442695
    %v1497 = vpow.pop %v1496
    %v1498 = vadd.f32 %v1495, 1.0
    %v1499 = vadd.f32 %v1497, 1.0
    %v1500 = vrcp.pop %v1498
    %v1501 = vmul.f32 1.0, %v1500
    %v1502 = vrcp.pop %v1499
    %v1503 = vmul.f32 1.0, %v1502
    %v1504 = vtanh.pop %v1474
    %v1505 = vtanh.pop %v1478
    %v1506 = vxor.u32 %v1475, 2147483648
    %v1507 = vxor.u32 %v1479, 2147483648
    %v1508 = vmul.f32 %v1506, 1.442695
    %v1509 = vpow.pop %v1508
    %v1510 = vmul.f32 %v1507, 1.442695
    %v1511 = vpow.pop %v1510
    %v1512 = vadd.f32 %v1509, 1.0
    %v1513 = vadd.f32 %v1511, 1.0
    %v1514 = vrcp.pop %v1512
    %v1515 = vmul.f32 1.0, %v1514
    %v1516 = vrcp.pop %v1513
    %v1517 = vmul.f32 1.0, %v1516
    %v1518 = vmul.f32 %v1501, %v1354
    %v1519 = vmul.f32 %v1503, %v1355
    %v1520 = vmul.f32 %v1489, %v1504
    %v1521 = vmul.f32 %v1491, %v1505
    %v1522 = vadd.f32 %v1518, %v1520
    %v1523 = vadd.f32 %v1519, %v1521
    %v1524 = vtanh.pop %v1522
    %v1525 = vtanh.pop %v1523
    %v1526 = vmul.f32 %v1515, %v1524
    %v1527 = vmul.f32 %v1517, %v1525
    %v1528 = vpack.c.bf16 %v1527, %v1526
    %v1530 = vunpack.c.l.b16 %v1528
    %v1531 = vunpack.c.h.b16 %v1528
    %v1532 = vpack.c.b16 %v1530, %v1530
    %v1533 = vpack.c.b16 %v1531, %v1531
    %s1536 = scalar_lea.vmem [#allocation3], 16
    %1537 = vst [vmem:[%s1536] sm:$0xf] %v1532
    %1538 = vst [vmem:[%s1536 + $0x4] sm:$0xf] %v1533
    %s1539 = smul.u32 6, 4
    %s1540 = smul.addr %s1539, 4
    %s1541 = scalar_lea.vmem [#allocation2], %s1540
    %v1542 = vld [vmem:[%s1541] sm:$0xff]
    %v1543 = vld [vmem:[%s1541 + $0x8] sm:$0xff]
    %v1544 = vld [vmem:[%s1541 + $0x10] sm:$0xff]
    %v1545 = vld [vmem:[%s1541 + $0x18] sm:$0xff]
    %v1546 = vunpack.c.l.bf16 %v1542
    %v1547 = vunpack.c.h.bf16 %v1542
    %v1548 = vunpack.c.l.bf16 %v1543
    %v1549 = vunpack.c.h.bf16 %v1543
    %v1550 = vunpack.c.l.bf16 %v1544
    %v1551 = vunpack.c.h.bf16 %v1544
    %v1552 = vunpack.c.l.bf16 %v1545
    %v1553 = vunpack.c.h.bf16 %v1545
    %1554 = vmatprep.subr.bf16.mxu0 %v1016
    %1555 = vmatpush1.bf16.msra.mxu0 %v1015
    %1556 = vmatprep.subr.bf16.mxu0 %v1012
    %1557 = vmatpush1.bf16.msra.mxu0 %v1011
    %1558 = vmatprep.subr.bf16.mxu0 %v1008
    %1559 = vmatpush1.bf16.msra.mxu0 %v1007
    %1560 = vmatprep.subr.bf16.mxu0 %v1004
    %1561 = vmatpush1.bf16.msra.mxu0 %v1003
    %1562 = vmatprep.subr.bf16.mxu0 %v1000
    %1563 = vmatpush1.bf16.msra.mxu0 %v999
    %1564 = vmatprep.subr.bf16.mxu0 %v996
    %1565 = vmatpush1.bf16.msra.mxu0 %v995
    %1566 = vmatprep.subr.bf16.mxu0 %v992
    %1567 = vmatpush1.bf16.msra.mxu0 %v991
    %1568 = vmatprep.subr.bf16.mxu0 %v988
    %1569 = vmatpush1.bf16.msra.mxu0 %v987
    %1570 = vmatprep.subr.bf16.mxu0 0
    %1571 = vmatpush2.bf16.msra.mxu0 0
    %1572 = vmatprep.subr.bf16.mxu0 0
    %1573 = vmatpush2.bf16.msra.mxu0 0
    %1574 = vmatprep.subr.bf16.mxu0 0
    %1575 = vmatpush2.bf16.msra.mxu0 0
    %1576 = vmatprep.subr.bf16.mxu0 0
    %1577 = vmatpush2.bf16.msra.mxu0 0
    %1578 = vmatprep.subr.bf16.mxu0 0
    %1579 = vmatpush2.bf16.msra.mxu0 0
    %1580 = vmatprep.subr.bf16.mxu0 0
    %1581 = vmatpush2.bf16.msra.mxu0 0
    %1582 = vmatprep.subr.bf16.mxu0 0
    %1583 = vmatpush2.bf16.msra.mxu0 0
    %1584 = vmatprep.subr.bf16.mxu0 0
    %1585 = vmatpush2.bf16.msra.mxu0 0
    %1586 = vmatprep.mubr.bf16.mxu0 0
    %1587 = vmatmul.mubr.bf16.gmra.mxu0 %v1528
    %v1588 = vpop.f32.mrf.mxu0
    %v1589 = vadd.f32 0.0, %v1588
    %v1590 = vpop.f32.mrf.mxu0
    %v1591 = vadd.f32 0.0, %v1590
    %v1592 = vpop.f32.mrf.mxu0
    %v1593 = vadd.f32 0.0, %v1592
    %v1594 = vpop.f32.mrf.mxu0
    %v1595 = vadd.f32 0.0, %v1594
    %1596 = vdwg.mxu0
    %1597 = vmatprep.subr.bf16.mxu0 %v1018
    %1598 = vmatpush1.bf16.msra.mxu0 %v1017
    %1599 = vmatprep.subr.bf16.mxu0 %v1014
    %1600 = vmatpush1.bf16.msra.mxu0 %v1013
    %1601 = vmatprep.subr.bf16.mxu0 %v1010
    %1602 = vmatpush1.bf16.msra.mxu0 %v1009
    %1603 = vmatprep.subr.bf16.mxu0 %v1006
    %1604 = vmatpush1.bf16.msra.mxu0 %v1005
    %1605 = vmatprep.subr.bf16.mxu0 %v1002
    %1606 = vmatpush1.bf16.msra.mxu0 %v1001
    %1607 = vmatprep.subr.bf16.mxu0 %v998
    %1608 = vmatpush1.bf16.msra.mxu0 %v997
    %1609 = vmatprep.subr.bf16.mxu0 %v994
    %1610 = vmatpush1.bf16.msra.mxu0 %v993
    %1611 = vmatprep.subr.bf16.mxu0 %v990
    %1612 = vmatpush1.bf16.msra.mxu0 %v989
    %1613 = vmatprep.subr.bf16.mxu0 0
    %1614 = vmatpush2.bf16.msra.mxu0 0
    %1615 = vmatprep.subr.bf16.mxu0 0
    %1616 = vmatpush2.bf16.msra.mxu0 0
    %1617 = vmatprep.subr.bf16.mxu0 0
    %1618 = vmatpush2.bf16.msra.mxu0 0
    %1619 = vmatprep.subr.bf16.mxu0 0
    %1620 = vmatpush2.bf16.msra.mxu0 0
    %1621 = vmatprep.subr.bf16.mxu0 0
    %1622 = vmatpush2.bf16.msra.mxu0 0
    %1623 = vmatprep.subr.bf16.mxu0 0
    %1624 = vmatpush2.bf16.msra.mxu0 0
    %1625 = vmatprep.subr.bf16.mxu0 0
    %1626 = vmatpush2.bf16.msra.mxu0 0
    %1627 = vmatprep.subr.bf16.mxu0 0
    %1628 = vmatpush2.bf16.msra.mxu0 0
    %1629 = vmatprep.mubr.bf16.mxu0 0
    %1630 = vmatmul.mubr.bf16.gmra.mxu0 %v1528
    %v1631 = vpop.f32.mrf.mxu0
    %v1632 = vadd.f32 0.0, %v1631
    %v1633 = vpop.f32.mrf.mxu0
    %v1634 = vadd.f32 0.0, %v1633
    %v1635 = vpop.f32.mrf.mxu0
    %v1636 = vadd.f32 0.0, %v1635
    %v1637 = vpop.f32.mrf.mxu0
    %v1638 = vadd.f32 0.0, %v1637
    %1639 = vdwg.mxu0
    %v1640 = vadd.f32 %v1546, %v1589
    %v1641 = vadd.f32 %v1547, %v1591
    %v1642 = vadd.f32 %v1548, %v1632
    %v1643 = vadd.f32 %v1549, %v1634
    %v1644 = vadd.f32 %v1550, %v1593
    %v1645 = vadd.f32 %v1551, %v1595
    %v1646 = vadd.f32 %v1552, %v1636
    %v1647 = vadd.f32 %v1553, %v1638
    %v1648 = vxor.u32 %v1640, 2147483648
    %v1649 = vxor.u32 %v1644, 2147483648
    %v1650 = vmul.f32 %v1648, 1.442695
    %v1651 = vpow.pop %v1650
    %v1652 = vmul.f32 %v1649, 1.442695
    %v1653 = vpow.pop %v1652
    %v1654 = vadd.f32 %v1651, 1.0
    %v1655 = vadd.f32 %v1653, 1.0
    %v1656 = vrcp.pop %v1654
    %v1657 = vmul.f32 1.0, %v1656
    %v1658 = vrcp.pop %v1655
    %v1659 = vmul.f32 1.0, %v1658
    %v1660 = vxor.u32 %v1641, 2147483648
    %v1661 = vxor.u32 %v1645, 2147483648
    %v1662 = vmul.f32 %v1660, 1.442695
    %v1663 = vpow.pop %v1662
    %v1664 = vmul.f32 %v1661, 1.442695
    %v1665 = vpow.pop %v1664
    %v1666 = vadd.f32 %v1663, 1.0
    %v1667 = vadd.f32 %v1665, 1.0
    %v1668 = vrcp.pop %v1666
    %v1669 = vmul.f32 1.0, %v1668
    %v1670 = vrcp.pop %v1667
    %v1671 = vmul.f32 1.0, %v1670
    %v1672 = vtanh.pop %v1642
    %v1673 = vtanh.pop %v1646
    %v1674 = vxor.u32 %v1643, 2147483648
    %v1675 = vxor.u32 %v1647, 2147483648
    %v1676 = vmul.f32 %v1674, 1.442695
    %v1677 = vpow.pop %v1676
    %v1678 = vmul.f32 %v1675, 1.442695
    %v1679 = vpow.pop %v1678
    %v1680 = vadd.f32 %v1677, 1.0
    %v1681 = vadd.f32 %v1679, 1.0
    %v1682 = vrcp.pop %v1680
    %v1683 = vmul.f32 1.0, %v1682
    %v1684 = vrcp.pop %v1681
    %v1685 = vmul.f32 1.0, %v1684
    %v1686 = vmul.f32 %v1669, %v1522
    %v1687 = vmul.f32 %v1671, %v1523
    %v1688 = vmul.f32 %v1657, %v1672
    %v1689 = vmul.f32 %v1659, %v1673
    %v1690 = vadd.f32 %v1686, %v1688
    %v1691 = vadd.f32 %v1687, %v1689
    %v1692 = vtanh.pop %v1690
    %v1693 = vtanh.pop %v1691
    %v1694 = vmul.f32 %v1683, %v1692
    %v1695 = vmul.f32 %v1685, %v1693
    %v1696 = vpack.c.bf16 %v1695, %v1694
    %v1698 = vunpack.c.l.b16 %v1696
    %v1699 = vunpack.c.h.b16 %v1696
    %v1700 = vpack.c.b16 %v1698, %v1698
    %v1701 = vpack.c.b16 %v1699, %v1699
    %s1704 = scalar_lea.vmem [#allocation3], 24
    %1705 = vst [vmem:[%s1704] sm:$0xf] %v1700
    %1706 = vst [vmem:[%s1704 + $0x4] sm:$0xf] %v1701
    %s1707 = smul.u32 8, 4
    %s1708 = smul.addr %s1707, 4
    %s1709 = scalar_lea.vmem [#allocation2], %s1708
    %v1710 = vld [vmem:[%s1709] sm:$0xff]
    %v1711 = vld [vmem:[%s1709 + $0x8] sm:$0xff]
    %v1712 = vld [vmem:[%s1709 + $0x10] sm:$0xff]
    %v1713 = vld [vmem:[%s1709 + $0x18] sm:$0xff]
    %v1714 = vunpack.c.l.bf16 %v1710
    %v1715 = vunpack.c.h.bf16 %v1710
    %v1716 = vunpack.c.l.bf16 %v1711
    %v1717 = vunpack.c.h.bf16 %v1711
    %v1718 = vunpack.c.l.bf16 %v1712
    %v1719 = vunpack.c.h.bf16 %v1712
    %v1720 = vunpack.c.l.bf16 %v1713
    %v1721 = vunpack.c.h.bf16 %v1713
    %1722 = vmatprep.subr.bf16.mxu0 %v1016
    %1723 = vmatpush1.bf16.msra.mxu0 %v1015
    %1724 = vmatprep.subr.bf16.mxu0 %v1012
    %1725 = vmatpush1.bf16.msra.mxu0 %v1011
    %1726 = vmatprep.subr.bf16.mxu0 %v1008
    %1727 = vmatpush1.bf16.msra.mxu0 %v1007
    %1728 = vmatprep.subr.bf16.mxu0 %v1004
    %1729 = vmatpush1.bf16.msra.mxu0 %v1003
    %1730 = vmatprep.subr.bf16.mxu0 %v1000
    %1731 = vmatpush1.bf16.msra.mxu0 %v999
    %1732 = vmatprep.subr.bf16.mxu0 %v996
    %1733 = vmatpush1.bf16.msra.mxu0 %v995
    %1734 = vmatprep.subr.bf16.mxu0 %v992
    %1735 = vmatpush1.bf16.msra.mxu0 %v991
    %1736 = vmatprep.subr.bf16.mxu0 %v988
    %1737 = vmatpush1.bf16.msra.mxu0 %v987
    %1738 = vmatprep.subr.bf16.mxu0 0
    %1739 = vmatpush2.bf16.msra.mxu0 0
    %1740 = vmatprep.subr.bf16.mxu0 0
    %1741 = vmatpush2.bf16.msra.mxu0 0
    %1742 = vmatprep.subr.bf16.mxu0 0
    %1743 = vmatpush2.bf16.msra.mxu0 0
    %1744 = vmatprep.subr.bf16.mxu0 0
    %1745 = vmatpush2.bf16.msra.mxu0 0
    %1746 = vmatprep.subr.bf16.mxu0 0
    %1747 = vmatpush2.bf16.msra.mxu0 0
    %1748 = vmatprep.subr.bf16.mxu0 0
    %1749 = vmatpush2.bf16.msra.mxu0 0
    %1750 = vmatprep.subr.bf16.mxu0 0
    %1751 = vmatpush2.bf16.msra.mxu0 0
    %1752 = vmatprep.subr.bf16.mxu0 0
    %1753 = vmatpush2.bf16.msra.mxu0 0
    %1754 = vmatprep.mubr.bf16.mxu0 0
    %1755 = vmatmul.mubr.bf16.gmra.mxu0 %v1696
    %v1756 = vpop.f32.mrf.mxu0
    %v1757 = vadd.f32 0.0, %v1756
    %v1758 = vpop.f32.mrf.mxu0
    %v1759 = vadd.f32 0.0, %v1758
    %v1760 = vpop.f32.mrf.mxu0
    %v1761 = vadd.f32 0.0, %v1760
    %v1762 = vpop.f32.mrf.mxu0
    %v1763 = vadd.f32 0.0, %v1762
    %1764 = vdwg.mxu0
    %1765 = vmatprep.subr.bf16.mxu0 %v1018
    %1766 = vmatpush1.bf16.msra.mxu0 %v1017
    %1767 = vmatprep.subr.bf16.mxu0 %v1014
    %1768 = vmatpush1.bf16.msra.mxu0 %v1013
    %1769 = vmatprep.subr.bf16.mxu0 %v1010
    %1770 = vmatpush1.bf16.msra.mxu0 %v1009
    %1771 = vmatprep.subr.bf16.mxu0 %v1006
    %1772 = vmatpush1.bf16.msra.mxu0 %v1005
    %1773 = vmatprep.subr.bf16.mxu0 %v1002
    %1774 = vmatpush1.bf16.msra.mxu0 %v1001
    %1775 = vmatprep.subr.bf16.mxu0 %v998
    %1776 = vmatpush1.bf16.msra.mxu0 %v997
    %1777 = vmatprep.subr.bf16.mxu0 %v994
    %1778 = vmatpush1.bf16.msra.mxu0 %v993
    %1779 = vmatprep.subr.bf16.mxu0 %v990
    %1780 = vmatpush1.bf16.msra.mxu0 %v989
    %1781 = vmatprep.subr.bf16.mxu0 0
    %1782 = vmatpush2.bf16.msra.mxu0 0
    %1783 = vmatprep.subr.bf16.mxu0 0
    %1784 = vmatpush2.bf16.msra.mxu0 0
    %1785 = vmatprep.subr.bf16.mxu0 0
    %1786 = vmatpush2.bf16.msra.mxu0 0
    %1787 = vmatprep.subr.bf16.mxu0 0
    %1788 = vmatpush2.bf16.msra.mxu0 0
    %1789 = vmatprep.subr.bf16.mxu0 0
    %1790 = vmatpush2.bf16.msra.mxu0 0
    %1791 = vmatprep.subr.bf16.mxu0 0
    %1792 = vmatpush2.bf16.msra.mxu0 0
    %1793 = vmatprep.subr.bf16.mxu0 0
    %1794 = vmatpush2.bf16.msra.mxu0 0
    %1795 = vmatprep.subr.bf16.mxu0 0
    %1796 = vmatpush2.bf16.msra.mxu0 0
    %1797 = vmatprep.mubr.bf16.mxu0 0
    %1798 = vmatmul.mubr.bf16.gmra.mxu0 %v1696
    %v1799 = vpop.f32.mrf.mxu0
    %v1800 = vadd.f32 0.0, %v1799
    %v1801 = vpop.f32.mrf.mxu0
    %v1802 = vadd.f32 0.0, %v1801
    %v1803 = vpop.f32.mrf.mxu0
    %v1804 = vadd.f32 0.0, %v1803
    %v1805 = vpop.f32.mrf.mxu0
    %v1806 = vadd.f32 0.0, %v1805
    %1807 = vdwg.mxu0
    %v1808 = vadd.f32 %v1714, %v1757
    %v1809 = vadd.f32 %v1715, %v1759
    %v1810 = vadd.f32 %v1716, %v1800
    %v1811 = vadd.f32 %v1717, %v1802
    %v1812 = vadd.f32 %v1718, %v1761
    %v1813 = vadd.f32 %v1719, %v1763
    %v1814 = vadd.f32 %v1720, %v1804
    %v1815 = vadd.f32 %v1721, %v1806
    %v1816 = vxor.u32 %v1808, 2147483648
    %v1817 = vxor.u32 %v1812, 2147483648
    %v1818 = vmul.f32 %v1816, 1.442695
    %v1819 = vpow.pop %v1818
    %v1820 = vmul.f32 %v1817, 1.442695
    %v1821 = vpow.pop %v1820
    %v1822 = vadd.f32 %v1819, 1.0
    %v1823 = vadd.f32 %v1821, 1.0
    %v1824 = vrcp.pop %v1822
    %v1825 = vmul.f32 1.0, %v1824
    %v1826 = vrcp.pop %v1823
    %v1827 = vmul.f32 1.0, %v1826
    %v1828 = vxor.u32 %v1809, 2147483648
    %v1829 = vxor.u32 %v1813, 2147483648
    %v1830 = vmul.f32 %v1828, 1.442695
    %v1831 = vpow.pop %v1830
    %v1832 = vmul.f32 %v1829, 1.442695
    %v1833 = vpow.pop %v1832
    %v1834 = vadd.f32 %v1831, 1.0
    %v1835 = vadd.f32 %v1833, 1.0
    %v1836 = vrcp.pop %v1834
    %v1837 = vmul.f32 1.0, %v1836
    %v1838 = vrcp.pop %v1835
    %v1839 = vmul.f32 1.0, %v1838
    %v1840 = vtanh.pop %v1810
    %v1841 = vtanh.pop %v1814
    %v1842 = vxor.u32 %v1811, 2147483648
    %v1843 = vxor.u32 %v1815, 2147483648
    %v1844 = vmul.f32 %v1842, 1.442695
    %v1845 = vpow.pop %v1844
    %v1846 = vmul.f32 %v1843, 1.442695
    %v1847 = vpow.pop %v1846
    %v1848 = vadd.f32 %v1845, 1.0
    %v1849 = vadd.f32 %v1847, 1.0
    %v1850 = vrcp.pop %v1848
    %v1851 = vmul.f32 1.0, %v1850
    %v1852 = vrcp.pop %v1849
    %v1853 = vmul.f32 1.0, %v1852
    %v1854 = vmul.f32 %v1837, %v1690
    %v1855 = vmul.f32 %v1839, %v1691
    %v1856 = vmul.f32 %v1825, %v1840
    %v1857 = vmul.f32 %v1827, %v1841
    %v1858 = vadd.f32 %v1854, %v1856
    %v1859 = vadd.f32 %v1855, %v1857
    %v1860 = vtanh.pop %v1858
    %v1861 = vtanh.pop %v1859
    %v1862 = vmul.f32 %v1851, %v1860
    %v1863 = vmul.f32 %v1853, %v1861
    %v1864 = vpack.c.bf16 %v1863, %v1862
    %v1866 = vunpack.c.l.b16 %v1864
    %v1867 = vunpack.c.h.b16 %v1864
    %v1868 = vpack.c.b16 %v1866, %v1866
    %v1869 = vpack.c.b16 %v1867, %v1867
    %s1872 = scalar_lea.vmem [#allocation3], 32
    %1873 = vst [vmem:[%s1872] sm:$0xf] %v1868
    %1874 = vst [vmem:[%s1872 + $0x4] sm:$0xf] %v1869
    %s1875 = smul.u32 10, 4
    %s1876 = smul.addr %s1875, 4
    %s1877 = scalar_lea.vmem [#allocation2], %s1876
    %v1878 = vld [vmem:[%s1877] sm:$0xff]
    %v1879 = vld [vmem:[%s1877 + $0x8] sm:$0xff]
    %v1880 = vld [vmem:[%s1877 + $0x10] sm:$0xff]
    %v1881 = vld [vmem:[%s1877 + $0x18] sm:$0xff]
    %v1882 = vunpack.c.l.bf16 %v1878
    %v1883 = vunpack.c.h.bf16 %v1878
    %v1884 = vunpack.c.l.bf16 %v1879
    %v1885 = vunpack.c.h.bf16 %v1879
    %v1886 = vunpack.c.l.bf16 %v1880
    %v1887 = vunpack.c.h.bf16 %v1880
    %v1888 = vunpack.c.l.bf16 %v1881
    %v1889 = vunpack.c.h.bf16 %v1881
    %1890 = vmatprep.subr.bf16.mxu0 %v1016
    %1891 = vmatpush1.bf16.msra.mxu0 %v1015
    %1892 = vmatprep.subr.bf16.mxu0 %v1012
    %1893 = vmatpush1.bf16.msra.mxu0 %v1011
    %1894 = vmatprep.subr.bf16.mxu0 %v1008
    %1895 = vmatpush1.bf16.msra.mxu0 %v1007
    %1896 = vmatprep.subr.bf16.mxu0 %v1004
    %1897 = vmatpush1.bf16.msra.mxu0 %v1003
    %1898 = vmatprep.subr.bf16.mxu0 %v1000
    %1899 = vmatpush1.bf16.msra.mxu0 %v999
    %1900 = vmatprep.subr.bf16.mxu0 %v996
    %1901 = vmatpush1.bf16.msra.mxu0 %v995
    %1902 = vmatprep.subr.bf16.mxu0 %v992
    %1903 = vmatpush1.bf16.msra.mxu0 %v991
    %1904 = vmatprep.subr.bf16.mxu0 %v988
    %1905 = vmatpush1.bf16.msra.mxu0 %v987
    %1906 = vmatprep.subr.bf16.mxu0 0
    %1907 = vmatpush2.bf16.msra.mxu0 0
    %1908 = vmatprep.subr.bf16.mxu0 0
    %1909 = vmatpush2.bf16.msra.mxu0 0
    %1910 = vmatprep.subr.bf16.mxu0 0
    %1911 = vmatpush2.bf16.msra.mxu0 0
    %1912 = vmatprep.subr.bf16.mxu0 0
    %1913 = vmatpush2.bf16.msra.mxu0 0
    %1914 = vmatprep.subr.bf16.mxu0 0
    %1915 = vmatpush2.bf16.msra.mxu0 0
    %1916 = vmatprep.subr.bf16.mxu0 0
    %1917 = vmatpush2.bf16.msra.mxu0 0
    %1918 = vmatprep.subr.bf16.mxu0 0
    %1919 = vmatpush2.bf16.msra.mxu0 0
    %1920 = vmatprep.subr.bf16.mxu0 0
    %1921 = vmatpush2.bf16.msra.mxu0 0
    %1922 = vmatprep.mubr.bf16.mxu0 0
    %1923 = vmatmul.mubr.bf16.gmra.mxu0 %v1864
    %v1924 = vpop.f32.mrf.mxu0
    %v1925 = vadd.f32 0.0, %v1924
    %v1926 = vpop.f32.mrf.mxu0
    %v1927 = vadd.f32 0.0, %v1926
    %v1928 = vpop.f32.mrf.mxu0
    %v1929 = vadd.f32 0.0, %v1928
    %v1930 = vpop.f32.mrf.mxu0
    %v1931 = vadd.f32 0.0, %v1930
    %1932 = vdwg.mxu0
    %1933 = vmatprep.subr.bf16.mxu0 %v1018
    %1934 = vmatpush1.bf16.msra.mxu0 %v1017
    %1935 = vmatprep.subr.bf16.mxu0 %v1014
    %1936 = vmatpush1.bf16.msra.mxu0 %v1013
    %1937 = vmatprep.subr.bf16.mxu0 %v1010
    %1938 = vmatpush1.bf16.msra.mxu0 %v1009
    %1939 = vmatprep.subr.bf16.mxu0 %v1006
    %1940 = vmatpush1.bf16.msra.mxu0 %v1005
    %1941 = vmatprep.subr.bf16.mxu0 %v1002
    %1942 = vmatpush1.bf16.msra.mxu0 %v1001
    %1943 = vmatprep.subr.bf16.mxu0 %v998
    %1944 = vmatpush1.bf16.msra.mxu0 %v997
    %1945 = vmatprep.subr.bf16.mxu0 %v994
    %1946 = vmatpush1.bf16.msra.mxu0 %v993
    %1947 = vmatprep.subr.bf16.mxu0 %v990
    %1948 = vmatpush1.bf16.msra.mxu0 %v989
    %1949 = vmatprep.subr.bf16.mxu0 0
    %1950 = vmatpush2.bf16.msra.mxu0 0
    %1951 = vmatprep.subr.bf16.mxu0 0
    %1952 = vmatpush2.bf16.msra.mxu0 0
    %1953 = vmatprep.subr.bf16.mxu0 0
    %1954 = vmatpush2.bf16.msra.mxu0 0
    %1955 = vmatprep.subr.bf16.mxu0 0
    %1956 = vmatpush2.bf16.msra.mxu0 0
    %1957 = vmatprep.subr.bf16.mxu0 0
    %1958 = vmatpush2.bf16.msra.mxu0 0
    %1959 = vmatprep.subr.bf16.mxu0 0
    %1960 = vmatpush2.bf16.msra.mxu0 0
    %1961 = vmatprep.subr.bf16.mxu0 0
    %1962 = vmatpush2.bf16.msra.mxu0 0
    %1963 = vmatprep.subr.bf16.mxu0 0
    %1964 = vmatpush2.bf16.msra.mxu0 0
    %1965 = vmatprep.mubr.bf16.mxu0 0
    %1966 = vmatmul.mubr.bf16.gmra.mxu0 %v1864
    %v1967 = vpop.f32.mrf.mxu0
    %v1968 = vadd.f32 0.0, %v1967
    %v1969 = vpop.f32.mrf.mxu0
    %v1970 = vadd.f32 0.0, %v1969
    %v1971 = vpop.f32.mrf.mxu0
    %v1972 = vadd.f32 0.0, %v1971
    %v1973 = vpop.f32.mrf.mxu0
    %v1974 = vadd.f32 0.0, %v1973
    %1975 = vdwg.mxu0
    %v1976 = vadd.f32 %v1882, %v1925
    %v1977 = vadd.f32 %v1883, %v1927
    %v1978 = vadd.f32 %v1884, %v1968
    %v1979 = vadd.f32 %v1885, %v1970
    %v1980 = vadd.f32 %v1886, %v1929
    %v1981 = vadd.f32 %v1887, %v1931
    %v1982 = vadd.f32 %v1888, %v1972
    %v1983 = vadd.f32 %v1889, %v1974
    %v1984 = vxor.u32 %v1976, 2147483648
    %v1985 = vxor.u32 %v1980, 2147483648
    %v1986 = vmul.f32 %v1984, 1.442695
    %v1987 = vpow.pop %v1986
    %v1988 = vmul.f32 %v1985, 1.442695
    %v1989 = vpow.pop %v1988
    %v1990 = vadd.f32 %v1987, 1.0
    %v1991 = vadd.f32 %v1989, 1.0
    %v1992 = vrcp.pop %v1990
    %v1993 = vmul.f32 1.0, %v1992
    %v1994 = vrcp.pop %v1991
    %v1995 = vmul.f32 1.0, %v1994
    %v1996 = vxor.u32 %v1977, 2147483648
    %v1997 = vxor.u32 %v1981, 2147483648
    %v1998 = vmul.f32 %v1996, 1.442695
    %v1999 = vpow.pop %v1998
    %v2000 = vmul.f32 %v1997, 1.442695
    %v2001 = vpow.pop %v2000
    %v2002 = vadd.f32 %v1999, 1.0
    %v2003 = vadd.f32 %v2001, 1.0
    %v2004 = vrcp.pop %v2002
    %v2005 = vmul.f32 1.0, %v2004
    %v2006 = vrcp.pop %v2003
    %v2007 = vmul.f32 1.0, %v2006
    %v2008 = vtanh.pop %v1978
    %v2009 = vtanh.pop %v1982
    %v2010 = vxor.u32 %v1979, 2147483648
    %v2011 = vxor.u32 %v1983, 2147483648
    %v2012 = vmul.f32 %v2010, 1.442695
    %v2013 = vpow.pop %v2012
    %v2014 = vmul.f32 %v2011, 1.442695
    %v2015 = vpow.pop %v2014
    %v2016 = vadd.f32 %v2013, 1.0
    %v2017 = vadd.f32 %v2015, 1.0
    %v2018 = vrcp.pop %v2016
    %v2019 = vmul.f32 1.0, %v2018
    %v2020 = vrcp.pop %v2017
    %v2021 = vmul.f32 1.0, %v2020
    %v2022 = vmul.f32 %v2005, %v1858
    %v2023 = vmul.f32 %v2007, %v1859
    %v2024 = vmul.f32 %v1993, %v2008
    %v2025 = vmul.f32 %v1995, %v2009
    %v2026 = vadd.f32 %v2022, %v2024
    %v2027 = vadd.f32 %v2023, %v2025
    %v2028 = vtanh.pop %v2026
    %v2029 = vtanh.pop %v2027
    %v2030 = vmul.f32 %v2019, %v2028
    %v2031 = vmul.f32 %v2021, %v2029
    %v2032 = vpack.c.bf16 %v2031, %v2030
    %v2034 = vunpack.c.l.b16 %v2032
    %v2035 = vunpack.c.h.b16 %v2032
    %v2036 = vpack.c.b16 %v2034, %v2034
    %v2037 = vpack.c.b16 %v2035, %v2035
    %s2040 = scalar_lea.vmem [#allocation3], 40
    %2041 = vst [vmem:[%s2040] sm:$0xf] %v2036
    %2042 = vst [vmem:[%s2040 + $0x4] sm:$0xf] %v2037
    %s2043 = smul.u32 12, 4
    %s2044 = smul.addr %s2043, 4
    %s2045 = scalar_lea.vmem [#allocation2], %s2044
    %v2046 = vld [vmem:[%s2045] sm:$0xff]
    %v2047 = vld [vmem:[%s2045 + $0x8] sm:$0xff]
    %v2048 = vld [vmem:[%s2045 + $0x10] sm:$0xff]
    %v2049 = vld [vmem:[%s2045 + $0x18] sm:$0xff]
    %v2050 = vunpack.c.l.bf16 %v2046
    %v2051 = vunpack.c.h.bf16 %v2046
    %v2052 = vunpack.c.l.bf16 %v2047
    %v2053 = vunpack.c.h.bf16 %v2047
    %v2054 = vunpack.c.l.bf16 %v2048
    %v2055 = vunpack.c.h.bf16 %v2048
    %v2056 = vunpack.c.l.bf16 %v2049
    %v2057 = vunpack.c.h.bf16 %v2049
    %2058 = vmatprep.subr.bf16.mxu0 %v1016
    %2059 = vmatpush1.bf16.msra.mxu0 %v1015
    %2060 = vmatprep.subr.bf16.mxu0 %v1012
    %2061 = vmatpush1.bf16.msra.mxu0 %v1011
    %2062 = vmatprep.subr.bf16.mxu0 %v1008
    %2063 = vmatpush1.bf16.msra.mxu0 %v1007
    %2064 = vmatprep.subr.bf16.mxu0 %v1004
    %2065 = vmatpush1.bf16.msra.mxu0 %v1003
    %2066 = vmatprep.subr.bf16.mxu0 %v1000
    %2067 = vmatpush1.bf16.msra.mxu0 %v999
    %2068 = vmatprep.subr.bf16.mxu0 %v996
    %2069 = vmatpush1.bf16.msra.mxu0 %v995
    %2070 = vmatprep.subr.bf16.mxu0 %v992
    %2071 = vmatpush1.bf16.msra.mxu0 %v991
    %2072 = vmatprep.subr.bf16.mxu0 %v988
    %2073 = vmatpush1.bf16.msra.mxu0 %v987
    %2074 = vmatprep.subr.bf16.mxu0 0
    %2075 = vmatpush2.bf16.msra.mxu0 0
    %2076 = vmatprep.subr.bf16.mxu0 0
    %2077 = vmatpush2.bf16.msra.mxu0 0
    %2078 = vmatprep.subr.bf16.mxu0 0
    %2079 = vmatpush2.bf16.msra.mxu0 0
    %2080 = vmatprep.subr.bf16.mxu0 0
    %2081 = vmatpush2.bf16.msra.mxu0 0
    %2082 = vmatprep.subr.bf16.mxu0 0
    %2083 = vmatpush2.bf16.msra.mxu0 0
    %2084 = vmatprep.subr.bf16.mxu0 0
    %2085 = vmatpush2.bf16.msra.mxu0 0
    %2086 = vmatprep.subr.bf16.mxu0 0
    %2087 = vmatpush2.bf16.msra.mxu0 0
    %2088 = vmatprep.subr.bf16.mxu0 0
    %2089 = vmatpush2.bf16.msra.mxu0 0
    %2090 = vmatprep.mubr.bf16.mxu0 0
    %2091 = vmatmul.mubr.bf16.gmra.mxu0 %v2032
    %v2092 = vpop.f32.mrf.mxu0
    %v2093 = vadd.f32 0.0, %v2092
    %v2094 = vpop.f32.mrf.mxu0
    %v2095 = vadd.f32 0.0, %v2094
    %v2096 = vpop.f32.mrf.mxu0
    %v2097 = vadd.f32 0.0, %v2096
    %v2098 = vpop.f32.mrf.mxu0
    %v2099 = vadd.f32 0.0, %v2098
    %2100 = vdwg.mxu0
    %2101 = vmatprep.subr.bf16.mxu0 %v1018
    %2102 = vmatpush1.bf16.msra.mxu0 %v1017
    %2103 = vmatprep.subr.bf16.mxu0 %v1014
    %2104 = vmatpush1.bf16.msra.mxu0 %v1013
    %2105 = vmatprep.subr.bf16.mxu0 %v1010
    %2106 = vmatpush1.bf16.msra.mxu0 %v1009
    %2107 = vmatprep.subr.bf16.mxu0 %v1006
    %2108 = vmatpush1.bf16.msra.mxu0 %v1005
    %2109 = vmatprep.subr.bf16.mxu0 %v1002
    %2110 = vmatpush1.bf16.msra.mxu0 %v1001
    %2111 = vmatprep.subr.bf16.mxu0 %v998
    %2112 = vmatpush1.bf16.msra.mxu0 %v997
    %2113 = vmatprep.subr.bf16.mxu0 %v994
    %2114 = vmatpush1.bf16.msra.mxu0 %v993
    %2115 = vmatprep.subr.bf16.mxu0 %v990
    %2116 = vmatpush1.bf16.msra.mxu0 %v989
    %2117 = vmatprep.subr.bf16.mxu0 0
    %2118 = vmatpush2.bf16.msra.mxu0 0
    %2119 = vmatprep.subr.bf16.mxu0 0
    %2120 = vmatpush2.bf16.msra.mxu0 0
    %2121 = vmatprep.subr.bf16.mxu0 0
    %2122 = vmatpush2.bf16.msra.mxu0 0
    %2123 = vmatprep.subr.bf16.mxu0 0
    %2124 = vmatpush2.bf16.msra.mxu0 0
    %2125 = vmatprep.subr.bf16.mxu0 0
    %2126 = vmatpush2.bf16.msra.mxu0 0
    %2127 = vmatprep.subr.bf16.mxu0 0
    %2128 = vmatpush2.bf16.msra.mxu0 0
    %2129 = vmatprep.subr.bf16.mxu0 0
    %2130 = vmatpush2.bf16.msra.mxu0 0
    %2131 = vmatprep.subr.bf16.mxu0 0
    %2132 = vmatpush2.bf16.msra.mxu0 0
    %2133 = vmatprep.mubr.bf16.mxu0 0
    %2134 = vmatmul.mubr.bf16.gmra.mxu0 %v2032
    %v2135 = vpop.f32.mrf.mxu0
    %v2136 = vadd.f32 0.0, %v2135
    %v2137 = vpop.f32.mrf.mxu0
    %v2138 = vadd.f32 0.0, %v2137
    %v2139 = vpop.f32.mrf.mxu0
    %v2140 = vadd.f32 0.0, %v2139
    %v2141 = vpop.f32.mrf.mxu0
    %v2142 = vadd.f32 0.0, %v2141
    %2143 = vdwg.mxu0
    %v2144 = vadd.f32 %v2050, %v2093
    %v2145 = vadd.f32 %v2051, %v2095
    %v2146 = vadd.f32 %v2052, %v2136
    %v2147 = vadd.f32 %v2053, %v2138
    %v2148 = vadd.f32 %v2054, %v2097
    %v2149 = vadd.f32 %v2055, %v2099
    %v2150 = vadd.f32 %v2056, %v2140
    %v2151 = vadd.f32 %v2057, %v2142
    %v2152 = vxor.u32 %v2144, 2147483648
    %v2153 = vxor.u32 %v2148, 2147483648
    %v2154 = vmul.f32 %v2152, 1.442695
    %v2155 = vpow.pop %v2154
    %v2156 = vmul.f32 %v2153, 1.442695
    %v2157 = vpow.pop %v2156
    %v2158 = vadd.f32 %v2155, 1.0
    %v2159 = vadd.f32 %v2157, 1.0
    %v2160 = vrcp.pop %v2158
    %v2161 = vmul.f32 1.0, %v2160
    %v2162 = vrcp.pop %v2159
    %v2163 = vmul.f32 1.0, %v2162
    %v2164 = vxor.u32 %v2145, 2147483648
    %v2165 = vxor.u32 %v2149, 2147483648
    %v2166 = vmul.f32 %v2164, 1.442695
    %v2167 = vpow.pop %v2166
    %v2168 = vmul.f32 %v2165, 1.442695
    %v2169 = vpow.pop %v2168
    %v2170 = vadd.f32 %v2167, 1.0
    %v2171 = vadd.f32 %v2169, 1.0
    %v2172 = vrcp.pop %v2170
    %v2173 = vmul.f32 1.0, %v2172
    %v2174 = vrcp.pop %v2171
    %v2175 = vmul.f32 1.0, %v2174
    %v2176 = vtanh.pop %v2146
    %v2177 = vtanh.pop %v2150
    %v2178 = vxor.u32 %v2147, 2147483648
    %v2179 = vxor.u32 %v2151, 2147483648
    %v2180 = vmul.f32 %v2178, 1.442695
    %v2181 = vpow.pop %v2180
    %v2182 = vmul.f32 %v2179, 1.442695
    %v2183 = vpow.pop %v2182
    %v2184 = vadd.f32 %v2181, 1.0
    %v2185 = vadd.f32 %v2183, 1.0
    %v2186 = vrcp.pop %v2184
    %v2187 = vmul.f32 1.0, %v2186
    %v2188 = vrcp.pop %v2185
    %v2189 = vmul.f32 1.0, %v2188
    %v2190 = vmul.f32 %v2173, %v2026
    %v2191 = vmul.f32 %v2175, %v2027
    %v2192 = vmul.f32 %v2161, %v2176
    %v2193 = vmul.f32 %v2163, %v2177
    %v2194 = vadd.f32 %v2190, %v2192
    %v2195 = vadd.f32 %v2191, %v2193
    %v2196 = vtanh.pop %v2194
    %v2197 = vtanh.pop %v2195
    %v2198 = vmul.f32 %v2187, %v2196
    %v2199 = vmul.f32 %v2189, %v2197
    %v2200 = vpack.c.bf16 %v2199, %v2198
    %v2202 = vunpack.c.l.b16 %v2200
    %v2203 = vunpack.c.h.b16 %v2200
    %v2204 = vpack.c.b16 %v2202, %v2202
    %v2205 = vpack.c.b16 %v2203, %v2203
    %s2208 = scalar_lea.vmem [#allocation3], 48
    %2209 = vst [vmem:[%s2208] sm:$0xf] %v2204
    %2210 = vst [vmem:[%s2208 + $0x4] sm:$0xf] %v2205
    %s2211 = smul.u32 14, 4
    %s2212 = smul.addr %s2211, 4
    %s2213 = scalar_lea.vmem [#allocation2], %s2212
    %v2214 = vld [vmem:[%s2213] sm:$0xff]
    %v2215 = vld [vmem:[%s2213 + $0x8] sm:$0xff]
    %v2216 = vld [vmem:[%s2213 + $0x10] sm:$0xff]
    %v2217 = vld [vmem:[%s2213 + $0x18] sm:$0xff]
    %v2218 = vunpack.c.l.bf16 %v2214
    %v2219 = vunpack.c.h.bf16 %v2214
    %v2220 = vunpack.c.l.bf16 %v2215
    %v2221 = vunpack.c.h.bf16 %v2215
    %v2222 = vunpack.c.l.bf16 %v2216
    %v2223 = vunpack.c.h.bf16 %v2216
    %v2224 = vunpack.c.l.bf16 %v2217
    %v2225 = vunpack.c.h.bf16 %v2217
    %2226 = vmatprep.subr.bf16.mxu0 %v1016
    %2227 = vmatpush1.bf16.msra.mxu0 %v1015
    %2228 = vmatprep.subr.bf16.mxu0 %v1012
    %2229 = vmatpush1.bf16.msra.mxu0 %v1011
    %2230 = vmatprep.subr.bf16.mxu0 %v1008
    %2231 = vmatpush1.bf16.msra.mxu0 %v1007
    %2232 = vmatprep.subr.bf16.mxu0 %v1004
    %2233 = vmatpush1.bf16.msra.mxu0 %v1003
    %2234 = vmatprep.subr.bf16.mxu0 %v1000
    %2235 = vmatpush1.bf16.msra.mxu0 %v999
    %2236 = vmatprep.subr.bf16.mxu0 %v996
    %2237 = vmatpush1.bf16.msra.mxu0 %v995
    %2238 = vmatprep.subr.bf16.mxu0 %v992
    %2239 = vmatpush1.bf16.msra.mxu0 %v991
    %2240 = vmatprep.subr.bf16.mxu0 %v988
    %2241 = vmatpush1.bf16.msra.mxu0 %v987
    %2242 = vmatprep.subr.bf16.mxu0 0
    %2243 = vmatpush2.bf16.msra.mxu0 0
    %2244 = vmatprep.subr.bf16.mxu0 0
    %2245 = vmatpush2.bf16.msra.mxu0 0
    %2246 = vmatprep.subr.bf16.mxu0 0
    %2247 = vmatpush2.bf16.msra.mxu0 0
    %2248 = vmatprep.subr.bf16.mxu0 0
    %2249 = vmatpush2.bf16.msra.mxu0 0
    %2250 = vmatprep.subr.bf16.mxu0 0
    %2251 = vmatpush2.bf16.msra.mxu0 0
    %2252 = vmatprep.subr.bf16.mxu0 0
    %2253 = vmatpush2.bf16.msra.mxu0 0
    %2254 = vmatprep.subr.bf16.mxu0 0
    %2255 = vmatpush2.bf16.msra.mxu0 0
    %2256 = vmatprep.subr.bf16.mxu0 0
    %2257 = vmatpush2.bf16.msra.mxu0 0
    %2258 = vmatprep.mubr.bf16.mxu0 0
    %2259 = vmatmul.mubr.bf16.gmra.mxu0 %v2200
    %v2260 = vpop.f32.mrf.mxu0
    %v2261 = vadd.f32 0.0, %v2260
    %v2262 = vpop.f32.mrf.mxu0
    %v2263 = vadd.f32 0.0, %v2262
    %v2264 = vpop.f32.mrf.mxu0
    %v2265 = vadd.f32 0.0, %v2264
    %v2266 = vpop.f32.mrf.mxu0
    %v2267 = vadd.f32 0.0, %v2266
    %2268 = vdwg.mxu0
    %2269 = vmatprep.subr.bf16.mxu0 %v1018
    %2270 = vmatpush1.bf16.msra.mxu0 %v1017
    %2271 = vmatprep.subr.bf16.mxu0 %v1014
    %2272 = vmatpush1.bf16.msra.mxu0 %v1013
    %2273 = vmatprep.subr.bf16.mxu0 %v1010
    %2274 = vmatpush1.bf16.msra.mxu0 %v1009
    %2275 = vmatprep.subr.bf16.mxu0 %v1006
    %2276 = vmatpush1.bf16.msra.mxu0 %v1005
    %2277 = vmatprep.subr.bf16.mxu0 %v1002
    %2278 = vmatpush1.bf16.msra.mxu0 %v1001
    %2279 = vmatprep.subr.bf16.mxu0 %v998
    %2280 = vmatpush1.bf16.msra.mxu0 %v997
    %2281 = vmatprep.subr.bf16.mxu0 %v994
    %2282 = vmatpush1.bf16.msra.mxu0 %v993
    %2283 = vmatprep.subr.bf16.mxu0 %v990
    %2284 = vmatpush1.bf16.msra.mxu0 %v989
    %2285 = vmatprep.subr.bf16.mxu0 0
    %2286 = vmatpush2.bf16.msra.mxu0 0
    %2287 = vmatprep.subr.bf16.mxu0 0
    %2288 = vmatpush2.bf16.msra.mxu0 0
    %2289 = vmatprep.subr.bf16.mxu0 0
    %2290 = vmatpush2.bf16.msra.mxu0 0
    %2291 = vmatprep.subr.bf16.mxu0 0
    %2292 = vmatpush2.bf16.msra.mxu0 0
    %2293 = vmatprep.subr.bf16.mxu0 0
    %2294 = vmatpush2.bf16.msra.mxu0 0
    %2295 = vmatprep.subr.bf16.mxu0 0
    %2296 = vmatpush2.bf16.msra.mxu0 0
    %2297 = vmatprep.subr.bf16.mxu0 0
    %2298 = vmatpush2.bf16.msra.mxu0 0
    %2299 = vmatprep.subr.bf16.mxu0 0
    %2300 = vmatpush2.bf16.msra.mxu0 0
    %2301 = vmatprep.mubr.bf16.mxu0 0
    %2302 = vmatmul.mubr.bf16.gmra.mxu0 %v2200
    %v2303 = vpop.f32.mrf.mxu0
    %v2304 = vadd.f32 0.0, %v2303
    %v2305 = vpop.f32.mrf.mxu0
    %v2306 = vadd.f32 0.0, %v2305
    %v2307 = vpop.f32.mrf.mxu0
    %v2308 = vadd.f32 0.0, %v2307
    %v2309 = vpop.f32.mrf.mxu0
    %v2310 = vadd.f32 0.0, %v2309
    %2311 = vdwg.mxu0
    %v2312 = vadd.f32 %v2218, %v2261
    %v2313 = vadd.f32 %v2219, %v2263
    %v2314 = vadd.f32 %v2220, %v2304
    %v2315 = vadd.f32 %v2221, %v2306
    %v2316 = vadd.f32 %v2222, %v2265
    %v2317 = vadd.f32 %v2223, %v2267
    %v2318 = vadd.f32 %v2224, %v2308
    %v2319 = vadd.f32 %v2225, %v2310
    %v2320 = vxor.u32 %v2312, 2147483648
    %v2321 = vxor.u32 %v2316, 2147483648
    %v2322 = vmul.f32 %v2320, 1.442695
    %v2323 = vpow.pop %v2322
    %v2324 = vmul.f32 %v2321, 1.442695
    %v2325 = vpow.pop %v2324
    %v2326 = vadd.f32 %v2323, 1.0
    %v2327 = vadd.f32 %v2325, 1.0
    %v2328 = vrcp.pop %v2326
    %v2329 = vmul.f32 1.0, %v2328
    %v2330 = vrcp.pop %v2327
    %v2331 = vmul.f32 1.0, %v2330
    %v2332 = vxor.u32 %v2313, 2147483648
    %v2333 = vxor.u32 %v2317, 2147483648
    %v2334 = vmul.f32 %v2332, 1.442695
    %v2335 = vpow.pop %v2334
    %v2336 = vmul.f32 %v2333, 1.442695
    %v2337 = vpow.pop %v2336
    %v2338 = vadd.f32 %v2335, 1.0
    %v2339 = vadd.f32 %v2337, 1.0
    %v2340 = vrcp.pop %v2338
    %v2341 = vmul.f32 1.0, %v2340
    %v2342 = vrcp.pop %v2339
    %v2343 = vmul.f32 1.0, %v2342
    %v2344 = vtanh.pop %v2314
    %v2345 = vtanh.pop %v2318
    %v2346 = vxor.u32 %v2315, 2147483648
    %v2347 = vxor.u32 %v2319, 2147483648
    %v2348 = vmul.f32 %v2346, 1.442695
    %v2349 = vpow.pop %v2348
    %v2350 = vmul.f32 %v2347, 1.442695
    %v2351 = vpow.pop %v2350
    %v2352 = vadd.f32 %v2349, 1.0
    %v2353 = vadd.f32 %v2351, 1.0
    %v2354 = vrcp.pop %v2352
    %v2355 = vmul.f32 1.0, %v2354
    %v2356 = vrcp.pop %v2353
    %v2357 = vmul.f32 1.0, %v2356
    %v2358 = vmul.f32 %v2341, %v2194
    %v2359 = vmul.f32 %v2343, %v2195
    %v2360 = vmul.f32 %v2329, %v2344
    %v2361 = vmul.f32 %v2331, %v2345
    %v2362 = vadd.f32 %v2358, %v2360
    %v2363 = vadd.f32 %v2359, %v2361
    %v2364 = vtanh.pop %v2362
    %v2365 = vtanh.pop %v2363
    %v2366 = vmul.f32 %v2355, %v2364
    %v2367 = vmul.f32 %v2357, %v2365
    %v2368 = vpack.c.bf16 %v2367, %v2366
    %v2370 = vunpack.c.l.b16 %v2368
    %v2371 = vunpack.c.h.b16 %v2368
    %v2372 = vpack.c.b16 %v2370, %v2370
    %v2373 = vpack.c.b16 %v2371, %v2371
    %s2376 = scalar_lea.vmem [#allocation3], 56
    %2377 = vst [vmem:[%s2376] sm:$0xf] %v2372
    %2378 = vst [vmem:[%s2376 + $0x4] sm:$0xf] %v2373
    %v2379 = vld [vmem:[#allocation3] sm:$0xf]
    %v2380 = vld [vmem:[#allocation3 + $0x4] sm:$0xf]
    %v2381 = vld [vmem:[#allocation3 + $0x8] sm:$0xf]
    %v2382 = vld [vmem:[#allocation3 + $0xc] sm:$0xf]
    %v2383 = vld [vmem:[#allocation3 + $0x10] sm:$0xf]
    %v2384 = vld [vmem:[#allocation3 + $0x14] sm:$0xf]
    %v2385 = vld [vmem:[#allocation3 + $0x18] sm:$0xf]
    %v2386 = vld [vmem:[#allocation3 + $0x1c] sm:$0xf]
    %v2387 = vld [vmem:[#allocation3 + $0x20] sm:$0xf]
    %v2388 = vld [vmem:[#allocation3 + $0x24] sm:$0xf]
    %v2389 = vld [vmem:[#allocation3 + $0x28] sm:$0xf]
    %v2390 = vld [vmem:[#allocation3 + $0x2c] sm:$0xf]
    %v2391 = vld [vmem:[#allocation3 + $0x30] sm:$0xf]
    %v2392 = vld [vmem:[#allocation3 + $0x34] sm:$0xf]
    %v2393 = vld [vmem:[#allocation3 + $0x38] sm:$0xf]
    %v2394 = vld [vmem:[#allocation3 + $0x3c] sm:$0xf]
    %v2395 = vld [vmem:[#allocation10] sm:$0xff]
    %v2396 = vld [vmem:[#allocation10 + $0x8] sm:$0xff]
    %v2397 = vld [vmem:[#allocation10 + $0x10] sm:$0xff]
    %v2398 = vld [vmem:[#allocation10 + $0x18] sm:$0xff]
    %v2399 = vld [vmem:[#allocation10 + $0x20] sm:$0xff]
    %v2400 = vld [vmem:[#allocation10 + $0x28] sm:$0xff]
    %v2401 = vld [vmem:[#allocation10 + $0x30] sm:$0xff]
    %v2402 = vld [vmem:[#allocation10 + $0x38] sm:$0xff]
    %v2403 = vld [vmem:[#allocation10 + $0x40] sm:$0xff]
    %v2404 = vld [vmem:[#allocation10 + $0x48] sm:$0xff]
    %v2405 = vld [vmem:[#allocation10 + $0x50] sm:$0xff]
    %v2406 = vld [vmem:[#allocation10 + $0x58] sm:$0xff]
    %v2407 = vld [vmem:[#allocation10 + $0x60] sm:$0xff]
    %v2408 = vld [vmem:[#allocation10 + $0x68] sm:$0xff]
    %v2409 = vld [vmem:[#allocation10 + $0x70] sm:$0xff]
    %v2410 = vld [vmem:[#allocation10 + $0x78] sm:$0xff]
    %v2411 = vld [vmem:[#allocation10 + $0x80] sm:$0xff]
    %v2412 = vld [vmem:[#allocation10 + $0x88] sm:$0xff]
    %v2413 = vld [vmem:[#allocation10 + $0x90] sm:$0xff]
    %v2414 = vld [vmem:[#allocation10 + $0x98] sm:$0xff]
    %v2415 = vld [vmem:[#allocation10 + $0xa0] sm:$0xff]
    %v2416 = vld [vmem:[#allocation10 + $0xa8] sm:$0xff]
    %v2417 = vld [vmem:[#allocation10 + $0xb0] sm:$0xff]
    %v2418 = vld [vmem:[#allocation10 + $0xb8] sm:$0xff]
    %v2419 = vld [vmem:[#allocation10 + $0xc0] sm:$0xff]
    %v2420 = vld [vmem:[#allocation10 + $0xc8] sm:$0xff]
    %v2421 = vld [vmem:[#allocation10 + $0xd0] sm:$0xff]
    %v2422 = vld [vmem:[#allocation10 + $0xd8] sm:$0xff]
    %v2423 = vld [vmem:[#allocation10 + $0xe0] sm:$0xff]
    %v2424 = vld [vmem:[#allocation10 + $0xe8] sm:$0xff]
    %v2425 = vld [vmem:[#allocation10 + $0xf0] sm:$0xff]
    %v2426 = vld [vmem:[#allocation10 + $0xf8] sm:$0xff]
    %v2427 = vld [vmem:[%s6] sm:$0xf]
    %v2429 = vlaneseq
    %v2430 = vshrl.u32 %v2429, 7
    %v2431 = vsub.s32 0, %v2430
    %v2432 = vrot.slane %v2427, %v2431
    %v2433 = vlaneseq
    %v2434 = vshrl.u32 %v2433, 7
    %v2435 = vsub.s32 1, %v2434
    %v2436 = vrot.slane %v2427, %v2435
    %v2437 = vlaneseq
    %v2438 = vshrl.u32 %v2437, 7
    %v2439 = vsub.s32 2, %v2438
    %v2440 = vrot.slane %v2427, %v2439
    %v2441 = vlaneseq
    %v2442 = vshrl.u32 %v2441, 7
    %v2443 = vsub.s32 3, %v2442
    %v2444 = vrot.slane %v2427, %v2443
    %v2465 = vunpack.c.l.b16 %v2379
    %v2466 = vunpack.c.l.b16 %v2380
    %v2467 = vunpack.c.l.b16 %v2381
    %v2468 = vunpack.c.l.b16 %v2382
    %v2469 = vunpack.c.l.b16 %v2383
    %v2470 = vunpack.c.l.b16 %v2384
    %v2471 = vunpack.c.l.b16 %v2385
    %v2472 = vunpack.c.l.b16 %v2386
    %v2473 = vunpack.c.l.b16 %v2387
    %v2474 = vunpack.c.l.b16 %v2388
    %v2475 = vunpack.c.l.b16 %v2389
    %v2476 = vunpack.c.l.b16 %v2390
    %v2477 = vunpack.c.l.b16 %v2391
    %v2478 = vunpack.c.l.b16 %v2392
    %v2479 = vunpack.c.l.b16 %v2393
    %v2480 = vunpack.c.l.b16 %v2394
    %v2481 = vpack.c.b16 %v2466, %v2465
    %v2482 = vpack.c.b16 %v2468, %v2467
    %v2483 = vpack.c.b16 %v2470, %v2469
    %v2484 = vpack.c.b16 %v2472, %v2471
    %v2485 = vpack.c.b16 %v2474, %v2473
    %v2486 = vpack.c.b16 %v2476, %v2475
    %v2487 = vpack.c.b16 %v2478, %v2477
    %v2488 = vpack.c.b16 %v2480, %v2479
    %v2529 = vunpack.c.l.b16 %v2395
    %v2530 = vunpack.c.h.b16 %v2395
    %v2531 = vunpack.c.l.b16 %v2396
    %v2532 = vunpack.c.h.b16 %v2396
    %v2533 = vunpack.c.l.b16 %v2397
    %v2534 = vunpack.c.h.b16 %v2397
    %v2535 = vunpack.c.l.b16 %v2398
    %v2536 = vunpack.c.h.b16 %v2398
    %v2537 = vunpack.c.l.b16 %v2399
    %v2538 = vunpack.c.h.b16 %v2399
    %v2539 = vunpack.c.l.b16 %v2400
    %v2540 = vunpack.c.h.b16 %v2400
    %v2541 = vunpack.c.l.b16 %v2401
    %v2542 = vunpack.c.h.b16 %v2401
    %v2543 = vunpack.c.l.b16 %v2402
    %v2544 = vunpack.c.h.b16 %v2402
    %v2545 = vunpack.c.l.b16 %v2403
    %v2546 = vunpack.c.h.b16 %v2403
    %v2547 = vunpack.c.l.b16 %v2404
    %v2548 = vunpack.c.h.b16 %v2404
    %v2549 = vunpack.c.l.b16 %v2405
    %v2550 = vunpack.c.h.b16 %v2405
    %v2551 = vunpack.c.l.b16 %v2406
    %v2552 = vunpack.c.h.b16 %v2406
    %v2553 = vunpack.c.l.b16 %v2407
    %v2554 = vunpack.c.h.b16 %v2407
    %v2555 = vunpack.c.l.b16 %v2408
    %v2556 = vunpack.c.h.b16 %v2408
    %v2557 = vunpack.c.l.b16 %v2409
    %v2558 = vunpack.c.h.b16 %v2409
    %v2559 = vunpack.c.l.b16 %v2410
    %v2560 = vunpack.c.h.b16 %v2410
    %v2561 = vunpack.c.l.b16 %v2411
    %v2562 = vunpack.c.h.b16 %v2411
    %v2563 = vunpack.c.l.b16 %v2412
    %v2564 = vunpack.c.h.b16 %v2412
    %v2565 = vunpack.c.l.b16 %v2413
    %v2566 = vunpack.c.h.b16 %v2413
    %v2567 = vunpack.c.l.b16 %v2414
    %v2568 = vunpack.c.h.b16 %v2414
    %v2569 = vunpack.c.l.b16 %v2415
    %v2570 = vunpack.c.h.b16 %v2415
    %v2571 = vunpack.c.l.b16 %v2416
    %v2572 = vunpack.c.h.b16 %v2416
    %v2573 = vunpack.c.l.b16 %v2417
    %v2574 = vunpack.c.h.b16 %v2417
    %v2575 = vunpack.c.l.b16 %v2418
    %v2576 = vunpack.c.h.b16 %v2418
    %v2577 = vunpack.c.l.b16 %v2419
    %v2578 = vunpack.c.h.b16 %v2419
    %v2579 = vunpack.c.l.b16 %v2420
    %v2580 = vunpack.c.h.b16 %v2420
    %v2581 = vunpack.c.l.b16 %v2421
    %v2582 = vunpack.c.h.b16 %v2421
    %v2583 = vunpack.c.l.b16 %v2422
    %v2584 = vunpack.c.h.b16 %v2422
    %v2585 = vunpack.c.l.b16 %v2423
    %v2586 = vunpack.c.h.b16 %v2423
    %v2587 = vunpack.c.l.b16 %v2424
    %v2588 = vunpack.c.h.b16 %v2424
    %v2589 = vunpack.c.l.b16 %v2425
    %v2590 = vunpack.c.h.b16 %v2425
    %v2591 = vunpack.c.l.b16 %v2426
    %v2592 = vunpack.c.h.b16 %v2426
    %v2593 = vpack.c.b16 %v2533, %v2529
    %v2594 = vpack.c.b16 %v2534, %v2530
    %v2595 = vpack.c.b16 %v2535, %v2531
    %v2596 = vpack.c.b16 %v2536, %v2532
    %v2597 = vpack.c.b16 %v2541, %v2537
    %v2598 = vpack.c.b16 %v2542, %v2538
    %v2599 = vpack.c.b16 %v2543, %v2539
    %v2600 = vpack.c.b16 %v2544, %v2540
    %v2601 = vpack.c.b16 %v2549, %v2545
    %v2602 = vpack.c.b16 %v2550, %v2546
    %v2603 = vpack.c.b16 %v2551, %v2547
    %v2604 = vpack.c.b16 %v2552, %v2548
    %v2605 = vpack.c.b16 %v2557, %v2553
    %v2606 = vpack.c.b16 %v2558, %v2554
    %v2607 = vpack.c.b16 %v2559, %v2555
    %v2608 = vpack.c.b16 %v2560, %v2556
    %v2609 = vpack.c.b16 %v2565, %v2561
    %v2610 = vpack.c.b16 %v2566, %v2562
    %v2611 = vpack.c.b16 %v2567, %v2563
    %v2612 = vpack.c.b16 %v2568, %v2564
    %v2613 = vpack.c.b16 %v2573, %v2569
    %v2614 = vpack.c.b16 %v2574, %v2570
    %v2615 = vpack.c.b16 %v2575, %v2571
    %v2616 = vpack.c.b16 %v2576, %v2572
    %v2617 = vpack.c.b16 %v2581, %v2577
    %v2618 = vpack.c.b16 %v2582, %v2578
    %v2619 = vpack.c.b16 %v2583, %v2579
    %v2620 = vpack.c.b16 %v2584, %v2580
    %v2621 = vpack.c.b16 %v2589, %v2585
    %v2622 = vpack.c.b16 %v2590, %v2586
    %v2623 = vpack.c.b16 %v2591, %v2587
    %v2624 = vpack.c.b16 %v2592, %v2588
    %2657 = vmatprep.subr.bf16.mxu0 %v2622
    %2658 = vmatpush1.bf16.msra.mxu0 %v2621
    %2659 = vmatprep.subr.bf16.mxu0 %v2618
    %2660 = vmatpush1.bf16.msra.mxu0 %v2617
    %2661 = vmatprep.subr.bf16.mxu0 %v2614
    %2662 = vmatpush1.bf16.msra.mxu0 %v2613
    %2663 = vmatprep.subr.bf16.mxu0 %v2610
    %2664 = vmatpush1.bf16.msra.mxu0 %v2609
    %2665 = vmatprep.subr.bf16.mxu0 %v2606
    %2666 = vmatpush1.bf16.msra.mxu0 %v2605
    %2667 = vmatprep.subr.bf16.mxu0 %v2602
    %2668 = vmatpush1.bf16.msra.mxu0 %v2601
    %2669 = vmatprep.subr.bf16.mxu0 %v2598
    %2670 = vmatpush1.bf16.msra.mxu0 %v2597
    %2671 = vmatprep.subr.bf16.mxu0 %v2594
    %2672 = vmatpush1.bf16.msra.mxu0 %v2593
    %2673 = vmatprep.subr.bf16.mxu0 0
    %2674 = vmatpush2.bf16.msra.mxu0 0
    %2675 = vmatprep.subr.bf16.mxu0 0
    %2676 = vmatpush2.bf16.msra.mxu0 0
    %2677 = vmatprep.subr.bf16.mxu0 0
    %2678 = vmatpush2.bf16.msra.mxu0 0
    %2679 = vmatprep.subr.bf16.mxu0 0
    %2680 = vmatpush2.bf16.msra.mxu0 0
    %2681 = vmatprep.subr.bf16.mxu0 0
    %2682 = vmatpush2.bf16.msra.mxu0 0
    %2683 = vmatprep.subr.bf16.mxu0 0
    %2684 = vmatpush2.bf16.msra.mxu0 0
    %2685 = vmatprep.subr.bf16.mxu0 0
    %2686 = vmatpush2.bf16.msra.mxu0 0
    %2687 = vmatprep.subr.bf16.mxu0 0
    %2688 = vmatpush2.bf16.msra.mxu0 0
    %2689 = vmatprep.mubr.bf16.mxu0 0
    %2690 = vmatmul.mubr.bf16.gmra.mxu0 %v2481
    %v2691 = vpop.f32.mrf.mxu0
    %v2692 = vadd.f32 %v2432, %v2691
    %v2693 = vpop.f32.mrf.mxu0
    %v2694 = vadd.f32 %v2436, %v2693
    %v2695 = vpop.f32.mrf.mxu0
    %v2696 = vadd.f32 %v2432, %v2695
    %v2697 = vpop.f32.mrf.mxu0
    %v2698 = vadd.f32 %v2436, %v2697
    %2699 = vmatprep.mubr.bf16.mxu0 0
    %2700 = vmatmul.mubr.bf16.gmra.mxu0 %v2482
    %v2701 = vpop.f32.mrf.mxu0
    %v2702 = vadd.f32 %v2432, %v2701
    %v2703 = vpop.f32.mrf.mxu0
    %v2704 = vadd.f32 %v2436, %v2703
    %v2705 = vpop.f32.mrf.mxu0
    %v2706 = vadd.f32 %v2432, %v2705
    %v2707 = vpop.f32.mrf.mxu0
    %v2708 = vadd.f32 %v2436, %v2707
    %2709 = vmatprep.mubr.bf16.mxu0 0
    %2710 = vmatmul.mubr.bf16.gmra.mxu0 %v2483
    %v2711 = vpop.f32.mrf.mxu0
    %v2712 = vadd.f32 %v2432, %v2711
    %v2713 = vpop.f32.mrf.mxu0
    %v2714 = vadd.f32 %v2436, %v2713
    %v2715 = vpop.f32.mrf.mxu0
    %v2716 = vadd.f32 %v2432, %v2715
    %v2717 = vpop.f32.mrf.mxu0
    %v2718 = vadd.f32 %v2436, %v2717
    %2719 = vmatprep.mubr.bf16.mxu0 0
    %2720 = vmatmul.mubr.bf16.gmra.mxu0 %v2484
    %v2721 = vpop.f32.mrf.mxu0
    %v2722 = vadd.f32 %v2432, %v2721
    %v2723 = vpop.f32.mrf.mxu0
    %v2724 = vadd.f32 %v2436, %v2723
    %v2725 = vpop.f32.mrf.mxu0
    %v2726 = vadd.f32 %v2432, %v2725
    %v2727 = vpop.f32.mrf.mxu0
    %v2728 = vadd.f32 %v2436, %v2727
    %2729 = vmatprep.mubr.bf16.mxu0 0
    %2730 = vmatmul.mubr.bf16.gmra.mxu0 %v2485
    %v2731 = vpop.f32.mrf.mxu0
    %v2732 = vadd.f32 %v2432, %v2731
    %v2733 = vpop.f32.mrf.mxu0
    %v2734 = vadd.f32 %v2436, %v2733
    %v2735 = vpop.f32.mrf.mxu0
    %v2736 = vadd.f32 %v2432, %v2735
    %v2737 = vpop.f32.mrf.mxu0
    %v2738 = vadd.f32 %v2436, %v2737
    %2739 = vmatprep.mubr.bf16.mxu0 0
    %2740 = vmatmul.mubr.bf16.gmra.mxu0 %v2486
    %v2741 = vpop.f32.mrf.mxu0
    %v2742 = vadd.f32 %v2432, %v2741
    %v2743 = vpop.f32.mrf.mxu0
    %v2744 = vadd.f32 %v2436, %v2743
    %v2745 = vpop.f32.mrf.mxu0
    %v2746 = vadd.f32 %v2432, %v2745
    %v2747 = vpop.f32.mrf.mxu0
    %v2748 = vadd.f32 %v2436, %v2747
    %2749 = vmatprep.mubr.bf16.mxu0 0
    %2750 = vmatmul.mubr.bf16.gmra.mxu0 %v2487
    %v2751 = vpop.f32.mrf.mxu0
    %v2752 = vadd.f32 %v2432, %v2751
    %v2753 = vpop.f32.mrf.mxu0
    %v2754 = vadd.f32 %v2436, %v2753
    %v2755 = vpop.f32.mrf.mxu0
    %v2756 = vadd.f32 %v2432, %v2755
    %v2757 = vpop.f32.mrf.mxu0
    %v2758 = vadd.f32 %v2436, %v2757
    %2759 = vmatprep.mubr.bf16.mxu0 0
    %2760 = vmatmul.mubr.bf16.gmra.mxu0 %v2488
    %v2761 = vpop.f32.mrf.mxu0
    %v2762 = vadd.f32 %v2432, %v2761
    %v2763 = vpop.f32.mrf.mxu0
    %v2764 = vadd.f32 %v2436, %v2763
    %v2765 = vpop.f32.mrf.mxu0
    %v2766 = vadd.f32 %v2432, %v2765
    %v2767 = vpop.f32.mrf.mxu0
    %v2768 = vadd.f32 %v2436, %v2767
    %2769 = vdwg.mxu0
    %2770 = vmatprep.subr.bf16.mxu0 %v2624
    %2771 = vmatpush1.bf16.msra.mxu0 %v2623
    %2772 = vmatprep.subr.bf16.mxu0 %v2620
    %2773 = vmatpush1.bf16.msra.mxu0 %v2619
    %2774 = vmatprep.subr.bf16.mxu0 %v2616
    %2775 = vmatpush1.bf16.msra.mxu0 %v2615
    %2776 = vmatprep.subr.bf16.mxu0 %v2612
    %2777 = vmatpush1.bf16.msra.mxu0 %v2611
    %2778 = vmatprep.subr.bf16.mxu0 %v2608
    %2779 = vmatpush1.bf16.msra.mxu0 %v2607
    %2780 = vmatprep.subr.bf16.mxu0 %v2604
    %2781 = vmatpush1.bf16.msra.mxu0 %v2603
    %2782 = vmatprep.subr.bf16.mxu0 %v2600
    %2783 = vmatpush1.bf16.msra.mxu0 %v2599
    %2784 = vmatprep.subr.bf16.mxu0 %v2596
    %2785 = vmatpush1.bf16.msra.mxu0 %v2595
    %2786 = vmatprep.subr.bf16.mxu0 0
    %2787 = vmatpush2.bf16.msra.mxu0 0
    %2788 = vmatprep.subr.bf16.mxu0 0
    %2789 = vmatpush2.bf16.msra.mxu0 0
    %2790 = vmatprep.subr.bf16.mxu0 0
    %2791 = vmatpush2.bf16.msra.mxu0 0
    %2792 = vmatprep.subr.bf16.mxu0 0
    %2793 = vmatpush2.bf16.msra.mxu0 0
    %2794 = vmatprep.subr.bf16.mxu0 0
    %2795 = vmatpush2.bf16.msra.mxu0 0
    %2796 = vmatprep.subr.bf16.mxu0 0
    %2797 = vmatpush2.bf16.msra.mxu0 0
    %2798 = vmatprep.subr.bf16.mxu0 0
    %2799 = vmatpush2.bf16.msra.mxu0 0
    %2800 = vmatprep.subr.bf16.mxu0 0
    %2801 = vmatpush2.bf16.msra.mxu0 0
    %2802 = vmatprep.mubr.bf16.mxu0 0
    %2803 = vmatmul.mubr.bf16.gmra.mxu0 %v2481
    %v2804 = vpop.f32.mrf.mxu0
    %v2805 = vadd.f32 %v2440, %v2804
    %v2806 = vpop.f32.mrf.mxu0
    %v2807 = vadd.f32 %v2444, %v2806
    %v2808 = vpop.f32.mrf.mxu0
    %v2809 = vadd.f32 %v2440, %v2808
    %v2810 = vpop.f32.mrf.mxu0
    %v2811 = vadd.f32 %v2444, %v2810
    %2812 = vmatprep.mubr.bf16.mxu0 0
    %2813 = vmatmul.mubr.bf16.gmra.mxu0 %v2482
    %v2814 = vpop.f32.mrf.mxu0
    %v2815 = vadd.f32 %v2440, %v2814
    %v2816 = vpop.f32.mrf.mxu0
    %v2817 = vadd.f32 %v2444, %v2816
    %v2818 = vpop.f32.mrf.mxu0
    %v2819 = vadd.f32 %v2440, %v2818
    %v2820 = vpop.f32.mrf.mxu0
    %v2821 = vadd.f32 %v2444, %v2820
    %2822 = vmatprep.mubr.bf16.mxu0 0
    %2823 = vmatmul.mubr.bf16.gmra.mxu0 %v2483
    %v2824 = vpop.f32.mrf.mxu0
    %v2825 = vadd.f32 %v2440, %v2824
    %v2826 = vpop.f32.mrf.mxu0
    %v2827 = vadd.f32 %v2444, %v2826
    %v2828 = vpop.f32.mrf.mxu0
    %v2829 = vadd.f32 %v2440, %v2828
    %v2830 = vpop.f32.mrf.mxu0
    %v2831 = vadd.f32 %v2444, %v2830
    %2832 = vmatprep.mubr.bf16.mxu0 0
    %2833 = vmatmul.mubr.bf16.gmra.mxu0 %v2484
    %v2834 = vpop.f32.mrf.mxu0
    %v2835 = vadd.f32 %v2440, %v2834
    %v2836 = vpop.f32.mrf.mxu0
    %v2837 = vadd.f32 %v2444, %v2836
    %v2838 = vpop.f32.mrf.mxu0
    %v2839 = vadd.f32 %v2440, %v2838
    %v2840 = vpop.f32.mrf.mxu0
    %v2841 = vadd.f32 %v2444, %v2840
    %2842 = vmatprep.mubr.bf16.mxu0 0
    %2843 = vmatmul.mubr.bf16.gmra.mxu0 %v2485
    %v2844 = vpop.f32.mrf.mxu0
    %v2845 = vadd.f32 %v2440, %v2844
    %v2846 = vpop.f32.mrf.mxu0
    %v2847 = vadd.f32 %v2444, %v2846
    %v2848 = vpop.f32.mrf.mxu0
    %v2849 = vadd.f32 %v2440, %v2848
    %v2850 = vpop.f32.mrf.mxu0
    %v2851 = vadd.f32 %v2444, %v2850
    %2852 = vmatprep.mubr.bf16.mxu0 0
    %2853 = vmatmul.mubr.bf16.gmra.mxu0 %v2486
    %v2854 = vpop.f32.mrf.mxu0
    %v2855 = vadd.f32 %v2440, %v2854
    %v2856 = vpop.f32.mrf.mxu0
    %v2857 = vadd.f32 %v2444, %v2856
    %v2858 = vpop.f32.mrf.mxu0
    %v2859 = vadd.f32 %v2440, %v2858
    %v2860 = vpop.f32.mrf.mxu0
    %v2861 = vadd.f32 %v2444, %v2860
    %2862 = vmatprep.mubr.bf16.mxu0 0
    %2863 = vmatmul.mubr.bf16.gmra.mxu0 %v2487
    %v2864 = vpop.f32.mrf.mxu0
    %v2865 = vadd.f32 %v2440, %v2864
    %v2866 = vpop.f32.mrf.mxu0
    %v2867 = vadd.f32 %v2444, %v2866
    %v2868 = vpop.f32.mrf.mxu0
    %v2869 = vadd.f32 %v2440, %v2868
    %v2870 = vpop.f32.mrf.mxu0
    %v2871 = vadd.f32 %v2444, %v2870
    %2872 = vmatprep.mubr.bf16.mxu0 0
    %2873 = vmatmul.mubr.bf16.gmra.mxu0 %v2488
    %v2874 = vpop.f32.mrf.mxu0
    %v2875 = vadd.f32 %v2440, %v2874
    %v2876 = vpop.f32.mrf.mxu0
    %v2877 = vadd.f32 %v2444, %v2876
    %v2878 = vpop.f32.mrf.mxu0
    %v2879 = vadd.f32 %v2440, %v2878
    %v2880 = vpop.f32.mrf.mxu0
    %v2881 = vadd.f32 %v2444, %v2880
    %2882 = vdwg.mxu0
    %v2883 = vpack.c.bf16 %v2696, %v2692
    %v2884 = vpack.c.bf16 %v2698, %v2694
    %v2885 = vpack.c.bf16 %v2809, %v2805
    %v2886 = vpack.c.bf16 %v2811, %v2807
    %v2887 = vpack.c.bf16 %v2706, %v2702
    %v2888 = vpack.c.bf16 %v2708, %v2704
    %v2889 = vpack.c.bf16 %v2819, %v2815
    %v2890 = vpack.c.bf16 %v2821, %v2817
    %v2891 = vpack.c.bf16 %v2716, %v2712
    %v2892 = vpack.c.bf16 %v2718, %v2714
    %v2893 = vpack.c.bf16 %v2829, %v2825
    %v2894 = vpack.c.bf16 %v2831, %v2827
    %v2895 = vpack.c.bf16 %v2726, %v2722
    %v2896 = vpack.c.bf16 %v2728, %v2724
    %v2897 = vpack.c.bf16 %v2839, %v2835
    %v2898 = vpack.c.bf16 %v2841, %v2837
    %v2899 = vpack.c.bf16 %v2736, %v2732
    %v2900 = vpack.c.bf16 %v2738, %v2734
    %v2901 = vpack.c.bf16 %v2849, %v2845
    %v2902 = vpack.c.bf16 %v2851, %v2847
    %v2903 = vpack.c.bf16 %v2746, %v2742
    %v2904 = vpack.c.bf16 %v2748, %v2744
    %v2905 = vpack.c.bf16 %v2859, %v2855
    %v2906 = vpack.c.bf16 %v2861, %v2857
    %v2907 = vpack.c.bf16 %v2756, %v2752
    %v2908 = vpack.c.bf16 %v2758, %v2754
    %v2909 = vpack.c.bf16 %v2869, %v2865
    %v2910 = vpack.c.bf16 %v2871, %v2867
    %v2911 = vpack.c.bf16 %v2766, %v2762
    %v2912 = vpack.c.bf16 %v2768, %v2764
    %v2913 = vpack.c.bf16 %v2879, %v2875
    %v2914 = vpack.c.bf16 %v2881, %v2877
    %v2947 = vunpack.c.l.b16 %v2883
    %v2948 = vunpack.c.l.b16 %v2884
    %v2949 = vunpack.c.l.b16 %v2885
    %v2950 = vunpack.c.l.b16 %v2886
    %v2951 = vunpack.c.h.b16 %v2883
    %v2952 = vunpack.c.h.b16 %v2884
    %v2953 = vunpack.c.h.b16 %v2885
    %v2954 = vunpack.c.h.b16 %v2886
    %v2955 = vunpack.c.l.b16 %v2887
    %v2956 = vunpack.c.l.b16 %v2888
    %v2957 = vunpack.c.l.b16 %v2889
    %v2958 = vunpack.c.l.b16 %v2890
    %v2959 = vunpack.c.h.b16 %v2887
    %v2960 = vunpack.c.h.b16 %v2888
    %v2961 = vunpack.c.h.b16 %v2889
    %v2962 = vunpack.c.h.b16 %v2890
    %v2963 = vunpack.c.l.b16 %v2891
    %v2964 = vunpack.c.l.b16 %v2892
    %v2965 = vunpack.c.l.b16 %v2893
    %v2966 = vunpack.c.l.b16 %v2894
    %v2967 = vunpack.c.h.b16 %v2891
    %v2968 = vunpack.c.h.b16 %v2892
    %v2969 = vunpack.c.h.b16 %v2893
    %v2970 = vunpack.c.h.b16 %v2894
    %v2971 = vunpack.c.l.b16 %v2895
    %v2972 = vunpack.c.l.b16 %v2896
    %v2973 = vunpack.c.l.b16 %v2897
    %v2974 = vunpack.c.l.b16 %v2898
    %v2975 = vunpack.c.h.b16 %v2895
    %v2976 = vunpack.c.h.b16 %v2896
    %v2977 = vunpack.c.h.b16 %v2897
    %v2978 = vunpack.c.h.b16 %v2898
    %v2979 = vunpack.c.l.b16 %v2899
    %v2980 = vunpack.c.l.b16 %v2900
    %v2981 = vunpack.c.l.b16 %v2901
    %v2982 = vunpack.c.l.b16 %v2902
    %v2983 = vunpack.c.h.b16 %v2899
    %v2984 = vunpack.c.h.b16 %v2900
    %v2985 = vunpack.c.h.b16 %v2901
    %v2986 = vunpack.c.h.b16 %v2902
    %v2987 = vunpack.c.l.b16 %v2903
    %v2988 = vunpack.c.l.b16 %v2904
    %v2989 = vunpack.c.l.b16 %v2905
    %v2990 = vunpack.c.l.b16 %v2906
    %v2991 = vunpack.c.h.b16 %v2903
    %v2992 = vunpack.c.h.b16 %v2904
    %v2993 = vunpack.c.h.b16 %v2905
    %v2994 = vunpack.c.h.b16 %v2906
    %v2995 = vunpack.c.l.b16 %v2907
    %v2996 = vunpack.c.l.b16 %v2908
    %v2997 = vunpack.c.l.b16 %v2909
    %v2998 = vunpack.c.l.b16 %v2910
    %v2999 = vunpack.c.h.b16 %v2907
    %v3000 = vunpack.c.h.b16 %v2908
    %v3001 = vunpack.c.h.b16 %v2909
    %v3002 = vunpack.c.h.b16 %v2910
    %v3003 = vunpack.c.l.b16 %v2911
    %v3004 = vunpack.c.l.b16 %v2912
    %v3005 = vunpack.c.l.b16 %v2913
    %v3006 = vunpack.c.l.b16 %v2914
    %v3007 = vunpack.c.h.b16 %v2911
    %v3008 = vunpack.c.h.b16 %v2912
    %v3009 = vunpack.c.h.b16 %v2913
    %v3010 = vunpack.c.h.b16 %v2914
    %v3011 = vpack.c.b16 %v2948, %v2947
    %v3012 = vpack.c.b16 %v2950, %v2949
    %v3013 = vpack.c.b16 %v2952, %v2951
    %v3014 = vpack.c.b16 %v2954, %v2953
    %v3015 = vpack.c.b16 %v2956, %v2955
    %v3016 = vpack.c.b16 %v2958, %v2957
    %v3017 = vpack.c.b16 %v2960, %v2959
    %v3018 = vpack.c.b16 %v2962, %v2961
    %v3019 = vpack.c.b16 %v2964, %v2963
    %v3020 = vpack.c.b16 %v2966, %v2965
    %v3021 = vpack.c.b16 %v2968, %v2967
    %v3022 = vpack.c.b16 %v2970, %v2969
    %v3023 = vpack.c.b16 %v2972, %v2971
    %v3024 = vpack.c.b16 %v2974, %v2973
    %v3025 = vpack.c.b16 %v2976, %v2975
    %v3026 = vpack.c.b16 %v2978, %v2977
    %v3027 = vpack.c.b16 %v2980, %v2979
    %v3028 = vpack.c.b16 %v2982, %v2981
    %v3029 = vpack.c.b16 %v2984, %v2983
    %v3030 = vpack.c.b16 %v2986, %v2985
    %v3031 = vpack.c.b16 %v2988, %v2987
    %v3032 = vpack.c.b16 %v2990, %v2989
    %v3033 = vpack.c.b16 %v2992, %v2991
    %v3034 = vpack.c.b16 %v2994, %v2993
    %v3035 = vpack.c.b16 %v2996, %v2995
    %v3036 = vpack.c.b16 %v2998, %v2997
    %v3037 = vpack.c.b16 %v3000, %v2999
    %v3038 = vpack.c.b16 %v3002, %v3001
    %v3039 = vpack.c.b16 %v3004, %v3003
    %v3040 = vpack.c.b16 %v3006, %v3005
    %v3041 = vpack.c.b16 %v3008, %v3007
    %v3042 = vpack.c.b16 %v3010, %v3009
    %3075 = vst [vmem:[#allocation2] sm:$0xff] %v3011
    %3076 = vst [vmem:[#allocation2 + $0x8] sm:$0xff] %v3012
    %3077 = vst [vmem:[#allocation2 + $0x10] sm:$0xff] %v3013
    %3078 = vst [vmem:[#allocation2 + $0x18] sm:$0xff] %v3014
    %3079 = vst [vmem:[#allocation2 + $0x20] sm:$0xff] %v3015
    %3080 = vst [vmem:[#allocation2 + $0x28] sm:$0xff] %v3016
    %3081 = vst [vmem:[#allocation2 + $0x30] sm:$0xff] %v3017
    %3082 = vst [vmem:[#allocation2 + $0x38] sm:$0xff] %v3018
    %3083 = vst [vmem:[#allocation2 + $0x40] sm:$0xff] %v3019
    %3084 = vst [vmem:[#allocation2 + $0x48] sm:$0xff] %v3020
    %3085 = vst [vmem:[#allocation2 + $0x50] sm:$0xff] %v3021
    %3086 = vst [vmem:[#allocation2 + $0x58] sm:$0xff] %v3022
    %3087 = vst [vmem:[#allocation2 + $0x60] sm:$0xff] %v3023
    %3088 = vst [vmem:[#allocation2 + $0x68] sm:$0xff] %v3024
    %3089 = vst [vmem:[#allocation2 + $0x70] sm:$0xff] %v3025
    %3090 = vst [vmem:[#allocation2 + $0x78] sm:$0xff] %v3026
    %3091 = vst [vmem:[#allocation2 + $0x80] sm:$0xff] %v3027
    %3092 = vst [vmem:[#allocation2 + $0x88] sm:$0xff] %v3028
    %3093 = vst [vmem:[#allocation2 + $0x90] sm:$0xff] %v3029
    %3094 = vst [vmem:[#allocation2 + $0x98] sm:$0xff] %v3030
    %3095 = vst [vmem:[#allocation2 + $0xa0] sm:$0xff] %v3031
    %3096 = vst [vmem:[#allocation2 + $0xa8] sm:$0xff] %v3032
    %3097 = vst [vmem:[#allocation2 + $0xb0] sm:$0xff] %v3033
    %3098 = vst [vmem:[#allocation2 + $0xb8] sm:$0xff] %v3034
    %3099 = vst [vmem:[#allocation2 + $0xc0] sm:$0xff] %v3035
    %3100 = vst [vmem:[#allocation2 + $0xc8] sm:$0xff] %v3036
    %3101 = vst [vmem:[#allocation2 + $0xd0] sm:$0xff] %v3037
    %3102 = vst [vmem:[#allocation2 + $0xd8] sm:$0xff] %v3038
    %3103 = vst [vmem:[#allocation2 + $0xe0] sm:$0xff] %v3039
    %3104 = vst [vmem:[#allocation2 + $0xe8] sm:$0xff] %v3040
    %3105 = vst [vmem:[#allocation2 + $0xf0] sm:$0xff] %v3041
    %3106 = vst [vmem:[#allocation2 + $0xf8] sm:$0xff] %v3042
    %v3107 = vld [vmem:[#allocation12] sm:$0xff]
    %v3108 = vld [vmem:[#allocation12 + $0x8] sm:$0xff]
    %v3109 = vld [vmem:[#allocation12 + $0x10] sm:$0xff]
    %v3110 = vld [vmem:[#allocation12 + $0x18] sm:$0xff]
    %v3111 = vld [vmem:[#allocation12 + $0x20] sm:$0xff]
    %v3112 = vld [vmem:[#allocation12 + $0x28] sm:$0xff]
    %v3113 = vld [vmem:[#allocation12 + $0x30] sm:$0xff]
    %v3114 = vld [vmem:[#allocation12 + $0x38] sm:$0xff]
    %v3115 = vld [vmem:[#allocation12 + $0x40] sm:$0xff]
    %v3116 = vld [vmem:[#allocation12 + $0x48] sm:$0xff]
    %v3117 = vld [vmem:[#allocation12 + $0x50] sm:$0xff]
    %v3118 = vld [vmem:[#allocation12 + $0x58] sm:$0xff]
    %v3119 = vld [vmem:[#allocation12 + $0x60] sm:$0xff]
    %v3120 = vld [vmem:[#allocation12 + $0x68] sm:$0xff]
    %v3121 = vld [vmem:[#allocation12 + $0x70] sm:$0xff]
    %v3122 = vld [vmem:[#allocation12 + $0x78] sm:$0xff]
    %v3123 = vld [vmem:[#allocation12 + $0x80] sm:$0xff]
    %v3124 = vld [vmem:[#allocation12 + $0x88] sm:$0xff]
    %v3125 = vld [vmem:[#allocation12 + $0x90] sm:$0xff]
    %v3126 = vld [vmem:[#allocation12 + $0x98] sm:$0xff]
    %v3127 = vld [vmem:[#allocation12 + $0xa0] sm:$0xff]
    %v3128 = vld [vmem:[#allocation12 + $0xa8] sm:$0xff]
    %v3129 = vld [vmem:[#allocation12 + $0xb0] sm:$0xff]
    %v3130 = vld [vmem:[#allocation12 + $0xb8] sm:$0xff]
    %v3131 = vld [vmem:[#allocation12 + $0xc0] sm:$0xff]
    %v3132 = vld [vmem:[#allocation12 + $0xc8] sm:$0xff]
    %v3133 = vld [vmem:[#allocation12 + $0xd0] sm:$0xff]
    %v3134 = vld [vmem:[#allocation12 + $0xd8] sm:$0xff]
    %v3135 = vld [vmem:[#allocation12 + $0xe0] sm:$0xff]
    %v3136 = vld [vmem:[#allocation12 + $0xe8] sm:$0xff]
    %v3137 = vld [vmem:[#allocation12 + $0xf0] sm:$0xff]
    %v3138 = vld [vmem:[#allocation12 + $0xf8] sm:$0xff]
    %v3139 = vld [vmem:[%s878] sm:$0xff]
    %v3140 = vld [vmem:[%s878 + $0x8] sm:$0xff]
    %v3141 = vld [vmem:[%s878 + $0x10] sm:$0xff]
    %v3142 = vld [vmem:[%s878 + $0x18] sm:$0xff]
    %v3143 = vunpack.c.l.bf16 %v3139
    %v3144 = vunpack.c.h.bf16 %v3139
    %v3145 = vunpack.c.l.bf16 %v3140
    %v3146 = vunpack.c.h.bf16 %v3140
    %v3147 = vunpack.c.l.bf16 %v3141
    %v3148 = vunpack.c.h.bf16 %v3141
    %v3149 = vunpack.c.l.bf16 %v3142
    %v3150 = vunpack.c.h.bf16 %v3142
    %v3183 = vunpack.c.l.b16 %v3107
    %v3184 = vunpack.c.h.b16 %v3107
    %v3185 = vunpack.c.l.b16 %v3108
    %v3186 = vunpack.c.h.b16 %v3108
    %v3187 = vunpack.c.l.b16 %v3109
    %v3188 = vunpack.c.h.b16 %v3109
    %v3189 = vunpack.c.l.b16 %v3110
    %v3190 = vunpack.c.h.b16 %v3110
    %v3191 = vunpack.c.l.b16 %v3111
    %v3192 = vunpack.c.h.b16 %v3111
    %v3193 = vunpack.c.l.b16 %v3112
    %v3194 = vunpack.c.h.b16 %v3112
    %v3195 = vunpack.c.l.b16 %v3113
    %v3196 = vunpack.c.h.b16 %v3113
    %v3197 = vunpack.c.l.b16 %v3114
    %v3198 = vunpack.c.h.b16 %v3114
    %v3199 = vunpack.c.l.b16 %v3115
    %v3200 = vunpack.c.h.b16 %v3115
    %v3201 = vunpack.c.l.b16 %v3116
    %v3202 = vunpack.c.h.b16 %v3116
    %v3203 = vunpack.c.l.b16 %v3117
    %v3204 = vunpack.c.h.b16 %v3117
    %v3205 = vunpack.c.l.b16 %v3118
    %v3206 = vunpack.c.h.b16 %v3118
    %v3207 = vunpack.c.l.b16 %v3119
    %v3208 = vunpack.c.h.b16 %v3119
    %v3209 = vunpack.c.l.b16 %v3120
    %v3210 = vunpack.c.h.b16 %v3120
    %v3211 = vunpack.c.l.b16 %v3121
    %v3212 = vunpack.c.h.b16 %v3121
    %v3213 = vunpack.c.l.b16 %v3122
    %v3214 = vunpack.c.h.b16 %v3122
    %v3215 = vunpack.c.l.b16 %v3123
    %v3216 = vunpack.c.h.b16 %v3123
    %v3217 = vunpack.c.l.b16 %v3124
    %v3218 = vunpack.c.h.b16 %v3124
    %v3219 = vunpack.c.l.b16 %v3125
    %v3220 = vunpack.c.h.b16 %v3125
    %v3221 = vunpack.c.l.b16 %v3126
    %v3222 = vunpack.c.h.b16 %v3126
    %v3223 = vunpack.c.l.b16 %v3127
    %v3224 = vunpack.c.h.b16 %v3127
    %v3225 = vunpack.c.l.b16 %v3128
    %v3226 = vunpack.c.h.b16 %v3128
    %v3227 = vunpack.c.l.b16 %v3129
    %v3228 = vunpack.c.h.b16 %v3129
    %v3229 = vunpack.c.l.b16 %v3130
    %v3230 = vunpack.c.h.b16 %v3130
    %v3231 = vunpack.c.l.b16 %v3131
    %v3232 = vunpack.c.h.b16 %v3131
    %v3233 = vunpack.c.l.b16 %v3132
    %v3234 = vunpack.c.h.b16 %v3132
    %v3235 = vunpack.c.l.b16 %v3133
    %v3236 = vunpack.c.h.b16 %v3133
    %v3237 = vunpack.c.l.b16 %v3134
    %v3238 = vunpack.c.h.b16 %v3134
    %v3239 = vunpack.c.l.b16 %v3135
    %v3240 = vunpack.c.h.b16 %v3135
    %v3241 = vunpack.c.l.b16 %v3136
    %v3242 = vunpack.c.h.b16 %v3136
    %v3243 = vunpack.c.l.b16 %v3137
    %v3244 = vunpack.c.h.b16 %v3137
    %v3245 = vunpack.c.l.b16 %v3138
    %v3246 = vunpack.c.h.b16 %v3138
    %v3247 = vpack.c.b16 %v3187, %v3183
    %v3248 = vpack.c.b16 %v3188, %v3184
    %v3249 = vpack.c.b16 %v3189, %v3185
    %v3250 = vpack.c.b16 %v3190, %v3186
    %v3251 = vpack.c.b16 %v3195, %v3191
    %v3252 = vpack.c.b16 %v3196, %v3192
    %v3253 = vpack.c.b16 %v3197, %v3193
    %v3254 = vpack.c.b16 %v3198, %v3194
    %v3255 = vpack.c.b16 %v3203, %v3199
    %v3256 = vpack.c.b16 %v3204, %v3200
    %v3257 = vpack.c.b16 %v3205, %v3201
    %v3258 = vpack.c.b16 %v3206, %v3202
    %v3259 = vpack.c.b16 %v3211, %v3207
    %v3260 = vpack.c.b16 %v3212, %v3208
    %v3261 = vpack.c.b16 %v3213, %v3209
    %v3262 = vpack.c.b16 %v3214, %v3210
    %v3263 = vpack.c.b16 %v3219, %v3215
    %v3264 = vpack.c.b16 %v3220, %v3216
    %v3265 = vpack.c.b16 %v3221, %v3217
    %v3266 = vpack.c.b16 %v3222, %v3218
    %v3267 = vpack.c.b16 %v3227, %v3223
    %v3268 = vpack.c.b16 %v3228, %v3224
    %v3269 = vpack.c.b16 %v3229, %v3225
    %v3270 = vpack.c.b16 %v3230, %v3226
    %v3271 = vpack.c.b16 %v3235, %v3231
    %v3272 = vpack.c.b16 %v3236, %v3232
    %v3273 = vpack.c.b16 %v3237, %v3233
    %v3274 = vpack.c.b16 %v3238, %v3234
    %v3275 = vpack.c.b16 %v3243, %v3239
    %v3276 = vpack.c.b16 %v3244, %v3240
    %v3277 = vpack.c.b16 %v3245, %v3241
    %v3278 = vpack.c.b16 %v3246, %v3242
    %3311 = vmatprep.subr.bf16.mxu0 %v3276
    %3312 = vmatpush1.bf16.msra.mxu0 %v3275
    %3313 = vmatprep.subr.bf16.mxu0 %v3272
    %3314 = vmatpush1.bf16.msra.mxu0 %v3271
    %3315 = vmatprep.subr.bf16.mxu0 %v3268
    %3316 = vmatpush1.bf16.msra.mxu0 %v3267
    %3317 = vmatprep.subr.bf16.mxu0 %v3264
    %3318 = vmatpush1.bf16.msra.mxu0 %v3263
    %3319 = vmatprep.subr.bf16.mxu0 %v3260
    %3320 = vmatpush1.bf16.msra.mxu0 %v3259
    %3321 = vmatprep.subr.bf16.mxu0 %v3256
    %3322 = vmatpush1.bf16.msra.mxu0 %v3255
    %3323 = vmatprep.subr.bf16.mxu0 %v3252
    %3324 = vmatpush1.bf16.msra.mxu0 %v3251
    %3325 = vmatprep.subr.bf16.mxu0 %v3248
    %3326 = vmatpush1.bf16.msra.mxu0 %v3247
    %3327 = vmatprep.subr.bf16.mxu0 0
    %3328 = vmatpush2.bf16.msra.mxu0 0
    %3329 = vmatprep.subr.bf16.mxu0 0
    %3330 = vmatpush2.bf16.msra.mxu0 0
    %3331 = vmatprep.subr.bf16.mxu0 0
    %3332 = vmatpush2.bf16.msra.mxu0 0
    %3333 = vmatprep.subr.bf16.mxu0 0
    %3334 = vmatpush2.bf16.msra.mxu0 0
    %3335 = vmatprep.subr.bf16.mxu0 0
    %3336 = vmatpush2.bf16.msra.mxu0 0
    %3337 = vmatprep.subr.bf16.mxu0 0
    %3338 = vmatpush2.bf16.msra.mxu0 0
    %3339 = vmatprep.subr.bf16.mxu0 0
    %3340 = vmatpush2.bf16.msra.mxu0 0
    %3341 = vmatprep.subr.bf16.mxu0 0
    %3342 = vmatpush2.bf16.msra.mxu0 0
    %3343 = vmatprep.mubr.bf16.mxu0 0
    %3344 = vmatmul.mubr.bf16.gmra.mxu0 0
    %v3345 = vpop.f32.mrf.mxu0
    %v3346 = vadd.f32 0.0, %v3345
    %v3347 = vpop.f32.mrf.mxu0
    %v3348 = vadd.f32 0.0, %v3347
    %v3349 = vpop.f32.mrf.mxu0
    %v3350 = vadd.f32 0.0, %v3349
    %v3351 = vpop.f32.mrf.mxu0
    %v3352 = vadd.f32 0.0, %v3351
    %3353 = vdwg.mxu0
    %3354 = vmatprep.subr.bf16.mxu0 %v3278
    %3355 = vmatpush1.bf16.msra.mxu0 %v3277
    %3356 = vmatprep.subr.bf16.mxu0 %v3274
    %3357 = vmatpush1.bf16.msra.mxu0 %v3273
    %3358 = vmatprep.subr.bf16.mxu0 %v3270
    %3359 = vmatpush1.bf16.msra.mxu0 %v3269
    %3360 = vmatprep.subr.bf16.mxu0 %v3266
    %3361 = vmatpush1.bf16.msra.mxu0 %v3265
    %3362 = vmatprep.subr.bf16.mxu0 %v3262
    %3363 = vmatpush1.bf16.msra.mxu0 %v3261
    %3364 = vmatprep.subr.bf16.mxu0 %v3258
    %3365 = vmatpush1.bf16.msra.mxu0 %v3257
    %3366 = vmatprep.subr.bf16.mxu0 %v3254
    %3367 = vmatpush1.bf16.msra.mxu0 %v3253
    %3368 = vmatprep.subr.bf16.mxu0 %v3250
    %3369 = vmatpush1.bf16.msra.mxu0 %v3249
    %3370 = vmatprep.subr.bf16.mxu0 0
    %3371 = vmatpush2.bf16.msra.mxu0 0
    %3372 = vmatprep.subr.bf16.mxu0 0
    %3373 = vmatpush2.bf16.msra.mxu0 0
    %3374 = vmatprep.subr.bf16.mxu0 0
    %3375 = vmatpush2.bf16.msra.mxu0 0
    %3376 = vmatprep.subr.bf16.mxu0 0
    %3377 = vmatpush2.bf16.msra.mxu0 0
    %3378 = vmatprep.subr.bf16.mxu0 0
    %3379 = vmatpush2.bf16.msra.mxu0 0
    %3380 = vmatprep.subr.bf16.mxu0 0
    %3381 = vmatpush2.bf16.msra.mxu0 0
    %3382 = vmatprep.subr.bf16.mxu0 0
    %3383 = vmatpush2.bf16.msra.mxu0 0
    %3384 = vmatprep.subr.bf16.mxu0 0
    %3385 = vmatpush2.bf16.msra.mxu0 0
    %3386 = vmatprep.mubr.bf16.mxu0 0
    %3387 = vmatmul.mubr.bf16.gmra.mxu0 0
    %v3388 = vpop.f32.mrf.mxu0
    %v3389 = vadd.f32 0.0, %v3388
    %v3390 = vpop.f32.mrf.mxu0
    %v3391 = vadd.f32 0.0, %v3390
    %v3392 = vpop.f32.mrf.mxu0
    %v3393 = vadd.f32 0.0, %v3392
    %v3394 = vpop.f32.mrf.mxu0
    %v3395 = vadd.f32 0.0, %v3394
    %3396 = vdwg.mxu0
    %v3397 = vadd.f32 %v3143, %v3346
    %v3398 = vadd.f32 %v3144, %v3348
    %v3399 = vadd.f32 %v3145, %v3389
    %v3400 = vadd.f32 %v3146, %v3391
    %v3401 = vadd.f32 %v3147, %v3350
    %v3402 = vadd.f32 %v3148, %v3352
    %v3403 = vadd.f32 %v3149, %v3393
    %v3404 = vadd.f32 %v3150, %v3395
    %v3405 = vxor.u32 %v3397, 2147483648
    %v3406 = vxor.u32 %v3401, 2147483648
    %v3407 = vmul.f32 %v3405, 1.442695
    %v3408 = vpow.pop %v3407
    %v3409 = vmul.f32 %v3406, 1.442695
    %v3410 = vpow.pop %v3409
    %v3411 = vadd.f32 %v3408, 1.0
    %v3412 = vadd.f32 %v3410, 1.0
    %v3413 = vrcp.pop %v3411
    %v3414 = vmul.f32 1.0, %v3413
    %v3415 = vrcp.pop %v3412
    %v3416 = vmul.f32 1.0, %v3415
    %v3417 = vxor.u32 %v3398, 2147483648
    %v3418 = vxor.u32 %v3402, 2147483648
    %v3419 = vmul.f32 %v3417, 1.442695
    %v3420 = vpow.pop %v3419
    %v3421 = vmul.f32 %v3418, 1.442695
    %v3422 = vpow.pop %v3421
    %v3423 = vadd.f32 %v3420, 1.0
    %v3424 = vadd.f32 %v3422, 1.0
    %v3425 = vrcp.pop %v3423
    %v3426 = vmul.f32 1.0, %v3425
    %v3427 = vrcp.pop %v3424
    %v3428 = vmul.f32 1.0, %v3427
    %v3429 = vtanh.pop %v3399
    %v3430 = vtanh.pop %v3403
    %v3431 = vxor.u32 %v3400, 2147483648
    %v3432 = vxor.u32 %v3404, 2147483648
    %v3433 = vmul.f32 %v3431, 1.442695
    %v3434 = vpow.pop %v3433
    %v3435 = vmul.f32 %v3432, 1.442695
    %v3436 = vpow.pop %v3435
    %v3437 = vadd.f32 %v3434, 1.0
    %v3438 = vadd.f32 %v3436, 1.0
    %v3439 = vrcp.pop %v3437
    %v3440 = vmul.f32 1.0, %v3439
    %v3441 = vrcp.pop %v3438
    %v3442 = vmul.f32 1.0, %v3441
    %v3443 = vmul.f32 %v3426, 0.0
    %v3444 = vmul.f32 %v3428, 0.0
    %v3445 = vmul.f32 %v3414, %v3429
    %v3446 = vmul.f32 %v3416, %v3430
    %v3447 = vadd.f32 %v3443, %v3445
    %v3448 = vadd.f32 %v3444, %v3446
    %v3449 = vtanh.pop %v3447
    %v3450 = vtanh.pop %v3448
    %v3451 = vmul.f32 %v3440, %v3449
    %v3452 = vmul.f32 %v3442, %v3450
    %v3453 = vld [vmem:[%s1205] sm:$0xff]
    %v3454 = vld [vmem:[%s1205 + $0x8] sm:$0xff]
    %v3455 = vld [vmem:[%s1205 + $0x10] sm:$0xff]
    %v3456 = vld [vmem:[%s1205 + $0x18] sm:$0xff]
    %v3457 = vunpack.c.l.bf16 %v3453
    %v3458 = vunpack.c.h.bf16 %v3453
    %v3459 = vunpack.c.l.bf16 %v3454
    %v3460 = vunpack.c.h.bf16 %v3454
    %v3461 = vunpack.c.l.bf16 %v3455
    %v3462 = vunpack.c.h.bf16 %v3455
    %v3463 = vunpack.c.l.bf16 %v3456
    %v3464 = vunpack.c.h.bf16 %v3456
    %v3465 = vpack.c.bf16 %v3452, %v3451
    %3466 = vmatprep.subr.bf16.mxu0 %v3276
    %3467 = vmatpush1.bf16.msra.mxu0 %v3275
    %3468 = vmatprep.subr.bf16.mxu0 %v3272
    %3469 = vmatpush1.bf16.msra.mxu0 %v3271
    %3470 = vmatprep.subr.bf16.mxu0 %v3268
    %3471 = vmatpush1.bf16.msra.mxu0 %v3267
    %3472 = vmatprep.subr.bf16.mxu0 %v3264
    %3473 = vmatpush1.bf16.msra.mxu0 %v3263
    %3474 = vmatprep.subr.bf16.mxu0 %v3260
    %3475 = vmatpush1.bf16.msra.mxu0 %v3259
    %3476 = vmatprep.subr.bf16.mxu0 %v3256
    %3477 = vmatpush1.bf16.msra.mxu0 %v3255
    %3478 = vmatprep.subr.bf16.mxu0 %v3252
    %3479 = vmatpush1.bf16.msra.mxu0 %v3251
    %3480 = vmatprep.subr.bf16.mxu0 %v3248
    %3481 = vmatpush1.bf16.msra.mxu0 %v3247
    %3482 = vmatprep.subr.bf16.mxu0 0
    %3483 = vmatpush2.bf16.msra.mxu0 0
    %3484 = vmatprep.subr.bf16.mxu0 0
    %3485 = vmatpush2.bf16.msra.mxu0 0
    %3486 = vmatprep.subr.bf16.mxu0 0
    %3487 = vmatpush2.bf16.msra.mxu0 0
    %3488 = vmatprep.subr.bf16.mxu0 0
    %3489 = vmatpush2.bf16.msra.mxu0 0
    %3490 = vmatprep.subr.bf16.mxu0 0
    %3491 = vmatpush2.bf16.msra.mxu0 0
    %3492 = vmatprep.subr.bf16.mxu0 0
    %3493 = vmatpush2.bf16.msra.mxu0 0
    %3494 = vmatprep.subr.bf16.mxu0 0
    %3495 = vmatpush2.bf16.msra.mxu0 0
    %3496 = vmatprep.subr.bf16.mxu0 0
    %3497 = vmatpush2.bf16.msra.mxu0 0
    %3498 = vmatprep.mubr.bf16.mxu0 0
    %3499 = vmatmul.mubr.bf16.gmra.mxu0 %v3465
    %v3500 = vpop.f32.mrf.mxu0
    %v3501 = vadd.f32 0.0, %v3500
    %v3502 = vpop.f32.mrf.mxu0
    %v3503 = vadd.f32 0.0, %v3502
    %v3504 = vpop.f32.mrf.mxu0
    %v3505 = vadd.f32 0.0, %v3504
    %v3506 = vpop.f32.mrf.mxu0
    %v3507 = vadd.f32 0.0, %v3506
    %3508 = vdwg.mxu0
    %3509 = vmatprep.subr.bf16.mxu0 %v3278
    %3510 = vmatpush1.bf16.msra.mxu0 %v3277
    %3511 = vmatprep.subr.bf16.mxu0 %v3274
    %3512 = vmatpush1.bf16.msra.mxu0 %v3273
    %3513 = vmatprep.subr.bf16.mxu0 %v3270
    %3514 = vmatpush1.bf16.msra.mxu0 %v3269
    %3515 = vmatprep.subr.bf16.mxu0 %v3266
    %3516 = vmatpush1.bf16.msra.mxu0 %v3265
    %3517 = vmatprep.subr.bf16.mxu0 %v3262
    %3518 = vmatpush1.bf16.msra.mxu0 %v3261
    %3519 = vmatprep.subr.bf16.mxu0 %v3258
    %3520 = vmatpush1.bf16.msra.mxu0 %v3257
    %3521 = vmatprep.subr.bf16.mxu0 %v3254
    %3522 = vmatpush1.bf16.msra.mxu0 %v3253
    %3523 = vmatprep.subr.bf16.mxu0 %v3250
    %3524 = vmatpush1.bf16.msra.mxu0 %v3249
    %3525 = vmatprep.subr.bf16.mxu0 0
    %3526 = vmatpush2.bf16.msra.mxu0 0
    %3527 = vmatprep.subr.bf16.mxu0 0
    %3528 = vmatpush2.bf16.msra.mxu0 0
    %3529 = vmatprep.subr.bf16.mxu0 0
    %3530 = vmatpush2.bf16.msra.mxu0 0
    %3531 = vmatprep.subr.bf16.mxu0 0
    %3532 = vmatpush2.bf16.msra.mxu0 0
    %3533 = vmatprep.subr.bf16.mxu0 0
    %3534 = vmatpush2.bf16.msra.mxu0 0
    %3535 = vmatprep.subr.bf16.mxu0 0
    %3536 = vmatpush2.bf16.msra.mxu0 0
    %3537 = vmatprep.subr.bf16.mxu0 0
    %3538 = vmatpush2.bf16.msra.mxu0 0
    %3539 = vmatprep.subr.bf16.mxu0 0
    %3540 = vmatpush2.bf16.msra.mxu0 0
    %3541 = vmatprep.mubr.bf16.mxu0 0
    %3542 = vmatmul.mubr.bf16.gmra.mxu0 %v3465
    %v3543 = vpop.f32.mrf.mxu0
    %v3544 = vadd.f32 0.0, %v3543
    %v3545 = vpop.f32.mrf.mxu0
    %v3546 = vadd.f32 0.0, %v3545
    %v3547 = vpop.f32.mrf.mxu0
    %v3548 = vadd.f32 0.0, %v3547
    %v3549 = vpop.f32.mrf.mxu0
    %v3550 = vadd.f32 0.0, %v3549
    %3551 = vdwg.mxu0
    %v3552 = vadd.f32 %v3457, %v3501
    %v3553 = vadd.f32 %v3458, %v3503
    %v3554 = vadd.f32 %v3459, %v3544
    %v3555 = vadd.f32 %v3460, %v3546
    %v3556 = vadd.f32 %v3461, %v3505
    %v3557 = vadd.f32 %v3462, %v3507
    %v3558 = vadd.f32 %v3463, %v3548
    %v3559 = vadd.f32 %v3464, %v3550
    %v3560 = vxor.u32 %v3552, 2147483648
    %v3561 = vxor.u32 %v3556, 2147483648
    %v3562 = vmul.f32 %v3560, 1.442695
    %v3563 = vpow.pop %v3562
    %v3564 = vmul.f32 %v3561, 1.442695
    %v3565 = vpow.pop %v3564
    %v3566 = vadd.f32 %v3563, 1.0
    %v3567 = vadd.f32 %v3565, 1.0
    %v3568 = vrcp.pop %v3566
    %v3569 = vmul.f32 1.0, %v3568
    %v3570 = vrcp.pop %v3567
    %v3571 = vmul.f32 1.0, %v3570
    %v3572 = vxor.u32 %v3553, 2147483648
    %v3573 = vxor.u32 %v3557, 2147483648
    %v3574 = vmul.f32 %v3572, 1.442695
    %v3575 = vpow.pop %v3574
    %v3576 = vmul.f32 %v3573, 1.442695
    %v3577 = vpow.pop %v3576
    %v3578 = vadd.f32 %v3575, 1.0
    %v3579 = vadd.f32 %v3577, 1.0
    %v3580 = vrcp.pop %v3578
    %v3581 = vmul.f32 1.0, %v3580
    %v3582 = vrcp.pop %v3579
    %v3583 = vmul.f32 1.0, %v3582
    %v3584 = vtanh.pop %v3554
    %v3585 = vtanh.pop %v3558
    %v3586 = vxor.u32 %v3555, 2147483648
    %v3587 = vxor.u32 %v3559, 2147483648
    %v3588 = vmul.f32 %v3586, 1.442695
    %v3589 = vpow.pop %v3588
    %v3590 = vmul.f32 %v3587, 1.442695
    %v3591 = vpow.pop %v3590
    %v3592 = vadd.f32 %v3589, 1.0
    %v3593 = vadd.f32 %v3591, 1.0
    %v3594 = vrcp.pop %v3592
    %v3595 = vmul.f32 1.0, %v3594
    %v3596 = vrcp.pop %v3593
    %v3597 = vmul.f32 1.0, %v3596
    %v3598 = vmul.f32 %v3581, %v3447
    %v3599 = vmul.f32 %v3583, %v3448
    %v3600 = vmul.f32 %v3569, %v3584
    %v3601 = vmul.f32 %v3571, %v3585
    %v3602 = vadd.f32 %v3598, %v3600
    %v3603 = vadd.f32 %v3599, %v3601
    %v3604 = vtanh.pop %v3602
    %v3605 = vtanh.pop %v3603
    %v3606 = vmul.f32 %v3595, %v3604
    %v3607 = vmul.f32 %v3597, %v3605
    %v3608 = vld [vmem:[%s1373] sm:$0xff]
    %v3609 = vld [vmem:[%s1373 + $0x8] sm:$0xff]
    %v3610 = vld [vmem:[%s1373 + $0x10] sm:$0xff]
    %v3611 = vld [vmem:[%s1373 + $0x18] sm:$0xff]
    %v3612 = vunpack.c.l.bf16 %v3608
    %v3613 = vunpack.c.h.bf16 %v3608
    %v3614 = vunpack.c.l.bf16 %v3609
    %v3615 = vunpack.c.h.bf16 %v3609
    %v3616 = vunpack.c.l.bf16 %v3610
    %v3617 = vunpack.c.h.bf16 %v3610
    %v3618 = vunpack.c.l.bf16 %v3611
    %v3619 = vunpack.c.h.bf16 %v3611
    %v3620 = vpack.c.bf16 %v3607, %v3606
    %3621 = vmatprep.subr.bf16.mxu0 %v3276
    %3622 = vmatpush1.bf16.msra.mxu0 %v3275
    %3623 = vmatprep.subr.bf16.mxu0 %v3272
    %3624 = vmatpush1.bf16.msra.mxu0 %v3271
    %3625 = vmatprep.subr.bf16.mxu0 %v3268
    %3626 = vmatpush1.bf16.msra.mxu0 %v3267
    %3627 = vmatprep.subr.bf16.mxu0 %v3264
    %3628 = vmatpush1.bf16.msra.mxu0 %v3263
    %3629 = vmatprep.subr.bf16.mxu0 %v3260
    %3630 = vmatpush1.bf16.msra.mxu0 %v3259
    %3631 = vmatprep.subr.bf16.mxu0 %v3256
    %3632 = vmatpush1.bf16.msra.mxu0 %v3255
    %3633 = vmatprep.subr.bf16.mxu0 %v3252
    %3634 = vmatpush1.bf16.msra.mxu0 %v3251
    %3635 = vmatprep.subr.bf16.mxu0 %v3248
    %3636 = vmatpush1.bf16.msra.mxu0 %v3247
    %3637 = vmatprep.subr.bf16.mxu0 0
    %3638 = vmatpush2.bf16.msra.mxu0 0
    %3639 = vmatprep.subr.bf16.mxu0 0
    %3640 = vmatpush2.bf16.msra.mxu0 0
    %3641 = vmatprep.subr.bf16.mxu0 0
    %3642 = vmatpush2.bf16.msra.mxu0 0
    %3643 = vmatprep.subr.bf16.mxu0 0
    %3644 = vmatpush2.bf16.msra.mxu0 0
    %3645 = vmatprep.subr.bf16.mxu0 0
    %3646 = vmatpush2.bf16.msra.mxu0 0
    %3647 = vmatprep.subr.bf16.mxu0 0
    %3648 = vmatpush2.bf16.msra.mxu0 0
    %3649 = vmatprep.subr.bf16.mxu0 0
    %3650 = vmatpush2.bf16.msra.mxu0 0
    %3651 = vmatprep.subr.bf16.mxu0 0
    %3652 = vmatpush2.bf16.msra.mxu0 0
    %3653 = vmatprep.mubr.bf16.mxu0 0
    %3654 = vmatmul.mubr.bf16.gmra.mxu0 %v3620
    %v3655 = vpop.f32.mrf.mxu0
    %v3656 = vadd.f32 0.0, %v3655
    %v3657 = vpop.f32.mrf.mxu0
    %v3658 = vadd.f32 0.0, %v3657
    %v3659 = vpop.f32.mrf.mxu0
    %v3660 = vadd.f32 0.0, %v3659
    %v3661 = vpop.f32.mrf.mxu0
    %v3662 = vadd.f32 0.0, %v3661
    %3663 = vdwg.mxu0
    %3664 = vmatprep.subr.bf16.mxu0 %v3278
    %3665 = vmatpush1.bf16.msra.mxu0 %v3277
    %3666 = vmatprep.subr.bf16.mxu0 %v3274
    %3667 = vmatpush1.bf16.msra.mxu0 %v3273
    %3668 = vmatprep.subr.bf16.mxu0 %v3270
    %3669 = vmatpush1.bf16.msra.mxu0 %v3269
    %3670 = vmatprep.subr.bf16.mxu0 %v3266
    %3671 = vmatpush1.bf16.msra.mxu0 %v3265
    %3672 = vmatprep.subr.bf16.mxu0 %v3262
    %3673 = vmatpush1.bf16.msra.mxu0 %v3261
    %3674 = vmatprep.subr.bf16.mxu0 %v3258
    %3675 = vmatpush1.bf16.msra.mxu0 %v3257
    %3676 = vmatprep.subr.bf16.mxu0 %v3254
    %3677 = vmatpush1.bf16.msra.mxu0 %v3253
    %3678 = vmatprep.subr.bf16.mxu0 %v3250
    %3679 = vmatpush1.bf16.msra.mxu0 %v3249
    %3680 = vmatprep.subr.bf16.mxu0 0
    %3681 = vmatpush2.bf16.msra.mxu0 0
    %3682 = vmatprep.subr.bf16.mxu0 0
    %3683 = vmatpush2.bf16.msra.mxu0 0
    %3684 = vmatprep.subr.bf16.mxu0 0
    %3685 = vmatpush2.bf16.msra.mxu0 0
    %3686 = vmatprep.subr.bf16.mxu0 0
    %3687 = vmatpush2.bf16.msra.mxu0 0
    %3688 = vmatprep.subr.bf16.mxu0 0
    %3689 = vmatpush2.bf16.msra.mxu0 0
    %3690 = vmatprep.subr.bf16.mxu0 0
    %3691 = vmatpush2.bf16.msra.mxu0 0
    %3692 = vmatprep.subr.bf16.mxu0 0
    %3693 = vmatpush2.bf16.msra.mxu0 0
    %3694 = vmatprep.subr.bf16.mxu0 0
    %3695 = vmatpush2.bf16.msra.mxu0 0
    %3696 = vmatprep.mubr.bf16.mxu0 0
    %3697 = vmatmul.mubr.bf16.gmra.mxu0 %v3620
    %v3698 = vpop.f32.mrf.mxu0
    %v3699 = vadd.f32 0.0, %v3698
    %v3700 = vpop.f32.mrf.mxu0
    %v3701 = vadd.f32 0.0, %v3700
    %v3702 = vpop.f32.mrf.mxu0
    %v3703 = vadd.f32 0.0, %v3702
    %v3704 = vpop.f32.mrf.mxu0
    %v3705 = vadd.f32 0.0, %v3704
    %3706 = vdwg.mxu0
    %v3707 = vadd.f32 %v3612, %v3656
    %v3708 = vadd.f32 %v3613, %v3658
    %v3709 = vadd.f32 %v3614, %v3699
    %v3710 = vadd.f32 %v3615, %v3701
    %v3711 = vadd.f32 %v3616, %v3660
    %v3712 = vadd.f32 %v3617, %v3662
    %v3713 = vadd.f32 %v3618, %v3703
    %v3714 = vadd.f32 %v3619, %v3705
    %v3715 = vxor.u32 %v3707, 2147483648
    %v3716 = vxor.u32 %v3711, 2147483648
    %v3717 = vmul.f32 %v3715, 1.442695
    %v3718 = vpow.pop %v3717
    %v3719 = vmul.f32 %v3716, 1.442695
    %v3720 = vpow.pop %v3719
    %v3721 = vadd.f32 %v3718, 1.0
    %v3722 = vadd.f32 %v3720, 1.0
    %v3723 = vrcp.pop %v3721
    %v3724 = vmul.f32 1.0, %v3723
    %v3725 = vrcp.pop %v3722
    %v3726 = vmul.f32 1.0, %v3725
    %v3727 = vxor.u32 %v3708, 2147483648
    %v3728 = vxor.u32 %v3712, 2147483648
    %v3729 = vmul.f32 %v3727, 1.442695
    %v3730 = vpow.pop %v3729
    %v3731 = vmul.f32 %v3728, 1.442695
    %v3732 = vpow.pop %v3731
    %v3733 = vadd.f32 %v3730, 1.0
    %v3734 = vadd.f32 %v3732, 1.0
    %v3735 = vrcp.pop %v3733
    %v3736 = vmul.f32 1.0, %v3735
    %v3737 = vrcp.pop %v3734
    %v3738 = vmul.f32 1.0, %v3737
    %v3739 = vtanh.pop %v3709
    %v3740 = vtanh.pop %v3713
    %v3741 = vxor.u32 %v3710, 2147483648
    %v3742 = vxor.u32 %v3714, 2147483648
    %v3743 = vmul.f32 %v3741, 1.442695
    %v3744 = vpow.pop %v3743
    %v3745 = vmul.f32 %v3742, 1.442695
    %v3746 = vpow.pop %v3745
    %v3747 = vadd.f32 %v3744, 1.0
    %v3748 = vadd.f32 %v3746, 1.0
    %v3749 = vrcp.pop %v3747
    %v3750 = vmul.f32 1.0, %v3749
    %v3751 = vrcp.pop %v3748
    %v3752 = vmul.f32 1.0, %v3751
    %v3753 = vmul.f32 %v3736, %v3602
    %v3754 = vmul.f32 %v3738, %v3603
    %v3755 = vmul.f32 %v3724, %v3739
    %v3756 = vmul.f32 %v3726, %v3740
    %v3757 = vadd.f32 %v3753, %v3755
    %v3758 = vadd.f32 %v3754, %v3756
    %v3759 = vtanh.pop %v3757
    %v3760 = vtanh.pop %v3758
    %v3761 = vmul.f32 %v3750, %v3759
    %v3762 = vmul.f32 %v3752, %v3760
    %v3763 = vld [vmem:[%s1541] sm:$0xff]
    %v3764 = vld [vmem:[%s1541 + $0x8] sm:$0xff]
    %v3765 = vld [vmem:[%s1541 + $0x10] sm:$0xff]
    %v3766 = vld [vmem:[%s1541 + $0x18] sm:$0xff]
    %v3767 = vunpack.c.l.bf16 %v3763
    %v3768 = vunpack.c.h.bf16 %v3763
    %v3769 = vunpack.c.l.bf16 %v3764
    %v3770 = vunpack.c.h.bf16 %v3764
    %v3771 = vunpack.c.l.bf16 %v3765
    %v3772 = vunpack.c.h.bf16 %v3765
    %v3773 = vunpack.c.l.bf16 %v3766
    %v3774 = vunpack.c.h.bf16 %v3766
    %v3775 = vpack.c.bf16 %v3762, %v3761
    %3776 = vmatprep.subr.bf16.mxu0 %v3276
    %3777 = vmatpush1.bf16.msra.mxu0 %v3275
    %3778 = vmatprep.subr.bf16.mxu0 %v3272
    %3779 = vmatpush1.bf16.msra.mxu0 %v3271
    %3780 = vmatprep.subr.bf16.mxu0 %v3268
    %3781 = vmatpush1.bf16.msra.mxu0 %v3267
    %3782 = vmatprep.subr.bf16.mxu0 %v3264
    %3783 = vmatpush1.bf16.msra.mxu0 %v3263
    %3784 = vmatprep.subr.bf16.mxu0 %v3260
    %3785 = vmatpush1.bf16.msra.mxu0 %v3259
    %3786 = vmatprep.subr.bf16.mxu0 %v3256
    %3787 = vmatpush1.bf16.msra.mxu0 %v3255
    %3788 = vmatprep.subr.bf16.mxu0 %v3252
    %3789 = vmatpush1.bf16.msra.mxu0 %v3251
    %3790 = vmatprep.subr.bf16.mxu0 %v3248
    %3791 = vmatpush1.bf16.msra.mxu0 %v3247
    %3792 = vmatprep.subr.bf16.mxu0 0
    %3793 = vmatpush2.bf16.msra.mxu0 0
    %3794 = vmatprep.subr.bf16.mxu0 0
    %3795 = vmatpush2.bf16.msra.mxu0 0
    %3796 = vmatprep.subr.bf16.mxu0 0
    %3797 = vmatpush2.bf16.msra.mxu0 0
    %3798 = vmatprep.subr.bf16.mxu0 0
    %3799 = vmatpush2.bf16.msra.mxu0 0
    %3800 = vmatprep.subr.bf16.mxu0 0
    %3801 = vmatpush2.bf16.msra.mxu0 0
    %3802 = vmatprep.subr.bf16.mxu0 0
    %3803 = vmatpush2.bf16.msra.mxu0 0
    %3804 = vmatprep.subr.bf16.mxu0 0
    %3805 = vmatpush2.bf16.msra.mxu0 0
    %3806 = vmatprep.subr.bf16.mxu0 0
    %3807 = vmatpush2.bf16.msra.mxu0 0
    %3808 = vmatprep.mubr.bf16.mxu0 0
    %3809 = vmatmul.mubr.bf16.gmra.mxu0 %v3775
    %v3810 = vpop.f32.mrf.mxu0
    %v3811 = vadd.f32 0.0, %v3810
    %v3812 = vpop.f32.mrf.mxu0
    %v3813 = vadd.f32 0.0, %v3812
    %v3814 = vpop.f32.mrf.mxu0
    %v3815 = vadd.f32 0.0, %v3814
    %v3816 = vpop.f32.mrf.mxu0
    %v3817 = vadd.f32 0.0, %v3816
    %3818 = vdwg.mxu0
    %3819 = vmatprep.subr.bf16.mxu0 %v3278
    %3820 = vmatpush1.bf16.msra.mxu0 %v3277
    %3821 = vmatprep.subr.bf16.mxu0 %v3274
    %3822 = vmatpush1.bf16.msra.mxu0 %v3273
    %3823 = vmatprep.subr.bf16.mxu0 %v3270
    %3824 = vmatpush1.bf16.msra.mxu0 %v3269
    %3825 = vmatprep.subr.bf16.mxu0 %v3266
    %3826 = vmatpush1.bf16.msra.mxu0 %v3265
    %3827 = vmatprep.subr.bf16.mxu0 %v3262
    %3828 = vmatpush1.bf16.msra.mxu0 %v3261
    %3829 = vmatprep.subr.bf16.mxu0 %v3258
    %3830 = vmatpush1.bf16.msra.mxu0 %v3257
    %3831 = vmatprep.subr.bf16.mxu0 %v3254
    %3832 = vmatpush1.bf16.msra.mxu0 %v3253
    %3833 = vmatprep.subr.bf16.mxu0 %v3250
    %3834 = vmatpush1.bf16.msra.mxu0 %v3249
    %3835 = vmatprep.subr.bf16.mxu0 0
    %3836 = vmatpush2.bf16.msra.mxu0 0
    %3837 = vmatprep.subr.bf16.mxu0 0
    %3838 = vmatpush2.bf16.msra.mxu0 0
    %3839 = vmatprep.subr.bf16.mxu0 0
    %3840 = vmatpush2.bf16.msra.mxu0 0
    %3841 = vmatprep.subr.bf16.mxu0 0
    %3842 = vmatpush2.bf16.msra.mxu0 0
    %3843 = vmatprep.subr.bf16.mxu0 0
    %3844 = vmatpush2.bf16.msra.mxu0 0
    %3845 = vmatprep.subr.bf16.mxu0 0
    %3846 = vmatpush2.bf16.msra.mxu0 0
    %3847 = vmatprep.subr.bf16.mxu0 0
    %3848 = vmatpush2.bf16.msra.mxu0 0
    %3849 = vmatprep.subr.bf16.mxu0 0
    %3850 = vmatpush2.bf16.msra.mxu0 0
    %3851 = vmatprep.mubr.bf16.mxu0 0
    %3852 = vmatmul.mubr.bf16.gmra.mxu0 %v3775
    %v3853 = vpop.f32.mrf.mxu0
    %v3854 = vadd.f32 0.0, %v3853
    %v3855 = vpop.f32.mrf.mxu0
    %v3856 = vadd.f32 0.0, %v3855
    %v3857 = vpop.f32.mrf.mxu0
    %v3858 = vadd.f32 0.0, %v3857
    %v3859 = vpop.f32.mrf.mxu0
    %v3860 = vadd.f32 0.0, %v3859
    %3861 = vdwg.mxu0
    %v3862 = vadd.f32 %v3767, %v3811
    %v3863 = vadd.f32 %v3768, %v3813
    %v3864 = vadd.f32 %v3769, %v3854
    %v3865 = vadd.f32 %v3770, %v3856
    %v3866 = vadd.f32 %v3771, %v3815
    %v3867 = vadd.f32 %v3772, %v3817
    %v3868 = vadd.f32 %v3773, %v3858
    %v3869 = vadd.f32 %v3774, %v3860
    %v3870 = vxor.u32 %v3862, 2147483648
    %v3871 = vxor.u32 %v3866, 2147483648
    %v3872 = vmul.f32 %v3870, 1.442695
    %v3873 = vpow.pop %v3872
    %v3874 = vmul.f32 %v3871, 1.442695
    %v3875 = vpow.pop %v3874
    %v3876 = vadd.f32 %v3873, 1.0
    %v3877 = vadd.f32 %v3875, 1.0
    %v3878 = vrcp.pop %v3876
    %v3879 = vmul.f32 1.0, %v3878
    %v3880 = vrcp.pop %v3877
    %v3881 = vmul.f32 1.0, %v3880
    %v3882 = vxor.u32 %v3863, 2147483648
    %v3883 = vxor.u32 %v3867, 2147483648
    %v3884 = vmul.f32 %v3882, 1.442695
    %v3885 = vpow.pop %v3884
    %v3886 = vmul.f32 %v3883, 1.442695
    %v3887 = vpow.pop %v3886
    %v3888 = vadd.f32 %v3885, 1.0
    %v3889 = vadd.f32 %v3887, 1.0
    %v3890 = vrcp.pop %v3888
    %v3891 = vmul.f32 1.0, %v3890
    %v3892 = vrcp.pop %v3889
    %v3893 = vmul.f32 1.0, %v3892
    %v3894 = vtanh.pop %v3864
    %v3895 = vtanh.pop %v3868
    %v3896 = vxor.u32 %v3865, 2147483648
    %v3897 = vxor.u32 %v3869, 2147483648
    %v3898 = vmul.f32 %v3896, 1.442695
    %v3899 = vpow.pop %v3898
    %v3900 = vmul.f32 %v3897, 1.442695
    %v3901 = vpow.pop %v3900
    %v3902 = vadd.f32 %v3899, 1.0
    %v3903 = vadd.f32 %v3901, 1.0
    %v3904 = vrcp.pop %v3902
    %v3905 = vmul.f32 1.0, %v3904
    %v3906 = vrcp.pop %v3903
    %v3907 = vmul.f32 1.0, %v3906
    %v3908 = vmul.f32 %v3891, %v3757
    %v3909 = vmul.f32 %v3893, %v3758
    %v3910 = vmul.f32 %v3879, %v3894
    %v3911 = vmul.f32 %v3881, %v3895
    %v3912 = vadd.f32 %v3908, %v3910
    %v3913 = vadd.f32 %v3909, %v3911
    %v3914 = vtanh.pop %v3912
    %v3915 = vtanh.pop %v3913
    %v3916 = vmul.f32 %v3905, %v3914
    %v3917 = vmul.f32 %v3907, %v3915
    %v3918 = vld [vmem:[%s1709] sm:$0xff]
    %v3919 = vld [vmem:[%s1709 + $0x8] sm:$0xff]
    %v3920 = vld [vmem:[%s1709 + $0x10] sm:$0xff]
    %v3921 = vld [vmem:[%s1709 + $0x18] sm:$0xff]
    %v3922 = vunpack.c.l.bf16 %v3918
    %v3923 = vunpack.c.h.bf16 %v3918
    %v3924 = vunpack.c.l.bf16 %v3919
    %v3925 = vunpack.c.h.bf16 %v3919
    %v3926 = vunpack.c.l.bf16 %v3920
    %v3927 = vunpack.c.h.bf16 %v3920
    %v3928 = vunpack.c.l.bf16 %v3921
    %v3929 = vunpack.c.h.bf16 %v3921
    %v3930 = vpack.c.bf16 %v3917, %v3916
    %3931 = vmatprep.subr.bf16.mxu0 %v3276
    %3932 = vmatpush1.bf16.msra.mxu0 %v3275
    %3933 = vmatprep.subr.bf16.mxu0 %v3272
    %3934 = vmatpush1.bf16.msra.mxu0 %v3271
    %3935 = vmatprep.subr.bf16.mxu0 %v3268
    %3936 = vmatpush1.bf16.msra.mxu0 %v3267
    %3937 = vmatprep.subr.bf16.mxu0 %v3264
    %3938 = vmatpush1.bf16.msra.mxu0 %v3263
    %3939 = vmatprep.subr.bf16.mxu0 %v3260
    %3940 = vmatpush1.bf16.msra.mxu0 %v3259
    %3941 = vmatprep.subr.bf16.mxu0 %v3256
    %3942 = vmatpush1.bf16.msra.mxu0 %v3255
    %3943 = vmatprep.subr.bf16.mxu0 %v3252
    %3944 = vmatpush1.bf16.msra.mxu0 %v3251
    %3945 = vmatprep.subr.bf16.mxu0 %v3248
    %3946 = vmatpush1.bf16.msra.mxu0 %v3247
    %3947 = vmatprep.subr.bf16.mxu0 0
    %3948 = vmatpush2.bf16.msra.mxu0 0
    %3949 = vmatprep.subr.bf16.mxu0 0
    %3950 = vmatpush2.bf16.msra.mxu0 0
    %3951 = vmatprep.subr.bf16.mxu0 0
    %3952 = vmatpush2.bf16.msra.mxu0 0
    %3953 = vmatprep.subr.bf16.mxu0 0
    %3954 = vmatpush2.bf16.msra.mxu0 0
    %3955 = vmatprep.subr.bf16.mxu0 0
    %3956 = vmatpush2.bf16.msra.mxu0 0
    %3957 = vmatprep.subr.bf16.mxu0 0
    %3958 = vmatpush2.bf16.msra.mxu0 0
    %3959 = vmatprep.subr.bf16.mxu0 0
    %3960 = vmatpush2.bf16.msra.mxu0 0
    %3961 = vmatprep.subr.bf16.mxu0 0
    %3962 = vmatpush2.bf16.msra.mxu0 0
    %3963 = vmatprep.mubr.bf16.mxu0 0
    %3964 = vmatmul.mubr.bf16.gmra.mxu0 %v3930
    %v3965 = vpop.f32.mrf.mxu0
    %v3966 = vadd.f32 0.0, %v3965
    %v3967 = vpop.f32.mrf.mxu0
    %v3968 = vadd.f32 0.0, %v3967
    %v3969 = vpop.f32.mrf.mxu0
    %v3970 = vadd.f32 0.0, %v3969
    %v3971 = vpop.f32.mrf.mxu0
    %v3972 = vadd.f32 0.0, %v3971
    %3973 = vdwg.mxu0
    %3974 = vmatprep.subr.bf16.mxu0 %v3278
    %3975 = vmatpush1.bf16.msra.mxu0 %v3277
    %3976 = vmatprep.subr.bf16.mxu0 %v3274
    %3977 = vmatpush1.bf16.msra.mxu0 %v3273
    %3978 = vmatprep.subr.bf16.mxu0 %v3270
    %3979 = vmatpush1.bf16.msra.mxu0 %v3269
    %3980 = vmatprep.subr.bf16.mxu0 %v3266
    %3981 = vmatpush1.bf16.msra.mxu0 %v3265
    %3982 = vmatprep.subr.bf16.mxu0 %v3262
    %3983 = vmatpush1.bf16.msra.mxu0 %v3261
    %3984 = vmatprep.subr.bf16.mxu0 %v3258
    %3985 = vmatpush1.bf16.msra.mxu0 %v3257
    %3986 = vmatprep.subr.bf16.mxu0 %v3254
    %3987 = vmatpush1.bf16.msra.mxu0 %v3253
    %3988 = vmatprep.subr.bf16.mxu0 %v3250
    %3989 = vmatpush1.bf16.msra.mxu0 %v3249
    %3990 = vmatprep.subr.bf16.mxu0 0
    %3991 = vmatpush2.bf16.msra.mxu0 0
    %3992 = vmatprep.subr.bf16.mxu0 0
    %3993 = vmatpush2.bf16.msra.mxu0 0
    %3994 = vmatprep.subr.bf16.mxu0 0
    %3995 = vmatpush2.bf16.msra.mxu0 0
    %3996 = vmatprep.subr.bf16.mxu0 0
    %3997 = vmatpush2.bf16.msra.mxu0 0
    %3998 = vmatprep.subr.bf16.mxu0 0
    %3999 = vmatpush2.bf16.msra.mxu0 0
    %4000 = vmatprep.subr.bf16.mxu0 0
    %4001 = vmatpush2.bf16.msra.mxu0 0
    %4002 = vmatprep.subr.bf16.mxu0 0
    %4003 = vmatpush2.bf16.msra.mxu0 0
    %4004 = vmatprep.subr.bf16.mxu0 0
    %4005 = vmatpush2.bf16.msra.mxu0 0
    %4006 = vmatprep.mubr.bf16.mxu0 0
    %4007 = vmatmul.mubr.bf16.gmra.mxu0 %v3930
    %v4008 = vpop.f32.mrf.mxu0
    %v4009 = vadd.f32 0.0, %v4008
    %v4010 = vpop.f32.mrf.mxu0
    %v4011 = vadd.f32 0.0, %v4010
    %v4012 = vpop.f32.mrf.mxu0
    %v4013 = vadd.f32 0.0, %v4012
    %v4014 = vpop.f32.mrf.mxu0
    %v4015 = vadd.f32 0.0, %v4014
    %4016 = vdwg.mxu0
    %v4017 = vadd.f32 %v3922, %v3966
    %v4018 = vadd.f32 %v3923, %v3968
    %v4019 = vadd.f32 %v3924, %v4009
    %v4020 = vadd.f32 %v3925, %v4011
    %v4021 = vadd.f32 %v3926, %v3970
    %v4022 = vadd.f32 %v3927, %v3972
    %v4023 = vadd.f32 %v3928, %v4013
    %v4024 = vadd.f32 %v3929, %v4015
    %v4025 = vxor.u32 %v4017, 2147483648
    %v4026 = vxor.u32 %v4021, 2147483648
    %v4027 = vmul.f32 %v4025, 1.442695
    %v4028 = vpow.pop %v4027
    %v4029 = vmul.f32 %v4026, 1.442695
    %v4030 = vpow.pop %v4029
    %v4031 = vadd.f32 %v4028, 1.0
    %v4032 = vadd.f32 %v4030, 1.0
    %v4033 = vrcp.pop %v4031
    %v4034 = vmul.f32 1.0, %v4033
    %v4035 = vrcp.pop %v4032
    %v4036 = vmul.f32 1.0, %v4035
    %v4037 = vxor.u32 %v4018, 2147483648
    %v4038 = vxor.u32 %v4022, 2147483648
    %v4039 = vmul.f32 %v4037, 1.442695
    %v4040 = vpow.pop %v4039
    %v4041 = vmul.f32 %v4038, 1.442695
    %v4042 = vpow.pop %v4041
    %v4043 = vadd.f32 %v4040, 1.0
    %v4044 = vadd.f32 %v4042, 1.0
    %v4045 = vrcp.pop %v4043
    %v4046 = vmul.f32 1.0, %v4045
    %v4047 = vrcp.pop %v4044
    %v4048 = vmul.f32 1.0, %v4047
    %v4049 = vtanh.pop %v4019
    %v4050 = vtanh.pop %v4023
    %v4051 = vxor.u32 %v4020, 2147483648
    %v4052 = vxor.u32 %v4024, 2147483648
    %v4053 = vmul.f32 %v4051, 1.442695
    %v4054 = vpow.pop %v4053
    %v4055 = vmul.f32 %v4052, 1.442695
    %v4056 = vpow.pop %v4055
    %v4057 = vadd.f32 %v4054, 1.0
    %v4058 = vadd.f32 %v4056, 1.0
    %v4059 = vrcp.pop %v4057
    %v4060 = vmul.f32 1.0, %v4059
    %v4061 = vrcp.pop %v4058
    %v4062 = vmul.f32 1.0, %v4061
    %v4063 = vmul.f32 %v4046, %v3912
    %v4064 = vmul.f32 %v4048, %v3913
    %v4065 = vmul.f32 %v4034, %v4049
    %v4066 = vmul.f32 %v4036, %v4050
    %v4067 = vadd.f32 %v4063, %v4065
    %v4068 = vadd.f32 %v4064, %v4066
    %v4069 = vtanh.pop %v4067
    %v4070 = vtanh.pop %v4068
    %v4071 = vmul.f32 %v4060, %v4069
    %v4072 = vmul.f32 %v4062, %v4070
    %v4073 = vld [vmem:[%s1877] sm:$0xff]
    %v4074 = vld [vmem:[%s1877 + $0x8] sm:$0xff]
    %v4075 = vld [vmem:[%s1877 + $0x10] sm:$0xff]
    %v4076 = vld [vmem:[%s1877 + $0x18] sm:$0xff]
    %v4077 = vunpack.c.l.bf16 %v4073
    %v4078 = vunpack.c.h.bf16 %v4073
    %v4079 = vunpack.c.l.bf16 %v4074
    %v4080 = vunpack.c.h.bf16 %v4074
    %v4081 = vunpack.c.l.bf16 %v4075
    %v4082 = vunpack.c.h.bf16 %v4075
    %v4083 = vunpack.c.l.bf16 %v4076
    %v4084 = vunpack.c.h.bf16 %v4076
    %v4085 = vpack.c.bf16 %v4072, %v4071
    %4086 = vmatprep.subr.bf16.mxu0 %v3276
    %4087 = vmatpush1.bf16.msra.mxu0 %v3275
    %4088 = vmatprep.subr.bf16.mxu0 %v3272
    %4089 = vmatpush1.bf16.msra.mxu0 %v3271
    %4090 = vmatprep.subr.bf16.mxu0 %v3268
    %4091 = vmatpush1.bf16.msra.mxu0 %v3267
    %4092 = vmatprep.subr.bf16.mxu0 %v3264
    %4093 = vmatpush1.bf16.msra.mxu0 %v3263
    %4094 = vmatprep.subr.bf16.mxu0 %v3260
    %4095 = vmatpush1.bf16.msra.mxu0 %v3259
    %4096 = vmatprep.subr.bf16.mxu0 %v3256
    %4097 = vmatpush1.bf16.msra.mxu0 %v3255
    %4098 = vmatprep.subr.bf16.mxu0 %v3252
    %4099 = vmatpush1.bf16.msra.mxu0 %v3251
    %4100 = vmatprep.subr.bf16.mxu0 %v3248
    %4101 = vmatpush1.bf16.msra.mxu0 %v3247
    %4102 = vmatprep.subr.bf16.mxu0 0
    %4103 = vmatpush2.bf16.msra.mxu0 0
    %4104 = vmatprep.subr.bf16.mxu0 0
    %4105 = vmatpush2.bf16.msra.mxu0 0
    %4106 = vmatprep.subr.bf16.mxu0 0
    %4107 = vmatpush2.bf16.msra.mxu0 0
    %4108 = vmatprep.subr.bf16.mxu0 0
    %4109 = vmatpush2.bf16.msra.mxu0 0
    %4110 = vmatprep.subr.bf16.mxu0 0
    %4111 = vmatpush2.bf16.msra.mxu0 0
    %4112 = vmatprep.subr.bf16.mxu0 0
    %4113 = vmatpush2.bf16.msra.mxu0 0
    %4114 = vmatprep.subr.bf16.mxu0 0
    %4115 = vmatpush2.bf16.msra.mxu0 0
    %4116 = vmatprep.subr.bf16.mxu0 0
    %4117 = vmatpush2.bf16.msra.mxu0 0
    %4118 = vmatprep.mubr.bf16.mxu0 0
    %4119 = vmatmul.mubr.bf16.gmra.mxu0 %v4085
    %v4120 = vpop.f32.mrf.mxu0
    %v4121 = vadd.f32 0.0, %v4120
    %v4122 = vpop.f32.mrf.mxu0
    %v4123 = vadd.f32 0.0, %v4122
    %v4124 = vpop.f32.mrf.mxu0
    %v4125 = vadd.f32 0.0, %v4124
    %v4126 = vpop.f32.mrf.mxu0
    %v4127 = vadd.f32 0.0, %v4126
    %4128 = vdwg.mxu0
    %4129 = vmatprep.subr.bf16.mxu0 %v3278
    %4130 = vmatpush1.bf16.msra.mxu0 %v3277
    %4131 = vmatprep.subr.bf16.mxu0 %v3274
    %4132 = vmatpush1.bf16.msra.mxu0 %v3273
    %4133 = vmatprep.subr.bf16.mxu0 %v3270
    %4134 = vmatpush1.bf16.msra.mxu0 %v3269
    %4135 = vmatprep.subr.bf16.mxu0 %v3266
    %4136 = vmatpush1.bf16.msra.mxu0 %v3265
    %4137 = vmatprep.subr.bf16.mxu0 %v3262
    %4138 = vmatpush1.bf16.msra.mxu0 %v3261
    %4139 = vmatprep.subr.bf16.mxu0 %v3258
    %4140 = vmatpush1.bf16.msra.mxu0 %v3257
    %4141 = vmatprep.subr.bf16.mxu0 %v3254
    %4142 = vmatpush1.bf16.msra.mxu0 %v3253
    %4143 = vmatprep.subr.bf16.mxu0 %v3250
    %4144 = vmatpush1.bf16.msra.mxu0 %v3249
    %4145 = vmatprep.subr.bf16.mxu0 0
    %4146 = vmatpush2.bf16.msra.mxu0 0
    %4147 = vmatprep.subr.bf16.mxu0 0
    %4148 = vmatpush2.bf16.msra.mxu0 0
    %4149 = vmatprep.subr.bf16.mxu0 0
    %4150 = vmatpush2.bf16.msra.mxu0 0
    %4151 = vmatprep.subr.bf16.mxu0 0
    %4152 = vmatpush2.bf16.msra.mxu0 0
    %4153 = vmatprep.subr.bf16.mxu0 0
    %4154 = vmatpush2.bf16.msra.mxu0 0
    %4155 = vmatprep.subr.bf16.mxu0 0
    %4156 = vmatpush2.bf16.msra.mxu0 0
    %4157 = vmatprep.subr.bf16.mxu0 0
    %4158 = vmatpush2.bf16.msra.mxu0 0
    %4159 = vmatprep.subr.bf16.mxu0 0
    %4160 = vmatpush2.bf16.msra.mxu0 0
    %4161 = vmatprep.mubr.bf16.mxu0 0
    %4162 = vmatmul.mubr.bf16.gmra.mxu0 %v4085
    %v4163 = vpop.f32.mrf.mxu0
    %v4164 = vadd.f32 0.0, %v4163
    %v4165 = vpop.f32.mrf.mxu0
    %v4166 = vadd.f32 0.0, %v4165
    %v4167 = vpop.f32.mrf.mxu0
    %v4168 = vadd.f32 0.0, %v4167
    %v4169 = vpop.f32.mrf.mxu0
    %v4170 = vadd.f32 0.0, %v4169
    %4171 = vdwg.mxu0
    %v4172 = vadd.f32 %v4077, %v4121
    %v4173 = vadd.f32 %v4078, %v4123
    %v4174 = vadd.f32 %v4079, %v4164
    %v4175 = vadd.f32 %v4080, %v4166
    %v4176 = vadd.f32 %v4081, %v4125
    %v4177 = vadd.f32 %v4082, %v4127
    %v4178 = vadd.f32 %v4083, %v4168
    %v4179 = vadd.f32 %v4084, %v4170
    %v4180 = vxor.u32 %v4172, 2147483648
    %v4181 = vxor.u32 %v4176, 2147483648
    %v4182 = vmul.f32 %v4180, 1.442695
    %v4183 = vpow.pop %v4182
    %v4184 = vmul.f32 %v4181, 1.442695
    %v4185 = vpow.pop %v4184
    %v4186 = vadd.f32 %v4183, 1.0
    %v4187 = vadd.f32 %v4185, 1.0
    %v4188 = vrcp.pop %v4186
    %v4189 = vmul.f32 1.0, %v4188
    %v4190 = vrcp.pop %v4187
    %v4191 = vmul.f32 1.0, %v4190
    %v4192 = vxor.u32 %v4173, 2147483648
    %v4193 = vxor.u32 %v4177, 2147483648
    %v4194 = vmul.f32 %v4192, 1.442695
    %v4195 = vpow.pop %v4194
    %v4196 = vmul.f32 %v4193, 1.442695
    %v4197 = vpow.pop %v4196
    %v4198 = vadd.f32 %v4195, 1.0
    %v4199 = vadd.f32 %v4197, 1.0
    %v4200 = vrcp.pop %v4198
    %v4201 = vmul.f32 1.0, %v4200
    %v4202 = vrcp.pop %v4199
    %v4203 = vmul.f32 1.0, %v4202
    %v4204 = vtanh.pop %v4174
    %v4205 = vtanh.pop %v4178
    %v4206 = vxor.u32 %v4175, 2147483648
    %v4207 = vxor.u32 %v4179, 2147483648
    %v4208 = vmul.f32 %v4206, 1.442695
    %v4209 = vpow.pop %v4208
    %v4210 = vmul.f32 %v4207, 1.442695
    %v4211 = vpow.pop %v4210
    %v4212 = vadd.f32 %v4209, 1.0
    %v4213 = vadd.f32 %v4211, 1.0
    %v4214 = vrcp.pop %v4212
    %v4215 = vmul.f32 1.0, %v4214
    %v4216 = vrcp.pop %v4213
    %v4217 = vmul.f32 1.0, %v4216
    %v4218 = vmul.f32 %v4201, %v4067
    %v4219 = vmul.f32 %v4203, %v4068
    %v4220 = vmul.f32 %v4189, %v4204
    %v4221 = vmul.f32 %v4191, %v4205
    %v4222 = vadd.f32 %v4218, %v4220
    %v4223 = vadd.f32 %v4219, %v4221
    %v4224 = vtanh.pop %v4222
    %v4225 = vtanh.pop %v4223
    %v4226 = vmul.f32 %v4215, %v4224
    %v4227 = vmul.f32 %v4217, %v4225
    %v4228 = vld [vmem:[%s2045] sm:$0xff]
    %v4229 = vld [vmem:[%s2045 + $0x8] sm:$0xff]
    %v4230 = vld [vmem:[%s2045 + $0x10] sm:$0xff]
    %v4231 = vld [vmem:[%s2045 + $0x18] sm:$0xff]
    %v4232 = vunpack.c.l.bf16 %v4228
    %v4233 = vunpack.c.h.bf16 %v4228
    %v4234 = vunpack.c.l.bf16 %v4229
    %v4235 = vunpack.c.h.bf16 %v4229
    %v4236 = vunpack.c.l.bf16 %v4230
    %v4237 = vunpack.c.h.bf16 %v4230
    %v4238 = vunpack.c.l.bf16 %v4231
    %v4239 = vunpack.c.h.bf16 %v4231
    %v4240 = vpack.c.bf16 %v4227, %v4226
    %4241 = vmatprep.subr.bf16.mxu0 %v3276
    %4242 = vmatpush1.bf16.msra.mxu0 %v3275
    %4243 = vmatprep.subr.bf16.mxu0 %v3272
    %4244 = vmatpush1.bf16.msra.mxu0 %v3271
    %4245 = vmatprep.subr.bf16.mxu0 %v3268
    %4246 = vmatpush1.bf16.msra.mxu0 %v3267
    %4247 = vmatprep.subr.bf16.mxu0 %v3264
    %4248 = vmatpush1.bf16.msra.mxu0 %v3263
    %4249 = vmatprep.subr.bf16.mxu0 %v3260
    %4250 = vmatpush1.bf16.msra.mxu0 %v3259
    %4251 = vmatprep.subr.bf16.mxu0 %v3256
    %4252 = vmatpush1.bf16.msra.mxu0 %v3255
    %4253 = vmatprep.subr.bf16.mxu0 %v3252
    %4254 = vmatpush1.bf16.msra.mxu0 %v3251
    %4255 = vmatprep.subr.bf16.mxu0 %v3248
    %4256 = vmatpush1.bf16.msra.mxu0 %v3247
    %4257 = vmatprep.subr.bf16.mxu0 0
    %4258 = vmatpush2.bf16.msra.mxu0 0
    %4259 = vmatprep.subr.bf16.mxu0 0
    %4260 = vmatpush2.bf16.msra.mxu0 0
    %4261 = vmatprep.subr.bf16.mxu0 0
    %4262 = vmatpush2.bf16.msra.mxu0 0
    %4263 = vmatprep.subr.bf16.mxu0 0
    %4264 = vmatpush2.bf16.msra.mxu0 0
    %4265 = vmatprep.subr.bf16.mxu0 0
    %4266 = vmatpush2.bf16.msra.mxu0 0
    %4267 = vmatprep.subr.bf16.mxu0 0
    %4268 = vmatpush2.bf16.msra.mxu0 0
    %4269 = vmatprep.subr.bf16.mxu0 0
    %4270 = vmatpush2.bf16.msra.mxu0 0
    %4271 = vmatprep.subr.bf16.mxu0 0
    %4272 = vmatpush2.bf16.msra.mxu0 0
    %4273 = vmatprep.mubr.bf16.mxu0 0
    %4274 = vmatmul.mubr.bf16.gmra.mxu0 %v4240
    %v4275 = vpop.f32.mrf.mxu0
    %v4276 = vadd.f32 0.0, %v4275
    %v4277 = vpop.f32.mrf.mxu0
    %v4278 = vadd.f32 0.0, %v4277
    %v4279 = vpop.f32.mrf.mxu0
    %v4280 = vadd.f32 0.0, %v4279
    %v4281 = vpop.f32.mrf.mxu0
    %v4282 = vadd.f32 0.0, %v4281
    %4283 = vdwg.mxu0
    %4284 = vmatprep.subr.bf16.mxu0 %v3278
    %4285 = vmatpush1.bf16.msra.mxu0 %v3277
    %4286 = vmatprep.subr.bf16.mxu0 %v3274
    %4287 = vmatpush1.bf16.msra.mxu0 %v3273
    %4288 = vmatprep.subr.bf16.mxu0 %v3270
    %4289 = vmatpush1.bf16.msra.mxu0 %v3269
    %4290 = vmatprep.subr.bf16.mxu0 %v3266
    %4291 = vmatpush1.bf16.msra.mxu0 %v3265
    %4292 = vmatprep.subr.bf16.mxu0 %v3262
    %4293 = vmatpush1.bf16.msra.mxu0 %v3261
    %4294 = vmatprep.subr.bf16.mxu0 %v3258
    %4295 = vmatpush1.bf16.msra.mxu0 %v3257
    %4296 = vmatprep.subr.bf16.mxu0 %v3254
    %4297 = vmatpush1.bf16.msra.mxu0 %v3253
    %4298 = vmatprep.subr.bf16.mxu0 %v3250
    %4299 = vmatpush1.bf16.msra.mxu0 %v3249
    %4300 = vmatprep.subr.bf16.mxu0 0
    %4301 = vmatpush2.bf16.msra.mxu0 0
    %4302 = vmatprep.subr.bf16.mxu0 0
    %4303 = vmatpush2.bf16.msra.mxu0 0
    %4304 = vmatprep.subr.bf16.mxu0 0
    %4305 = vmatpush2.bf16.msra.mxu0 0
    %4306 = vmatprep.subr.bf16.mxu0 0
    %4307 = vmatpush2.bf16.msra.mxu0 0
    %4308 = vmatprep.subr.bf16.mxu0 0
    %4309 = vmatpush2.bf16.msra.mxu0 0
    %4310 = vmatprep.subr.bf16.mxu0 0
    %4311 = vmatpush2.bf16.msra.mxu0 0
    %4312 = vmatprep.subr.bf16.mxu0 0
    %4313 = vmatpush2.bf16.msra.mxu0 0
    %4314 = vmatprep.subr.bf16.mxu0 0
    %4315 = vmatpush2.bf16.msra.mxu0 0
    %4316 = vmatprep.mubr.bf16.mxu0 0
    %4317 = vmatmul.mubr.bf16.gmra.mxu0 %v4240
    %v4318 = vpop.f32.mrf.mxu0
    %v4319 = vadd.f32 0.0, %v4318
    %v4320 = vpop.f32.mrf.mxu0
    %v4321 = vadd.f32 0.0, %v4320
    %v4322 = vpop.f32.mrf.mxu0
    %v4323 = vadd.f32 0.0, %v4322
    %v4324 = vpop.f32.mrf.mxu0
    %v4325 = vadd.f32 0.0, %v4324
    %4326 = vdwg.mxu0
    %v4327 = vadd.f32 %v4232, %v4276
    %v4328 = vadd.f32 %v4233, %v4278
    %v4329 = vadd.f32 %v4234, %v4319
    %v4330 = vadd.f32 %v4235, %v4321
    %v4331 = vadd.f32 %v4236, %v4280
    %v4332 = vadd.f32 %v4237, %v4282
    %v4333 = vadd.f32 %v4238, %v4323
    %v4334 = vadd.f32 %v4239, %v4325
    %v4335 = vxor.u32 %v4327, 2147483648
    %v4336 = vxor.u32 %v4331, 2147483648
    %v4337 = vmul.f32 %v4335, 1.442695
    %v4338 = vpow.pop %v4337
    %v4339 = vmul.f32 %v4336, 1.442695
    %v4340 = vpow.pop %v4339
    %v4341 = vadd.f32 %v4338, 1.0
    %v4342 = vadd.f32 %v4340, 1.0
    %v4343 = vrcp.pop %v4341
    %v4344 = vmul.f32 1.0, %v4343
    %v4345 = vrcp.pop %v4342
    %v4346 = vmul.f32 1.0, %v4345
    %v4347 = vxor.u32 %v4328, 2147483648
    %v4348 = vxor.u32 %v4332, 2147483648
    %v4349 = vmul.f32 %v4347, 1.442695
    %v4350 = vpow.pop %v4349
    %v4351 = vmul.f32 %v4348, 1.442695
    %v4352 = vpow.pop %v4351
    %v4353 = vadd.f32 %v4350, 1.0
    %v4354 = vadd.f32 %v4352, 1.0
    %v4355 = vrcp.pop %v4353
    %v4356 = vmul.f32 1.0, %v4355
    %v4357 = vrcp.pop %v4354
    %v4358 = vmul.f32 1.0, %v4357
    %v4359 = vtanh.pop %v4329
    %v4360 = vtanh.pop %v4333
    %v4361 = vxor.u32 %v4330, 2147483648
    %v4362 = vxor.u32 %v4334, 2147483648
    %v4363 = vmul.f32 %v4361, 1.442695
    %v4364 = vpow.pop %v4363
    %v4365 = vmul.f32 %v4362, 1.442695
    %v4366 = vpow.pop %v4365
    %v4367 = vadd.f32 %v4364, 1.0
    %v4368 = vadd.f32 %v4366, 1.0
    %v4369 = vrcp.pop %v4367
    %v4370 = vmul.f32 1.0, %v4369
    %v4371 = vrcp.pop %v4368
    %v4372 = vmul.f32 1.0, %v4371
    %v4373 = vmul.f32 %v4356, %v4222
    %v4374 = vmul.f32 %v4358, %v4223
    %v4375 = vmul.f32 %v4344, %v4359
    %v4376 = vmul.f32 %v4346, %v4360
    %v4377 = vadd.f32 %v4373, %v4375
    %v4378 = vadd.f32 %v4374, %v4376
    %v4379 = vtanh.pop %v4377
    %v4380 = vtanh.pop %v4378
    %v4381 = vmul.f32 %v4370, %v4379
    %v4382 = vmul.f32 %v4372, %v4380
    %v4383 = vld [vmem:[%s2213] sm:$0xff]
    %v4384 = vld [vmem:[%s2213 + $0x8] sm:$0xff]
    %v4385 = vld [vmem:[%s2213 + $0x10] sm:$0xff]
    %v4386 = vld [vmem:[%s2213 + $0x18] sm:$0xff]
    %v4387 = vunpack.c.l.bf16 %v4383
    %v4388 = vunpack.c.h.bf16 %v4383
    %v4389 = vunpack.c.l.bf16 %v4384
    %v4390 = vunpack.c.h.bf16 %v4384
    %v4391 = vunpack.c.l.bf16 %v4385
    %v4392 = vunpack.c.h.bf16 %v4385
    %v4393 = vunpack.c.l.bf16 %v4386
    %v4394 = vunpack.c.h.bf16 %v4386
    %v4395 = vpack.c.bf16 %v4382, %v4381
    %4396 = vmatprep.subr.bf16.mxu0 %v3276
    %4397 = vmatpush1.bf16.msra.mxu0 %v3275
    %4398 = vmatprep.subr.bf16.mxu0 %v3272
    %4399 = vmatpush1.bf16.msra.mxu0 %v3271
    %4400 = vmatprep.subr.bf16.mxu0 %v3268
    %4401 = vmatpush1.bf16.msra.mxu0 %v3267
    %4402 = vmatprep.subr.bf16.mxu0 %v3264
    %4403 = vmatpush1.bf16.msra.mxu0 %v3263
    %4404 = vmatprep.subr.bf16.mxu0 %v3260
    %4405 = vmatpush1.bf16.msra.mxu0 %v3259
    %4406 = vmatprep.subr.bf16.mxu0 %v3256
    %4407 = vmatpush1.bf16.msra.mxu0 %v3255
    %4408 = vmatprep.subr.bf16.mxu0 %v3252
    %4409 = vmatpush1.bf16.msra.mxu0 %v3251
    %4410 = vmatprep.subr.bf16.mxu0 %v3248
    %4411 = vmatpush1.bf16.msra.mxu0 %v3247
    %4412 = vmatprep.subr.bf16.mxu0 0
    %4413 = vmatpush2.bf16.msra.mxu0 0
    %4414 = vmatprep.subr.bf16.mxu0 0
    %4415 = vmatpush2.bf16.msra.mxu0 0
    %4416 = vmatprep.subr.bf16.mxu0 0
    %4417 = vmatpush2.bf16.msra.mxu0 0
    %4418 = vmatprep.subr.bf16.mxu0 0
    %4419 = vmatpush2.bf16.msra.mxu0 0
    %4420 = vmatprep.subr.bf16.mxu0 0
    %4421 = vmatpush2.bf16.msra.mxu0 0
    %4422 = vmatprep.subr.bf16.mxu0 0
    %4423 = vmatpush2.bf16.msra.mxu0 0
    %4424 = vmatprep.subr.bf16.mxu0 0
    %4425 = vmatpush2.bf16.msra.mxu0 0
    %4426 = vmatprep.subr.bf16.mxu0 0
    %4427 = vmatpush2.bf16.msra.mxu0 0
    %4428 = vmatprep.mubr.bf16.mxu0 0
    %4429 = vmatmul.mubr.bf16.gmra.mxu0 %v4395
    %v4430 = vpop.f32.mrf.mxu0
    %v4431 = vadd.f32 0.0, %v4430
    %v4432 = vpop.f32.mrf.mxu0
    %v4433 = vadd.f32 0.0, %v4432
    %v4434 = vpop.f32.mrf.mxu0
    %v4435 = vadd.f32 0.0, %v4434
    %v4436 = vpop.f32.mrf.mxu0
    %v4437 = vadd.f32 0.0, %v4436
    %4438 = vdwg.mxu0
    %4439 = vmatprep.subr.bf16.mxu0 %v3278
    %4440 = vmatpush1.bf16.msra.mxu0 %v3277
    %4441 = vmatprep.subr.bf16.mxu0 %v3274
    %4442 = vmatpush1.bf16.msra.mxu0 %v3273
    %4443 = vmatprep.subr.bf16.mxu0 %v3270
    %4444 = vmatpush1.bf16.msra.mxu0 %v3269
    %4445 = vmatprep.subr.bf16.mxu0 %v3266
    %4446 = vmatpush1.bf16.msra.mxu0 %v3265
    %4447 = vmatprep.subr.bf16.mxu0 %v3262
    %4448 = vmatpush1.bf16.msra.mxu0 %v3261
    %4449 = vmatprep.subr.bf16.mxu0 %v3258
    %4450 = vmatpush1.bf16.msra.mxu0 %v3257
    %4451 = vmatprep.subr.bf16.mxu0 %v3254
    %4452 = vmatpush1.bf16.msra.mxu0 %v3253
    %4453 = vmatprep.subr.bf16.mxu0 %v3250
    %4454 = vmatpush1.bf16.msra.mxu0 %v3249
    %4455 = vmatprep.subr.bf16.mxu0 0
    %4456 = vmatpush2.bf16.msra.mxu0 0
    %4457 = vmatprep.subr.bf16.mxu0 0
    %4458 = vmatpush2.bf16.msra.mxu0 0
    %4459 = vmatprep.subr.bf16.mxu0 0
    %4460 = vmatpush2.bf16.msra.mxu0 0
    %4461 = vmatprep.subr.bf16.mxu0 0
    %4462 = vmatpush2.bf16.msra.mxu0 0
    %4463 = vmatprep.subr.bf16.mxu0 0
    %4464 = vmatpush2.bf16.msra.mxu0 0
    %4465 = vmatprep.subr.bf16.mxu0 0
    %4466 = vmatpush2.bf16.msra.mxu0 0
    %4467 = vmatprep.subr.bf16.mxu0 0
    %4468 = vmatpush2.bf16.msra.mxu0 0
    %4469 = vmatprep.subr.bf16.mxu0 0
    %4470 = vmatpush2.bf16.msra.mxu0 0
    %4471 = vmatprep.mubr.bf16.mxu0 0
    %4472 = vmatmul.mubr.bf16.gmra.mxu0 %v4395
    %v4473 = vpop.f32.mrf.mxu0
    %v4474 = vadd.f32 0.0, %v4473
    %v4475 = vpop.f32.mrf.mxu0
    %v4476 = vadd.f32 0.0, %v4475
    %v4477 = vpop.f32.mrf.mxu0
    %v4478 = vadd.f32 0.0, %v4477
    %v4479 = vpop.f32.mrf.mxu0
    %v4480 = vadd.f32 0.0, %v4479
    %4481 = vdwg.mxu0
    %v4482 = vadd.f32 %v4387, %v4431
    %v4483 = vadd.f32 %v4388, %v4433
    %v4484 = vadd.f32 %v4389, %v4474
    %v4485 = vadd.f32 %v4390, %v4476
    %v4486 = vadd.f32 %v4391, %v4435
    %v4487 = vadd.f32 %v4392, %v4437
    %v4488 = vadd.f32 %v4393, %v4478
    %v4489 = vadd.f32 %v4394, %v4480
    %v4490 = vxor.u32 %v4482, 2147483648
    %v4491 = vxor.u32 %v4486, 2147483648
    %v4492 = vmul.f32 %v4490, 1.442695
    %v4493 = vpow.pop %v4492
    %v4494 = vmul.f32 %v4491, 1.442695
    %v4495 = vpow.pop %v4494
    %v4496 = vadd.f32 %v4493, 1.0
    %v4497 = vadd.f32 %v4495, 1.0
    %v4498 = vrcp.pop %v4496
    %v4499 = vmul.f32 1.0, %v4498
    %v4500 = vrcp.pop %v4497
    %v4501 = vmul.f32 1.0, %v4500
    %v4502 = vxor.u32 %v4483, 2147483648
    %v4503 = vxor.u32 %v4487, 2147483648
    %v4504 = vmul.f32 %v4502, 1.442695
    %v4505 = vpow.pop %v4504
    %v4506 = vmul.f32 %v4503, 1.442695
    %v4507 = vpow.pop %v4506
    %v4508 = vadd.f32 %v4505, 1.0
    %v4509 = vadd.f32 %v4507, 1.0
    %v4510 = vrcp.pop %v4508
    %v4511 = vmul.f32 1.0, %v4510
    %v4512 = vrcp.pop %v4509
    %v4513 = vmul.f32 1.0, %v4512
    %v4514 = vtanh.pop %v4484
    %v4515 = vtanh.pop %v4488
    %v4516 = vxor.u32 %v4485, 2147483648
    %v4517 = vxor.u32 %v4489, 2147483648
    %v4518 = vmul.f32 %v4516, 1.442695
    %v4519 = vpow.pop %v4518
    %v4520 = vmul.f32 %v4517, 1.442695
    %v4521 = vpow.pop %v4520
    %v4522 = vadd.f32 %v4519, 1.0
    %v4523 = vadd.f32 %v4521, 1.0
    %v4524 = vrcp.pop %v4522
    %v4525 = vmul.f32 1.0, %v4524
    %v4526 = vrcp.pop %v4523
    %v4527 = vmul.f32 1.0, %v4526
    %v4528 = vmul.f32 %v4511, %v4377
    %v4529 = vmul.f32 %v4513, %v4378
    %v4530 = vmul.f32 %v4499, %v4514
    %v4531 = vmul.f32 %v4501, %v4515
    %v4532 = vadd.f32 %v4528, %v4530
    %v4533 = vadd.f32 %v4529, %v4531
    %v4534 = vtanh.pop %v4532
    %v4535 = vtanh.pop %v4533
    %v4536 = vmul.f32 %v4525, %v4534
    %v4537 = vmul.f32 %v4527, %v4535
    %v4538 = vpack.c.bf16 %v4537, %v4536
    %v4539 = vld [vmem:[#allocation13] sm:$0xf]
    %v4540 = vld [vmem:[#allocation13 + $0x4] sm:$0xf]
    %v4541 = vld [vmem:[#allocation13 + $0x8] sm:$0xf]
    %v4542 = vld [vmem:[#allocation13 + $0xc] sm:$0xf]
    %v4543 = vld [vmem:[#allocation13 + $0x10] sm:$0xf]
    %v4544 = vld [vmem:[#allocation13 + $0x14] sm:$0xf]
    %v4545 = vld [vmem:[#allocation13 + $0x18] sm:$0xf]
    %v4546 = vld [vmem:[#allocation13 + $0x1c] sm:$0xf]
    %v4547 = vld [vmem:[#allocation13 + $0x20] sm:$0xf]
    %v4548 = vld [vmem:[#allocation13 + $0x24] sm:$0xf]
    %v4549 = vld [vmem:[#allocation13 + $0x28] sm:$0xf]
    %v4550 = vld [vmem:[#allocation13 + $0x2c] sm:$0xf]
    %v4551 = vld [vmem:[#allocation13 + $0x30] sm:$0xf]
    %v4552 = vld [vmem:[#allocation13 + $0x34] sm:$0xf]
    %v4553 = vld [vmem:[#allocation13 + $0x38] sm:$0xf]
    %v4554 = vld [vmem:[#allocation13 + $0x3c] sm:$0xf]
    %v4555 = vld [vmem:[%s8] sm:$0x1]
    %v4557 = vlaneseq
    %v4558 = vshrl.u32 %v4557, 7
    %v4559 = vsub.s32 0, %v4558
    %v4560 = vrot.slane %v4555, %v4559
    %v4578 = vunpack.c.l.b16 %v4539
    %v4579 = vunpack.c.l.b16 %v4540
    %v4580 = vunpack.c.l.b16 %v4541
    %v4581 = vunpack.c.l.b16 %v4542
    %v4582 = vunpack.c.l.b16 %v4543
    %v4583 = vunpack.c.l.b16 %v4544
    %v4584 = vunpack.c.l.b16 %v4545
    %v4585 = vunpack.c.l.b16 %v4546
    %v4586 = vunpack.c.l.b16 %v4547
    %v4587 = vunpack.c.l.b16 %v4548
    %v4588 = vunpack.c.l.b16 %v4549
    %v4589 = vunpack.c.l.b16 %v4550
    %v4590 = vunpack.c.l.b16 %v4551
    %v4591 = vunpack.c.l.b16 %v4552
    %v4592 = vunpack.c.l.b16 %v4553
    %v4593 = vunpack.c.l.b16 %v4554
    %v4594 = vpack.c.b16 %v4579, %v4578
    %v4595 = vpack.c.b16 %v4581, %v4580
    %v4596 = vpack.c.b16 %v4583, %v4582
    %v4597 = vpack.c.b16 %v4585, %v4584
    %v4598 = vpack.c.b16 %v4587, %v4586
    %v4599 = vpack.c.b16 %v4589, %v4588
    %v4600 = vpack.c.b16 %v4591, %v4590
    %v4601 = vpack.c.b16 %v4593, %v4592
    %4610 = vmatprep.subr.bf16.mxu0 0
    %4611 = vmatpush1.bf16.msra.mxu0 %v4601
    %4612 = vmatprep.subr.bf16.mxu0 0
    %4613 = vmatpush1.bf16.msra.mxu0 %v4600
    %4614 = vmatprep.subr.bf16.mxu0 0
    %4615 = vmatpush1.bf16.msra.mxu0 %v4599
    %4616 = vmatprep.subr.bf16.mxu0 0
    %4617 = vmatpush1.bf16.msra.mxu0 %v4598
    %4618 = vmatprep.subr.bf16.mxu0 0
    %4619 = vmatpush1.bf16.msra.mxu0 %v4597
    %4620 = vmatprep.subr.bf16.mxu0 0
    %4621 = vmatpush1.bf16.msra.mxu0 %v4596
    %4622 = vmatprep.subr.bf16.mxu0 0
    %4623 = vmatpush1.bf16.msra.mxu0 %v4595
    %4624 = vmatprep.subr.bf16.mxu0 0
    %4625 = vmatpush1.bf16.msra.mxu0 %v4594
    %4626 = vmatprep.subr.bf16.mxu0 0
    %4627 = vmatpush2.bf16.msra.mxu0 0
    %4628 = vmatprep.subr.bf16.mxu0 0
    %4629 = vmatpush2.bf16.msra.mxu0 0
    %4630 = vmatprep.subr.bf16.mxu0 0
    %4631 = vmatpush2.bf16.msra.mxu0 0
    %4632 = vmatprep.subr.bf16.mxu0 0
    %4633 = vmatpush2.bf16.msra.mxu0 0
    %4634 = vmatprep.subr.bf16.mxu0 0
    %4635 = vmatpush2.bf16.msra.mxu0 0
    %4636 = vmatprep.subr.bf16.mxu0 0
    %4637 = vmatpush2.bf16.msra.mxu0 0
    %4638 = vmatprep.subr.bf16.mxu0 0
    %4639 = vmatpush2.bf16.msra.mxu0 0
    %4640 = vmatprep.subr.bf16.mxu0 0
    %4641 = vmatpush2.bf16.msra.mxu0 0
    %4642 = vmatprep.mubr.bf16.mxu0 0
    %4643 = vmatmul.mubr.bf16.gmra.mxu0 %v4538
    %v4644 = vpop.f32.mrf.mxu0
    %v4645 = vadd.f32 %v4560, %v4644
    %v4646 = vpop.f32.mrf.mxu0
    %v4647 = vpop.f32.mrf.mxu0
    %v4648 = vadd.f32 %v4560, %v4647
    %v4649 = vpop.f32.mrf.mxu0
    %4650 = vdwg.mxu0
    %4651 = vst [vmem:[#allocation15] sm:$0xff] %v4645
    %4652 = vst [vmem:[#allocation15 + $0x8] sm:$0xff] %v4648
    // Predicated region
    $region62: #{tpu_custom_call.1} parent=1 // pred_check
      _
    $region63: #{tpu_custom_call.1} parent=1 // pred_check_branch
      %4654 = sbr.rel (0) target = $region65
    $region64: #{tpu_custom_call.1} parent=1 // pred_region
      %s4656 = ssub.s32 256, 256
      %4657 = vsyncadd [#allocation6], %s4656
      %s4658 = sshll.u32 [#allocation15], 4
      %s4659 = int_to_ptr.vmem [resolvable:$true] %s4658
      %4664 = dma.vmem_to_hbm [thread:$0]  %s4659, 256, %s9, [#allocation6], 128, 128, 8
    $region65: #{tpu_custom_call.1} parent=1 // pred_fallthru
      _
    // Predicated region
    $region66: #{tpu_custom_call.1} parent=1 // pred_check
      _
    $region67: #{tpu_custom_call.1} parent=1 // pred_check_branch
      %4666 = sbr.rel (0) target = $region69
    $region68: #{tpu_custom_call.1} parent=1 // pred_region
      %4667 = dma.done [#allocation6], 256
    $region69: #{tpu_custom_call.1} parent=1 // pred_fallthru
      _
    %4668 = vsyncpa [#allocation5], 1
    %4669 = vsyncpa [#allocation8], 1
    %4670 = vsyncpa [#allocation11], 1
    %4671 = vsyncpa [#allocation14], 1
    %4672 = vsyncpa [#allocation6], 1

</llo_original>
